<compile_context>
chip_gen: v6e
topology: v6e:2x2x1
jax: 0.10.0
libtpu: 0.0.40
codegen_flags: <defaults>
</compile_context>

<pallas_src>
import functools

import jax
import jax.numpy as jnp
from jax import lax
from jax.experimental import pallas as pl
from jax.experimental.pallas import tpu as pltpu

PRIMITIVES = [
    "none",
    "max_pool_3x3",
    "avg_pool_3x3",
    "skip_connect",
    "sep_conv_3x3",
    "sep_conv_5x5",
    "dil_conv_3x3",
    "dil_conv_5x5",
]
NUM_OPS = len(PRIMITIVES)
BN_EPS = 1e-5
PAD = 4  # max spatial halo (dil_conv_5x5: k=5, dilation=2 -> pad=4)


# ----------------------------------------------------------------------------
# The single fused kernel
# ----------------------------------------------------------------------------
def _mixed_op_kernel(z_ref, mask_ref, x_ref,
                     s3_dw1_ref, s3_pw1_ref, s3_dw2_ref, s3_pw2_ref,
                     s5_dw1_ref, s5_pw1_ref, s5_dw2_ref, s5_pw2_ref,
                     d3_dw_ref, d3_pw_ref, d5_dw_ref, d5_pw_ref,
                     out_ref, *, C, Wp, Mp, ext, n_valid):
    # x:    (C, Mext) zero-padded, channel-major, flattened (N,Hp,Wp) on lanes
    # mask: (1, Mext) 1.0 at valid interior pixels, 0.0 at padding / halo
    x = x_ref[...]
    mask = mask_ref[...]
    inv_n = 1.0 / float(n_valid)

    def mask_at(e):
        # validity mask for an array carried at flat extension e
        return mask[:, ext - e: ext - e + Mp + 2 * e]

    def sanitize(y, m):
        return jnp.where(m > 0.0, y, 0.0)

    def batch_norm(y, m):
        # BatchNorm2d(affine=False), training-mode batch statistics over the
        # n_valid real pixels; single-pass variance (E[x^2] - E[x]^2).
        y = sanitize(y, m)
        mean = jnp.sum(y, axis=1, keepdims=True) * inv_n
        ex2 = jnp.sum(y * y, axis=1, keepdims=True) * inv_n
        var = jnp.maximum(ex2 - mean * mean, 0.0)
        return sanitize((y - mean) * lax.rsqrt(var + BN_EPS), m)

    def dw_conv(a, e_in, e_out, w, k, dil, pad):
        # Depthwise k x k conv (stride 1) via static lane-offset slices.
        # a: (C, Mp + 2*e_in), zero at invalid pixels; w: (C, k*k).
        L = Mp + 2 * e_out
        base = e_in - e_out
        acc = None
        t = 0
        for dy in range(k):
            for dx in range(k):
                off = (dy * dil - pad) * Wp + (dx * dil - pad)
                term = w[:, t:t + 1] * a[:, base + off: base + off + L]
                acc = term if acc is None else acc + term
                t += 1
        return acc

    def pw_conv(a, w):
        # 1x1 conv as VPU broadcast-MACs: out[co] = sum_ci w[co, ci] * a[ci].
        acc = None
        for ci in range(C):
            term = w[:, ci:ci + 1] * a[ci:ci + 1, :]
            acc = term if acc is None else acc + term
        return acc

    relu_x = jnp.maximum(x, 0.0)  # hoisted: shared by all 4 conv branches

    def sep_conv(dw1, pw1, dw2, pw2, k):
        # ReLU -> dwKxK -> 1x1 -> BN -> ReLU -> dwKxK -> 1x1 -> BN
        pad = (k - 1) // 2
        e1 = pad * Wp + pad
        a = dw_conv(relu_x, ext, e1, dw1, k, 1, pad)
        a = batch_norm(pw_conv(a, pw1), mask_at(e1))
        a = jnp.maximum(a, 0.0)
        a = dw_conv(a, e1, 0, dw2, k, 1, pad)
        return batch_norm(pw_conv(a, pw2), mask_at(0))

    def dil_conv(dw, pw, k):
        # ReLU -> dilated (d=2) dwKxK -> 1x1 -> BN
        pad = k - 1
        a = dw_conv(relu_x, ext, 0, dw, k, 2, pad)
        return batch_norm(pw_conv(a, pw), mask_at(0))

    def max_pool_bn():
        # 3x3, stride 1, pad 1 (implicit -inf padding), then BN
        xneg = jnp.where(mask > 0.0, x, -1e30)
        m = None
        for dy in range(3):
            for dx in range(3):
                off = (dy - 1) * Wp + (dx - 1)
                sl = xneg[:, ext + off: ext + off + Mp]
                m = sl if m is None else jnp.maximum(m, sl)
        return batch_norm(m, mask_at(0))

    def avg_pool_bn():
        # 3x3, stride 1, pad 1, count_include_pad=False, then BN
        s = None
        cnt = None
        for dy in range(3):
            for dx in range(3):
                off = (dy - 1) * Wp + (dx - 1)
                xs = x[:, ext + off: ext + off + Mp]
                ms = mask[:, ext + off: ext + off + Mp]
                s = xs if s is None else s + xs
                cnt = ms if cnt is None else cnt + ms
        avg = s / jnp.maximum(cnt, 1.0)
        return batch_norm(avg, mask_at(0))

    skip = x[:, ext: ext + Mp]  # Identity

    # Weighted mix, fused.  'none' (Zero) contributes 0 -> omitted (k starts at 1).
    out = z_ref[1] * max_pool_bn()
    out = out + z_ref[2] * avg_pool_bn()
    out = out + z_ref[3] * skip
    out = out + z_ref[4] * sep_conv(s3_dw1_ref[...], s3_pw1_ref[...],
                                    s3_dw2_ref[...], s3_pw2_ref[...], 3)
    out = out + z_ref[5] * sep_conv(s5_dw1_ref[...], s5_pw1_ref[...],
                                    s5_dw2_ref[...], s5_pw2_ref[...], 5)
    out = out + z_ref[6] * dil_conv(d3_dw_ref[...], d3_pw_ref[...], 3)
    out = out + z_ref[7] * dil_conv(d5_dw_ref[...], d5_pw_ref[...], 5)
    out_ref[...] = out


# ----------------------------------------------------------------------------
# Wrapper: one shared padded copy of x, channel-major flat layout, one call
# ----------------------------------------------------------------------------
def mixed_op_forward(x_nchw, Z, params, stride=1):
    assert stride == 1  # TODO(synk): stride=2 path not implemented
    N, C, H, W = x_nchw.shape
    Hp, Wp = H + 2 * PAD, W + 2 * PAD
    Mp = N * Hp * Wp
    ext = ((PAD * Wp + PAD + 127) // 128) * 128   # 128-aligned flat halo
    n_valid = N * H * W

    # Single padded copy of x: NCHW -> (C, N, Hp, Wp) -> (C, Mext), plus mask.
    xc = jnp.transpose(x_nchw.astype(jnp.float32), (1, 0, 2, 3))
    xp = jnp.pad(xc, ((0, 0), (0, 0), (PAD, PAD), (PAD, PAD)))
    xf = jnp.pad(xp.reshape(C, Mp), ((0, 0), (ext, ext)))

    vm = jnp.pad(jnp.ones((N, H, W), jnp.float32),
                 ((0, 0), (PAD, PAD), (PAD, PAD)))
    vmf = jnp.pad(vm.reshape(1, Mp), ((0, 0), (ext, ext)))

    p3, p5 = params["sep_conv_3x3"], params["sep_conv_5x5"]
    d3, d5 = params["dil_conv_3x3"], params["dil_conv_5x5"]
    dw = lambda w: w.reshape(C, -1).astype(jnp.float32)   # (C,K,K) -> (C,K*K)
    pw = lambda w: w.astype(jnp.float32)                  # (Cout,Cin)

    kern = functools.partial(_mixed_op_kernel, C=C, Wp=Wp, Mp=Mp,
                             ext=ext, n_valid=n_valid)
    vmem = pl.BlockSpec(memory_space=pltpu.MemorySpace.VMEM)
    smem = pl.BlockSpec(memory_space=pltpu.MemorySpace.SMEM)

    out_flat = pl.pallas_call(
        kern,
        out_shape=jax.ShapeDtypeStruct((C, Mp), jnp.float32),
        in_specs=[smem] + [vmem] * 14,
        out_specs=vmem,
    )(Z.astype(jnp.float32), vmf, xf,
      dw(p3["dw1"]), pw(p3["pw1"]), dw(p3["dw2"]), pw(p3["pw2"]),
      dw(p5["dw1"]), pw(p5["pw1"]), dw(p5["dw2"]), pw(p5["pw2"]),
      dw(d3["dw"]), pw(d3["pw"]), dw(d5["dw"]), pw(d5["pw"]))

    out = out_flat.reshape(C, N, Hp, Wp)[:, :, PAD:PAD + H, PAD:PAD + W]
    return jnp.transpose(out, (1, 0, 2, 3))  # back to NCHW


# ----------------------------------------------------------------------------
# Deterministic synthetic parameters (shapes from the PyTorch __init__)
# ----------------------------------------------------------------------------
def init_params(key, C):
    def w(k, shape, fan_in):
        return jax.random.normal(k, shape, jnp.float32) * (2.0 / fan_in) ** 0.5

    k = jax.random.split(key, 12)
    return {
        "sep_conv_3x3": {"dw1": w(k[0], (C, 3, 3), 9), "pw1": w(k[1], (C, C), C),
                         "dw2": w(k[2], (C, 3, 3), 9), "pw2": w(k[3], (C, C), C)},
        "sep_conv_5x5": {"dw1": w(k[4], (C, 5, 5), 25), "pw1": w(k[5], (C, C), C),
                         "dw2": w(k[6], (C, 5, 5), 25), "pw2": w(k[7], (C, C), C)},
        "dil_conv_3x3": {"dw": w(k[8], (C, 3, 3), 9), "pw": w(k[9], (C, C), C)},
        "dil_conv_5x5": {"dw": w(k[10], (C, 5, 5), 25), "pw": w(k[11], (C, C), C)},
    }


if __name__ == "__main__":
    key = jax.random.PRNGKey(0)
    kx, kz, kp = jax.random.split(key, 3)

    N, C, H, W = 2, 4, 16, 16
    x = jax.random.normal(kx, (N, C, H, W), jnp.float32)
    Z = jax.nn.softmax(jax.random.normal(kz, (NUM_OPS,), jnp.float32))
    params = init_params(kp, C)

    fwd = jax.jit(lambda x, Z, params: mixed_op_forward(x, Z, params, stride=1))
    out = fwd(x, Z, params)
    jax.block_until_ready(out)

    assert out.shape == (N, C, H, W) and out.dtype == jnp.float32
    assert bool(jnp.all(jnp.isfinite(out)))
    print("KERNEL_OK")
</pallas_src>

<mosaic_0001>
module attributes {stable_mosaic.version = 11 : i64} {
  func.func @_mixed_op_kernel(%arg0: memref<8xf32, #tpu.memory_space<smem>>, %arg1: memref<1x1408xf32, #tpu.memory_space<vmem>>, %arg2: memref<4x1408xf32, #tpu.memory_space<vmem>>, %arg3: memref<4x9xf32, #tpu.memory_space<vmem>>, %arg4: memref<4x4xf32, #tpu.memory_space<vmem>>, %arg5: memref<4x9xf32, #tpu.memory_space<vmem>>, %arg6: memref<4x4xf32, #tpu.memory_space<vmem>>, %arg7: memref<4x25xf32, #tpu.memory_space<vmem>>, %arg8: memref<4x4xf32, #tpu.memory_space<vmem>>, %arg9: memref<4x25xf32, #tpu.memory_space<vmem>>, %arg10: memref<4x4xf32, #tpu.memory_space<vmem>>, %arg11: memref<4x9xf32, #tpu.memory_space<vmem>>, %arg12: memref<4x4xf32, #tpu.memory_space<vmem>>, %arg13: memref<4x25xf32, #tpu.memory_space<vmem>>, %arg14: memref<4x4xf32, #tpu.memory_space<vmem>>, %arg15: memref<4x1152xf32, #tpu.memory_space<vmem>>) attributes {dimension_semantics = [], scalar_prefetch = 0 : i64, scratch_operands = 0 : i64, tpu.core_type = #tpu.core_type<tc>} {
    %c0 = arith.constant 0 : index
    %c0_0 = arith.constant 0 : index
    %0 = vector.load %arg2[%c0, %c0_0] : memref<4x1408xf32, #tpu.memory_space<vmem>>, vector<4x1408xf32>
    %c0_1 = arith.constant 0 : index
    %c0_2 = arith.constant 0 : index
    %1 = vector.load %arg1[%c0_1, %c0_2] : memref<1x1408xf32, #tpu.memory_space<vmem>>, vector<1x1408xf32>
    %cst = arith.constant 0.000000e+00 : f32
    %2 = vector.broadcast %cst : f32 to vector<4x1408xf32>
    %3 = arith.maximumf %0, %2 : vector<4x1408xf32>
    %4 = vector.extract_strided_slice %0 {offsets = [0, 128], sizes = [4, 1152], strides = [1, 1]} : vector<4x1408xf32> to vector<4x1152xf32>
    %c1 = arith.constant 1 : index
    %5 = memref.load %arg0[%c1] : memref<8xf32, #tpu.memory_space<smem>>
    %cst_3 = arith.constant 0.000000e+00 : f32
    %6 = vector.broadcast %cst_3 : f32 to vector<1x1408xf32>
    %7 = arith.cmpf ogt, %1, %6 : vector<1x1408xf32>
    %cst_4 = arith.constant -1.000000e+30 : f32
    %8 = vector.shape_cast %7 : vector<1x1408xi1> to vector<1x1408xi1>
    %9 = vector.broadcast %8 : vector<1x1408xi1> to vector<4x1408xi1>
    %10 = vector.broadcast %cst_4 : f32 to vector<4x1408xf32>
    %11 = arith.select %9, %0, %10 : vector<4x1408xi1>, vector<4x1408xf32>
    %12 = vector.extract_strided_slice %11 {offsets = [0, 103], sizes = [4, 1152], strides = [1, 1]} : vector<4x1408xf32> to vector<4x1152xf32>
    %13 = vector.extract_strided_slice %11 {offsets = [0, 104], sizes = [4, 1152], strides = [1, 1]} : vector<4x1408xf32> to vector<4x1152xf32>
    %14 = arith.maximumf %12, %13 : vector<4x1152xf32>
    %15 = vector.extract_strided_slice %11 {offsets = [0, 105], sizes = [4, 1152], strides = [1, 1]} : vector<4x1408xf32> to vector<4x1152xf32>
    %16 = arith.maximumf %14, %15 : vector<4x1152xf32>
    %17 = vector.extract_strided_slice %11 {offsets = [0, 127], sizes = [4, 1152], strides = [1, 1]} : vector<4x1408xf32> to vector<4x1152xf32>
    %18 = arith.maximumf %16, %17 : vector<4x1152xf32>
    %19 = vector.extract_strided_slice %11 {offsets = [0, 128], sizes = [4, 1152], strides = [1, 1]} : vector<4x1408xf32> to vector<4x1152xf32>
    %20 = arith.maximumf %18, %19 : vector<4x1152xf32>
    %21 = vector.extract_strided_slice %11 {offsets = [0, 129], sizes = [4, 1152], strides = [1, 1]} : vector<4x1408xf32> to vector<4x1152xf32>
    %22 = arith.maximumf %20, %21 : vector<4x1152xf32>
    %23 = vector.extract_strided_slice %11 {offsets = [0, 151], sizes = [4, 1152], strides = [1, 1]} : vector<4x1408xf32> to vector<4x1152xf32>
    %24 = arith.maximumf %22, %23 : vector<4x1152xf32>
    %25 = vector.extract_strided_slice %11 {offsets = [0, 152], sizes = [4, 1152], strides = [1, 1]} : vector<4x1408xf32> to vector<4x1152xf32>
    %26 = arith.maximumf %24, %25 : vector<4x1152xf32>
    %27 = vector.extract_strided_slice %11 {offsets = [0, 153], sizes = [4, 1152], strides = [1, 1]} : vector<4x1408xf32> to vector<4x1152xf32>
    %28 = arith.maximumf %26, %27 : vector<4x1152xf32>
    %29 = vector.extract_strided_slice %1 {offsets = [0, 128], sizes = [1, 1152], strides = [1, 1]} : vector<1x1408xf32> to vector<1x1152xf32>
    %cst_5 = arith.constant 0.000000e+00 : f32
    %30 = vector.broadcast %cst_5 : f32 to vector<1x1152xf32>
    %31 = arith.cmpf ogt, %29, %30 : vector<1x1152xf32>
    %cst_6 = arith.constant 0.000000e+00 : f32
    %32 = vector.shape_cast %31 : vector<1x1152xi1> to vector<1x1152xi1>
    %33 = vector.broadcast %32 : vector<1x1152xi1> to vector<4x1152xi1>
    %34 = vector.broadcast %cst_6 : f32 to vector<4x1152xf32>
    %35 = arith.select %33, %28, %34 : vector<4x1152xi1>, vector<4x1152xf32>
    %cst_7 = arith.constant dense<0.000000e+00> : vector<4xf32>
    %36 = vector.multi_reduction <add>, %35, %cst_7 [1] : vector<4x1152xf32> to vector<4xf32>
    %37 = vector.shape_cast %36 : vector<4xf32> to vector<4x1xf32>
    %cst_8 = arith.constant 0.001953125 : f32
    %38 = vector.broadcast %cst_8 : f32 to vector<4x1xf32>
    %39 = arith.mulf %37, %38 : vector<4x1xf32>
    %40 = arith.mulf %35, %35 : vector<4x1152xf32>
    %cst_9 = arith.constant dense<0.000000e+00> : vector<4xf32>
    %41 = vector.multi_reduction <add>, %40, %cst_9 [1] : vector<4x1152xf32> to vector<4xf32>
    %42 = vector.shape_cast %41 : vector<4xf32> to vector<4x1xf32>
    %cst_10 = arith.constant 0.001953125 : f32
    %43 = vector.broadcast %cst_10 : f32 to vector<4x1xf32>
    %44 = arith.mulf %42, %43 : vector<4x1xf32>
    %45 = arith.mulf %39, %39 : vector<4x1xf32>
    %46 = arith.subf %44, %45 : vector<4x1xf32>
    %cst_11 = arith.constant 0.000000e+00 : f32
    %47 = vector.broadcast %cst_11 : f32 to vector<4x1xf32>
    %48 = arith.maximumf %46, %47 : vector<4x1xf32>
    %49 = vector.broadcast %39 : vector<4x1xf32> to vector<4x1152xf32>
    %50 = arith.subf %35, %49 : vector<4x1152xf32>
    %cst_12 = arith.constant 9.99999974E-6 : f32
    %51 = vector.broadcast %cst_12 : f32 to vector<4x1xf32>
    %52 = arith.addf %48, %51 : vector<4x1xf32>
    %53 = math.rsqrt %52 : vector<4x1xf32>
    %54 = vector.broadcast %53 : vector<4x1xf32> to vector<4x1152xf32>
    %55 = arith.mulf %50, %54 : vector<4x1152xf32>
    %cst_13 = arith.constant 0.000000e+00 : f32
    %56 = vector.broadcast %cst_13 : f32 to vector<1x1152xf32>
    %57 = arith.cmpf ogt, %29, %56 : vector<1x1152xf32>
    %cst_14 = arith.constant 0.000000e+00 : f32
    %58 = vector.shape_cast %57 : vector<1x1152xi1> to vector<1x1152xi1>
    %59 = vector.broadcast %58 : vector<1x1152xi1> to vector<4x1152xi1>
    %60 = vector.broadcast %cst_14 : f32 to vector<4x1152xf32>
    %61 = arith.select %59, %55, %60 : vector<4x1152xi1>, vector<4x1152xf32>
    %62 = vector.broadcast %5 : f32 to vector<4x1152xf32>
    %63 = arith.mulf %62, %61 : vector<4x1152xf32>
    %c2 = arith.constant 2 : index
    %64 = memref.load %arg0[%c2] : memref<8xf32, #tpu.memory_space<smem>>
    %65 = vector.extract_strided_slice %0 {offsets = [0, 103], sizes = [4, 1152], strides = [1, 1]} : vector<4x1408xf32> to vector<4x1152xf32>
    %66 = vector.extract_strided_slice %1 {offsets = [0, 103], sizes = [1, 1152], strides = [1, 1]} : vector<1x1408xf32> to vector<1x1152xf32>
    %67 = vector.extract_strided_slice %0 {offsets = [0, 104], sizes = [4, 1152], strides = [1, 1]} : vector<4x1408xf32> to vector<4x1152xf32>
    %68 = vector.extract_strided_slice %1 {offsets = [0, 104], sizes = [1, 1152], strides = [1, 1]} : vector<1x1408xf32> to vector<1x1152xf32>
    %69 = arith.addf %65, %67 : vector<4x1152xf32>
    %70 = arith.addf %66, %68 : vector<1x1152xf32>
    %71 = vector.extract_strided_slice %0 {offsets = [0, 105], sizes = [4, 1152], strides = [1, 1]} : vector<4x1408xf32> to vector<4x1152xf32>
    %72 = vector.extract_strided_slice %1 {offsets = [0, 105], sizes = [1, 1152], strides = [1, 1]} : vector<1x1408xf32> to vector<1x1152xf32>
    %73 = arith.addf %69, %71 : vector<4x1152xf32>
    %74 = arith.addf %70, %72 : vector<1x1152xf32>
    %75 = vector.extract_strided_slice %0 {offsets = [0, 127], sizes = [4, 1152], strides = [1, 1]} : vector<4x1408xf32> to vector<4x1152xf32>
    %76 = vector.extract_strided_slice %1 {offsets = [0, 127], sizes = [1, 1152], strides = [1, 1]} : vector<1x1408xf32> to vector<1x1152xf32>
    %77 = arith.addf %73, %75 : vector<4x1152xf32>
    %78 = arith.addf %74, %76 : vector<1x1152xf32>
    %79 = vector.extract_strided_slice %0 {offsets = [0, 128], sizes = [4, 1152], strides = [1, 1]} : vector<4x1408xf32> to vector<4x1152xf32>
    %80 = vector.extract_strided_slice %1 {offsets = [0, 128], sizes = [1, 1152], strides = [1, 1]} : vector<1x1408xf32> to vector<1x1152xf32>
    %81 = arith.addf %77, %79 : vector<4x1152xf32>
    %82 = arith.addf %78, %80 : vector<1x1152xf32>
    %83 = vector.extract_strided_slice %0 {offsets = [0, 129], sizes = [4, 1152], strides = [1, 1]} : vector<4x1408xf32> to vector<4x1152xf32>
    %84 = vector.extract_strided_slice %1 {offsets = [0, 129], sizes = [1, 1152], strides = [1, 1]} : vector<1x1408xf32> to vector<1x1152xf32>
    %85 = arith.addf %81, %83 : vector<4x1152xf32>
    %86 = arith.addf %82, %84 : vector<1x1152xf32>
    %87 = vector.extract_strided_slice %0 {offsets = [0, 151], sizes = [4, 1152], strides = [1, 1]} : vector<4x1408xf32> to vector<4x1152xf32>
    %88 = vector.extract_strided_slice %1 {offsets = [0, 151], sizes = [1, 1152], strides = [1, 1]} : vector<1x1408xf32> to vector<1x1152xf32>
    %89 = arith.addf %85, %87 : vector<4x1152xf32>
    %90 = arith.addf %86, %88 : vector<1x1152xf32>
    %91 = vector.extract_strided_slice %0 {offsets = [0, 152], sizes = [4, 1152], strides = [1, 1]} : vector<4x1408xf32> to vector<4x1152xf32>
    %92 = vector.extract_strided_slice %1 {offsets = [0, 152], sizes = [1, 1152], strides = [1, 1]} : vector<1x1408xf32> to vector<1x1152xf32>
    %93 = arith.addf %89, %91 : vector<4x1152xf32>
    %94 = arith.addf %90, %92 : vector<1x1152xf32>
    %95 = vector.extract_strided_slice %0 {offsets = [0, 153], sizes = [4, 1152], strides = [1, 1]} : vector<4x1408xf32> to vector<4x1152xf32>
    %96 = vector.extract_strided_slice %1 {offsets = [0, 153], sizes = [1, 1152], strides = [1, 1]} : vector<1x1408xf32> to vector<1x1152xf32>
    %97 = arith.addf %93, %95 : vector<4x1152xf32>
    %98 = arith.addf %94, %96 : vector<1x1152xf32>
    %cst_15 = arith.constant 1.000000e+00 : f32
    %99 = vector.broadcast %cst_15 : f32 to vector<1x1152xf32>
    %100 = arith.maximumf %98, %99 : vector<1x1152xf32>
    %101 = vector.broadcast %100 : vector<1x1152xf32> to vector<4x1152xf32>
    %102 = arith.divf %97, %101 : vector<4x1152xf32>
    %103 = vector.extract_strided_slice %1 {offsets = [0, 128], sizes = [1, 1152], strides = [1, 1]} : vector<1x1408xf32> to vector<1x1152xf32>
    %cst_16 = arith.constant 0.000000e+00 : f32
    %104 = vector.broadcast %cst_16 : f32 to vector<1x1152xf32>
    %105 = arith.cmpf ogt, %103, %104 : vector<1x1152xf32>
    %cst_17 = arith.constant 0.000000e+00 : f32
    %106 = vector.shape_cast %105 : vector<1x1152xi1> to vector<1x1152xi1>
    %107 = vector.broadcast %106 : vector<1x1152xi1> to vector<4x1152xi1>
    %108 = vector.broadcast %cst_17 : f32 to vector<4x1152xf32>
    %109 = arith.select %107, %102, %108 : vector<4x1152xi1>, vector<4x1152xf32>
    %cst_18 = arith.constant dense<0.000000e+00> : vector<4xf32>
    %110 = vector.multi_reduction <add>, %109, %cst_18 [1] : vector<4x1152xf32> to vector<4xf32>
    %111 = vector.shape_cast %110 : vector<4xf32> to vector<4x1xf32>
    %cst_19 = arith.constant 0.001953125 : f32
    %112 = vector.broadcast %cst_19 : f32 to vector<4x1xf32>
    %113 = arith.mulf %111, %112 : vector<4x1xf32>
    %114 = arith.mulf %109, %109 : vector<4x1152xf32>
    %cst_20 = arith.constant dense<0.000000e+00> : vector<4xf32>
    %115 = vector.multi_reduction <add>, %114, %cst_20 [1] : vector<4x1152xf32> to vector<4xf32>
    %116 = vector.shape_cast %115 : vector<4xf32> to vector<4x1xf32>
    %cst_21 = arith.constant 0.001953125 : f32
    %117 = vector.broadcast %cst_21 : f32 to vector<4x1xf32>
    %118 = arith.mulf %116, %117 : vector<4x1xf32>
    %119 = arith.mulf %113, %113 : vector<4x1xf32>
    %120 = arith.subf %118, %119 : vector<4x1xf32>
    %cst_22 = arith.constant 0.000000e+00 : f32
    %121 = vector.broadcast %cst_22 : f32 to vector<4x1xf32>
    %122 = arith.maximumf %120, %121 : vector<4x1xf32>
    %123 = vector.broadcast %113 : vector<4x1xf32> to vector<4x1152xf32>
    %124 = arith.subf %109, %123 : vector<4x1152xf32>
    %cst_23 = arith.constant 9.99999974E-6 : f32
    %125 = vector.broadcast %cst_23 : f32 to vector<4x1xf32>
    %126 = arith.addf %122, %125 : vector<4x1xf32>
    %127 = math.rsqrt %126 : vector<4x1xf32>
    %128 = vector.broadcast %127 : vector<4x1xf32> to vector<4x1152xf32>
    %129 = arith.mulf %124, %128 : vector<4x1152xf32>
    %cst_24 = arith.constant 0.000000e+00 : f32
    %130 = vector.broadcast %cst_24 : f32 to vector<1x1152xf32>
    %131 = arith.cmpf ogt, %103, %130 : vector<1x1152xf32>
    %cst_25 = arith.constant 0.000000e+00 : f32
    %132 = vector.shape_cast %131 : vector<1x1152xi1> to vector<1x1152xi1>
    %133 = vector.broadcast %132 : vector<1x1152xi1> to vector<4x1152xi1>
    %134 = vector.broadcast %cst_25 : f32 to vector<4x1152xf32>
    %135 = arith.select %133, %129, %134 : vector<4x1152xi1>, vector<4x1152xf32>
    %136 = vector.broadcast %64 : f32 to vector<4x1152xf32>
    %137 = arith.mulf %136, %135 : vector<4x1152xf32>
    %138 = arith.addf %63, %137 : vector<4x1152xf32>
    %c3 = arith.constant 3 : index
    %139 = memref.load %arg0[%c3] : memref<8xf32, #tpu.memory_space<smem>>
    %140 = vector.broadcast %139 : f32 to vector<4x1152xf32>
    %141 = arith.mulf %140, %4 : vector<4x1152xf32>
    %142 = arith.addf %138, %141 : vector<4x1152xf32>
    %c4 = arith.constant 4 : index
    %143 = memref.load %arg0[%c4] : memref<8xf32, #tpu.memory_space<smem>>
    %c0_26 = arith.constant 0 : index
    %c0_27 = arith.constant 0 : index
    %144 = vector.load %arg3[%c0_26, %c0_27] : memref<4x9xf32, #tpu.memory_space<vmem>>, vector<4x9xf32>
    %c0_28 = arith.constant 0 : index
    %c0_29 = arith.constant 0 : index
    %145 = vector.load %arg4[%c0_28, %c0_29] : memref<4x4xf32, #tpu.memory_space<vmem>>, vector<4x4xf32>
    %c0_30 = arith.constant 0 : index
    %c0_31 = arith.constant 0 : index
    %146 = vector.load %arg5[%c0_30, %c0_31] : memref<4x9xf32, #tpu.memory_space<vmem>>, vector<4x9xf32>
    %c0_32 = arith.constant 0 : index
    %c0_33 = arith.constant 0 : index
    %147 = vector.load %arg6[%c0_32, %c0_33] : memref<4x4xf32, #tpu.memory_space<vmem>>, vector<4x4xf32>
    %148 = vector.extract_strided_slice %144 {offsets = [0, 0], sizes = [4, 1], strides = [1, 1]} : vector<4x9xf32> to vector<4x1xf32>
    %149 = vector.extract_strided_slice %3 {offsets = [0, 78], sizes = [4, 1202], strides = [1, 1]} : vector<4x1408xf32> to vector<4x1202xf32>
    %150 = vector.broadcast %148 : vector<4x1xf32> to vector<4x1202xf32>
    %151 = arith.mulf %150, %149 : vector<4x1202xf32>
    %152 = vector.extract_strided_slice %144 {offsets = [0, 1], sizes = [4, 1], strides = [1, 1]} : vector<4x9xf32> to vector<4x1xf32>
    %153 = vector.extract_strided_slice %3 {offsets = [0, 79], sizes = [4, 1202], strides = [1, 1]} : vector<4x1408xf32> to vector<4x1202xf32>
    %154 = vector.broadcast %152 : vector<4x1xf32> to vector<4x1202xf32>
    %155 = arith.mulf %154, %153 : vector<4x1202xf32>
    %156 = arith.addf %151, %155 : vector<4x1202xf32>
    %157 = vector.extract_strided_slice %144 {offsets = [0, 2], sizes = [4, 1], strides = [1, 1]} : vector<4x9xf32> to vector<4x1xf32>
    %158 = vector.extract_strided_slice %3 {offsets = [0, 80], sizes = [4, 1202], strides = [1, 1]} : vector<4x1408xf32> to vector<4x1202xf32>
    %159 = vector.broadcast %157 : vector<4x1xf32> to vector<4x1202xf32>
    %160 = arith.mulf %159, %158 : vector<4x1202xf32>
    %161 = arith.addf %156, %160 : vector<4x1202xf32>
    %162 = vector.extract_strided_slice %144 {offsets = [0, 3], sizes = [4, 1], strides = [1, 1]} : vector<4x9xf32> to vector<4x1xf32>
    %163 = vector.extract_strided_slice %3 {offsets = [0, 102], sizes = [4, 1202], strides = [1, 1]} : vector<4x1408xf32> to vector<4x1202xf32>
    %164 = vector.broadcast %162 : vector<4x1xf32> to vector<4x1202xf32>
    %165 = arith.mulf %164, %163 : vector<4x1202xf32>
    %166 = arith.addf %161, %165 : vector<4x1202xf32>
    %167 = vector.extract_strided_slice %144 {offsets = [0, 4], sizes = [4, 1], strides = [1, 1]} : vector<4x9xf32> to vector<4x1xf32>
    %168 = vector.extract_strided_slice %3 {offsets = [0, 103], sizes = [4, 1202], strides = [1, 1]} : vector<4x1408xf32> to vector<4x1202xf32>
    %169 = vector.broadcast %167 : vector<4x1xf32> to vector<4x1202xf32>
    %170 = arith.mulf %169, %168 : vector<4x1202xf32>
    %171 = arith.addf %166, %170 : vector<4x1202xf32>
    %172 = vector.extract_strided_slice %144 {offsets = [0, 5], sizes = [4, 1], strides = [1, 1]} : vector<4x9xf32> to vector<4x1xf32>
    %173 = vector.extract_strided_slice %3 {offsets = [0, 104], sizes = [4, 1202], strides = [1, 1]} : vector<4x1408xf32> to vector<4x1202xf32>
    %174 = vector.broadcast %172 : vector<4x1xf32> to vector<4x1202xf32>
    %175 = arith.mulf %174, %173 : vector<4x1202xf32>
    %176 = arith.addf %171, %175 : vector<4x1202xf32>
    %177 = vector.extract_strided_slice %144 {offsets = [0, 6], sizes = [4, 1], strides = [1, 1]} : vector<4x9xf32> to vector<4x1xf32>
    %178 = vector.extract_strided_slice %3 {offsets = [0, 126], sizes = [4, 1202], strides = [1, 1]} : vector<4x1408xf32> to vector<4x1202xf32>
    %179 = vector.broadcast %177 : vector<4x1xf32> to vector<4x1202xf32>
    %180 = arith.mulf %179, %178 : vector<4x1202xf32>
    %181 = arith.addf %176, %180 : vector<4x1202xf32>
    %182 = vector.extract_strided_slice %144 {offsets = [0, 7], sizes = [4, 1], strides = [1, 1]} : vector<4x9xf32> to vector<4x1xf32>
    %183 = vector.extract_strided_slice %3 {offsets = [0, 127], sizes = [4, 1202], strides = [1, 1]} : vector<4x1408xf32> to vector<4x1202xf32>
    %184 = vector.broadcast %182 : vector<4x1xf32> to vector<4x1202xf32>
    %185 = arith.mulf %184, %183 : vector<4x1202xf32>
    %186 = arith.addf %181, %185 : vector<4x1202xf32>
    %187 = vector.extract_strided_slice %144 {offsets = [0, 8], sizes = [4, 1], strides = [1, 1]} : vector<4x9xf32> to vector<4x1xf32>
    %188 = vector.extract_strided_slice %3 {offsets = [0, 128], sizes = [4, 1202], strides = [1, 1]} : vector<4x1408xf32> to vector<4x1202xf32>
    %189 = vector.broadcast %187 : vector<4x1xf32> to vector<4x1202xf32>
    %190 = arith.mulf %189, %188 : vector<4x1202xf32>
    %191 = arith.addf %186, %190 : vector<4x1202xf32>
    %192 = vector.extract_strided_slice %145 {offsets = [0, 0], sizes = [4, 1], strides = [1, 1]} : vector<4x4xf32> to vector<4x1xf32>
    %193 = vector.extract_strided_slice %191 {offsets = [0, 0], sizes = [1, 1202], strides = [1, 1]} : vector<4x1202xf32> to vector<1x1202xf32>
    %194 = vector.broadcast %192 : vector<4x1xf32> to vector<4x1202xf32>
    %195 = vector.broadcast %193 : vector<1x1202xf32> to vector<4x1202xf32>
    %196 = arith.mulf %194, %195 : vector<4x1202xf32>
    %197 = vector.extract_strided_slice %145 {offsets = [0, 1], sizes = [4, 1], strides = [1, 1]} : vector<4x4xf32> to vector<4x1xf32>
    %198 = vector.extract_strided_slice %191 {offsets = [1, 0], sizes = [1, 1202], strides = [1, 1]} : vector<4x1202xf32> to vector<1x1202xf32>
    %199 = vector.broadcast %197 : vector<4x1xf32> to vector<4x1202xf32>
    %200 = vector.broadcast %198 : vector<1x1202xf32> to vector<4x1202xf32>
    %201 = arith.mulf %199, %200 : vector<4x1202xf32>
    %202 = arith.addf %196, %201 : vector<4x1202xf32>
    %203 = vector.extract_strided_slice %145 {offsets = [0, 2], sizes = [4, 1], strides = [1, 1]} : vector<4x4xf32> to vector<4x1xf32>
    %204 = vector.extract_strided_slice %191 {offsets = [2, 0], sizes = [1, 1202], strides = [1, 1]} : vector<4x1202xf32> to vector<1x1202xf32>
    %205 = vector.broadcast %203 : vector<4x1xf32> to vector<4x1202xf32>
    %206 = vector.broadcast %204 : vector<1x1202xf32> to vector<4x1202xf32>
    %207 = arith.mulf %205, %206 : vector<4x1202xf32>
    %208 = arith.addf %202, %207 : vector<4x1202xf32>
    %209 = vector.extract_strided_slice %145 {offsets = [0, 3], sizes = [4, 1], strides = [1, 1]} : vector<4x4xf32> to vector<4x1xf32>
    %210 = vector.extract_strided_slice %191 {offsets = [3, 0], sizes = [1, 1202], strides = [1, 1]} : vector<4x1202xf32> to vector<1x1202xf32>
    %211 = vector.broadcast %209 : vector<4x1xf32> to vector<4x1202xf32>
    %212 = vector.broadcast %210 : vector<1x1202xf32> to vector<4x1202xf32>
    %213 = arith.mulf %211, %212 : vector<4x1202xf32>
    %214 = arith.addf %208, %213 : vector<4x1202xf32>
    %215 = vector.extract_strided_slice %1 {offsets = [0, 103], sizes = [1, 1202], strides = [1, 1]} : vector<1x1408xf32> to vector<1x1202xf32>
    %cst_34 = arith.constant 0.000000e+00 : f32
    %216 = vector.broadcast %cst_34 : f32 to vector<1x1202xf32>
    %217 = arith.cmpf ogt, %215, %216 : vector<1x1202xf32>
    %cst_35 = arith.constant 0.000000e+00 : f32
    %218 = vector.shape_cast %217 : vector<1x1202xi1> to vector<1x1202xi1>
    %219 = vector.broadcast %218 : vector<1x1202xi1> to vector<4x1202xi1>
    %220 = vector.broadcast %cst_35 : f32 to vector<4x1202xf32>
    %221 = arith.select %219, %214, %220 : vector<4x1202xi1>, vector<4x1202xf32>
    %cst_36 = arith.constant dense<0.000000e+00> : vector<4xf32>
    %222 = vector.multi_reduction <add>, %221, %cst_36 [1] : vector<4x1202xf32> to vector<4xf32>
    %223 = vector.shape_cast %222 : vector<4xf32> to vector<4x1xf32>
    %cst_37 = arith.constant 0.001953125 : f32
    %224 = vector.broadcast %cst_37 : f32 to vector<4x1xf32>
    %225 = arith.mulf %223, %224 : vector<4x1xf32>
    %226 = arith.mulf %221, %221 : vector<4x1202xf32>
    %cst_38 = arith.constant dense<0.000000e+00> : vector<4xf32>
    %227 = vector.multi_reduction <add>, %226, %cst_38 [1] : vector<4x1202xf32> to vector<4xf32>
    %228 = vector.shape_cast %227 : vector<4xf32> to vector<4x1xf32>
    %cst_39 = arith.constant 0.001953125 : f32
    %229 = vector.broadcast %cst_39 : f32 to vector<4x1xf32>
    %230 = arith.mulf %228, %229 : vector<4x1xf32>
    %231 = arith.mulf %225, %225 : vector<4x1xf32>
    %232 = arith.subf %230, %231 : vector<4x1xf32>
    %cst_40 = arith.constant 0.000000e+00 : f32
    %233 = vector.broadcast %cst_40 : f32 to vector<4x1xf32>
    %234 = arith.maximumf %232, %233 : vector<4x1xf32>
    %235 = vector.broadcast %225 : vector<4x1xf32> to vector<4x1202xf32>
    %236 = arith.subf %221, %235 : vector<4x1202xf32>
    %cst_41 = arith.constant 9.99999974E-6 : f32
    %237 = vector.broadcast %cst_41 : f32 to vector<4x1xf32>
    %238 = arith.addf %234, %237 : vector<4x1xf32>
    %239 = math.rsqrt %238 : vector<4x1xf32>
    %240 = vector.broadcast %239 : vector<4x1xf32> to vector<4x1202xf32>
    %241 = arith.mulf %236, %240 : vector<4x1202xf32>
    %cst_42 = arith.constant 0.000000e+00 : f32
    %242 = vector.broadcast %cst_42 : f32 to vector<1x1202xf32>
    %243 = arith.cmpf ogt, %215, %242 : vector<1x1202xf32>
    %cst_43 = arith.constant 0.000000e+00 : f32
    %244 = vector.shape_cast %243 : vector<1x1202xi1> to vector<1x1202xi1>
    %245 = vector.broadcast %244 : vector<1x1202xi1> to vector<4x1202xi1>
    %246 = vector.broadcast %cst_43 : f32 to vector<4x1202xf32>
    %247 = arith.select %245, %241, %246 : vector<4x1202xi1>, vector<4x1202xf32>
    %cst_44 = arith.constant 0.000000e+00 : f32
    %248 = vector.broadcast %cst_44 : f32 to vector<4x1202xf32>
    %249 = arith.maximumf %247, %248 : vector<4x1202xf32>
    %250 = vector.extract_strided_slice %146 {offsets = [0, 0], sizes = [4, 1], strides = [1, 1]} : vector<4x9xf32> to vector<4x1xf32>
    %251 = vector.extract_strided_slice %249 {offsets = [0, 0], sizes = [4, 1152], strides = [1, 1]} : vector<4x1202xf32> to vector<4x1152xf32>
    %252 = vector.broadcast %250 : vector<4x1xf32> to vector<4x1152xf32>
    %253 = arith.mulf %252, %251 : vector<4x1152xf32>
    %254 = vector.extract_strided_slice %146 {offsets = [0, 1], sizes = [4, 1], strides = [1, 1]} : vector<4x9xf32> to vector<4x1xf32>
    %255 = vector.extract_strided_slice %249 {offsets = [0, 1], sizes = [4, 1152], strides = [1, 1]} : vector<4x1202xf32> to vector<4x1152xf32>
    %256 = vector.broadcast %254 : vector<4x1xf32> to vector<4x1152xf32>
    %257 = arith.mulf %256, %255 : vector<4x1152xf32>
    %258 = arith.addf %253, %257 : vector<4x1152xf32>
    %259 = vector.extract_strided_slice %146 {offsets = [0, 2], sizes = [4, 1], strides = [1, 1]} : vector<4x9xf32> to vector<4x1xf32>
    %260 = vector.extract_strided_slice %249 {offsets = [0, 2], sizes = [4, 1152], strides = [1, 1]} : vector<4x1202xf32> to vector<4x1152xf32>
    %261 = vector.broadcast %259 : vector<4x1xf32> to vector<4x1152xf32>
    %262 = arith.mulf %261, %260 : vector<4x1152xf32>
    %263 = arith.addf %258, %262 : vector<4x1152xf32>
    %264 = vector.extract_strided_slice %146 {offsets = [0, 3], sizes = [4, 1], strides = [1, 1]} : vector<4x9xf32> to vector<4x1xf32>
    %265 = vector.extract_strided_slice %249 {offsets = [0, 24], sizes = [4, 1152], strides = [1, 1]} : vector<4x1202xf32> to vector<4x1152xf32>
    %266 = vector.broadcast %264 : vector<4x1xf32> to vector<4x1152xf32>
    %267 = arith.mulf %266, %265 : vector<4x1152xf32>
    %268 = arith.addf %263, %267 : vector<4x1152xf32>
    %269 = vector.extract_strided_slice %146 {offsets = [0, 4], sizes = [4, 1], strides = [1, 1]} : vector<4x9xf32> to vector<4x1xf32>
    %270 = vector.extract_strided_slice %249 {offsets = [0, 25], sizes = [4, 1152], strides = [1, 1]} : vector<4x1202xf32> to vector<4x1152xf32>
    %271 = vector.broadcast %269 : vector<4x1xf32> to vector<4x1152xf32>
    %272 = arith.mulf %271, %270 : vector<4x1152xf32>
    %273 = arith.addf %268, %272 : vector<4x1152xf32>
    %274 = vector.extract_strided_slice %146 {offsets = [0, 5], sizes = [4, 1], strides = [1, 1]} : vector<4x9xf32> to vector<4x1xf32>
    %275 = vector.extract_strided_slice %249 {offsets = [0, 26], sizes = [4, 1152], strides = [1, 1]} : vector<4x1202xf32> to vector<4x1152xf32>
    %276 = vector.broadcast %274 : vector<4x1xf32> to vector<4x1152xf32>
    %277 = arith.mulf %276, %275 : vector<4x1152xf32>
    %278 = arith.addf %273, %277 : vector<4x1152xf32>
    %279 = vector.extract_strided_slice %146 {offsets = [0, 6], sizes = [4, 1], strides = [1, 1]} : vector<4x9xf32> to vector<4x1xf32>
    %280 = vector.extract_strided_slice %249 {offsets = [0, 48], sizes = [4, 1152], strides = [1, 1]} : vector<4x1202xf32> to vector<4x1152xf32>
    %281 = vector.broadcast %279 : vector<4x1xf32> to vector<4x1152xf32>
    %282 = arith.mulf %281, %280 : vector<4x1152xf32>
    %283 = arith.addf %278, %282 : vector<4x1152xf32>
    %284 = vector.extract_strided_slice %146 {offsets = [0, 7], sizes = [4, 1], strides = [1, 1]} : vector<4x9xf32> to vector<4x1xf32>
    %285 = vector.extract_strided_slice %249 {offsets = [0, 49], sizes = [4, 1152], strides = [1, 1]} : vector<4x1202xf32> to vector<4x1152xf32>
    %286 = vector.broadcast %284 : vector<4x1xf32> to vector<4x1152xf32>
    %287 = arith.mulf %286, %285 : vector<4x1152xf32>
    %288 = arith.addf %283, %287 : vector<4x1152xf32>
    %289 = vector.extract_strided_slice %146 {offsets = [0, 8], sizes = [4, 1], strides = [1, 1]} : vector<4x9xf32> to vector<4x1xf32>
    %290 = vector.extract_strided_slice %249 {offsets = [0, 50], sizes = [4, 1152], strides = [1, 1]} : vector<4x1202xf32> to vector<4x1152xf32>
    %291 = vector.broadcast %289 : vector<4x1xf32> to vector<4x1152xf32>
    %292 = arith.mulf %291, %290 : vector<4x1152xf32>
    %293 = arith.addf %288, %292 : vector<4x1152xf32>
    %294 = vector.extract_strided_slice %147 {offsets = [0, 0], sizes = [4, 1], strides = [1, 1]} : vector<4x4xf32> to vector<4x1xf32>
    %295 = vector.extract_strided_slice %293 {offsets = [0, 0], sizes = [1, 1152], strides = [1, 1]} : vector<4x1152xf32> to vector<1x1152xf32>
    %296 = vector.broadcast %294 : vector<4x1xf32> to vector<4x1152xf32>
    %297 = vector.broadcast %295 : vector<1x1152xf32> to vector<4x1152xf32>
    %298 = arith.mulf %296, %297 : vector<4x1152xf32>
    %299 = vector.extract_strided_slice %147 {offsets = [0, 1], sizes = [4, 1], strides = [1, 1]} : vector<4x4xf32> to vector<4x1xf32>
    %300 = vector.extract_strided_slice %293 {offsets = [1, 0], sizes = [1, 1152], strides = [1, 1]} : vector<4x1152xf32> to vector<1x1152xf32>
    %301 = vector.broadcast %299 : vector<4x1xf32> to vector<4x1152xf32>
    %302 = vector.broadcast %300 : vector<1x1152xf32> to vector<4x1152xf32>
    %303 = arith.mulf %301, %302 : vector<4x1152xf32>
    %304 = arith.addf %298, %303 : vector<4x1152xf32>
    %305 = vector.extract_strided_slice %147 {offsets = [0, 2], sizes = [4, 1], strides = [1, 1]} : vector<4x4xf32> to vector<4x1xf32>
    %306 = vector.extract_strided_slice %293 {offsets = [2, 0], sizes = [1, 1152], strides = [1, 1]} : vector<4x1152xf32> to vector<1x1152xf32>
    %307 = vector.broadcast %305 : vector<4x1xf32> to vector<4x1152xf32>
    %308 = vector.broadcast %306 : vector<1x1152xf32> to vector<4x1152xf32>
    %309 = arith.mulf %307, %308 : vector<4x1152xf32>
    %310 = arith.addf %304, %309 : vector<4x1152xf32>
    %311 = vector.extract_strided_slice %147 {offsets = [0, 3], sizes = [4, 1], strides = [1, 1]} : vector<4x4xf32> to vector<4x1xf32>
    %312 = vector.extract_strided_slice %293 {offsets = [3, 0], sizes = [1, 1152], strides = [1, 1]} : vector<4x1152xf32> to vector<1x1152xf32>
    %313 = vector.broadcast %311 : vector<4x1xf32> to vector<4x1152xf32>
    %314 = vector.broadcast %312 : vector<1x1152xf32> to vector<4x1152xf32>
    %315 = arith.mulf %313, %314 : vector<4x1152xf32>
    %316 = arith.addf %310, %315 : vector<4x1152xf32>
    %317 = vector.extract_strided_slice %1 {offsets = [0, 128], sizes = [1, 1152], strides = [1, 1]} : vector<1x1408xf32> to vector<1x1152xf32>
    %cst_45 = arith.constant 0.000000e+00 : f32
    %318 = vector.broadcast %cst_45 : f32 to vector<1x1152xf32>
    %319 = arith.cmpf ogt, %317, %318 : vector<1x1152xf32>
    %cst_46 = arith.constant 0.000000e+00 : f32
    %320 = vector.shape_cast %319 : vector<1x1152xi1> to vector<1x1152xi1>
    %321 = vector.broadcast %320 : vector<1x1152xi1> to vector<4x1152xi1>
    %322 = vector.broadcast %cst_46 : f32 to vector<4x1152xf32>
    %323 = arith.select %321, %316, %322 : vector<4x1152xi1>, vector<4x1152xf32>
    %cst_47 = arith.constant dense<0.000000e+00> : vector<4xf32>
    %324 = vector.multi_reduction <add>, %323, %cst_47 [1] : vector<4x1152xf32> to vector<4xf32>
    %325 = vector.shape_cast %324 : vector<4xf32> to vector<4x1xf32>
    %cst_48 = arith.constant 0.001953125 : f32
    %326 = vector.broadcast %cst_48 : f32 to vector<4x1xf32>
    %327 = arith.mulf %325, %326 : vector<4x1xf32>
    %328 = arith.mulf %323, %323 : vector<4x1152xf32>
    %cst_49 = arith.constant dense<0.000000e+00> : vector<4xf32>
    %329 = vector.multi_reduction <add>, %328, %cst_49 [1] : vector<4x1152xf32> to vector<4xf32>
    %330 = vector.shape_cast %329 : vector<4xf32> to vector<4x1xf32>
    %cst_50 = arith.constant 0.001953125 : f32
    %331 = vector.broadcast %cst_50 : f32 to vector<4x1xf32>
    %332 = arith.mulf %330, %331 : vector<4x1xf32>
    %333 = arith.mulf %327, %327 : vector<4x1xf32>
    %334 = arith.subf %332, %333 : vector<4x1xf32>
    %cst_51 = arith.constant 0.000000e+00 : f32
    %335 = vector.broadcast %cst_51 : f32 to vector<4x1xf32>
    %336 = arith.maximumf %334, %335 : vector<4x1xf32>
    %337 = vector.broadcast %327 : vector<4x1xf32> to vector<4x1152xf32>
    %338 = arith.subf %323, %337 : vector<4x1152xf32>
    %cst_52 = arith.constant 9.99999974E-6 : f32
    %339 = vector.broadcast %cst_52 : f32 to vector<4x1xf32>
    %340 = arith.addf %336, %339 : vector<4x1xf32>
    %341 = math.rsqrt %340 : vector<4x1xf32>
    %342 = vector.broadcast %341 : vector<4x1xf32> to vector<4x1152xf32>
    %343 = arith.mulf %338, %342 : vector<4x1152xf32>
    %cst_53 = arith.constant 0.000000e+00 : f32
    %344 = vector.broadcast %cst_53 : f32 to vector<1x1152xf32>
    %345 = arith.cmpf ogt, %317, %344 : vector<1x1152xf32>
    %cst_54 = arith.constant 0.000000e+00 : f32
    %346 = vector.shape_cast %345 : vector<1x1152xi1> to vector<1x1152xi1>
    %347 = vector.broadcast %346 : vector<1x1152xi1> to vector<4x1152xi1>
    %348 = vector.broadcast %cst_54 : f32 to vector<4x1152xf32>
    %349 = arith.select %347, %343, %348 : vector<4x1152xi1>, vector<4x1152xf32>
    %350 = vector.broadcast %143 : f32 to vector<4x1152xf32>
    %351 = arith.mulf %350, %349 : vector<4x1152xf32>
    %352 = arith.addf %142, %351 : vector<4x1152xf32>
    %c5 = arith.constant 5 : index
    %353 = memref.load %arg0[%c5] : memref<8xf32, #tpu.memory_space<smem>>
    %c0_55 = arith.constant 0 : index
    %c0_56 = arith.constant 0 : index
    %354 = vector.load %arg7[%c0_55, %c0_56] : memref<4x25xf32, #tpu.memory_space<vmem>>, vector<4x25xf32>
    %c0_57 = arith.constant 0 : index
    %c0_58 = arith.constant 0 : index
    %355 = vector.load %arg8[%c0_57, %c0_58] : memref<4x4xf32, #tpu.memory_space<vmem>>, vector<4x4xf32>
    %c0_59 = arith.constant 0 : index
    %c0_60 = arith.constant 0 : index
    %356 = vector.load %arg9[%c0_59, %c0_60] : memref<4x25xf32, #tpu.memory_space<vmem>>, vector<4x25xf32>
    %c0_61 = arith.constant 0 : index
    %c0_62 = arith.constant 0 : index
    %357 = vector.load %arg10[%c0_61, %c0_62] : memref<4x4xf32, #tpu.memory_space<vmem>>, vector<4x4xf32>
    %358 = vector.extract_strided_slice %354 {offsets = [0, 0], sizes = [4, 1], strides = [1, 1]} : vector<4x25xf32> to vector<4x1xf32>
    %359 = vector.extract_strided_slice %3 {offsets = [0, 28], sizes = [4, 1252], strides = [1, 1]} : vector<4x1408xf32> to vector<4x1252xf32>
    %360 = vector.broadcast %358 : vector<4x1xf32> to vector<4x1252xf32>
    %361 = arith.mulf %360, %359 : vector<4x1252xf32>
    %362 = vector.extract_strided_slice %354 {offsets = [0, 1], sizes = [4, 1], strides = [1, 1]} : vector<4x25xf32> to vector<4x1xf32>
    %363 = vector.extract_strided_slice %3 {offsets = [0, 29], sizes = [4, 1252], strides = [1, 1]} : vector<4x1408xf32> to vector<4x1252xf32>
    %364 = vector.broadcast %362 : vector<4x1xf32> to vector<4x1252xf32>
    %365 = arith.mulf %364, %363 : vector<4x1252xf32>
    %366 = arith.addf %361, %365 : vector<4x1252xf32>
    %367 = vector.extract_strided_slice %354 {offsets = [0, 2], sizes = [4, 1], strides = [1, 1]} : vector<4x25xf32> to vector<4x1xf32>
    %368 = vector.extract_strided_slice %3 {offsets = [0, 30], sizes = [4, 1252], strides = [1, 1]} : vector<4x1408xf32> to vector<4x1252xf32>
    %369 = vector.broadcast %367 : vector<4x1xf32> to vector<4x1252xf32>
    %370 = arith.mulf %369, %368 : vector<4x1252xf32>
    %371 = arith.addf %366, %370 : vector<4x1252xf32>
    %372 = vector.extract_strided_slice %354 {offsets = [0, 3], sizes = [4, 1], strides = [1, 1]} : vector<4x25xf32> to vector<4x1xf32>
    %373 = vector.extract_strided_slice %3 {offsets = [0, 31], sizes = [4, 1252], strides = [1, 1]} : vector<4x1408xf32> to vector<4x1252xf32>
    %374 = vector.broadcast %372 : vector<4x1xf32> to vector<4x1252xf32>
    %375 = arith.mulf %374, %373 : vector<4x1252xf32>
    %376 = arith.addf %371, %375 : vector<4x1252xf32>
    %377 = vector.extract_strided_slice %354 {offsets = [0, 4], sizes = [4, 1], strides = [1, 1]} : vector<4x25xf32> to vector<4x1xf32>
    %378 = vector.extract_strided_slice %3 {offsets = [0, 32], sizes = [4, 1252], strides = [1, 1]} : vector<4x1408xf32> to vector<4x1252xf32>
    %379 = vector.broadcast %377 : vector<4x1xf32> to vector<4x1252xf32>
    %380 = arith.mulf %379, %378 : vector<4x1252xf32>
    %381 = arith.addf %376, %380 : vector<4x1252xf32>
    %382 = vector.extract_strided_slice %354 {offsets = [0, 5], sizes = [4, 1], strides = [1, 1]} : vector<4x25xf32> to vector<4x1xf32>
    %383 = vector.extract_strided_slice %3 {offsets = [0, 52], sizes = [4, 1252], strides = [1, 1]} : vector<4x1408xf32> to vector<4x1252xf32>
    %384 = vector.broadcast %382 : vector<4x1xf32> to vector<4x1252xf32>
    %385 = arith.mulf %384, %383 : vector<4x1252xf32>
    %386 = arith.addf %381, %385 : vector<4x1252xf32>
    %387 = vector.extract_strided_slice %354 {offsets = [0, 6], sizes = [4, 1], strides = [1, 1]} : vector<4x25xf32> to vector<4x1xf32>
    %388 = vector.extract_strided_slice %3 {offsets = [0, 53], sizes = [4, 1252], strides = [1, 1]} : vector<4x1408xf32> to vector<4x1252xf32>
    %389 = vector.broadcast %387 : vector<4x1xf32> to vector<4x1252xf32>
    %390 = arith.mulf %389, %388 : vector<4x1252xf32>
    %391 = arith.addf %386, %390 : vector<4x1252xf32>
    %392 = vector.extract_strided_slice %354 {offsets = [0, 7], sizes = [4, 1], strides = [1, 1]} : vector<4x25xf32> to vector<4x1xf32>
    %393 = vector.extract_strided_slice %3 {offsets = [0, 54], sizes = [4, 1252], strides = [1, 1]} : vector<4x1408xf32> to vector<4x1252xf32>
    %394 = vector.broadcast %392 : vector<4x1xf32> to vector<4x1252xf32>
    %395 = arith.mulf %394, %393 : vector<4x1252xf32>
    %396 = arith.addf %391, %395 : vector<4x1252xf32>
    %397 = vector.extract_strided_slice %354 {offsets = [0, 8], sizes = [4, 1], strides = [1, 1]} : vector<4x25xf32> to vector<4x1xf32>
    %398 = vector.extract_strided_slice %3 {offsets = [0, 55], sizes = [4, 1252], strides = [1, 1]} : vector<4x1408xf32> to vector<4x1252xf32>
    %399 = vector.broadcast %397 : vector<4x1xf32> to vector<4x1252xf32>
    %400 = arith.mulf %399, %398 : vector<4x1252xf32>
    %401 = arith.addf %396, %400 : vector<4x1252xf32>
    %402 = vector.extract_strided_slice %354 {offsets = [0, 9], sizes = [4, 1], strides = [1, 1]} : vector<4x25xf32> to vector<4x1xf32>
    %403 = vector.extract_strided_slice %3 {offsets = [0, 56], sizes = [4, 1252], strides = [1, 1]} : vector<4x1408xf32> to vector<4x1252xf32>
    %404 = vector.broadcast %402 : vector<4x1xf32> to vector<4x1252xf32>
    %405 = arith.mulf %404, %403 : vector<4x1252xf32>
    %406 = arith.addf %401, %405 : vector<4x1252xf32>
    %407 = vector.extract_strided_slice %354 {offsets = [0, 10], sizes = [4, 1], strides = [1, 1]} : vector<4x25xf32> to vector<4x1xf32>
    %408 = vector.extract_strided_slice %3 {offsets = [0, 76], sizes = [4, 1252], strides = [1, 1]} : vector<4x1408xf32> to vector<4x1252xf32>
    %409 = vector.broadcast %407 : vector<4x1xf32> to vector<4x1252xf32>
    %410 = arith.mulf %409, %408 : vector<4x1252xf32>
    %411 = arith.addf %406, %410 : vector<4x1252xf32>
    %412 = vector.extract_strided_slice %354 {offsets = [0, 11], sizes = [4, 1], strides = [1, 1]} : vector<4x25xf32> to vector<4x1xf32>
    %413 = vector.extract_strided_slice %3 {offsets = [0, 77], sizes = [4, 1252], strides = [1, 1]} : vector<4x1408xf32> to vector<4x1252xf32>
    %414 = vector.broadcast %412 : vector<4x1xf32> to vector<4x1252xf32>
    %415 = arith.mulf %414, %413 : vector<4x1252xf32>
    %416 = arith.addf %411, %415 : vector<4x1252xf32>
    %417 = vector.extract_strided_slice %354 {offsets = [0, 12], sizes = [4, 1], strides = [1, 1]} : vector<4x25xf32> to vector<4x1xf32>
    %418 = vector.extract_strided_slice %3 {offsets = [0, 78], sizes = [4, 1252], strides = [1, 1]} : vector<4x1408xf32> to vector<4x1252xf32>
    %419 = vector.broadcast %417 : vector<4x1xf32> to vector<4x1252xf32>
    %420 = arith.mulf %419, %418 : vector<4x1252xf32>
    %421 = arith.addf %416, %420 : vector<4x1252xf32>
    %422 = vector.extract_strided_slice %354 {offsets = [0, 13], sizes = [4, 1], strides = [1, 1]} : vector<4x25xf32> to vector<4x1xf32>
    %423 = vector.extract_strided_slice %3 {offsets = [0, 79], sizes = [4, 1252], strides = [1, 1]} : vector<4x1408xf32> to vector<4x1252xf32>
    %424 = vector.broadcast %422 : vector<4x1xf32> to vector<4x1252xf32>
    %425 = arith.mulf %424, %423 : vector<4x1252xf32>
    %426 = arith.addf %421, %425 : vector<4x1252xf32>
    %427 = vector.extract_strided_slice %354 {offsets = [0, 14], sizes = [4, 1], strides = [1, 1]} : vector<4x25xf32> to vector<4x1xf32>
    %428 = vector.extract_strided_slice %3 {offsets = [0, 80], sizes = [4, 1252], strides = [1, 1]} : vector<4x1408xf32> to vector<4x1252xf32>
    %429 = vector.broadcast %427 : vector<4x1xf32> to vector<4x1252xf32>
    %430 = arith.mulf %429, %428 : vector<4x1252xf32>
    %431 = arith.addf %426, %430 : vector<4x1252xf32>
    %432 = vector.extract_strided_slice %354 {offsets = [0, 15], sizes = [4, 1], strides = [1, 1]} : vector<4x25xf32> to vector<4x1xf32>
    %433 = vector.extract_strided_slice %3 {offsets = [0, 100], sizes = [4, 1252], strides = [1, 1]} : vector<4x1408xf32> to vector<4x1252xf32>
    %434 = vector.broadcast %432 : vector<4x1xf32> to vector<4x1252xf32>
    %435 = arith.mulf %434, %433 : vector<4x1252xf32>
    %436 = arith.addf %431, %435 : vector<4x1252xf32>
    %437 = vector.extract_strided_slice %354 {offsets = [0, 16], sizes = [4, 1], strides = [1, 1]} : vector<4x25xf32> to vector<4x1xf32>
    %438 = vector.extract_strided_slice %3 {offsets = [0, 101], sizes = [4, 1252], strides = [1, 1]} : vector<4x1408xf32> to vector<4x1252xf32>
    %439 = vector.broadcast %437 : vector<4x1xf32> to vector<4x1252xf32>
    %440 = arith.mulf %439, %438 : vector<4x1252xf32>
    %441 = arith.addf %436, %440 : vector<4x1252xf32>
    %442 = vector.extract_strided_slice %354 {offsets = [0, 17], sizes = [4, 1], strides = [1, 1]} : vector<4x25xf32> to vector<4x1xf32>
    %443 = vector.extract_strided_slice %3 {offsets = [0, 102], sizes = [4, 1252], strides = [1, 1]} : vector<4x1408xf32> to vector<4x1252xf32>
    %444 = vector.broadcast %442 : vector<4x1xf32> to vector<4x1252xf32>
    %445 = arith.mulf %444, %443 : vector<4x1252xf32>
    %446 = arith.addf %441, %445 : vector<4x1252xf32>
    %447 = vector.extract_strided_slice %354 {offsets = [0, 18], sizes = [4, 1], strides = [1, 1]} : vector<4x25xf32> to vector<4x1xf32>
    %448 = vector.extract_strided_slice %3 {offsets = [0, 103], sizes = [4, 1252], strides = [1, 1]} : vector<4x1408xf32> to vector<4x1252xf32>
    %449 = vector.broadcast %447 : vector<4x1xf32> to vector<4x1252xf32>
    %450 = arith.mulf %449, %448 : vector<4x1252xf32>
    %451 = arith.addf %446, %450 : vector<4x1252xf32>
    %452 = vector.extract_strided_slice %354 {offsets = [0, 19], sizes = [4, 1], strides = [1, 1]} : vector<4x25xf32> to vector<4x1xf32>
    %453 = vector.extract_strided_slice %3 {offsets = [0, 104], sizes = [4, 1252], strides = [1, 1]} : vector<4x1408xf32> to vector<4x1252xf32>
    %454 = vector.broadcast %452 : vector<4x1xf32> to vector<4x1252xf32>
    %455 = arith.mulf %454, %453 : vector<4x1252xf32>
    %456 = arith.addf %451, %455 : vector<4x1252xf32>
    %457 = vector.extract_strided_slice %354 {offsets = [0, 20], sizes = [4, 1], strides = [1, 1]} : vector<4x25xf32> to vector<4x1xf32>
    %458 = vector.extract_strided_slice %3 {offsets = [0, 124], sizes = [4, 1252], strides = [1, 1]} : vector<4x1408xf32> to vector<4x1252xf32>
    %459 = vector.broadcast %457 : vector<4x1xf32> to vector<4x1252xf32>
    %460 = arith.mulf %459, %458 : vector<4x1252xf32>
    %461 = arith.addf %456, %460 : vector<4x1252xf32>
    %462 = vector.extract_strided_slice %354 {offsets = [0, 21], sizes = [4, 1], strides = [1, 1]} : vector<4x25xf32> to vector<4x1xf32>
    %463 = vector.extract_strided_slice %3 {offsets = [0, 125], sizes = [4, 1252], strides = [1, 1]} : vector<4x1408xf32> to vector<4x1252xf32>
    %464 = vector.broadcast %462 : vector<4x1xf32> to vector<4x1252xf32>
    %465 = arith.mulf %464, %463 : vector<4x1252xf32>
    %466 = arith.addf %461, %465 : vector<4x1252xf32>
    %467 = vector.extract_strided_slice %354 {offsets = [0, 22], sizes = [4, 1], strides = [1, 1]} : vector<4x25xf32> to vector<4x1xf32>
    %468 = vector.extract_strided_slice %3 {offsets = [0, 126], sizes = [4, 1252], strides = [1, 1]} : vector<4x1408xf32> to vector<4x1252xf32>
    %469 = vector.broadcast %467 : vector<4x1xf32> to vector<4x1252xf32>
    %470 = arith.mulf %469, %468 : vector<4x1252xf32>
    %471 = arith.addf %466, %470 : vector<4x1252xf32>
    %472 = vector.extract_strided_slice %354 {offsets = [0, 23], sizes = [4, 1], strides = [1, 1]} : vector<4x25xf32> to vector<4x1xf32>
    %473 = vector.extract_strided_slice %3 {offsets = [0, 127], sizes = [4, 1252], strides = [1, 1]} : vector<4x1408xf32> to vector<4x1252xf32>
    %474 = vector.broadcast %472 : vector<4x1xf32> to vector<4x1252xf32>
    %475 = arith.mulf %474, %473 : vector<4x1252xf32>
    %476 = arith.addf %471, %475 : vector<4x1252xf32>
    %477 = vector.extract_strided_slice %354 {offsets = [0, 24], sizes = [4, 1], strides = [1, 1]} : vector<4x25xf32> to vector<4x1xf32>
    %478 = vector.extract_strided_slice %3 {offsets = [0, 128], sizes = [4, 1252], strides = [1, 1]} : vector<4x1408xf32> to vector<4x1252xf32>
    %479 = vector.broadcast %477 : vector<4x1xf32> to vector<4x1252xf32>
    %480 = arith.mulf %479, %478 : vector<4x1252xf32>
    %481 = arith.addf %476, %480 : vector<4x1252xf32>
    %482 = vector.extract_strided_slice %355 {offsets = [0, 0], sizes = [4, 1], strides = [1, 1]} : vector<4x4xf32> to vector<4x1xf32>
    %483 = vector.extract_strided_slice %481 {offsets = [0, 0], sizes = [1, 1252], strides = [1, 1]} : vector<4x1252xf32> to vector<1x1252xf32>
    %484 = vector.broadcast %482 : vector<4x1xf32> to vector<4x1252xf32>
    %485 = vector.broadcast %483 : vector<1x1252xf32> to vector<4x1252xf32>
    %486 = arith.mulf %484, %485 : vector<4x1252xf32>
    %487 = vector.extract_strided_slice %355 {offsets = [0, 1], sizes = [4, 1], strides = [1, 1]} : vector<4x4xf32> to vector<4x1xf32>
    %488 = vector.extract_strided_slice %481 {offsets = [1, 0], sizes = [1, 1252], strides = [1, 1]} : vector<4x1252xf32> to vector<1x1252xf32>
    %489 = vector.broadcast %487 : vector<4x1xf32> to vector<4x1252xf32>
    %490 = vector.broadcast %488 : vector<1x1252xf32> to vector<4x1252xf32>
    %491 = arith.mulf %489, %490 : vector<4x1252xf32>
    %492 = arith.addf %486, %491 : vector<4x1252xf32>
    %493 = vector.extract_strided_slice %355 {offsets = [0, 2], sizes = [4, 1], strides = [1, 1]} : vector<4x4xf32> to vector<4x1xf32>
    %494 = vector.extract_strided_slice %481 {offsets = [2, 0], sizes = [1, 1252], strides = [1, 1]} : vector<4x1252xf32> to vector<1x1252xf32>
    %495 = vector.broadcast %493 : vector<4x1xf32> to vector<4x1252xf32>
    %496 = vector.broadcast %494 : vector<1x1252xf32> to vector<4x1252xf32>
    %497 = arith.mulf %495, %496 : vector<4x1252xf32>
    %498 = arith.addf %492, %497 : vector<4x1252xf32>
    %499 = vector.extract_strided_slice %355 {offsets = [0, 3], sizes = [4, 1], strides = [1, 1]} : vector<4x4xf32> to vector<4x1xf32>
    %500 = vector.extract_strided_slice %481 {offsets = [3, 0], sizes = [1, 1252], strides = [1, 1]} : vector<4x1252xf32> to vector<1x1252xf32>
    %501 = vector.broadcast %499 : vector<4x1xf32> to vector<4x1252xf32>
    %502 = vector.broadcast %500 : vector<1x1252xf32> to vector<4x1252xf32>
    %503 = arith.mulf %501, %502 : vector<4x1252xf32>
    %504 = arith.addf %498, %503 : vector<4x1252xf32>
    %505 = vector.extract_strided_slice %1 {offsets = [0, 78], sizes = [1, 1252], strides = [1, 1]} : vector<1x1408xf32> to vector<1x1252xf32>
    %cst_63 = arith.constant 0.000000e+00 : f32
    %506 = vector.broadcast %cst_63 : f32 to vector<1x1252xf32>
    %507 = arith.cmpf ogt, %505, %506 : vector<1x1252xf32>
    %cst_64 = arith.constant 0.000000e+00 : f32
    %508 = vector.shape_cast %507 : vector<1x1252xi1> to vector<1x1252xi1>
    %509 = vector.broadcast %508 : vector<1x1252xi1> to vector<4x1252xi1>
    %510 = vector.broadcast %cst_64 : f32 to vector<4x1252xf32>
    %511 = arith.select %509, %504, %510 : vector<4x1252xi1>, vector<4x1252xf32>
    %cst_65 = arith.constant dense<0.000000e+00> : vector<4xf32>
    %512 = vector.multi_reduction <add>, %511, %cst_65 [1] : vector<4x1252xf32> to vector<4xf32>
    %513 = vector.shape_cast %512 : vector<4xf32> to vector<4x1xf32>
    %cst_66 = arith.constant 0.001953125 : f32
    %514 = vector.broadcast %cst_66 : f32 to vector<4x1xf32>
    %515 = arith.mulf %513, %514 : vector<4x1xf32>
    %516 = arith.mulf %511, %511 : vector<4x1252xf32>
    %cst_67 = arith.constant dense<0.000000e+00> : vector<4xf32>
    %517 = vector.multi_reduction <add>, %516, %cst_67 [1] : vector<4x1252xf32> to vector<4xf32>
    %518 = vector.shape_cast %517 : vector<4xf32> to vector<4x1xf32>
    %cst_68 = arith.constant 0.001953125 : f32
    %519 = vector.broadcast %cst_68 : f32 to vector<4x1xf32>
    %520 = arith.mulf %518, %519 : vector<4x1xf32>
    %521 = arith.mulf %515, %515 : vector<4x1xf32>
    %522 = arith.subf %520, %521 : vector<4x1xf32>
    %cst_69 = arith.constant 0.000000e+00 : f32
    %523 = vector.broadcast %cst_69 : f32 to vector<4x1xf32>
    %524 = arith.maximumf %522, %523 : vector<4x1xf32>
    %525 = vector.broadcast %515 : vector<4x1xf32> to vector<4x1252xf32>
    %526 = arith.subf %511, %525 : vector<4x1252xf32>
    %cst_70 = arith.constant 9.99999974E-6 : f32
    %527 = vector.broadcast %cst_70 : f32 to vector<4x1xf32>
    %528 = arith.addf %524, %527 : vector<4x1xf32>
    %529 = math.rsqrt %528 : vector<4x1xf32>
    %530 = vector.broadcast %529 : vector<4x1xf32> to vector<4x1252xf32>
    %531 = arith.mulf %526, %530 : vector<4x1252xf32>
    %cst_71 = arith.constant 0.000000e+00 : f32
    %532 = vector.broadcast %cst_71 : f32 to vector<1x1252xf32>
    %533 = arith.cmpf ogt, %505, %532 : vector<1x1252xf32>
    %cst_72 = arith.constant 0.000000e+00 : f32
    %534 = vector.shape_cast %533 : vector<1x1252xi1> to vector<1x1252xi1>
    %535 = vector.broadcast %534 : vector<1x1252xi1> to vector<4x1252xi1>
    %536 = vector.broadcast %cst_72 : f32 to vector<4x1252xf32>
    %537 = arith.select %535, %531, %536 : vector<4x1252xi1>, vector<4x1252xf32>
    %cst_73 = arith.constant 0.000000e+00 : f32
    %538 = vector.broadcast %cst_73 : f32 to vector<4x1252xf32>
    %539 = arith.maximumf %537, %538 : vector<4x1252xf32>
    %540 = vector.extract_strided_slice %356 {offsets = [0, 0], sizes = [4, 1], strides = [1, 1]} : vector<4x25xf32> to vector<4x1xf32>
    %541 = vector.extract_strided_slice %539 {offsets = [0, 0], sizes = [4, 1152], strides = [1, 1]} : vector<4x1252xf32> to vector<4x1152xf32>
    %542 = vector.broadcast %540 : vector<4x1xf32> to vector<4x1152xf32>
    %543 = arith.mulf %542, %541 : vector<4x1152xf32>
    %544 = vector.extract_strided_slice %356 {offsets = [0, 1], sizes = [4, 1], strides = [1, 1]} : vector<4x25xf32> to vector<4x1xf32>
    %545 = vector.extract_strided_slice %539 {offsets = [0, 1], sizes = [4, 1152], strides = [1, 1]} : vector<4x1252xf32> to vector<4x1152xf32>
    %546 = vector.broadcast %544 : vector<4x1xf32> to vector<4x1152xf32>
    %547 = arith.mulf %546, %545 : vector<4x1152xf32>
    %548 = arith.addf %543, %547 : vector<4x1152xf32>
    %549 = vector.extract_strided_slice %356 {offsets = [0, 2], sizes = [4, 1], strides = [1, 1]} : vector<4x25xf32> to vector<4x1xf32>
    %550 = vector.extract_strided_slice %539 {offsets = [0, 2], sizes = [4, 1152], strides = [1, 1]} : vector<4x1252xf32> to vector<4x1152xf32>
    %551 = vector.broadcast %549 : vector<4x1xf32> to vector<4x1152xf32>
    %552 = arith.mulf %551, %550 : vector<4x1152xf32>
    %553 = arith.addf %548, %552 : vector<4x1152xf32>
    %554 = vector.extract_strided_slice %356 {offsets = [0, 3], sizes = [4, 1], strides = [1, 1]} : vector<4x25xf32> to vector<4x1xf32>
    %555 = vector.extract_strided_slice %539 {offsets = [0, 3], sizes = [4, 1152], strides = [1, 1]} : vector<4x1252xf32> to vector<4x1152xf32>
    %556 = vector.broadcast %554 : vector<4x1xf32> to vector<4x1152xf32>
    %557 = arith.mulf %556, %555 : vector<4x1152xf32>
    %558 = arith.addf %553, %557 : vector<4x1152xf32>
    %559 = vector.extract_strided_slice %356 {offsets = [0, 4], sizes = [4, 1], strides = [1, 1]} : vector<4x25xf32> to vector<4x1xf32>
    %560 = vector.extract_strided_slice %539 {offsets = [0, 4], sizes = [4, 1152], strides = [1, 1]} : vector<4x1252xf32> to vector<4x1152xf32>
    %561 = vector.broadcast %559 : vector<4x1xf32> to vector<4x1152xf32>
    %562 = arith.mulf %561, %560 : vector<4x1152xf32>
    %563 = arith.addf %558, %562 : vector<4x1152xf32>
    %564 = vector.extract_strided_slice %356 {offsets = [0, 5], sizes = [4, 1], strides = [1, 1]} : vector<4x25xf32> to vector<4x1xf32>
    %565 = vector.extract_strided_slice %539 {offsets = [0, 24], sizes = [4, 1152], strides = [1, 1]} : vector<4x1252xf32> to vector<4x1152xf32>
    %566 = vector.broadcast %564 : vector<4x1xf32> to vector<4x1152xf32>
    %567 = arith.mulf %566, %565 : vector<4x1152xf32>
    %568 = arith.addf %563, %567 : vector<4x1152xf32>
    %569 = vector.extract_strided_slice %356 {offsets = [0, 6], sizes = [4, 1], strides = [1, 1]} : vector<4x25xf32> to vector<4x1xf32>
    %570 = vector.extract_strided_slice %539 {offsets = [0, 25], sizes = [4, 1152], strides = [1, 1]} : vector<4x1252xf32> to vector<4x1152xf32>
    %571 = vector.broadcast %569 : vector<4x1xf32> to vector<4x1152xf32>
    %572 = arith.mulf %571, %570 : vector<4x1152xf32>
    %573 = arith.addf %568, %572 : vector<4x1152xf32>
    %574 = vector.extract_strided_slice %356 {offsets = [0, 7], sizes = [4, 1], strides = [1, 1]} : vector<4x25xf32> to vector<4x1xf32>
    %575 = vector.extract_strided_slice %539 {offsets = [0, 26], sizes = [4, 1152], strides = [1, 1]} : vector<4x1252xf32> to vector<4x1152xf32>
    %576 = vector.broadcast %574 : vector<4x1xf32> to vector<4x1152xf32>
    %577 = arith.mulf %576, %575 : vector<4x1152xf32>
    %578 = arith.addf %573, %577 : vector<4x1152xf32>
    %579 = vector.extract_strided_slice %356 {offsets = [0, 8], sizes = [4, 1], strides = [1, 1]} : vector<4x25xf32> to vector<4x1xf32>
    %580 = vector.extract_strided_slice %539 {offsets = [0, 27], sizes = [4, 1152], strides = [1, 1]} : vector<4x1252xf32> to vector<4x1152xf32>
    %581 = vector.broadcast %579 : vector<4x1xf32> to vector<4x1152xf32>
    %582 = arith.mulf %581, %580 : vector<4x1152xf32>
    %583 = arith.addf %578, %582 : vector<4x1152xf32>
    %584 = vector.extract_strided_slice %356 {offsets = [0, 9], sizes = [4, 1], strides = [1, 1]} : vector<4x25xf32> to vector<4x1xf32>
    %585 = vector.extract_strided_slice %539 {offsets = [0, 28], sizes = [4, 1152], strides = [1, 1]} : vector<4x1252xf32> to vector<4x1152xf32>
    %586 = vector.broadcast %584 : vector<4x1xf32> to vector<4x1152xf32>
    %587 = arith.mulf %586, %585 : vector<4x1152xf32>
    %588 = arith.addf %583, %587 : vector<4x1152xf32>
    %589 = vector.extract_strided_slice %356 {offsets = [0, 10], sizes = [4, 1], strides = [1, 1]} : vector<4x25xf32> to vector<4x1xf32>
    %590 = vector.extract_strided_slice %539 {offsets = [0, 48], sizes = [4, 1152], strides = [1, 1]} : vector<4x1252xf32> to vector<4x1152xf32>
    %591 = vector.broadcast %589 : vector<4x1xf32> to vector<4x1152xf32>
    %592 = arith.mulf %591, %590 : vector<4x1152xf32>
    %593 = arith.addf %588, %592 : vector<4x1152xf32>
    %594 = vector.extract_strided_slice %356 {offsets = [0, 11], sizes = [4, 1], strides = [1, 1]} : vector<4x25xf32> to vector<4x1xf32>
    %595 = vector.extract_strided_slice %539 {offsets = [0, 49], sizes = [4, 1152], strides = [1, 1]} : vector<4x1252xf32> to vector<4x1152xf32>
    %596 = vector.broadcast %594 : vector<4x1xf32> to vector<4x1152xf32>
    %597 = arith.mulf %596, %595 : vector<4x1152xf32>
    %598 = arith.addf %593, %597 : vector<4x1152xf32>
    %599 = vector.extract_strided_slice %356 {offsets = [0, 12], sizes = [4, 1], strides = [1, 1]} : vector<4x25xf32> to vector<4x1xf32>
    %600 = vector.extract_strided_slice %539 {offsets = [0, 50], sizes = [4, 1152], strides = [1, 1]} : vector<4x1252xf32> to vector<4x1152xf32>
    %601 = vector.broadcast %599 : vector<4x1xf32> to vector<4x1152xf32>
    %602 = arith.mulf %601, %600 : vector<4x1152xf32>
    %603 = arith.addf %598, %602 : vector<4x1152xf32>
    %604 = vector.extract_strided_slice %356 {offsets = [0, 13], sizes = [4, 1], strides = [1, 1]} : vector<4x25xf32> to vector<4x1xf32>
    %605 = vector.extract_strided_slice %539 {offsets = [0, 51], sizes = [4, 1152], strides = [1, 1]} : vector<4x1252xf32> to vector<4x1152xf32>
    %606 = vector.broadcast %604 : vector<4x1xf32> to vector<4x1152xf32>
    %607 = arith.mulf %606, %605 : vector<4x1152xf32>
    %608 = arith.addf %603, %607 : vector<4x1152xf32>
    %609 = vector.extract_strided_slice %356 {offsets = [0, 14], sizes = [4, 1], strides = [1, 1]} : vector<4x25xf32> to vector<4x1xf32>
    %610 = vector.extract_strided_slice %539 {offsets = [0, 52], sizes = [4, 1152], strides = [1, 1]} : vector<4x1252xf32> to vector<4x1152xf32>
    %611 = vector.broadcast %609 : vector<4x1xf32> to vector<4x1152xf32>
    %612 = arith.mulf %611, %610 : vector<4x1152xf32>
    %613 = arith.addf %608, %612 : vector<4x1152xf32>
    %614 = vector.extract_strided_slice %356 {offsets = [0, 15], sizes = [4, 1], strides = [1, 1]} : vector<4x25xf32> to vector<4x1xf32>
    %615 = vector.extract_strided_slice %539 {offsets = [0, 72], sizes = [4, 1152], strides = [1, 1]} : vector<4x1252xf32> to vector<4x1152xf32>
    %616 = vector.broadcast %614 : vector<4x1xf32> to vector<4x1152xf32>
    %617 = arith.mulf %616, %615 : vector<4x1152xf32>
    %618 = arith.addf %613, %617 : vector<4x1152xf32>
    %619 = vector.extract_strided_slice %356 {offsets = [0, 16], sizes = [4, 1], strides = [1, 1]} : vector<4x25xf32> to vector<4x1xf32>
    %620 = vector.extract_strided_slice %539 {offsets = [0, 73], sizes = [4, 1152], strides = [1, 1]} : vector<4x1252xf32> to vector<4x1152xf32>
    %621 = vector.broadcast %619 : vector<4x1xf32> to vector<4x1152xf32>
    %622 = arith.mulf %621, %620 : vector<4x1152xf32>
    %623 = arith.addf %618, %622 : vector<4x1152xf32>
    %624 = vector.extract_strided_slice %356 {offsets = [0, 17], sizes = [4, 1], strides = [1, 1]} : vector<4x25xf32> to vector<4x1xf32>
    %625 = vector.extract_strided_slice %539 {offsets = [0, 74], sizes = [4, 1152], strides = [1, 1]} : vector<4x1252xf32> to vector<4x1152xf32>
    %626 = vector.broadcast %624 : vector<4x1xf32> to vector<4x1152xf32>
    %627 = arith.mulf %626, %625 : vector<4x1152xf32>
    %628 = arith.addf %623, %627 : vector<4x1152xf32>
    %629 = vector.extract_strided_slice %356 {offsets = [0, 18], sizes = [4, 1], strides = [1, 1]} : vector<4x25xf32> to vector<4x1xf32>
    %630 = vector.extract_strided_slice %539 {offsets = [0, 75], sizes = [4, 1152], strides = [1, 1]} : vector<4x1252xf32> to vector<4x1152xf32>
    %631 = vector.broadcast %629 : vector<4x1xf32> to vector<4x1152xf32>
    %632 = arith.mulf %631, %630 : vector<4x1152xf32>
    %633 = arith.addf %628, %632 : vector<4x1152xf32>
    %634 = vector.extract_strided_slice %356 {offsets = [0, 19], sizes = [4, 1], strides = [1, 1]} : vector<4x25xf32> to vector<4x1xf32>
    %635 = vector.extract_strided_slice %539 {offsets = [0, 76], sizes = [4, 1152], strides = [1, 1]} : vector<4x1252xf32> to vector<4x1152xf32>
    %636 = vector.broadcast %634 : vector<4x1xf32> to vector<4x1152xf32>
    %637 = arith.mulf %636, %635 : vector<4x1152xf32>
    %638 = arith.addf %633, %637 : vector<4x1152xf32>
    %639 = vector.extract_strided_slice %356 {offsets = [0, 20], sizes = [4, 1], strides = [1, 1]} : vector<4x25xf32> to vector<4x1xf32>
    %640 = vector.extract_strided_slice %539 {offsets = [0, 96], sizes = [4, 1152], strides = [1, 1]} : vector<4x1252xf32> to vector<4x1152xf32>
    %641 = vector.broadcast %639 : vector<4x1xf32> to vector<4x1152xf32>
    %642 = arith.mulf %641, %640 : vector<4x1152xf32>
    %643 = arith.addf %638, %642 : vector<4x1152xf32>
    %644 = vector.extract_strided_slice %356 {offsets = [0, 21], sizes = [4, 1], strides = [1, 1]} : vector<4x25xf32> to vector<4x1xf32>
    %645 = vector.extract_strided_slice %539 {offsets = [0, 97], sizes = [4, 1152], strides = [1, 1]} : vector<4x1252xf32> to vector<4x1152xf32>
    %646 = vector.broadcast %644 : vector<4x1xf32> to vector<4x1152xf32>
    %647 = arith.mulf %646, %645 : vector<4x1152xf32>
    %648 = arith.addf %643, %647 : vector<4x1152xf32>
    %649 = vector.extract_strided_slice %356 {offsets = [0, 22], sizes = [4, 1], strides = [1, 1]} : vector<4x25xf32> to vector<4x1xf32>
    %650 = vector.extract_strided_slice %539 {offsets = [0, 98], sizes = [4, 1152], strides = [1, 1]} : vector<4x1252xf32> to vector<4x1152xf32>
    %651 = vector.broadcast %649 : vector<4x1xf32> to vector<4x1152xf32>
    %652 = arith.mulf %651, %650 : vector<4x1152xf32>
    %653 = arith.addf %648, %652 : vector<4x1152xf32>
    %654 = vector.extract_strided_slice %356 {offsets = [0, 23], sizes = [4, 1], strides = [1, 1]} : vector<4x25xf32> to vector<4x1xf32>
    %655 = vector.extract_strided_slice %539 {offsets = [0, 99], sizes = [4, 1152], strides = [1, 1]} : vector<4x1252xf32> to vector<4x1152xf32>
    %656 = vector.broadcast %654 : vector<4x1xf32> to vector<4x1152xf32>
    %657 = arith.mulf %656, %655 : vector<4x1152xf32>
    %658 = arith.addf %653, %657 : vector<4x1152xf32>
    %659 = vector.extract_strided_slice %356 {offsets = [0, 24], sizes = [4, 1], strides = [1, 1]} : vector<4x25xf32> to vector<4x1xf32>
    %660 = vector.extract_strided_slice %539 {offsets = [0, 100], sizes = [4, 1152], strides = [1, 1]} : vector<4x1252xf32> to vector<4x1152xf32>
    %661 = vector.broadcast %659 : vector<4x1xf32> to vector<4x1152xf32>
    %662 = arith.mulf %661, %660 : vector<4x1152xf32>
    %663 = arith.addf %658, %662 : vector<4x1152xf32>
    %664 = vector.extract_strided_slice %357 {offsets = [0, 0], sizes = [4, 1], strides = [1, 1]} : vector<4x4xf32> to vector<4x1xf32>
    %665 = vector.extract_strided_slice %663 {offsets = [0, 0], sizes = [1, 1152], strides = [1, 1]} : vector<4x1152xf32> to vector<1x1152xf32>
    %666 = vector.broadcast %664 : vector<4x1xf32> to vector<4x1152xf32>
    %667 = vector.broadcast %665 : vector<1x1152xf32> to vector<4x1152xf32>
    %668 = arith.mulf %666, %667 : vector<4x1152xf32>
    %669 = vector.extract_strided_slice %357 {offsets = [0, 1], sizes = [4, 1], strides = [1, 1]} : vector<4x4xf32> to vector<4x1xf32>
    %670 = vector.extract_strided_slice %663 {offsets = [1, 0], sizes = [1, 1152], strides = [1, 1]} : vector<4x1152xf32> to vector<1x1152xf32>
    %671 = vector.broadcast %669 : vector<4x1xf32> to vector<4x1152xf32>
    %672 = vector.broadcast %670 : vector<1x1152xf32> to vector<4x1152xf32>
    %673 = arith.mulf %671, %672 : vector<4x1152xf32>
    %674 = arith.addf %668, %673 : vector<4x1152xf32>
    %675 = vector.extract_strided_slice %357 {offsets = [0, 2], sizes = [4, 1], strides = [1, 1]} : vector<4x4xf32> to vector<4x1xf32>
    %676 = vector.extract_strided_slice %663 {offsets = [2, 0], sizes = [1, 1152], strides = [1, 1]} : vector<4x1152xf32> to vector<1x1152xf32>
    %677 = vector.broadcast %675 : vector<4x1xf32> to vector<4x1152xf32>
    %678 = vector.broadcast %676 : vector<1x1152xf32> to vector<4x1152xf32>
    %679 = arith.mulf %677, %678 : vector<4x1152xf32>
    %680 = arith.addf %674, %679 : vector<4x1152xf32>
    %681 = vector.extract_strided_slice %357 {offsets = [0, 3], sizes = [4, 1], strides = [1, 1]} : vector<4x4xf32> to vector<4x1xf32>
    %682 = vector.extract_strided_slice %663 {offsets = [3, 0], sizes = [1, 1152], strides = [1, 1]} : vector<4x1152xf32> to vector<1x1152xf32>
    %683 = vector.broadcast %681 : vector<4x1xf32> to vector<4x1152xf32>
    %684 = vector.broadcast %682 : vector<1x1152xf32> to vector<4x1152xf32>
    %685 = arith.mulf %683, %684 : vector<4x1152xf32>
    %686 = arith.addf %680, %685 : vector<4x1152xf32>
    %687 = vector.extract_strided_slice %1 {offsets = [0, 128], sizes = [1, 1152], strides = [1, 1]} : vector<1x1408xf32> to vector<1x1152xf32>
    %cst_74 = arith.constant 0.000000e+00 : f32
    %688 = vector.broadcast %cst_74 : f32 to vector<1x1152xf32>
    %689 = arith.cmpf ogt, %687, %688 : vector<1x1152xf32>
    %cst_75 = arith.constant 0.000000e+00 : f32
    %690 = vector.shape_cast %689 : vector<1x1152xi1> to vector<1x1152xi1>
    %691 = vector.broadcast %690 : vector<1x1152xi1> to vector<4x1152xi1>
    %692 = vector.broadcast %cst_75 : f32 to vector<4x1152xf32>
    %693 = arith.select %691, %686, %692 : vector<4x1152xi1>, vector<4x1152xf32>
    %cst_76 = arith.constant dense<0.000000e+00> : vector<4xf32>
    %694 = vector.multi_reduction <add>, %693, %cst_76 [1] : vector<4x1152xf32> to vector<4xf32>
    %695 = vector.shape_cast %694 : vector<4xf32> to vector<4x1xf32>
    %cst_77 = arith.constant 0.001953125 : f32
    %696 = vector.broadcast %cst_77 : f32 to vector<4x1xf32>
    %697 = arith.mulf %695, %696 : vector<4x1xf32>
    %698 = arith.mulf %693, %693 : vector<4x1152xf32>
    %cst_78 = arith.constant dense<0.000000e+00> : vector<4xf32>
    %699 = vector.multi_reduction <add>, %698, %cst_78 [1] : vector<4x1152xf32> to vector<4xf32>
    %700 = vector.shape_cast %699 : vector<4xf32> to vector<4x1xf32>
    %cst_79 = arith.constant 0.001953125 : f32
    %701 = vector.broadcast %cst_79 : f32 to vector<4x1xf32>
    %702 = arith.mulf %700, %701 : vector<4x1xf32>
    %703 = arith.mulf %697, %697 : vector<4x1xf32>
    %704 = arith.subf %702, %703 : vector<4x1xf32>
    %cst_80 = arith.constant 0.000000e+00 : f32
    %705 = vector.broadcast %cst_80 : f32 to vector<4x1xf32>
    %706 = arith.maximumf %704, %705 : vector<4x1xf32>
    %707 = vector.broadcast %697 : vector<4x1xf32> to vector<4x1152xf32>
    %708 = arith.subf %693, %707 : vector<4x1152xf32>
    %cst_81 = arith.constant 9.99999974E-6 : f32
    %709 = vector.broadcast %cst_81 : f32 to vector<4x1xf32>
    %710 = arith.addf %706, %709 : vector<4x1xf32>
    %711 = math.rsqrt %710 : vector<4x1xf32>
    %712 = vector.broadcast %711 : vector<4x1xf32> to vector<4x1152xf32>
    %713 = arith.mulf %708, %712 : vector<4x1152xf32>
    %cst_82 = arith.constant 0.000000e+00 : f32
    %714 = vector.broadcast %cst_82 : f32 to vector<1x1152xf32>
    %715 = arith.cmpf ogt, %687, %714 : vector<1x1152xf32>
    %cst_83 = arith.constant 0.000000e+00 : f32
    %716 = vector.shape_cast %715 : vector<1x1152xi1> to vector<1x1152xi1>
    %717 = vector.broadcast %716 : vector<1x1152xi1> to vector<4x1152xi1>
    %718 = vector.broadcast %cst_83 : f32 to vector<4x1152xf32>
    %719 = arith.select %717, %713, %718 : vector<4x1152xi1>, vector<4x1152xf32>
    %720 = vector.broadcast %353 : f32 to vector<4x1152xf32>
    %721 = arith.mulf %720, %719 : vector<4x1152xf32>
    %722 = arith.addf %352, %721 : vector<4x1152xf32>
    %c6 = arith.constant 6 : index
    %723 = memref.load %arg0[%c6] : memref<8xf32, #tpu.memory_space<smem>>
    %c0_84 = arith.constant 0 : index
    %c0_85 = arith.constant 0 : index
    %724 = vector.load %arg11[%c0_84, %c0_85] : memref<4x9xf32, #tpu.memory_space<vmem>>, vector<4x9xf32>
    %c0_86 = arith.constant 0 : index
    %c0_87 = arith.constant 0 : index
    %725 = vector.load %arg12[%c0_86, %c0_87] : memref<4x4xf32, #tpu.memory_space<vmem>>, vector<4x4xf32>
    %726 = vector.extract_strided_slice %724 {offsets = [0, 0], sizes = [4, 1], strides = [1, 1]} : vector<4x9xf32> to vector<4x1xf32>
    %727 = vector.extract_strided_slice %3 {offsets = [0, 78], sizes = [4, 1152], strides = [1, 1]} : vector<4x1408xf32> to vector<4x1152xf32>
    %728 = vector.broadcast %726 : vector<4x1xf32> to vector<4x1152xf32>
    %729 = arith.mulf %728, %727 : vector<4x1152xf32>
    %730 = vector.extract_strided_slice %724 {offsets = [0, 1], sizes = [4, 1], strides = [1, 1]} : vector<4x9xf32> to vector<4x1xf32>
    %731 = vector.extract_strided_slice %3 {offsets = [0, 80], sizes = [4, 1152], strides = [1, 1]} : vector<4x1408xf32> to vector<4x1152xf32>
    %732 = vector.broadcast %730 : vector<4x1xf32> to vector<4x1152xf32>
    %733 = arith.mulf %732, %731 : vector<4x1152xf32>
    %734 = arith.addf %729, %733 : vector<4x1152xf32>
    %735 = vector.extract_strided_slice %724 {offsets = [0, 2], sizes = [4, 1], strides = [1, 1]} : vector<4x9xf32> to vector<4x1xf32>
    %736 = vector.extract_strided_slice %3 {offsets = [0, 82], sizes = [4, 1152], strides = [1, 1]} : vector<4x1408xf32> to vector<4x1152xf32>
    %737 = vector.broadcast %735 : vector<4x1xf32> to vector<4x1152xf32>
    %738 = arith.mulf %737, %736 : vector<4x1152xf32>
    %739 = arith.addf %734, %738 : vector<4x1152xf32>
    %740 = vector.extract_strided_slice %724 {offsets = [0, 3], sizes = [4, 1], strides = [1, 1]} : vector<4x9xf32> to vector<4x1xf32>
    %741 = vector.extract_strided_slice %3 {offsets = [0, 126], sizes = [4, 1152], strides = [1, 1]} : vector<4x1408xf32> to vector<4x1152xf32>
    %742 = vector.broadcast %740 : vector<4x1xf32> to vector<4x1152xf32>
    %743 = arith.mulf %742, %741 : vector<4x1152xf32>
    %744 = arith.addf %739, %743 : vector<4x1152xf32>
    %745 = vector.extract_strided_slice %724 {offsets = [0, 4], sizes = [4, 1], strides = [1, 1]} : vector<4x9xf32> to vector<4x1xf32>
    %746 = vector.extract_strided_slice %3 {offsets = [0, 128], sizes = [4, 1152], strides = [1, 1]} : vector<4x1408xf32> to vector<4x1152xf32>
    %747 = vector.broadcast %745 : vector<4x1xf32> to vector<4x1152xf32>
    %748 = arith.mulf %747, %746 : vector<4x1152xf32>
    %749 = arith.addf %744, %748 : vector<4x1152xf32>
    %750 = vector.extract_strided_slice %724 {offsets = [0, 5], sizes = [4, 1], strides = [1, 1]} : vector<4x9xf32> to vector<4x1xf32>
    %751 = vector.extract_strided_slice %3 {offsets = [0, 130], sizes = [4, 1152], strides = [1, 1]} : vector<4x1408xf32> to vector<4x1152xf32>
    %752 = vector.broadcast %750 : vector<4x1xf32> to vector<4x1152xf32>
    %753 = arith.mulf %752, %751 : vector<4x1152xf32>
    %754 = arith.addf %749, %753 : vector<4x1152xf32>
    %755 = vector.extract_strided_slice %724 {offsets = [0, 6], sizes = [4, 1], strides = [1, 1]} : vector<4x9xf32> to vector<4x1xf32>
    %756 = vector.extract_strided_slice %3 {offsets = [0, 174], sizes = [4, 1152], strides = [1, 1]} : vector<4x1408xf32> to vector<4x1152xf32>
    %757 = vector.broadcast %755 : vector<4x1xf32> to vector<4x1152xf32>
    %758 = arith.mulf %757, %756 : vector<4x1152xf32>
    %759 = arith.addf %754, %758 : vector<4x1152xf32>
    %760 = vector.extract_strided_slice %724 {offsets = [0, 7], sizes = [4, 1], strides = [1, 1]} : vector<4x9xf32> to vector<4x1xf32>
    %761 = vector.extract_strided_slice %3 {offsets = [0, 176], sizes = [4, 1152], strides = [1, 1]} : vector<4x1408xf32> to vector<4x1152xf32>
    %762 = vector.broadcast %760 : vector<4x1xf32> to vector<4x1152xf32>
    %763 = arith.mulf %762, %761 : vector<4x1152xf32>
    %764 = arith.addf %759, %763 : vector<4x1152xf32>
    %765 = vector.extract_strided_slice %724 {offsets = [0, 8], sizes = [4, 1], strides = [1, 1]} : vector<4x9xf32> to vector<4x1xf32>
    %766 = vector.extract_strided_slice %3 {offsets = [0, 178], sizes = [4, 1152], strides = [1, 1]} : vector<4x1408xf32> to vector<4x1152xf32>
    %767 = vector.broadcast %765 : vector<4x1xf32> to vector<4x1152xf32>
    %768 = arith.mulf %767, %766 : vector<4x1152xf32>
    %769 = arith.addf %764, %768 : vector<4x1152xf32>
    %770 = vector.extract_strided_slice %725 {offsets = [0, 0], sizes = [4, 1], strides = [1, 1]} : vector<4x4xf32> to vector<4x1xf32>
    %771 = vector.extract_strided_slice %769 {offsets = [0, 0], sizes = [1, 1152], strides = [1, 1]} : vector<4x1152xf32> to vector<1x1152xf32>
    %772 = vector.broadcast %770 : vector<4x1xf32> to vector<4x1152xf32>
    %773 = vector.broadcast %771 : vector<1x1152xf32> to vector<4x1152xf32>
    %774 = arith.mulf %772, %773 : vector<4x1152xf32>
    %775 = vector.extract_strided_slice %725 {offsets = [0, 1], sizes = [4, 1], strides = [1, 1]} : vector<4x4xf32> to vector<4x1xf32>
    %776 = vector.extract_strided_slice %769 {offsets = [1, 0], sizes = [1, 1152], strides = [1, 1]} : vector<4x1152xf32> to vector<1x1152xf32>
    %777 = vector.broadcast %775 : vector<4x1xf32> to vector<4x1152xf32>
    %778 = vector.broadcast %776 : vector<1x1152xf32> to vector<4x1152xf32>
    %779 = arith.mulf %777, %778 : vector<4x1152xf32>
    %780 = arith.addf %774, %779 : vector<4x1152xf32>
    %781 = vector.extract_strided_slice %725 {offsets = [0, 2], sizes = [4, 1], strides = [1, 1]} : vector<4x4xf32> to vector<4x1xf32>
    %782 = vector.extract_strided_slice %769 {offsets = [2, 0], sizes = [1, 1152], strides = [1, 1]} : vector<4x1152xf32> to vector<1x1152xf32>
    %783 = vector.broadcast %781 : vector<4x1xf32> to vector<4x1152xf32>
    %784 = vector.broadcast %782 : vector<1x1152xf32> to vector<4x1152xf32>
    %785 = arith.mulf %783, %784 : vector<4x1152xf32>
    %786 = arith.addf %780, %785 : vector<4x1152xf32>
    %787 = vector.extract_strided_slice %725 {offsets = [0, 3], sizes = [4, 1], strides = [1, 1]} : vector<4x4xf32> to vector<4x1xf32>
    %788 = vector.extract_strided_slice %769 {offsets = [3, 0], sizes = [1, 1152], strides = [1, 1]} : vector<4x1152xf32> to vector<1x1152xf32>
    %789 = vector.broadcast %787 : vector<4x1xf32> to vector<4x1152xf32>
    %790 = vector.broadcast %788 : vector<1x1152xf32> to vector<4x1152xf32>
    %791 = arith.mulf %789, %790 : vector<4x1152xf32>
    %792 = arith.addf %786, %791 : vector<4x1152xf32>
    %793 = vector.extract_strided_slice %1 {offsets = [0, 128], sizes = [1, 1152], strides = [1, 1]} : vector<1x1408xf32> to vector<1x1152xf32>
    %cst_88 = arith.constant 0.000000e+00 : f32
    %794 = vector.broadcast %cst_88 : f32 to vector<1x1152xf32>
    %795 = arith.cmpf ogt, %793, %794 : vector<1x1152xf32>
    %cst_89 = arith.constant 0.000000e+00 : f32
    %796 = vector.shape_cast %795 : vector<1x1152xi1> to vector<1x1152xi1>
    %797 = vector.broadcast %796 : vector<1x1152xi1> to vector<4x1152xi1>
    %798 = vector.broadcast %cst_89 : f32 to vector<4x1152xf32>
    %799 = arith.select %797, %792, %798 : vector<4x1152xi1>, vector<4x1152xf32>
    %cst_90 = arith.constant dense<0.000000e+00> : vector<4xf32>
    %800 = vector.multi_reduction <add>, %799, %cst_90 [1] : vector<4x1152xf32> to vector<4xf32>
    %801 = vector.shape_cast %800 : vector<4xf32> to vector<4x1xf32>
    %cst_91 = arith.constant 0.001953125 : f32
    %802 = vector.broadcast %cst_91 : f32 to vector<4x1xf32>
    %803 = arith.mulf %801, %802 : vector<4x1xf32>
    %804 = arith.mulf %799, %799 : vector<4x1152xf32>
    %cst_92 = arith.constant dense<0.000000e+00> : vector<4xf32>
    %805 = vector.multi_reduction <add>, %804, %cst_92 [1] : vector<4x1152xf32> to vector<4xf32>
    %806 = vector.shape_cast %805 : vector<4xf32> to vector<4x1xf32>
    %cst_93 = arith.constant 0.001953125 : f32
    %807 = vector.broadcast %cst_93 : f32 to vector<4x1xf32>
    %808 = arith.mulf %806, %807 : vector<4x1xf32>
    %809 = arith.mulf %803, %803 : vector<4x1xf32>
    %810 = arith.subf %808, %809 : vector<4x1xf32>
    %cst_94 = arith.constant 0.000000e+00 : f32
    %811 = vector.broadcast %cst_94 : f32 to vector<4x1xf32>
    %812 = arith.maximumf %810, %811 : vector<4x1xf32>
    %813 = vector.broadcast %803 : vector<4x1xf32> to vector<4x1152xf32>
    %814 = arith.subf %799, %813 : vector<4x1152xf32>
    %cst_95 = arith.constant 9.99999974E-6 : f32
    %815 = vector.broadcast %cst_95 : f32 to vector<4x1xf32>
    %816 = arith.addf %812, %815 : vector<4x1xf32>
    %817 = math.rsqrt %816 : vector<4x1xf32>
    %818 = vector.broadcast %817 : vector<4x1xf32> to vector<4x1152xf32>
    %819 = arith.mulf %814, %818 : vector<4x1152xf32>
    %cst_96 = arith.constant 0.000000e+00 : f32
    %820 = vector.broadcast %cst_96 : f32 to vector<1x1152xf32>
    %821 = arith.cmpf ogt, %793, %820 : vector<1x1152xf32>
    %cst_97 = arith.constant 0.000000e+00 : f32
    %822 = vector.shape_cast %821 : vector<1x1152xi1> to vector<1x1152xi1>
    %823 = vector.broadcast %822 : vector<1x1152xi1> to vector<4x1152xi1>
    %824 = vector.broadcast %cst_97 : f32 to vector<4x1152xf32>
    %825 = arith.select %823, %819, %824 : vector<4x1152xi1>, vector<4x1152xf32>
    %826 = vector.broadcast %723 : f32 to vector<4x1152xf32>
    %827 = arith.mulf %826, %825 : vector<4x1152xf32>
    %828 = arith.addf %722, %827 : vector<4x1152xf32>
    %c7 = arith.constant 7 : index
    %829 = memref.load %arg0[%c7] : memref<8xf32, #tpu.memory_space<smem>>
    %c0_98 = arith.constant 0 : index
    %c0_99 = arith.constant 0 : index
    %830 = vector.load %arg13[%c0_98, %c0_99] : memref<4x25xf32, #tpu.memory_space<vmem>>, vector<4x25xf32>
    %c0_100 = arith.constant 0 : index
    %c0_101 = arith.constant 0 : index
    %831 = vector.load %arg14[%c0_100, %c0_101] : memref<4x4xf32, #tpu.memory_space<vmem>>, vector<4x4xf32>
    %832 = vector.extract_strided_slice %830 {offsets = [0, 0], sizes = [4, 1], strides = [1, 1]} : vector<4x25xf32> to vector<4x1xf32>
    %833 = vector.extract_strided_slice %3 {offsets = [0, 28], sizes = [4, 1152], strides = [1, 1]} : vector<4x1408xf32> to vector<4x1152xf32>
    %834 = vector.broadcast %832 : vector<4x1xf32> to vector<4x1152xf32>
    %835 = arith.mulf %834, %833 : vector<4x1152xf32>
    %836 = vector.extract_strided_slice %830 {offsets = [0, 1], sizes = [4, 1], strides = [1, 1]} : vector<4x25xf32> to vector<4x1xf32>
    %837 = vector.extract_strided_slice %3 {offsets = [0, 30], sizes = [4, 1152], strides = [1, 1]} : vector<4x1408xf32> to vector<4x1152xf32>
    %838 = vector.broadcast %836 : vector<4x1xf32> to vector<4x1152xf32>
    %839 = arith.mulf %838, %837 : vector<4x1152xf32>
    %840 = arith.addf %835, %839 : vector<4x1152xf32>
    %841 = vector.extract_strided_slice %830 {offsets = [0, 2], sizes = [4, 1], strides = [1, 1]} : vector<4x25xf32> to vector<4x1xf32>
    %842 = vector.extract_strided_slice %3 {offsets = [0, 32], sizes = [4, 1152], strides = [1, 1]} : vector<4x1408xf32> to vector<4x1152xf32>
    %843 = vector.broadcast %841 : vector<4x1xf32> to vector<4x1152xf32>
    %844 = arith.mulf %843, %842 : vector<4x1152xf32>
    %845 = arith.addf %840, %844 : vector<4x1152xf32>
    %846 = vector.extract_strided_slice %830 {offsets = [0, 3], sizes = [4, 1], strides = [1, 1]} : vector<4x25xf32> to vector<4x1xf32>
    %847 = vector.extract_strided_slice %3 {offsets = [0, 34], sizes = [4, 1152], strides = [1, 1]} : vector<4x1408xf32> to vector<4x1152xf32>
    %848 = vector.broadcast %846 : vector<4x1xf32> to vector<4x1152xf32>
    %849 = arith.mulf %848, %847 : vector<4x1152xf32>
    %850 = arith.addf %845, %849 : vector<4x1152xf32>
    %851 = vector.extract_strided_slice %830 {offsets = [0, 4], sizes = [4, 1], strides = [1, 1]} : vector<4x25xf32> to vector<4x1xf32>
    %852 = vector.extract_strided_slice %3 {offsets = [0, 36], sizes = [4, 1152], strides = [1, 1]} : vector<4x1408xf32> to vector<4x1152xf32>
    %853 = vector.broadcast %851 : vector<4x1xf32> to vector<4x1152xf32>
    %854 = arith.mulf %853, %852 : vector<4x1152xf32>
    %855 = arith.addf %850, %854 : vector<4x1152xf32>
    %856 = vector.extract_strided_slice %830 {offsets = [0, 5], sizes = [4, 1], strides = [1, 1]} : vector<4x25xf32> to vector<4x1xf32>
    %857 = vector.extract_strided_slice %3 {offsets = [0, 76], sizes = [4, 1152], strides = [1, 1]} : vector<4x1408xf32> to vector<4x1152xf32>
    %858 = vector.broadcast %856 : vector<4x1xf32> to vector<4x1152xf32>
    %859 = arith.mulf %858, %857 : vector<4x1152xf32>
    %860 = arith.addf %855, %859 : vector<4x1152xf32>
    %861 = vector.extract_strided_slice %830 {offsets = [0, 6], sizes = [4, 1], strides = [1, 1]} : vector<4x25xf32> to vector<4x1xf32>
    %862 = vector.extract_strided_slice %3 {offsets = [0, 78], sizes = [4, 1152], strides = [1, 1]} : vector<4x1408xf32> to vector<4x1152xf32>
    %863 = vector.broadcast %861 : vector<4x1xf32> to vector<4x1152xf32>
    %864 = arith.mulf %863, %862 : vector<4x1152xf32>
    %865 = arith.addf %860, %864 : vector<4x1152xf32>
    %866 = vector.extract_strided_slice %830 {offsets = [0, 7], sizes = [4, 1], strides = [1, 1]} : vector<4x25xf32> to vector<4x1xf32>
    %867 = vector.extract_strided_slice %3 {offsets = [0, 80], sizes = [4, 1152], strides = [1, 1]} : vector<4x1408xf32> to vector<4x1152xf32>
    %868 = vector.broadcast %866 : vector<4x1xf32> to vector<4x1152xf32>
    %869 = arith.mulf %868, %867 : vector<4x1152xf32>
    %870 = arith.addf %865, %869 : vector<4x1152xf32>
    %871 = vector.extract_strided_slice %830 {offsets = [0, 8], sizes = [4, 1], strides = [1, 1]} : vector<4x25xf32> to vector<4x1xf32>
    %872 = vector.extract_strided_slice %3 {offsets = [0, 82], sizes = [4, 1152], strides = [1, 1]} : vector<4x1408xf32> to vector<4x1152xf32>
    %873 = vector.broadcast %871 : vector<4x1xf32> to vector<4x1152xf32>
    %874 = arith.mulf %873, %872 : vector<4x1152xf32>
    %875 = arith.addf %870, %874 : vector<4x1152xf32>
    %876 = vector.extract_strided_slice %830 {offsets = [0, 9], sizes = [4, 1], strides = [1, 1]} : vector<4x25xf32> to vector<4x1xf32>
    %877 = vector.extract_strided_slice %3 {offsets = [0, 84], sizes = [4, 1152], strides = [1, 1]} : vector<4x1408xf32> to vector<4x1152xf32>
    %878 = vector.broadcast %876 : vector<4x1xf32> to vector<4x1152xf32>
    %879 = arith.mulf %878, %877 : vector<4x1152xf32>
    %880 = arith.addf %875, %879 : vector<4x1152xf32>
    %881 = vector.extract_strided_slice %830 {offsets = [0, 10], sizes = [4, 1], strides = [1, 1]} : vector<4x25xf32> to vector<4x1xf32>
    %882 = vector.extract_strided_slice %3 {offsets = [0, 124], sizes = [4, 1152], strides = [1, 1]} : vector<4x1408xf32> to vector<4x1152xf32>
    %883 = vector.broadcast %881 : vector<4x1xf32> to vector<4x1152xf32>
    %884 = arith.mulf %883, %882 : vector<4x1152xf32>
    %885 = arith.addf %880, %884 : vector<4x1152xf32>
    %886 = vector.extract_strided_slice %830 {offsets = [0, 11], sizes = [4, 1], strides = [1, 1]} : vector<4x25xf32> to vector<4x1xf32>
    %887 = vector.extract_strided_slice %3 {offsets = [0, 126], sizes = [4, 1152], strides = [1, 1]} : vector<4x1408xf32> to vector<4x1152xf32>
    %888 = vector.broadcast %886 : vector<4x1xf32> to vector<4x1152xf32>
    %889 = arith.mulf %888, %887 : vector<4x1152xf32>
    %890 = arith.addf %885, %889 : vector<4x1152xf32>
    %891 = vector.extract_strided_slice %830 {offsets = [0, 12], sizes = [4, 1], strides = [1, 1]} : vector<4x25xf32> to vector<4x1xf32>
    %892 = vector.extract_strided_slice %3 {offsets = [0, 128], sizes = [4, 1152], strides = [1, 1]} : vector<4x1408xf32> to vector<4x1152xf32>
    %893 = vector.broadcast %891 : vector<4x1xf32> to vector<4x1152xf32>
    %894 = arith.mulf %893, %892 : vector<4x1152xf32>
    %895 = arith.addf %890, %894 : vector<4x1152xf32>
    %896 = vector.extract_strided_slice %830 {offsets = [0, 13], sizes = [4, 1], strides = [1, 1]} : vector<4x25xf32> to vector<4x1xf32>
    %897 = vector.extract_strided_slice %3 {offsets = [0, 130], sizes = [4, 1152], strides = [1, 1]} : vector<4x1408xf32> to vector<4x1152xf32>
    %898 = vector.broadcast %896 : vector<4x1xf32> to vector<4x1152xf32>
    %899 = arith.mulf %898, %897 : vector<4x1152xf32>
    %900 = arith.addf %895, %899 : vector<4x1152xf32>
    %901 = vector.extract_strided_slice %830 {offsets = [0, 14], sizes = [4, 1], strides = [1, 1]} : vector<4x25xf32> to vector<4x1xf32>
    %902 = vector.extract_strided_slice %3 {offsets = [0, 132], sizes = [4, 1152], strides = [1, 1]} : vector<4x1408xf32> to vector<4x1152xf32>
    %903 = vector.broadcast %901 : vector<4x1xf32> to vector<4x1152xf32>
    %904 = arith.mulf %903, %902 : vector<4x1152xf32>
    %905 = arith.addf %900, %904 : vector<4x1152xf32>
    %906 = vector.extract_strided_slice %830 {offsets = [0, 15], sizes = [4, 1], strides = [1, 1]} : vector<4x25xf32> to vector<4x1xf32>
    %907 = vector.extract_strided_slice %3 {offsets = [0, 172], sizes = [4, 1152], strides = [1, 1]} : vector<4x1408xf32> to vector<4x1152xf32>
    %908 = vector.broadcast %906 : vector<4x1xf32> to vector<4x1152xf32>
    %909 = arith.mulf %908, %907 : vector<4x1152xf32>
    %910 = arith.addf %905, %909 : vector<4x1152xf32>
    %911 = vector.extract_strided_slice %830 {offsets = [0, 16], sizes = [4, 1], strides = [1, 1]} : vector<4x25xf32> to vector<4x1xf32>
    %912 = vector.extract_strided_slice %3 {offsets = [0, 174], sizes = [4, 1152], strides = [1, 1]} : vector<4x1408xf32> to vector<4x1152xf32>
    %913 = vector.broadcast %911 : vector<4x1xf32> to vector<4x1152xf32>
    %914 = arith.mulf %913, %912 : vector<4x1152xf32>
    %915 = arith.addf %910, %914 : vector<4x1152xf32>
    %916 = vector.extract_strided_slice %830 {offsets = [0, 17], sizes = [4, 1], strides = [1, 1]} : vector<4x25xf32> to vector<4x1xf32>
    %917 = vector.extract_strided_slice %3 {offsets = [0, 176], sizes = [4, 1152], strides = [1, 1]} : vector<4x1408xf32> to vector<4x1152xf32>
    %918 = vector.broadcast %916 : vector<4x1xf32> to vector<4x1152xf32>
    %919 = arith.mulf %918, %917 : vector<4x1152xf32>
    %920 = arith.addf %915, %919 : vector<4x1152xf32>
    %921 = vector.extract_strided_slice %830 {offsets = [0, 18], sizes = [4, 1], strides = [1, 1]} : vector<4x25xf32> to vector<4x1xf32>
    %922 = vector.extract_strided_slice %3 {offsets = [0, 178], sizes = [4, 1152], strides = [1, 1]} : vector<4x1408xf32> to vector<4x1152xf32>
    %923 = vector.broadcast %921 : vector<4x1xf32> to vector<4x1152xf32>
    %924 = arith.mulf %923, %922 : vector<4x1152xf32>
    %925 = arith.addf %920, %924 : vector<4x1152xf32>
    %926 = vector.extract_strided_slice %830 {offsets = [0, 19], sizes = [4, 1], strides = [1, 1]} : vector<4x25xf32> to vector<4x1xf32>
    %927 = vector.extract_strided_slice %3 {offsets = [0, 180], sizes = [4, 1152], strides = [1, 1]} : vector<4x1408xf32> to vector<4x1152xf32>
    %928 = vector.broadcast %926 : vector<4x1xf32> to vector<4x1152xf32>
    %929 = arith.mulf %928, %927 : vector<4x1152xf32>
    %930 = arith.addf %925, %929 : vector<4x1152xf32>
    %931 = vector.extract_strided_slice %830 {offsets = [0, 20], sizes = [4, 1], strides = [1, 1]} : vector<4x25xf32> to vector<4x1xf32>
    %932 = vector.extract_strided_slice %3 {offsets = [0, 220], sizes = [4, 1152], strides = [1, 1]} : vector<4x1408xf32> to vector<4x1152xf32>
    %933 = vector.broadcast %931 : vector<4x1xf32> to vector<4x1152xf32>
    %934 = arith.mulf %933, %932 : vector<4x1152xf32>
    %935 = arith.addf %930, %934 : vector<4x1152xf32>
    %936 = vector.extract_strided_slice %830 {offsets = [0, 21], sizes = [4, 1], strides = [1, 1]} : vector<4x25xf32> to vector<4x1xf32>
    %937 = vector.extract_strided_slice %3 {offsets = [0, 222], sizes = [4, 1152], strides = [1, 1]} : vector<4x1408xf32> to vector<4x1152xf32>
    %938 = vector.broadcast %936 : vector<4x1xf32> to vector<4x1152xf32>
    %939 = arith.mulf %938, %937 : vector<4x1152xf32>
    %940 = arith.addf %935, %939 : vector<4x1152xf32>
    %941 = vector.extract_strided_slice %830 {offsets = [0, 22], sizes = [4, 1], strides = [1, 1]} : vector<4x25xf32> to vector<4x1xf32>
    %942 = vector.extract_strided_slice %3 {offsets = [0, 224], sizes = [4, 1152], strides = [1, 1]} : vector<4x1408xf32> to vector<4x1152xf32>
    %943 = vector.broadcast %941 : vector<4x1xf32> to vector<4x1152xf32>
    %944 = arith.mulf %943, %942 : vector<4x1152xf32>
    %945 = arith.addf %940, %944 : vector<4x1152xf32>
    %946 = vector.extract_strided_slice %830 {offsets = [0, 23], sizes = [4, 1], strides = [1, 1]} : vector<4x25xf32> to vector<4x1xf32>
    %947 = vector.extract_strided_slice %3 {offsets = [0, 226], sizes = [4, 1152], strides = [1, 1]} : vector<4x1408xf32> to vector<4x1152xf32>
    %948 = vector.broadcast %946 : vector<4x1xf32> to vector<4x1152xf32>
    %949 = arith.mulf %948, %947 : vector<4x1152xf32>
    %950 = arith.addf %945, %949 : vector<4x1152xf32>
    %951 = vector.extract_strided_slice %830 {offsets = [0, 24], sizes = [4, 1], strides = [1, 1]} : vector<4x25xf32> to vector<4x1xf32>
    %952 = vector.extract_strided_slice %3 {offsets = [0, 228], sizes = [4, 1152], strides = [1, 1]} : vector<4x1408xf32> to vector<4x1152xf32>
    %953 = vector.broadcast %951 : vector<4x1xf32> to vector<4x1152xf32>
    %954 = arith.mulf %953, %952 : vector<4x1152xf32>
    %955 = arith.addf %950, %954 : vector<4x1152xf32>
    %956 = vector.extract_strided_slice %831 {offsets = [0, 0], sizes = [4, 1], strides = [1, 1]} : vector<4x4xf32> to vector<4x1xf32>
    %957 = vector.extract_strided_slice %955 {offsets = [0, 0], sizes = [1, 1152], strides = [1, 1]} : vector<4x1152xf32> to vector<1x1152xf32>
    %958 = vector.broadcast %956 : vector<4x1xf32> to vector<4x1152xf32>
    %959 = vector.broadcast %957 : vector<1x1152xf32> to vector<4x1152xf32>
    %960 = arith.mulf %958, %959 : vector<4x1152xf32>
    %961 = vector.extract_strided_slice %831 {offsets = [0, 1], sizes = [4, 1], strides = [1, 1]} : vector<4x4xf32> to vector<4x1xf32>
    %962 = vector.extract_strided_slice %955 {offsets = [1, 0], sizes = [1, 1152], strides = [1, 1]} : vector<4x1152xf32> to vector<1x1152xf32>
    %963 = vector.broadcast %961 : vector<4x1xf32> to vector<4x1152xf32>
    %964 = vector.broadcast %962 : vector<1x1152xf32> to vector<4x1152xf32>
    %965 = arith.mulf %963, %964 : vector<4x1152xf32>
    %966 = arith.addf %960, %965 : vector<4x1152xf32>
    %967 = vector.extract_strided_slice %831 {offsets = [0, 2], sizes = [4, 1], strides = [1, 1]} : vector<4x4xf32> to vector<4x1xf32>
    %968 = vector.extract_strided_slice %955 {offsets = [2, 0], sizes = [1, 1152], strides = [1, 1]} : vector<4x1152xf32> to vector<1x1152xf32>
    %969 = vector.broadcast %967 : vector<4x1xf32> to vector<4x1152xf32>
    %970 = vector.broadcast %968 : vector<1x1152xf32> to vector<4x1152xf32>
    %971 = arith.mulf %969, %970 : vector<4x1152xf32>
    %972 = arith.addf %966, %971 : vector<4x1152xf32>
    %973 = vector.extract_strided_slice %831 {offsets = [0, 3], sizes = [4, 1], strides = [1, 1]} : vector<4x4xf32> to vector<4x1xf32>
    %974 = vector.extract_strided_slice %955 {offsets = [3, 0], sizes = [1, 1152], strides = [1, 1]} : vector<4x1152xf32> to vector<1x1152xf32>
    %975 = vector.broadcast %973 : vector<4x1xf32> to vector<4x1152xf32>
    %976 = vector.broadcast %974 : vector<1x1152xf32> to vector<4x1152xf32>
    %977 = arith.mulf %975, %976 : vector<4x1152xf32>
    %978 = arith.addf %972, %977 : vector<4x1152xf32>
    %979 = vector.extract_strided_slice %1 {offsets = [0, 128], sizes = [1, 1152], strides = [1, 1]} : vector<1x1408xf32> to vector<1x1152xf32>
    %cst_102 = arith.constant 0.000000e+00 : f32
    %980 = vector.broadcast %cst_102 : f32 to vector<1x1152xf32>
    %981 = arith.cmpf ogt, %979, %980 : vector<1x1152xf32>
    %cst_103 = arith.constant 0.000000e+00 : f32
    %982 = vector.shape_cast %981 : vector<1x1152xi1> to vector<1x1152xi1>
    %983 = vector.broadcast %982 : vector<1x1152xi1> to vector<4x1152xi1>
    %984 = vector.broadcast %cst_103 : f32 to vector<4x1152xf32>
    %985 = arith.select %983, %978, %984 : vector<4x1152xi1>, vector<4x1152xf32>
    %cst_104 = arith.constant dense<0.000000e+00> : vector<4xf32>
    %986 = vector.multi_reduction <add>, %985, %cst_104 [1] : vector<4x1152xf32> to vector<4xf32>
    %987 = vector.shape_cast %986 : vector<4xf32> to vector<4x1xf32>
    %cst_105 = arith.constant 0.001953125 : f32
    %988 = vector.broadcast %cst_105 : f32 to vector<4x1xf32>
    %989 = arith.mulf %987, %988 : vector<4x1xf32>
    %990 = arith.mulf %985, %985 : vector<4x1152xf32>
    %cst_106 = arith.constant dense<0.000000e+00> : vector<4xf32>
    %991 = vector.multi_reduction <add>, %990, %cst_106 [1] : vector<4x1152xf32> to vector<4xf32>
    %992 = vector.shape_cast %991 : vector<4xf32> to vector<4x1xf32>
    %cst_107 = arith.constant 0.001953125 : f32
    %993 = vector.broadcast %cst_107 : f32 to vector<4x1xf32>
    %994 = arith.mulf %992, %993 : vector<4x1xf32>
    %995 = arith.mulf %989, %989 : vector<4x1xf32>
    %996 = arith.subf %994, %995 : vector<4x1xf32>
    %cst_108 = arith.constant 0.000000e+00 : f32
    %997 = vector.broadcast %cst_108 : f32 to vector<4x1xf32>
    %998 = arith.maximumf %996, %997 : vector<4x1xf32>
    %999 = vector.broadcast %989 : vector<4x1xf32> to vector<4x1152xf32>
    %1000 = arith.subf %985, %999 : vector<4x1152xf32>
    %cst_109 = arith.constant 9.99999974E-6 : f32
    %1001 = vector.broadcast %cst_109 : f32 to vector<4x1xf32>
    %1002 = arith.addf %998, %1001 : vector<4x1xf32>
    %1003 = math.rsqrt %1002 : vector<4x1xf32>
    %1004 = vector.broadcast %1003 : vector<4x1xf32> to vector<4x1152xf32>
    %1005 = arith.mulf %1000, %1004 : vector<4x1152xf32>
    %cst_110 = arith.constant 0.000000e+00 : f32
    %1006 = vector.broadcast %cst_110 : f32 to vector<1x1152xf32>
    %1007 = arith.cmpf ogt, %979, %1006 : vector<1x1152xf32>
    %cst_111 = arith.constant 0.000000e+00 : f32
    %1008 = vector.shape_cast %1007 : vector<1x1152xi1> to vector<1x1152xi1>
    %1009 = vector.broadcast %1008 : vector<1x1152xi1> to vector<4x1152xi1>
    %1010 = vector.broadcast %cst_111 : f32 to vector<4x1152xf32>
    %1011 = arith.select %1009, %1005, %1010 : vector<4x1152xi1>, vector<4x1152xf32>
    %1012 = vector.broadcast %829 : f32 to vector<4x1152xf32>
    %1013 = arith.mulf %1012, %1011 : vector<4x1152xf32>
    %1014 = arith.addf %828, %1013 : vector<4x1152xf32>
    %c0_112 = arith.constant 0 : index
    %c0_113 = arith.constant 0 : index
    %1015 = vector.load %arg15[%c0_112, %c0_113] : memref<4x1152xf32, #tpu.memory_space<vmem>>, vector<4x1152xf32>
    tpu.vector_store %arg15[%c0_112, %c0_113], %1014 {strides = array<i32>} : memref<4x1152xf32, #tpu.memory_space<vmem>>, vector<4x1152xf32>,
    return
  }
}

</mosaic_0001>

<llo_original>
// kernel: _lambda_.1
$region0: #{_lambda_.1}
  #allocation0 [shape = 'u32[]', space=smem, size = 0x4, offset = 0x4, fixed_abs, tag = 'smem constant byte address 0x4 - core index']
  #allocation1 [shape = 'u32[144,128]{1,0:T(1,128)}', space=vmem, size = 0x12000, scoped, tag = 'internal scratch']
  %s0 = inlined_call_operand.vmem [shape: f32[8], index: 0, kind: input, shape index: {}]
  %s1 = inlined_call_operand.vmem [shape: f32[1,1408], index: 1, kind: input, shape index: {}]
  %s2 = inlined_call_operand.vmem [shape: f32[4,1408], index: 2, kind: input, shape index: {}]
  %s3 = inlined_call_operand.vmem [shape: f32[4,9], index: 3, kind: input, shape index: {}]
  %s4 = inlined_call_operand.vmem [shape: f32[4,4], index: 4, kind: input, shape index: {}]
  %s5 = inlined_call_operand.vmem [shape: f32[4,9], index: 5, kind: input, shape index: {}]
  %s6 = inlined_call_operand.vmem [shape: f32[4,4], index: 6, kind: input, shape index: {}]
  %s7 = inlined_call_operand.vmem [shape: f32[4,25], index: 7, kind: input, shape index: {}]
  %s8 = inlined_call_operand.vmem [shape: f32[4,4], index: 8, kind: input, shape index: {}]
  %s9 = inlined_call_operand.vmem [shape: f32[4,25], index: 9, kind: input, shape index: {}]
  %s10 = inlined_call_operand.vmem [shape: f32[4,4], index: 10, kind: input, shape index: {}]
  %s11 = inlined_call_operand.vmem [shape: f32[4,9], index: 11, kind: input, shape index: {}]
  %s12 = inlined_call_operand.vmem [shape: f32[4,4], index: 12, kind: input, shape index: {}]
  %s13 = inlined_call_operand.vmem [shape: f32[4,25], index: 13, kind: input, shape index: {}]
  %s14 = inlined_call_operand.vmem [shape: f32[4,4], index: 14, kind: input, shape index: {}]
  %s15 = inlined_call_operand.vmem [shape: f32[4,1152], index: 15, kind: output, shape index: {}]
  %s16 = sld [smem:[#allocation0]]
  $region74: #{_lambda_.1} parent=0
    _
  %s18 = ssub.s32 1, %s16
  %s19 = scalar_select 0, %s18, %s16
  $region1: #{_lambda_.1} parent=0
    #allocation2 [shape = 'u8[512]{0}', space=smem, size = 0x200, scoped, tag = 'input window, operand 0, single buffered']
    #allocation3 [shape = 's32[1]{0}', space=sflag, size = 0x4, scoped, tag = 'scoped memory for _lambda_.1']
    %20 = vsyncpa [#allocation3], 0
    // Predicated region
    $region2: #{_lambda_.1} parent=1 // pred_check
      _
    $region3: #{_lambda_.1} parent=1 // pred_check_branch
      %22 = sbr.rel (0) target = $region5
    $region4: #{_lambda_.1} parent=1 // pred_region
      %s24 = ssub.s32 16, 16
      %25 = vsyncadd [#allocation3], %s24
      %s27 = sshll.u32 %s0, 4
      %s28 = int_to_ptr.vmem [resolvable:$true] %s27
      %30 = dma.vmem_to_smem %s28, 16, [#allocation2], [#allocation3]
    $region5: #{_lambda_.1} parent=1 // pred_fallthru
      _
    // Predicated region
    $region6: #{_lambda_.1} parent=1 // pred_check
      _
    $region7: #{_lambda_.1} parent=1 // pred_check_branch
      %32 = sbr.rel (0) target = $region9
    $region8: #{_lambda_.1} parent=1 // pred_region
      _
    $region9: #{_lambda_.1} parent=1 // pred_fallthru
      _
    // Predicated region
    $region10: #{_lambda_.1} parent=1 // pred_check
      _
    $region11: #{_lambda_.1} parent=1 // pred_check_branch
      %34 = sbr.rel (0) target = $region13
    $region12: #{_lambda_.1} parent=1 // pred_region
      _
    $region13: #{_lambda_.1} parent=1 // pred_fallthru
      _
    // Predicated region
    $region14: #{_lambda_.1} parent=1 // pred_check
      _
    $region15: #{_lambda_.1} parent=1 // pred_check_branch
      %36 = sbr.rel (0) target = $region17
    $region16: #{_lambda_.1} parent=1 // pred_region
      _
    $region17: #{_lambda_.1} parent=1 // pred_fallthru
      _
    // Predicated region
    $region18: #{_lambda_.1} parent=1 // pred_check
      _
    $region19: #{_lambda_.1} parent=1 // pred_check_branch
      %38 = sbr.rel (0) target = $region21
    $region20: #{_lambda_.1} parent=1 // pred_region
      _
    $region21: #{_lambda_.1} parent=1 // pred_fallthru
      _
    // Predicated region
    $region22: #{_lambda_.1} parent=1 // pred_check
      _
    $region23: #{_lambda_.1} parent=1 // pred_check_branch
      %40 = sbr.rel (0) target = $region25
    $region24: #{_lambda_.1} parent=1 // pred_region
      _
    $region25: #{_lambda_.1} parent=1 // pred_fallthru
      _
    // Predicated region
    $region26: #{_lambda_.1} parent=1 // pred_check
      _
    $region27: #{_lambda_.1} parent=1 // pred_check_branch
      %42 = sbr.rel (0) target = $region29
    $region28: #{_lambda_.1} parent=1 // pred_region
      _
    $region29: #{_lambda_.1} parent=1 // pred_fallthru
      _
    // Predicated region
    $region30: #{_lambda_.1} parent=1 // pred_check
      _
    $region31: #{_lambda_.1} parent=1 // pred_check_branch
      %44 = sbr.rel (0) target = $region33
    $region32: #{_lambda_.1} parent=1 // pred_region
      _
    $region33: #{_lambda_.1} parent=1 // pred_fallthru
      _
    // Predicated region
    $region34: #{_lambda_.1} parent=1 // pred_check
      _
    $region35: #{_lambda_.1} parent=1 // pred_check_branch
      %46 = sbr.rel (0) target = $region37
    $region36: #{_lambda_.1} parent=1 // pred_region
      _
    $region37: #{_lambda_.1} parent=1 // pred_fallthru
      _
    // Predicated region
    $region38: #{_lambda_.1} parent=1 // pred_check
      _
    $region39: #{_lambda_.1} parent=1 // pred_check_branch
      %48 = sbr.rel (0) target = $region41
    $region40: #{_lambda_.1} parent=1 // pred_region
      _
    $region41: #{_lambda_.1} parent=1 // pred_fallthru
      _
    // Predicated region
    $region42: #{_lambda_.1} parent=1 // pred_check
      _
    $region43: #{_lambda_.1} parent=1 // pred_check_branch
      %50 = sbr.rel (0) target = $region45
    $region44: #{_lambda_.1} parent=1 // pred_region
      _
    $region45: #{_lambda_.1} parent=1 // pred_fallthru
      _
    // Predicated region
    $region46: #{_lambda_.1} parent=1 // pred_check
      _
    $region47: #{_lambda_.1} parent=1 // pred_check_branch
      %52 = sbr.rel (0) target = $region49
    $region48: #{_lambda_.1} parent=1 // pred_region
      _
    $region49: #{_lambda_.1} parent=1 // pred_fallthru
      _
    // Predicated region
    $region50: #{_lambda_.1} parent=1 // pred_check
      _
    $region51: #{_lambda_.1} parent=1 // pred_check_branch
      %54 = sbr.rel (0) target = $region53
    $region52: #{_lambda_.1} parent=1 // pred_region
      _
    $region53: #{_lambda_.1} parent=1 // pred_fallthru
      _
    // Predicated region
    $region54: #{_lambda_.1} parent=1 // pred_check
      _
    $region55: #{_lambda_.1} parent=1 // pred_check_branch
      %56 = sbr.rel (0) target = $region57
    $region56: #{_lambda_.1} parent=1 // pred_region
      _
    $region57: #{_lambda_.1} parent=1 // pred_fallthru
      _
    // Predicated region
    $region58: #{_lambda_.1} parent=1 // pred_check
      _
    $region59: #{_lambda_.1} parent=1 // pred_check_branch
      %58 = sbr.rel (0) target = $region61
    $region60: #{_lambda_.1} parent=1 // pred_region
      _
    $region61: #{_lambda_.1} parent=1 // pred_fallthru
      _
    // Predicated region
    $region62: #{_lambda_.1} parent=1 // pred_check
      _
    $region63: #{_lambda_.1} parent=1 // pred_check_branch
      %60 = sbr.rel (0) target = $region65
    $region64: #{_lambda_.1} parent=1 // pred_region
      %61 = dma.done [#allocation3], 16
    $region65: #{_lambda_.1} parent=1 // pred_fallthru
      _
    %62 = sfence
    %v63 = vld [vmem:[%s2] sm:$0xff]
    %v64 = vld [vmem:[%s2 + $0x8] sm:$0xff]
    %v65 = vld [vmem:[%s2 + $0x10] sm:$0xff]
    %v66 = vld [vmem:[%s2 + $0x18] sm:$0xff]
    %v67 = vld [vmem:[%s2 + $0x20] sm:$0xff]
    %v68 = vld [vmem:[%s2 + $0x28] sm:$0xf]
    %v69 = vld [vmem:[%s1] sm:$0xff]
    %v70 = vld [vmem:[%s1 + $0x8] sm:$0x7]
    %v71 = vmax.f32 %v63, 0.0
    %v72 = vmax.f32 %v64, 0.0
    %v73 = vmax.f32 %v65, 0.0
    %v74 = vmax.f32 %v66, 0.0
    %v75 = vmax.f32 %v67, 0.0
    %v76 = vmax.f32 %v68, 0.0
    %s77 = sld [smem:[#allocation2 + $0x1]]
    %vm78 = vcmp.gt.f32.partialorder %v69, 0.0
    %vm79 = vcmp.gt.f32.partialorder %v70, 0.0
    %v80 = vsel %vm78, 1, 0
    %v81 = vsel %vm79, 1, 0
    %v82 = vlaneseq
    %v83 = vshrl.u32 %v82, 7
    %v84 = vsub.s32 0, %v83
    %v85 = vrot.slane %v80, %v84
    %v86 = vlaneseq
    %v87 = vshrl.u32 %v86, 7
    %v88 = vsub.s32 1, %v87
    %v89 = vrot.slane %v80, %v88
    %v90 = vlaneseq
    %v91 = vshrl.u32 %v90, 7
    %v92 = vsub.s32 2, %v91
    %v93 = vrot.slane %v80, %v92
    %v94 = vlaneseq
    %v95 = vshrl.u32 %v94, 7
    %v96 = vsub.s32 3, %v95
    %v97 = vrot.slane %v80, %v96
    %v98 = vlaneseq
    %v99 = vshrl.u32 %v98, 7
    %v100 = vsub.s32 4, %v99
    %v101 = vrot.slane %v80, %v100
    %v102 = vlaneseq
    %v103 = vshrl.u32 %v102, 7
    %v104 = vsub.s32 5, %v103
    %v105 = vrot.slane %v80, %v104
    %v106 = vlaneseq
    %v107 = vshrl.u32 %v106, 7
    %v108 = vsub.s32 6, %v107
    %v109 = vrot.slane %v80, %v108
    %v110 = vlaneseq
    %v111 = vshrl.u32 %v110, 7
    %v112 = vsub.s32 7, %v111
    %v113 = vrot.slane %v80, %v112
    %v114 = vlaneseq
    %v115 = vshrl.u32 %v114, 7
    %v116 = vsub.s32 0, %v115
    %v117 = vrot.slane %v81, %v116
    %v118 = vlaneseq
    %v119 = vshrl.u32 %v118, 7
    %v120 = vsub.s32 1, %v119
    %v121 = vrot.slane %v81, %v120
    %v122 = vlaneseq
    %v123 = vshrl.u32 %v122, 7
    %v124 = vsub.s32 2, %v123
    %v125 = vrot.slane %v81, %v124
    %vm126 = vcmp.eq.s32.totalorder %v85, 1
    %vm127 = vcmp.eq.s32.totalorder %v89, 1
    %vm128 = vcmp.eq.s32.totalorder %v93, 1
    %vm129 = vcmp.eq.s32.totalorder %v97, 1
    %vm130 = vcmp.eq.s32.totalorder %v101, 1
    %vm131 = vcmp.eq.s32.totalorder %v105, 1
    %vm132 = vcmp.eq.s32.totalorder %v109, 1
    %vm133 = vcmp.eq.s32.totalorder %v113, 1
    %vm134 = vcmp.eq.s32.totalorder %v117, 1
    %vm135 = vcmp.eq.s32.totalorder %v121, 1
    %vm136 = vcmp.eq.s32.totalorder %v125, 1
    %v143 = vcombine.high %v63, %v63
    %v144 = vcombine.high %v64, %v64
    %v145 = vcombine.high %v65, %v65
    %v146 = vcombine.high %v66, %v66
    %v147 = vcombine.high %v67, %v67
    %v153 = vsel %vm126, %v63, -1e+30
    %v154 = vsel %vm127, %v143, -1e+30
    %v155 = vsel %vm128, %v64, -1e+30
    %v156 = vsel %vm129, %v144, -1e+30
    %v157 = vsel %vm130, %v65, -1e+30
    %v158 = vsel %vm131, %v145, -1e+30
    %v159 = vsel %vm132, %v66, -1e+30
    %v160 = vsel %vm133, %v146, -1e+30
    %v161 = vsel %vm134, %v67, -1e+30
    %v162 = vsel %vm135, %v147, -1e+30
    %v163 = vsel %vm136, %v68, -1e+30
    %174 = vrot.lane.b32.xlu0 %v153, 127
    %v175 = vpop.permute.xlu0 %174
    %176 = vrot.lane.b32.xlu0 %v154, 127
    %v177 = vpop.permute.xlu0 %176
    %178 = vrot.lane.b32.xlu0 %v155, 127
    %v179 = vpop.permute.xlu0 %178
    %180 = vrot.lane.b32.xlu0 %v156, 127
    %v181 = vpop.permute.xlu0 %180
    %182 = vrot.lane.b32.xlu0 %v157, 127
    %v183 = vpop.permute.xlu0 %182
    %184 = vrot.lane.b32.xlu0 %v158, 127
    %v185 = vpop.permute.xlu0 %184
    %186 = vrot.lane.b32.xlu0 %v159, 127
    %v187 = vpop.permute.xlu0 %186
    %188 = vrot.lane.b32.xlu0 %v160, 127
    %v189 = vpop.permute.xlu0 %188
    %190 = vrot.lane.b32.xlu0 %v161, 127
    %v191 = vpop.permute.xlu0 %190
    %192 = vrot.lane.b32.xlu0 %v162, 127
    %v193 = vpop.permute.xlu0 %192
    %vm194 = vcmask 1039360
    %v195 = vsel %vm194, %v175, %v177
    %v196 = vsel %vm194, %v177, %v179
    %v197 = vsel %vm194, %v179, %v181
    %v198 = vsel %vm194, %v181, %v183
    %v199 = vsel %vm194, %v183, %v185
    %v200 = vsel %vm194, %v185, %v187
    %v201 = vsel %vm194, %v187, %v189
    %v202 = vsel %vm194, %v189, %v191
    %v203 = vsel %vm194, %v191, %v193
    %v214 = vmax.f32 %v153, %v195
    %v215 = vmax.f32 %v154, %v196
    %v216 = vmax.f32 %v155, %v197
    %v217 = vmax.f32 %v156, %v198
    %v218 = vmax.f32 %v157, %v199
    %v219 = vmax.f32 %v158, %v200
    %v220 = vmax.f32 %v159, %v201
    %v221 = vmax.f32 %v160, %v202
    %v222 = vmax.f32 %v161, %v203
    %v223 = vmax.f32 %v162, %v193
    %224 = vrot.lane.b32.xlu0 %v153, 126
    %v225 = vpop.permute.xlu0 %224
    %226 = vrot.lane.b32.xlu0 %v154, 126
    %v227 = vpop.permute.xlu0 %226
    %228 = vrot.lane.b32.xlu0 %v155, 126
    %v229 = vpop.permute.xlu0 %228
    %230 = vrot.lane.b32.xlu0 %v156, 126
    %v231 = vpop.permute.xlu0 %230
    %232 = vrot.lane.b32.xlu0 %v157, 126
    %v233 = vpop.permute.xlu0 %232
    %234 = vrot.lane.b32.xlu0 %v158, 126
    %v235 = vpop.permute.xlu0 %234
    %236 = vrot.lane.b32.xlu0 %v159, 126
    %v237 = vpop.permute.xlu0 %236
    %238 = vrot.lane.b32.xlu0 %v160, 126
    %v239 = vpop.permute.xlu0 %238
    %240 = vrot.lane.b32.xlu0 %v161, 126
    %v241 = vpop.permute.xlu0 %240
    %242 = vrot.lane.b32.xlu0 %v162, 126
    %v243 = vpop.permute.xlu0 %242
    %vm244 = vcmask 1031168
    %v245 = vsel %vm244, %v225, %v227
    %v246 = vsel %vm244, %v227, %v229
    %v247 = vsel %vm244, %v229, %v231
    %v248 = vsel %vm244, %v231, %v233
    %v249 = vsel %vm244, %v233, %v235
    %v250 = vsel %vm244, %v235, %v237
    %v251 = vsel %vm244, %v237, %v239
    %v252 = vsel %vm244, %v239, %v241
    %v253 = vsel %vm244, %v241, %v243
    %v264 = vmax.f32 %v214, %v245
    %v265 = vmax.f32 %v215, %v246
    %v266 = vmax.f32 %v216, %v247
    %v267 = vmax.f32 %v217, %v248
    %v268 = vmax.f32 %v218, %v249
    %v269 = vmax.f32 %v219, %v250
    %v270 = vmax.f32 %v220, %v251
    %v271 = vmax.f32 %v221, %v252
    %v272 = vmax.f32 %v222, %v253
    %v273 = vmax.f32 %v223, %v243
    %274 = vrot.lane.b32.xlu0 %v153, 104
    %v275 = vpop.permute.xlu0 %274
    %276 = vrot.lane.b32.xlu0 %v154, 104
    %v277 = vpop.permute.xlu0 %276
    %278 = vrot.lane.b32.xlu0 %v155, 104
    %v279 = vpop.permute.xlu0 %278
    %280 = vrot.lane.b32.xlu0 %v156, 104
    %v281 = vpop.permute.xlu0 %280
    %282 = vrot.lane.b32.xlu0 %v157, 104
    %v283 = vpop.permute.xlu0 %282
    %284 = vrot.lane.b32.xlu0 %v158, 104
    %v285 = vpop.permute.xlu0 %284
    %286 = vrot.lane.b32.xlu0 %v159, 104
    %v287 = vpop.permute.xlu0 %286
    %288 = vrot.lane.b32.xlu0 %v160, 104
    %v289 = vpop.permute.xlu0 %288
    %290 = vrot.lane.b32.xlu0 %v161, 104
    %v291 = vpop.permute.xlu0 %290
    %292 = vrot.lane.b32.xlu0 %v162, 104
    %v293 = vpop.permute.xlu0 %292
    %vm294 = vcmask 850944
    %v295 = vsel %vm294, %v275, %v277
    %v296 = vsel %vm294, %v277, %v279
    %v297 = vsel %vm294, %v279, %v281
    %v298 = vsel %vm294, %v281, %v283
    %v299 = vsel %vm294, %v283, %v285
    %v300 = vsel %vm294, %v285, %v287
    %v301 = vsel %vm294, %v287, %v289
    %v302 = vsel %vm294, %v289, %v291
    %v303 = vsel %vm294, %v291, %v293
    %v314 = vmax.f32 %v264, %v295
    %v315 = vmax.f32 %v265, %v296
    %v316 = vmax.f32 %v266, %v297
    %v317 = vmax.f32 %v267, %v298
    %v318 = vmax.f32 %v268, %v299
    %v319 = vmax.f32 %v269, %v300
    %v320 = vmax.f32 %v270, %v301
    %v321 = vmax.f32 %v271, %v302
    %v322 = vmax.f32 %v272, %v303
    %v323 = vmax.f32 %v273, %v293
    %324 = vrot.lane.b32.xlu0 %v154, 103
    %v325 = vpop.permute.xlu0 %324
    %326 = vrot.lane.b32.xlu0 %v155, 103
    %v327 = vpop.permute.xlu0 %326
    %328 = vrot.lane.b32.xlu0 %v156, 103
    %v329 = vpop.permute.xlu0 %328
    %330 = vrot.lane.b32.xlu0 %v157, 103
    %v331 = vpop.permute.xlu0 %330
    %332 = vrot.lane.b32.xlu0 %v158, 103
    %v333 = vpop.permute.xlu0 %332
    %334 = vrot.lane.b32.xlu0 %v159, 103
    %v335 = vpop.permute.xlu0 %334
    %336 = vrot.lane.b32.xlu0 %v160, 103
    %v337 = vpop.permute.xlu0 %336
    %338 = vrot.lane.b32.xlu0 %v161, 103
    %v339 = vpop.permute.xlu0 %338
    %340 = vrot.lane.b32.xlu0 %v162, 103
    %v341 = vpop.permute.xlu0 %340
    %vm342 = vcmask 842752
    %v343 = vsel %vm342, %v325, %v327
    %v344 = vsel %vm342, %v327, %v329
    %v345 = vsel %vm342, %v329, %v331
    %v346 = vsel %vm342, %v331, %v333
    %v347 = vsel %vm342, %v333, %v335
    %v348 = vsel %vm342, %v335, %v337
    %v349 = vsel %vm342, %v337, %v339
    %v350 = vsel %vm342, %v339, %v341
    %v361 = vmax.f32 %v314, %v325
    %v362 = vmax.f32 %v315, %v343
    %v363 = vmax.f32 %v316, %v344
    %v364 = vmax.f32 %v317, %v345
    %v365 = vmax.f32 %v318, %v346
    %v366 = vmax.f32 %v319, %v347
    %v367 = vmax.f32 %v320, %v348
    %v368 = vmax.f32 %v321, %v349
    %v369 = vmax.f32 %v322, %v350
    %v370 = vmax.f32 %v323, %v341
    %372 = vrot.lane.b32.xlu0 %v154, 102
    %v373 = vpop.permute.xlu0 %372
    %374 = vrot.lane.b32.xlu0 %v155, 102
    %v375 = vpop.permute.xlu0 %374
    %376 = vrot.lane.b32.xlu0 %v156, 102
    %v377 = vpop.permute.xlu0 %376
    %378 = vrot.lane.b32.xlu0 %v157, 102
    %v379 = vpop.permute.xlu0 %378
    %380 = vrot.lane.b32.xlu0 %v158, 102
    %v381 = vpop.permute.xlu0 %380
    %382 = vrot.lane.b32.xlu0 %v159, 102
    %v383 = vpop.permute.xlu0 %382
    %384 = vrot.lane.b32.xlu0 %v160, 102
    %v385 = vpop.permute.xlu0 %384
    %386 = vrot.lane.b32.xlu0 %v161, 102
    %v387 = vpop.permute.xlu0 %386
    %388 = vrot.lane.b32.xlu0 %v162, 102
    %v389 = vpop.permute.xlu0 %388
    %390 = vrot.lane.b32.xlu0 %v163, 102
    %v391 = vpop.permute.xlu0 %390
    %vm392 = vcmask 834560
    %v393 = vsel %vm392, %v373, %v375
    %v394 = vsel %vm392, %v375, %v377
    %v395 = vsel %vm392, %v377, %v379
    %v396 = vsel %vm392, %v379, %v381
    %v397 = vsel %vm392, %v381, %v383
    %v398 = vsel %vm392, %v383, %v385
    %v399 = vsel %vm392, %v385, %v387
    %v400 = vsel %vm392, %v387, %v389
    %v401 = vsel %vm392, %v389, %v391
    %v412 = vmax.f32 %v361, %v373
    %v413 = vmax.f32 %v362, %v393
    %v414 = vmax.f32 %v363, %v394
    %v415 = vmax.f32 %v364, %v395
    %v416 = vmax.f32 %v365, %v396
    %v417 = vmax.f32 %v366, %v397
    %v418 = vmax.f32 %v367, %v398
    %v419 = vmax.f32 %v368, %v399
    %v420 = vmax.f32 %v369, %v400
    %v421 = vmax.f32 %v370, %v401
    %422 = vrot.lane.b32.xlu0 %v154, 80
    %v423 = vpop.permute.xlu0 %422
    %424 = vrot.lane.b32.xlu0 %v155, 80
    %v425 = vpop.permute.xlu0 %424
    %426 = vrot.lane.b32.xlu0 %v156, 80
    %v427 = vpop.permute.xlu0 %426
    %428 = vrot.lane.b32.xlu0 %v157, 80
    %v429 = vpop.permute.xlu0 %428
    %430 = vrot.lane.b32.xlu0 %v158, 80
    %v431 = vpop.permute.xlu0 %430
    %432 = vrot.lane.b32.xlu0 %v159, 80
    %v433 = vpop.permute.xlu0 %432
    %434 = vrot.lane.b32.xlu0 %v160, 80
    %v435 = vpop.permute.xlu0 %434
    %436 = vrot.lane.b32.xlu0 %v161, 80
    %v437 = vpop.permute.xlu0 %436
    %438 = vrot.lane.b32.xlu0 %v162, 80
    %v439 = vpop.permute.xlu0 %438
    %440 = vrot.lane.b32.xlu0 %v163, 80
    %v441 = vpop.permute.xlu0 %440
    %vm442 = vcmask 654336
    %v443 = vsel %vm442, %v423, %v425
    %v444 = vsel %vm442, %v425, %v427
    %v445 = vsel %vm442, %v427, %v429
    %v446 = vsel %vm442, %v429, %v431
    %v447 = vsel %vm442, %v431, %v433
    %v448 = vsel %vm442, %v433, %v435
    %v449 = vsel %vm442, %v435, %v437
    %v450 = vsel %vm442, %v437, %v439
    %v451 = vsel %vm442, %v439, %v441
    %v462 = vmax.f32 %v412, %v423
    %v463 = vmax.f32 %v413, %v443
    %v464 = vmax.f32 %v414, %v444
    %v465 = vmax.f32 %v415, %v445
    %v466 = vmax.f32 %v416, %v446
    %v467 = vmax.f32 %v417, %v447
    %v468 = vmax.f32 %v418, %v448
    %v469 = vmax.f32 %v419, %v449
    %v470 = vmax.f32 %v420, %v450
    %v471 = vmax.f32 %v421, %v451
    %472 = vrot.lane.b32.xlu0 %v154, 79
    %v473 = vpop.permute.xlu0 %472
    %474 = vrot.lane.b32.xlu0 %v155, 79
    %v475 = vpop.permute.xlu0 %474
    %476 = vrot.lane.b32.xlu0 %v156, 79
    %v477 = vpop.permute.xlu0 %476
    %478 = vrot.lane.b32.xlu0 %v157, 79
    %v479 = vpop.permute.xlu0 %478
    %480 = vrot.lane.b32.xlu0 %v158, 79
    %v481 = vpop.permute.xlu0 %480
    %482 = vrot.lane.b32.xlu0 %v159, 79
    %v483 = vpop.permute.xlu0 %482
    %484 = vrot.lane.b32.xlu0 %v160, 79
    %v485 = vpop.permute.xlu0 %484
    %486 = vrot.lane.b32.xlu0 %v161, 79
    %v487 = vpop.permute.xlu0 %486
    %488 = vrot.lane.b32.xlu0 %v162, 79
    %v489 = vpop.permute.xlu0 %488
    %490 = vrot.lane.b32.xlu0 %v163, 79
    %v491 = vpop.permute.xlu0 %490
    %vm492 = vcmask 646144
    %v493 = vsel %vm492, %v473, %v475
    %v494 = vsel %vm492, %v475, %v477
    %v495 = vsel %vm492, %v477, %v479
    %v496 = vsel %vm492, %v479, %v481
    %v497 = vsel %vm492, %v481, %v483
    %v498 = vsel %vm492, %v483, %v485
    %v499 = vsel %vm492, %v485, %v487
    %v500 = vsel %vm492, %v487, %v489
    %v501 = vsel %vm492, %v489, %v491
    %v512 = vmax.f32 %v462, %v473
    %v513 = vmax.f32 %v463, %v493
    %v514 = vmax.f32 %v464, %v494
    %v515 = vmax.f32 %v465, %v495
    %v516 = vmax.f32 %v466, %v496
    %v517 = vmax.f32 %v467, %v497
    %v518 = vmax.f32 %v468, %v498
    %v519 = vmax.f32 %v469, %v499
    %v520 = vmax.f32 %v470, %v500
    %v521 = vmax.f32 %v471, %v501
    %522 = vrot.lane.b32.xlu0 %v154, 78
    %v523 = vpop.permute.xlu0 %522
    %524 = vrot.lane.b32.xlu0 %v155, 78
    %v525 = vpop.permute.xlu0 %524
    %526 = vrot.lane.b32.xlu0 %v156, 78
    %v527 = vpop.permute.xlu0 %526
    %528 = vrot.lane.b32.xlu0 %v157, 78
    %v529 = vpop.permute.xlu0 %528
    %530 = vrot.lane.b32.xlu0 %v158, 78
    %v531 = vpop.permute.xlu0 %530
    %532 = vrot.lane.b32.xlu0 %v159, 78
    %v533 = vpop.permute.xlu0 %532
    %534 = vrot.lane.b32.xlu0 %v160, 78
    %v535 = vpop.permute.xlu0 %534
    %536 = vrot.lane.b32.xlu0 %v161, 78
    %v537 = vpop.permute.xlu0 %536
    %538 = vrot.lane.b32.xlu0 %v162, 78
    %v539 = vpop.permute.xlu0 %538
    %540 = vrot.lane.b32.xlu0 %v163, 78
    %v541 = vpop.permute.xlu0 %540
    %vm542 = vcmask 637952
    %v543 = vsel %vm542, %v523, %v525
    %v544 = vsel %vm542, %v525, %v527
    %v545 = vsel %vm542, %v527, %v529
    %v546 = vsel %vm542, %v529, %v531
    %v547 = vsel %vm542, %v531, %v533
    %v548 = vsel %vm542, %v533, %v535
    %v549 = vsel %vm542, %v535, %v537
    %v550 = vsel %vm542, %v537, %v539
    %v551 = vsel %vm542, %v539, %v541
    %v562 = vmax.f32 %v512, %v523
    %v563 = vmax.f32 %v513, %v543
    %v564 = vmax.f32 %v514, %v544
    %v565 = vmax.f32 %v515, %v545
    %v566 = vmax.f32 %v516, %v546
    %v567 = vmax.f32 %v517, %v547
    %v568 = vmax.f32 %v518, %v548
    %v569 = vmax.f32 %v519, %v549
    %v570 = vmax.f32 %v520, %v550
    %v571 = vmax.f32 %v521, %v551
    %v574 = vrot.slane %v69, 1
    %v575 = vrot.slane %v70, 1
    %vm576 = vcmask 1046528
    %v577 = vsel %vm576, %v574, %v575
    %vm580 = vcmp.gt.f32.partialorder %v577, 0.0
    %vm581 = vcmp.gt.f32.partialorder %v575, 0.0
    %v582 = vsel %vm580, 1, 0
    %v583 = vsel %vm581, 1, 0
    %v584 = vlaneseq
    %v585 = vshrl.u32 %v584, 7
    %v586 = vsub.s32 0, %v585
    %v587 = vrot.slane %v582, %v586
    %v588 = vlaneseq
    %v589 = vshrl.u32 %v588, 7
    %v590 = vsub.s32 1, %v589
    %v591 = vrot.slane %v582, %v590
    %v592 = vlaneseq
    %v593 = vshrl.u32 %v592, 7
    %v594 = vsub.s32 2, %v593
    %v595 = vrot.slane %v582, %v594
    %v596 = vlaneseq
    %v597 = vshrl.u32 %v596, 7
    %v598 = vsub.s32 3, %v597
    %v599 = vrot.slane %v582, %v598
    %v600 = vlaneseq
    %v601 = vshrl.u32 %v600, 7
    %v602 = vsub.s32 4, %v601
    %v603 = vrot.slane %v582, %v602
    %v604 = vlaneseq
    %v605 = vshrl.u32 %v604, 7
    %v606 = vsub.s32 5, %v605
    %v607 = vrot.slane %v582, %v606
    %v608 = vlaneseq
    %v609 = vshrl.u32 %v608, 7
    %v610 = vsub.s32 6, %v609
    %v611 = vrot.slane %v582, %v610
    %v612 = vlaneseq
    %v613 = vshrl.u32 %v612, 7
    %v614 = vsub.s32 7, %v613
    %v615 = vrot.slane %v582, %v614
    %v616 = vlaneseq
    %v617 = vshrl.u32 %v616, 7
    %v618 = vsub.s32 0, %v617
    %v619 = vrot.slane %v583, %v618
    %vm620 = vcmp.eq.s32.totalorder %v587, 1
    %vm621 = vcmp.eq.s32.totalorder %v591, 1
    %vm622 = vcmp.eq.s32.totalorder %v595, 1
    %vm623 = vcmp.eq.s32.totalorder %v599, 1
    %vm624 = vcmp.eq.s32.totalorder %v603, 1
    %vm625 = vcmp.eq.s32.totalorder %v607, 1
    %vm626 = vcmp.eq.s32.totalorder %v611, 1
    %vm627 = vcmp.eq.s32.totalorder %v615, 1
    %vm628 = vcmp.eq.s32.totalorder %v619, 1
    %639 = vrot.lane.b32.xlu0 %v562, 25
    %v640 = vpop.permute.xlu0 %639
    %641 = vrot.lane.b32.xlu0 %v563, 25
    %v642 = vpop.permute.xlu0 %641
    %643 = vrot.lane.b32.xlu0 %v564, 25
    %v644 = vpop.permute.xlu0 %643
    %645 = vrot.lane.b32.xlu0 %v565, 25
    %v646 = vpop.permute.xlu0 %645
    %647 = vrot.lane.b32.xlu0 %v566, 25
    %v648 = vpop.permute.xlu0 %647
    %649 = vrot.lane.b32.xlu0 %v567, 25
    %v650 = vpop.permute.xlu0 %649
    %651 = vrot.lane.b32.xlu0 %v568, 25
    %v652 = vpop.permute.xlu0 %651
    %653 = vrot.lane.b32.xlu0 %v569, 25
    %v654 = vpop.permute.xlu0 %653
    %655 = vrot.lane.b32.xlu0 %v570, 25
    %v656 = vpop.permute.xlu0 %655
    %657 = vrot.lane.b32.xlu0 %v571, 25
    %v658 = vpop.permute.xlu0 %657
    %vm659 = vcmask 203776
    %v660 = vsel %vm659, %v640, %v642
    %v661 = vsel %vm659, %v642, %v644
    %v662 = vsel %vm659, %v644, %v646
    %v663 = vsel %vm659, %v646, %v648
    %v664 = vsel %vm659, %v648, %v650
    %v665 = vsel %vm659, %v650, %v652
    %v666 = vsel %vm659, %v652, %v654
    %v667 = vsel %vm659, %v654, %v656
    %v668 = vsel %vm659, %v656, %v658
    %v678 = vsel %vm620, %v660, 0.0
    %v679 = vsel %vm621, %v661, 0.0
    %v680 = vsel %vm622, %v662, 0.0
    %v681 = vsel %vm623, %v663, 0.0
    %v682 = vsel %vm624, %v664, 0.0
    %v683 = vsel %vm625, %v665, 0.0
    %v684 = vsel %vm626, %v666, 0.0
    %v685 = vsel %vm627, %v667, 0.0
    %v686 = vsel %vm628, %v668, 0.0
    %vm687 = vcmask 1043456
    %v688 = vsel %vm687, %v678, 0.0
    %v689 = vsel %vm687, %v679, 0.0
    %v690 = vadd.f32 %v688, %v689
    %v691 = vsel %vm687, %v680, 0.0
    %v692 = vadd.f32 %v690, %v691
    %v693 = vsel %vm687, %v681, 0.0
    %v694 = vadd.f32 %v692, %v693
    %v695 = vsel %vm687, %v682, 0.0
    %v696 = vadd.f32 %v694, %v695
    %v697 = vsel %vm687, %v683, 0.0
    %v698 = vadd.f32 %v696, %v697
    %v699 = vsel %vm687, %v684, 0.0
    %v700 = vadd.f32 %v698, %v699
    %v701 = vsel %vm687, %v685, 0.0
    %v702 = vadd.f32 %v700, %v701
    %v703 = vsel %vm687, %v686, 0.0
    %v704 = vadd.f32 %v702, %v703
    %705 = vadd.xlane.f32.xlu0 %v704
    %v706 = vpop.xlane.xlu0 %705
    %v707 = vmul.f32 %v706, 0.001953125
    %v708 = vmul.f32 %v678, %v678
    %v709 = vmul.f32 %v679, %v679
    %v710 = vmul.f32 %v680, %v680
    %v711 = vmul.f32 %v681, %v681
    %v712 = vmul.f32 %v682, %v682
    %v713 = vmul.f32 %v683, %v683
    %v714 = vmul.f32 %v684, %v684
    %v715 = vmul.f32 %v685, %v685
    %v716 = vmul.f32 %v686, %v686
    %v717 = vsel %vm687, %v708, 0.0
    %v718 = vsel %vm687, %v709, 0.0
    %v719 = vadd.f32 %v717, %v718
    %v720 = vsel %vm687, %v710, 0.0
    %v721 = vadd.f32 %v719, %v720
    %v722 = vsel %vm687, %v711, 0.0
    %v723 = vadd.f32 %v721, %v722
    %v724 = vsel %vm687, %v712, 0.0
    %v725 = vadd.f32 %v723, %v724
    %v726 = vsel %vm687, %v713, 0.0
    %v727 = vadd.f32 %v725, %v726
    %v728 = vsel %vm687, %v714, 0.0
    %v729 = vadd.f32 %v727, %v728
    %v730 = vsel %vm687, %v715, 0.0
    %v731 = vadd.f32 %v729, %v730
    %v732 = vsel %vm687, %v716, 0.0
    %v733 = vadd.f32 %v731, %v732
    %734 = vadd.xlane.f32.xlu0 %v733
    %v735 = vpop.xlane.xlu0 %734
    %v736 = vmul.f32 %v735, 0.001953125
    %v737 = vmul.f32 %v707, %v707
    %v738 = vsub.f32 %v736, %v737
    %v739 = vmax.f32 %v738, 0.0
    %v740 = vsub.f32 %v678, %v707
    %v741 = vsub.f32 %v679, %v707
    %v742 = vsub.f32 %v680, %v707
    %v743 = vsub.f32 %v681, %v707
    %v744 = vsub.f32 %v682, %v707
    %v745 = vsub.f32 %v683, %v707
    %v746 = vsub.f32 %v684, %v707
    %v747 = vsub.f32 %v685, %v707
    %v748 = vsub.f32 %v686, %v707
    %v749 = vadd.f32 %v739, 1e-05
    %v750 = vrsqrt.pop %v749
    %v751 = vmul.f32 %v740, %v750
    %v752 = vmul.f32 %v741, %v750
    %v753 = vmul.f32 %v742, %v750
    %v754 = vmul.f32 %v743, %v750
    %v755 = vmul.f32 %v744, %v750
    %v756 = vmul.f32 %v745, %v750
    %v757 = vmul.f32 %v746, %v750
    %v758 = vmul.f32 %v747, %v750
    %v759 = vmul.f32 %v748, %v750
    %v760 = vsel %vm620, %v751, 0.0
    %v761 = vsel %vm621, %v752, 0.0
    %v762 = vsel %vm622, %v753, 0.0
    %v763 = vsel %vm623, %v754, 0.0
    %v764 = vsel %vm624, %v755, 0.0
    %v765 = vsel %vm625, %v756, 0.0
    %v766 = vsel %vm626, %v757, 0.0
    %v767 = vsel %vm627, %v758, 0.0
    %v768 = vsel %vm628, %v759, 0.0
    %v769 = vstv %s77
    %v770 = vmul.f32 %v769, %v760
    %v771 = vmul.f32 %v769, %v761
    %v772 = vmul.f32 %v769, %v762
    %v773 = vmul.f32 %v769, %v763
    %v774 = vmul.f32 %v769, %v764
    %v775 = vmul.f32 %v769, %v765
    %v776 = vmul.f32 %v769, %v766
    %v777 = vmul.f32 %v769, %v767
    %v778 = vmul.f32 %v769, %v768
    %s779 = sld [smem:[#allocation2 + $0x2]]
    %780 = vrot.lane.b32.xlu0 %v63, 127
    %v781 = vpop.permute.xlu0 %780
    %782 = vrot.lane.b32.xlu0 %v64, 127
    %v783 = vpop.permute.xlu0 %782
    %784 = vrot.lane.b32.xlu0 %v65, 127
    %v785 = vpop.permute.xlu0 %784
    %786 = vrot.lane.b32.xlu0 %v66, 127
    %v787 = vpop.permute.xlu0 %786
    %788 = vrot.lane.b32.xlu0 %v67, 127
    %v789 = vpop.permute.xlu0 %788
    %v790 = vrot.slane %v781, 4
    %v791 = vrot.slane %v783, 4
    %v792 = vrot.slane %v785, 4
    %v793 = vrot.slane %v787, 4
    %v794 = vrot.slane %v789, 4
    %v795 = vsel %vm687, %v790, %v791
    %v796 = vsel %vm194, %v781, %v795
    %v797 = vsel %vm687, %v791, %v792
    %v798 = vsel %vm194, %v783, %v797
    %v799 = vsel %vm687, %v792, %v793
    %v800 = vsel %vm194, %v785, %v799
    %v801 = vsel %vm687, %v793, %v794
    %v802 = vsel %vm194, %v787, %v801
    %v803 = vsel %vm194, %v789, %v794
    %v809 = vadd.f32 %v63, %v796
    %v810 = vadd.f32 %v64, %v798
    %v811 = vadd.f32 %v65, %v800
    %v812 = vadd.f32 %v66, %v802
    %v813 = vadd.f32 %v67, %v803
    %814 = vrot.lane.b32.xlu0 %v69, 127
    %v815 = vpop.permute.xlu0 %814
    %816 = vrot.lane.b32.xlu0 %v70, 127
    %v817 = vpop.permute.xlu0 %816
    %v818 = vrot.slane %v815, 1
    %v819 = vrot.slane %v817, 1
    %v820 = vsel %vm576, %v818, %v819
    %v821 = vsel %vm194, %v815, %v820
    %v822 = vsel %vm194, %v817, %v819
    %v825 = vadd.f32 %v69, %v821
    %v826 = vadd.f32 %v70, %v822
    %827 = vrot.lane.b32.xlu0 %v63, 126
    %v828 = vpop.permute.xlu0 %827
    %829 = vrot.lane.b32.xlu0 %v64, 126
    %v830 = vpop.permute.xlu0 %829
    %831 = vrot.lane.b32.xlu0 %v65, 126
    %v832 = vpop.permute.xlu0 %831
    %833 = vrot.lane.b32.xlu0 %v66, 126
    %v834 = vpop.permute.xlu0 %833
    %835 = vrot.lane.b32.xlu0 %v67, 126
    %v836 = vpop.permute.xlu0 %835
    %v837 = vrot.slane %v828, 4
    %v838 = vrot.slane %v830, 4
    %v839 = vrot.slane %v832, 4
    %v840 = vrot.slane %v834, 4
    %v841 = vrot.slane %v836, 4
    %v842 = vsel %vm687, %v837, %v838
    %v843 = vsel %vm244, %v828, %v842
    %v844 = vsel %vm687, %v838, %v839
    %v845 = vsel %vm244, %v830, %v844
    %v846 = vsel %vm687, %v839, %v840
    %v847 = vsel %vm244, %v832, %v846
    %v848 = vsel %vm687, %v840, %v841
    %v849 = vsel %vm244, %v834, %v848
    %v850 = vsel %vm244, %v836, %v841
    %v856 = vadd.f32 %v809, %v843
    %v857 = vadd.f32 %v810, %v845
    %v858 = vadd.f32 %v811, %v847
    %v859 = vadd.f32 %v812, %v849
    %v860 = vadd.f32 %v813, %v850
    %861 = vrot.lane.b32.xlu0 %v69, 126
    %v862 = vpop.permute.xlu0 %861
    %863 = vrot.lane.b32.xlu0 %v70, 126
    %v864 = vpop.permute.xlu0 %863
    %v865 = vrot.slane %v862, 1
    %v866 = vrot.slane %v864, 1
    %v867 = vsel %vm576, %v865, %v866
    %v868 = vsel %vm244, %v862, %v867
    %v869 = vsel %vm244, %v864, %v866
    %v872 = vadd.f32 %v825, %v868
    %v873 = vadd.f32 %v826, %v869
    %874 = vrot.lane.b32.xlu0 %v63, 104
    %v875 = vpop.permute.xlu0 %874
    %876 = vrot.lane.b32.xlu0 %v64, 104
    %v877 = vpop.permute.xlu0 %876
    %878 = vrot.lane.b32.xlu0 %v65, 104
    %v879 = vpop.permute.xlu0 %878
    %880 = vrot.lane.b32.xlu0 %v66, 104
    %v881 = vpop.permute.xlu0 %880
    %882 = vrot.lane.b32.xlu0 %v67, 104
    %v883 = vpop.permute.xlu0 %882
    %v884 = vrot.slane %v875, 4
    %v885 = vrot.slane %v877, 4
    %v886 = vrot.slane %v879, 4
    %v887 = vrot.slane %v881, 4
    %v888 = vrot.slane %v883, 4
    %v889 = vsel %vm687, %v884, %v885
    %v890 = vsel %vm294, %v875, %v889
    %v891 = vsel %vm687, %v885, %v886
    %v892 = vsel %vm294, %v877, %v891
    %v893 = vsel %vm687, %v886, %v887
    %v894 = vsel %vm294, %v879, %v893
    %v895 = vsel %vm687, %v887, %v888
    %v896 = vsel %vm294, %v881, %v895
    %v897 = vsel %vm294, %v883, %v888
    %v903 = vadd.f32 %v856, %v890
    %v904 = vadd.f32 %v857, %v892
    %v905 = vadd.f32 %v858, %v894
    %v906 = vadd.f32 %v859, %v896
    %v907 = vadd.f32 %v860, %v897
    %908 = vrot.lane.b32.xlu0 %v69, 104
    %v909 = vpop.permute.xlu0 %908
    %910 = vrot.lane.b32.xlu0 %v70, 104
    %v911 = vpop.permute.xlu0 %910
    %v912 = vrot.slane %v909, 1
    %v913 = vrot.slane %v911, 1
    %v914 = vsel %vm576, %v912, %v913
    %v915 = vsel %vm294, %v909, %v914
    %v916 = vsel %vm294, %v911, %v913
    %v919 = vadd.f32 %v872, %v915
    %v920 = vadd.f32 %v873, %v916
    %921 = vrot.lane.b32.xlu0 %v63, 103
    %v922 = vpop.permute.xlu0 %921
    %923 = vrot.lane.b32.xlu0 %v64, 103
    %v924 = vpop.permute.xlu0 %923
    %925 = vrot.lane.b32.xlu0 %v65, 103
    %v926 = vpop.permute.xlu0 %925
    %927 = vrot.lane.b32.xlu0 %v66, 103
    %v928 = vpop.permute.xlu0 %927
    %929 = vrot.lane.b32.xlu0 %v67, 103
    %v930 = vpop.permute.xlu0 %929
    %v931 = vrot.slane %v922, 4
    %v932 = vrot.slane %v924, 4
    %v933 = vrot.slane %v926, 4
    %v934 = vrot.slane %v928, 4
    %v935 = vrot.slane %v930, 4
    %v936 = vsel %vm687, %v931, %v932
    %v937 = vsel %vm342, %v922, %v936
    %v938 = vsel %vm687, %v932, %v933
    %v939 = vsel %vm342, %v924, %v938
    %v940 = vsel %vm687, %v933, %v934
    %v941 = vsel %vm342, %v926, %v940
    %v942 = vsel %vm687, %v934, %v935
    %v943 = vsel %vm342, %v928, %v942
    %v944 = vsel %vm342, %v930, %v935
    %v950 = vadd.f32 %v903, %v937
    %v951 = vadd.f32 %v904, %v939
    %v952 = vadd.f32 %v905, %v941
    %v953 = vadd.f32 %v906, %v943
    %v954 = vadd.f32 %v907, %v944
    %955 = vrot.lane.b32.xlu0 %v69, 103
    %v956 = vpop.permute.xlu0 %955
    %957 = vrot.lane.b32.xlu0 %v70, 103
    %v958 = vpop.permute.xlu0 %957
    %v959 = vrot.slane %v956, 1
    %v960 = vrot.slane %v958, 1
    %v961 = vsel %vm576, %v959, %v960
    %v962 = vsel %vm342, %v956, %v961
    %v963 = vsel %vm342, %v958, %v960
    %v966 = vadd.f32 %v919, %v962
    %v967 = vadd.f32 %v920, %v963
    %968 = vrot.lane.b32.xlu0 %v63, 102
    %v969 = vpop.permute.xlu0 %968
    %970 = vrot.lane.b32.xlu0 %v64, 102
    %v971 = vpop.permute.xlu0 %970
    %972 = vrot.lane.b32.xlu0 %v65, 102
    %v973 = vpop.permute.xlu0 %972
    %974 = vrot.lane.b32.xlu0 %v66, 102
    %v975 = vpop.permute.xlu0 %974
    %976 = vrot.lane.b32.xlu0 %v67, 102
    %v977 = vpop.permute.xlu0 %976
    %978 = vrot.lane.b32.xlu0 %v68, 102
    %v979 = vpop.permute.xlu0 %978
    %v980 = vrot.slane %v969, 4
    %v981 = vrot.slane %v971, 4
    %v982 = vrot.slane %v973, 4
    %v983 = vrot.slane %v975, 4
    %v984 = vrot.slane %v977, 4
    %v985 = vrot.slane %v979, 4
    %v986 = vsel %vm687, %v980, %v981
    %v987 = vsel %vm392, %v969, %v986
    %v988 = vsel %vm687, %v981, %v982
    %v989 = vsel %vm392, %v971, %v988
    %v990 = vsel %vm687, %v982, %v983
    %v991 = vsel %vm392, %v973, %v990
    %v992 = vsel %vm687, %v983, %v984
    %v993 = vsel %vm392, %v975, %v992
    %v994 = vsel %vm687, %v984, %v985
    %v995 = vsel %vm392, %v977, %v994
    %v1001 = vadd.f32 %v950, %v987
    %v1002 = vadd.f32 %v951, %v989
    %v1003 = vadd.f32 %v952, %v991
    %v1004 = vadd.f32 %v953, %v993
    %v1005 = vadd.f32 %v954, %v995
    %1006 = vrot.lane.b32.xlu0 %v69, 102
    %v1007 = vpop.permute.xlu0 %1006
    %1008 = vrot.lane.b32.xlu0 %v70, 102
    %v1009 = vpop.permute.xlu0 %1008
    %v1010 = vrot.slane %v1007, 1
    %v1011 = vrot.slane %v1009, 1
    %v1012 = vsel %vm576, %v1010, %v1011
    %v1013 = vsel %vm392, %v1007, %v1012
    %v1014 = vsel %vm392, %v1009, %v1011
    %v1017 = vadd.f32 %v966, %v1013
    %v1018 = vadd.f32 %v967, %v1014
    %1019 = vrot.lane.b32.xlu0 %v63, 80
    %v1020 = vpop.permute.xlu0 %1019
    %1021 = vrot.lane.b32.xlu0 %v64, 80
    %v1022 = vpop.permute.xlu0 %1021
    %1023 = vrot.lane.b32.xlu0 %v65, 80
    %v1024 = vpop.permute.xlu0 %1023
    %1025 = vrot.lane.b32.xlu0 %v66, 80
    %v1026 = vpop.permute.xlu0 %1025
    %1027 = vrot.lane.b32.xlu0 %v67, 80
    %v1028 = vpop.permute.xlu0 %1027
    %1029 = vrot.lane.b32.xlu0 %v68, 80
    %v1030 = vpop.permute.xlu0 %1029
    %v1031 = vrot.slane %v1020, 4
    %v1032 = vrot.slane %v1022, 4
    %v1033 = vrot.slane %v1024, 4
    %v1034 = vrot.slane %v1026, 4
    %v1035 = vrot.slane %v1028, 4
    %v1036 = vrot.slane %v1030, 4
    %v1037 = vsel %vm687, %v1031, %v1032
    %v1038 = vsel %vm442, %v1020, %v1037
    %v1039 = vsel %vm687, %v1032, %v1033
    %v1040 = vsel %vm442, %v1022, %v1039
    %v1041 = vsel %vm687, %v1033, %v1034
    %v1042 = vsel %vm442, %v1024, %v1041
    %v1043 = vsel %vm687, %v1034, %v1035
    %v1044 = vsel %vm442, %v1026, %v1043
    %v1045 = vsel %vm687, %v1035, %v1036
    %v1046 = vsel %vm442, %v1028, %v1045
    %v1052 = vadd.f32 %v1001, %v1038
    %v1053 = vadd.f32 %v1002, %v1040
    %v1054 = vadd.f32 %v1003, %v1042
    %v1055 = vadd.f32 %v1004, %v1044
    %v1056 = vadd.f32 %v1005, %v1046
    %1057 = vrot.lane.b32.xlu0 %v69, 80
    %v1058 = vpop.permute.xlu0 %1057
    %1059 = vrot.lane.b32.xlu0 %v70, 80
    %v1060 = vpop.permute.xlu0 %1059
    %v1061 = vrot.slane %v1058, 1
    %v1062 = vrot.slane %v1060, 1
    %v1063 = vsel %vm576, %v1061, %v1062
    %v1064 = vsel %vm442, %v1058, %v1063
    %v1065 = vsel %vm442, %v1060, %v1062
    %v1068 = vadd.f32 %v1017, %v1064
    %v1069 = vadd.f32 %v1018, %v1065
    %1070 = vrot.lane.b32.xlu0 %v63, 79
    %v1071 = vpop.permute.xlu0 %1070
    %1072 = vrot.lane.b32.xlu0 %v64, 79
    %v1073 = vpop.permute.xlu0 %1072
    %1074 = vrot.lane.b32.xlu0 %v65, 79
    %v1075 = vpop.permute.xlu0 %1074
    %1076 = vrot.lane.b32.xlu0 %v66, 79
    %v1077 = vpop.permute.xlu0 %1076
    %1078 = vrot.lane.b32.xlu0 %v67, 79
    %v1079 = vpop.permute.xlu0 %1078
    %1080 = vrot.lane.b32.xlu0 %v68, 79
    %v1081 = vpop.permute.xlu0 %1080
    %v1082 = vrot.slane %v1071, 4
    %v1083 = vrot.slane %v1073, 4
    %v1084 = vrot.slane %v1075, 4
    %v1085 = vrot.slane %v1077, 4
    %v1086 = vrot.slane %v1079, 4
    %v1087 = vrot.slane %v1081, 4
    %v1088 = vsel %vm687, %v1082, %v1083
    %v1089 = vsel %vm492, %v1071, %v1088
    %v1090 = vsel %vm687, %v1083, %v1084
    %v1091 = vsel %vm492, %v1073, %v1090
    %v1092 = vsel %vm687, %v1084, %v1085
    %v1093 = vsel %vm492, %v1075, %v1092
    %v1094 = vsel %vm687, %v1085, %v1086
    %v1095 = vsel %vm492, %v1077, %v1094
    %v1096 = vsel %vm687, %v1086, %v1087
    %v1097 = vsel %vm492, %v1079, %v1096
    %v1103 = vadd.f32 %v1052, %v1089
    %v1104 = vadd.f32 %v1053, %v1091
    %v1105 = vadd.f32 %v1054, %v1093
    %v1106 = vadd.f32 %v1055, %v1095
    %v1107 = vadd.f32 %v1056, %v1097
    %1108 = vrot.lane.b32.xlu0 %v69, 79
    %v1109 = vpop.permute.xlu0 %1108
    %1110 = vrot.lane.b32.xlu0 %v70, 79
    %v1111 = vpop.permute.xlu0 %1110
    %v1112 = vrot.slane %v1109, 1
    %v1113 = vrot.slane %v1111, 1
    %v1114 = vsel %vm576, %v1112, %v1113
    %v1115 = vsel %vm492, %v1109, %v1114
    %v1116 = vsel %vm492, %v1111, %v1113
    %v1119 = vadd.f32 %v1068, %v1115
    %v1120 = vadd.f32 %v1069, %v1116
    %1121 = vrot.lane.b32.xlu0 %v63, 78
    %v1122 = vpop.permute.xlu0 %1121
    %1123 = vrot.lane.b32.xlu0 %v64, 78
    %v1124 = vpop.permute.xlu0 %1123
    %1125 = vrot.lane.b32.xlu0 %v65, 78
    %v1126 = vpop.permute.xlu0 %1125
    %1127 = vrot.lane.b32.xlu0 %v66, 78
    %v1128 = vpop.permute.xlu0 %1127
    %1129 = vrot.lane.b32.xlu0 %v67, 78
    %v1130 = vpop.permute.xlu0 %1129
    %1131 = vrot.lane.b32.xlu0 %v68, 78
    %v1132 = vpop.permute.xlu0 %1131
    %v1133 = vrot.slane %v1122, 4
    %v1134 = vrot.slane %v1124, 4
    %v1135 = vrot.slane %v1126, 4
    %v1136 = vrot.slane %v1128, 4
    %v1137 = vrot.slane %v1130, 4
    %v1138 = vrot.slane %v1132, 4
    %v1139 = vsel %vm687, %v1133, %v1134
    %v1140 = vsel %vm542, %v1122, %v1139
    %v1141 = vsel %vm687, %v1134, %v1135
    %v1142 = vsel %vm542, %v1124, %v1141
    %v1143 = vsel %vm687, %v1135, %v1136
    %v1144 = vsel %vm542, %v1126, %v1143
    %v1145 = vsel %vm687, %v1136, %v1137
    %v1146 = vsel %vm542, %v1128, %v1145
    %v1147 = vsel %vm687, %v1137, %v1138
    %v1148 = vsel %vm542, %v1130, %v1147
    %v1154 = vadd.f32 %v1103, %v1140
    %v1155 = vadd.f32 %v1104, %v1142
    %v1156 = vadd.f32 %v1105, %v1144
    %v1157 = vadd.f32 %v1106, %v1146
    %v1158 = vadd.f32 %v1107, %v1148
    %1159 = vrot.lane.b32.xlu0 %v69, 78
    %v1160 = vpop.permute.xlu0 %1159
    %1161 = vrot.lane.b32.xlu0 %v70, 78
    %v1162 = vpop.permute.xlu0 %1161
    %v1163 = vrot.slane %v1160, 1
    %v1164 = vrot.slane %v1162, 1
    %v1165 = vsel %vm576, %v1163, %v1164
    %v1166 = vsel %vm542, %v1160, %v1165
    %v1167 = vsel %vm542, %v1162, %v1164
    %v1170 = vadd.f32 %v1119, %v1166
    %v1171 = vadd.f32 %v1120, %v1167
    %v1172 = vmax.f32 %v1170, 1.0
    %v1173 = vmax.f32 %v1171, 1.0
    %v1176 = vlaneseq
    %v1177 = vshrl.u32 %v1176, 7
    %v1178 = vsub.s32 0, %v1177
    %v1179 = vrot.slane %v1172, %v1178
    %v1180 = vlaneseq
    %v1181 = vshrl.u32 %v1180, 7
    %v1182 = vsub.s32 1, %v1181
    %v1183 = vrot.slane %v1172, %v1182
    %v1184 = vlaneseq
    %v1185 = vshrl.u32 %v1184, 7
    %v1186 = vsub.s32 2, %v1185
    %v1187 = vrot.slane %v1172, %v1186
    %v1188 = vlaneseq
    %v1189 = vshrl.u32 %v1188, 7
    %v1190 = vsub.s32 3, %v1189
    %v1191 = vrot.slane %v1172, %v1190
    %v1192 = vlaneseq
    %v1193 = vshrl.u32 %v1192, 7
    %v1194 = vsub.s32 4, %v1193
    %v1195 = vrot.slane %v1172, %v1194
    %v1196 = vlaneseq
    %v1197 = vshrl.u32 %v1196, 7
    %v1198 = vsub.s32 5, %v1197
    %v1199 = vrot.slane %v1172, %v1198
    %v1200 = vlaneseq
    %v1201 = vshrl.u32 %v1200, 7
    %v1202 = vsub.s32 6, %v1201
    %v1203 = vrot.slane %v1172, %v1202
    %v1204 = vlaneseq
    %v1205 = vshrl.u32 %v1204, 7
    %v1206 = vsub.s32 7, %v1205
    %v1207 = vrot.slane %v1172, %v1206
    %v1208 = vlaneseq
    %v1209 = vshrl.u32 %v1208, 7
    %v1210 = vsub.s32 0, %v1209
    %v1211 = vrot.slane %v1173, %v1210
    %v1212 = vlaneseq
    %v1213 = vshrl.u32 %v1212, 7
    %v1214 = vsub.s32 1, %v1213
    %v1215 = vrot.slane %v1173, %v1214
    %v1216 = vcombine.low %v1179, %v1183
    %v1217 = vcombine.low %v1187, %v1191
    %v1218 = vcombine.low %v1195, %v1199
    %v1219 = vcombine.low %v1203, %v1207
    %v1220 = vcombine.low %v1211, %v1215
    %v1226 = vrcp.pop %v1216
    %v1227 = vmul.f32 %v1154, %v1226
    %v1228 = vrcp.pop %v1217
    %v1229 = vmul.f32 %v1155, %v1228
    %v1230 = vrcp.pop %v1218
    %v1231 = vmul.f32 %v1156, %v1230
    %v1232 = vrcp.pop %v1219
    %v1233 = vmul.f32 %v1157, %v1232
    %v1234 = vrcp.pop %v1220
    %v1235 = vmul.f32 %v1158, %v1234
    %v1241 = vcombine.high %v1227, %v1227
    %v1242 = vcombine.high %v1229, %v1229
    %v1243 = vcombine.high %v1231, %v1231
    %v1244 = vcombine.high %v1233, %v1233
    %v1245 = vcombine.high %v1235, %v1235
    %1246 = vrot.lane.b32.xlu0 %v1227, 25
    %v1247 = vpop.permute.xlu0 %1246
    %1248 = vrot.lane.b32.xlu0 %v1241, 25
    %v1249 = vpop.permute.xlu0 %1248
    %1250 = vrot.lane.b32.xlu0 %v1229, 25
    %v1251 = vpop.permute.xlu0 %1250
    %1252 = vrot.lane.b32.xlu0 %v1242, 25
    %v1253 = vpop.permute.xlu0 %1252
    %1254 = vrot.lane.b32.xlu0 %v1231, 25
    %v1255 = vpop.permute.xlu0 %1254
    %1256 = vrot.lane.b32.xlu0 %v1243, 25
    %v1257 = vpop.permute.xlu0 %1256
    %1258 = vrot.lane.b32.xlu0 %v1233, 25
    %v1259 = vpop.permute.xlu0 %1258
    %1260 = vrot.lane.b32.xlu0 %v1244, 25
    %v1261 = vpop.permute.xlu0 %1260
    %1262 = vrot.lane.b32.xlu0 %v1235, 25
    %v1263 = vpop.permute.xlu0 %1262
    %1264 = vrot.lane.b32.xlu0 %v1245, 25
    %v1265 = vpop.permute.xlu0 %1264
    %v1266 = vsel %vm659, %v1247, %v1249
    %v1267 = vsel %vm659, %v1249, %v1251
    %v1268 = vsel %vm659, %v1251, %v1253
    %v1269 = vsel %vm659, %v1253, %v1255
    %v1270 = vsel %vm659, %v1255, %v1257
    %v1271 = vsel %vm659, %v1257, %v1259
    %v1272 = vsel %vm659, %v1259, %v1261
    %v1273 = vsel %vm659, %v1261, %v1263
    %v1274 = vsel %vm659, %v1263, %v1265
    %v1284 = vsel %vm620, %v1266, 0.0
    %v1285 = vsel %vm621, %v1267, 0.0
    %v1286 = vsel %vm622, %v1268, 0.0
    %v1287 = vsel %vm623, %v1269, 0.0
    %v1288 = vsel %vm624, %v1270, 0.0
    %v1289 = vsel %vm625, %v1271, 0.0
    %v1290 = vsel %vm626, %v1272, 0.0
    %v1291 = vsel %vm627, %v1273, 0.0
    %v1292 = vsel %vm628, %v1274, 0.0
    %v1293 = vsel %vm687, %v1284, 0.0
    %v1294 = vsel %vm687, %v1285, 0.0
    %v1295 = vadd.f32 %v1293, %v1294
    %v1296 = vsel %vm687, %v1286, 0.0
    %v1297 = vadd.f32 %v1295, %v1296
    %v1298 = vsel %vm687, %v1287, 0.0
    %v1299 = vadd.f32 %v1297, %v1298
    %v1300 = vsel %vm687, %v1288, 0.0
    %v1301 = vadd.f32 %v1299, %v1300
    %v1302 = vsel %vm687, %v1289, 0.0
    %v1303 = vadd.f32 %v1301, %v1302
    %v1304 = vsel %vm687, %v1290, 0.0
    %v1305 = vadd.f32 %v1303, %v1304
    %v1306 = vsel %vm687, %v1291, 0.0
    %v1307 = vadd.f32 %v1305, %v1306
    %v1308 = vsel %vm687, %v1292, 0.0
    %v1309 = vadd.f32 %v1307, %v1308
    %1310 = vadd.xlane.f32.xlu0 %v1309
    %v1311 = vpop.xlane.xlu0 %1310
    %v1312 = vmul.f32 %v1311, 0.001953125
    %v1313 = vmul.f32 %v1284, %v1284
    %v1314 = vmul.f32 %v1285, %v1285
    %v1315 = vmul.f32 %v1286, %v1286
    %v1316 = vmul.f32 %v1287, %v1287
    %v1317 = vmul.f32 %v1288, %v1288
    %v1318 = vmul.f32 %v1289, %v1289
    %v1319 = vmul.f32 %v1290, %v1290
    %v1320 = vmul.f32 %v1291, %v1291
    %v1321 = vmul.f32 %v1292, %v1292
    %v1322 = vsel %vm687, %v1313, 0.0
    %v1323 = vsel %vm687, %v1314, 0.0
    %v1324 = vadd.f32 %v1322, %v1323
    %v1325 = vsel %vm687, %v1315, 0.0
    %v1326 = vadd.f32 %v1324, %v1325
    %v1327 = vsel %vm687, %v1316, 0.0
    %v1328 = vadd.f32 %v1326, %v1327
    %v1329 = vsel %vm687, %v1317, 0.0
    %v1330 = vadd.f32 %v1328, %v1329
    %v1331 = vsel %vm687, %v1318, 0.0
    %v1332 = vadd.f32 %v1330, %v1331
    %v1333 = vsel %vm687, %v1319, 0.0
    %v1334 = vadd.f32 %v1332, %v1333
    %v1335 = vsel %vm687, %v1320, 0.0
    %v1336 = vadd.f32 %v1334, %v1335
    %v1337 = vsel %vm687, %v1321, 0.0
    %v1338 = vadd.f32 %v1336, %v1337
    %1339 = vadd.xlane.f32.xlu0 %v1338
    %v1340 = vpop.xlane.xlu0 %1339
    %v1341 = vmul.f32 %v1340, 0.001953125
    %v1342 = vmul.f32 %v1312, %v1312
    %v1343 = vsub.f32 %v1341, %v1342
    %v1344 = vmax.f32 %v1343, 0.0
    %v1345 = vsub.f32 %v1284, %v1312
    %v1346 = vsub.f32 %v1285, %v1312
    %v1347 = vsub.f32 %v1286, %v1312
    %v1348 = vsub.f32 %v1287, %v1312
    %v1349 = vsub.f32 %v1288, %v1312
    %v1350 = vsub.f32 %v1289, %v1312
    %v1351 = vsub.f32 %v1290, %v1312
    %v1352 = vsub.f32 %v1291, %v1312
    %v1353 = vsub.f32 %v1292, %v1312
    %v1354 = vadd.f32 %v1344, 1e-05
    %v1355 = vrsqrt.pop %v1354
    %v1356 = vmul.f32 %v1345, %v1355
    %v1357 = vmul.f32 %v1346, %v1355
    %v1358 = vmul.f32 %v1347, %v1355
    %v1359 = vmul.f32 %v1348, %v1355
    %v1360 = vmul.f32 %v1349, %v1355
    %v1361 = vmul.f32 %v1350, %v1355
    %v1362 = vmul.f32 %v1351, %v1355
    %v1363 = vmul.f32 %v1352, %v1355
    %v1364 = vmul.f32 %v1353, %v1355
    %v1365 = vsel %vm620, %v1356, 0.0
    %v1366 = vsel %vm621, %v1357, 0.0
    %v1367 = vsel %vm622, %v1358, 0.0
    %v1368 = vsel %vm623, %v1359, 0.0
    %v1369 = vsel %vm624, %v1360, 0.0
    %v1370 = vsel %vm625, %v1361, 0.0
    %v1371 = vsel %vm626, %v1362, 0.0
    %v1372 = vsel %vm627, %v1363, 0.0
    %v1373 = vsel %vm628, %v1364, 0.0
    %v1374 = vstv %s779
    %v1375 = vmul.f32 %v1374, %v1365
    %v1376 = vmul.f32 %v1374, %v1366
    %v1377 = vmul.f32 %v1374, %v1367
    %v1378 = vmul.f32 %v1374, %v1368
    %v1379 = vmul.f32 %v1374, %v1369
    %v1380 = vmul.f32 %v1374, %v1370
    %v1381 = vmul.f32 %v1374, %v1371
    %v1382 = vmul.f32 %v1374, %v1372
    %v1383 = vmul.f32 %v1374, %v1373
    %v1384 = vadd.f32 %v770, %v1375
    %v1385 = vadd.f32 %v771, %v1376
    %v1386 = vadd.f32 %v772, %v1377
    %v1387 = vadd.f32 %v773, %v1378
    %v1388 = vadd.f32 %v774, %v1379
    %v1389 = vadd.f32 %v775, %v1380
    %v1390 = vadd.f32 %v776, %v1381
    %v1391 = vadd.f32 %v777, %v1382
    %v1392 = vadd.f32 %v778, %v1383
    %s1393 = sld [smem:[#allocation2 + $0x3]]
    %v1394 = vstv %s1393
    %v1395 = vrot.slane %v63, 4
    %v1396 = vrot.slane %v64, 4
    %v1397 = vrot.slane %v65, 4
    %v1398 = vrot.slane %v66, 4
    %v1399 = vrot.slane %v67, 4
    %v1400 = vsel %vm687, %v1395, %v1396
    %v1401 = vsel %vm687, %v1396, %v1397
    %v1402 = vsel %vm687, %v1397, %v1398
    %v1403 = vsel %vm687, %v1398, %v1399
    %v1409 = vmul.f32 %v1394, %v1400
    %v1410 = vmul.f32 %v1394, %v1401
    %v1411 = vmul.f32 %v1394, %v1402
    %v1412 = vmul.f32 %v1394, %v1403
    %v1413 = vmul.f32 %v1394, %v1399
    %v1418 = vcombine.high %v1409, %v1409
    %v1419 = vcombine.high %v1410, %v1410
    %v1420 = vcombine.high %v1411, %v1411
    %v1421 = vcombine.high %v1412, %v1412
    %v1426 = vadd.f32 %v1384, %v1409
    %v1427 = vadd.f32 %v1385, %v1418
    %v1428 = vadd.f32 %v1386, %v1410
    %v1429 = vadd.f32 %v1387, %v1419
    %v1430 = vadd.f32 %v1388, %v1411
    %v1431 = vadd.f32 %v1389, %v1420
    %v1432 = vadd.f32 %v1390, %v1412
    %v1433 = vadd.f32 %v1391, %v1421
    %v1434 = vadd.f32 %v1392, %v1413
    %s1435 = sld [smem:[#allocation2 + $0x4]]
    %v1436 = vld [vmem:[%s3] sm:$0xf]
    %v1437 = vld [vmem:[%s4] sm:$0xf]
    %v1438 = vld [vmem:[%s5] sm:$0xf]
    %v1439 = vld [vmem:[%s6] sm:$0xf]
    %1441 = vset.pattern.permute.xlu0 0
    %1442 = vperm.xlu0 %1441, %v1436
    %v1443 = vpop.permute.xlu0 %1442
    %v1450 = vcombine.high %v71, %v71
    %v1451 = vcombine.high %v72, %v72
    %v1452 = vcombine.high %v73, %v73
    %v1453 = vcombine.high %v74, %v74
    %v1454 = vcombine.high %v75, %v75
    %1455 = vrot.lane.b32.xlu0 %v71, 50
    %v1456 = vpop.permute.xlu0 %1455
    %1457 = vrot.lane.b32.xlu0 %v1450, 50
    %v1458 = vpop.permute.xlu0 %1457
    %1459 = vrot.lane.b32.xlu0 %v72, 50
    %v1460 = vpop.permute.xlu0 %1459
    %1461 = vrot.lane.b32.xlu0 %v1451, 50
    %v1462 = vpop.permute.xlu0 %1461
    %1463 = vrot.lane.b32.xlu0 %v73, 50
    %v1464 = vpop.permute.xlu0 %1463
    %1465 = vrot.lane.b32.xlu0 %v1452, 50
    %v1466 = vpop.permute.xlu0 %1465
    %1467 = vrot.lane.b32.xlu0 %v74, 50
    %v1468 = vpop.permute.xlu0 %1467
    %1469 = vrot.lane.b32.xlu0 %v1453, 50
    %v1470 = vpop.permute.xlu0 %1469
    %1471 = vrot.lane.b32.xlu0 %v75, 50
    %v1472 = vpop.permute.xlu0 %1471
    %1473 = vrot.lane.b32.xlu0 %v1454, 50
    %v1474 = vpop.permute.xlu0 %1473
    %vm1475 = vcmask 408576
    %v1476 = vsel %vm1475, %v1456, %v1458
    %v1477 = vsel %vm1475, %v1458, %v1460
    %v1478 = vsel %vm1475, %v1460, %v1462
    %v1479 = vsel %vm1475, %v1462, %v1464
    %v1480 = vsel %vm1475, %v1464, %v1466
    %v1481 = vsel %vm1475, %v1466, %v1468
    %v1482 = vsel %vm1475, %v1468, %v1470
    %v1483 = vsel %vm1475, %v1470, %v1472
    %v1484 = vsel %vm1475, %v1472, %v1474
    %v1495 = vmul.f32 %v1443, %v1476
    %v1496 = vmul.f32 %v1443, %v1477
    %v1497 = vmul.f32 %v1443, %v1478
    %v1498 = vmul.f32 %v1443, %v1479
    %v1499 = vmul.f32 %v1443, %v1480
    %v1500 = vmul.f32 %v1443, %v1481
    %v1501 = vmul.f32 %v1443, %v1482
    %v1502 = vmul.f32 %v1443, %v1483
    %v1503 = vmul.f32 %v1443, %v1484
    %v1504 = vmul.f32 %v1443, %v1474
    %1505 = vset.pattern.permute.xlu0 1
    %1506 = vperm.xlu0 %1505, %v1436
    %v1507 = vpop.permute.xlu0 %1506
    %1510 = vrot.lane.b32.xlu0 %v71, 49
    %v1511 = vpop.permute.xlu0 %1510
    %1512 = vrot.lane.b32.xlu0 %v1450, 49
    %v1513 = vpop.permute.xlu0 %1512
    %1514 = vrot.lane.b32.xlu0 %v72, 49
    %v1515 = vpop.permute.xlu0 %1514
    %1516 = vrot.lane.b32.xlu0 %v1451, 49
    %v1517 = vpop.permute.xlu0 %1516
    %1518 = vrot.lane.b32.xlu0 %v73, 49
    %v1519 = vpop.permute.xlu0 %1518
    %1520 = vrot.lane.b32.xlu0 %v1452, 49
    %v1521 = vpop.permute.xlu0 %1520
    %1522 = vrot.lane.b32.xlu0 %v74, 49
    %v1523 = vpop.permute.xlu0 %1522
    %1524 = vrot.lane.b32.xlu0 %v1453, 49
    %v1525 = vpop.permute.xlu0 %1524
    %1526 = vrot.lane.b32.xlu0 %v75, 49
    %v1527 = vpop.permute.xlu0 %1526
    %1528 = vrot.lane.b32.xlu0 %v1454, 49
    %v1529 = vpop.permute.xlu0 %1528
    %1530 = vrot.lane.b32.xlu0 %v76, 49
    %v1531 = vpop.permute.xlu0 %1530
    %vm1532 = vcmask 400384
    %v1533 = vsel %vm1532, %v1511, %v1513
    %v1534 = vsel %vm1532, %v1513, %v1515
    %v1535 = vsel %vm1532, %v1515, %v1517
    %v1536 = vsel %vm1532, %v1517, %v1519
    %v1537 = vsel %vm1532, %v1519, %v1521
    %v1538 = vsel %vm1532, %v1521, %v1523
    %v1539 = vsel %vm1532, %v1523, %v1525
    %v1540 = vsel %vm1532, %v1525, %v1527
    %v1541 = vsel %vm1532, %v1527, %v1529
    %v1542 = vsel %vm1532, %v1529, %v1531
    %v1553 = vmul.f32 %v1507, %v1533
    %v1554 = vmul.f32 %v1507, %v1534
    %v1555 = vmul.f32 %v1507, %v1535
    %v1556 = vmul.f32 %v1507, %v1536
    %v1557 = vmul.f32 %v1507, %v1537
    %v1558 = vmul.f32 %v1507, %v1538
    %v1559 = vmul.f32 %v1507, %v1539
    %v1560 = vmul.f32 %v1507, %v1540
    %v1561 = vmul.f32 %v1507, %v1541
    %v1562 = vmul.f32 %v1507, %v1542
    %v1563 = vadd.f32 %v1495, %v1553
    %v1564 = vadd.f32 %v1496, %v1554
    %v1565 = vadd.f32 %v1497, %v1555
    %v1566 = vadd.f32 %v1498, %v1556
    %v1567 = vadd.f32 %v1499, %v1557
    %v1568 = vadd.f32 %v1500, %v1558
    %v1569 = vadd.f32 %v1501, %v1559
    %v1570 = vadd.f32 %v1502, %v1560
    %v1571 = vadd.f32 %v1503, %v1561
    %v1572 = vadd.f32 %v1504, %v1562
    %1573 = vset.pattern.permute.xlu0 2
    %1574 = vperm.xlu0 %1573, %v1436
    %v1575 = vpop.permute.xlu0 %1574
    %1577 = vrot.lane.b32.xlu0 %v71, 48
    %v1578 = vpop.permute.xlu0 %1577
    %1579 = vrot.lane.b32.xlu0 %v1450, 48
    %v1580 = vpop.permute.xlu0 %1579
    %1581 = vrot.lane.b32.xlu0 %v72, 48
    %v1582 = vpop.permute.xlu0 %1581
    %1583 = vrot.lane.b32.xlu0 %v1451, 48
    %v1584 = vpop.permute.xlu0 %1583
    %1585 = vrot.lane.b32.xlu0 %v73, 48
    %v1586 = vpop.permute.xlu0 %1585
    %1587 = vrot.lane.b32.xlu0 %v1452, 48
    %v1588 = vpop.permute.xlu0 %1587
    %1589 = vrot.lane.b32.xlu0 %v74, 48
    %v1590 = vpop.permute.xlu0 %1589
    %1591 = vrot.lane.b32.xlu0 %v1453, 48
    %v1592 = vpop.permute.xlu0 %1591
    %1593 = vrot.lane.b32.xlu0 %v75, 48
    %v1594 = vpop.permute.xlu0 %1593
    %1595 = vrot.lane.b32.xlu0 %v1454, 48
    %v1596 = vpop.permute.xlu0 %1595
    %1597 = vrot.lane.b32.xlu0 %v76, 48
    %v1598 = vpop.permute.xlu0 %1597
    %vm1599 = vcmask 392192
    %v1600 = vsel %vm1599, %v1578, %v1580
    %v1601 = vsel %vm1599, %v1580, %v1582
    %v1602 = vsel %vm1599, %v1582, %v1584
    %v1603 = vsel %vm1599, %v1584, %v1586
    %v1604 = vsel %vm1599, %v1586, %v1588
    %v1605 = vsel %vm1599, %v1588, %v1590
    %v1606 = vsel %vm1599, %v1590, %v1592
    %v1607 = vsel %vm1599, %v1592, %v1594
    %v1608 = vsel %vm1599, %v1594, %v1596
    %v1609 = vsel %vm1599, %v1596, %v1598
    %v1620 = vmul.f32 %v1575, %v1600
    %v1621 = vmul.f32 %v1575, %v1601
    %v1622 = vmul.f32 %v1575, %v1602
    %v1623 = vmul.f32 %v1575, %v1603
    %v1624 = vmul.f32 %v1575, %v1604
    %v1625 = vmul.f32 %v1575, %v1605
    %v1626 = vmul.f32 %v1575, %v1606
    %v1627 = vmul.f32 %v1575, %v1607
    %v1628 = vmul.f32 %v1575, %v1608
    %v1629 = vmul.f32 %v1575, %v1609
    %v1630 = vadd.f32 %v1563, %v1620
    %v1631 = vadd.f32 %v1564, %v1621
    %v1632 = vadd.f32 %v1565, %v1622
    %v1633 = vadd.f32 %v1566, %v1623
    %v1634 = vadd.f32 %v1567, %v1624
    %v1635 = vadd.f32 %v1568, %v1625
    %v1636 = vadd.f32 %v1569, %v1626
    %v1637 = vadd.f32 %v1570, %v1627
    %v1638 = vadd.f32 %v1571, %v1628
    %v1639 = vadd.f32 %v1572, %v1629
    %1640 = vset.pattern.permute.xlu0 3
    %1641 = vperm.xlu0 %1640, %v1436
    %v1642 = vpop.permute.xlu0 %1641
    %1644 = vrot.lane.b32.xlu0 %v71, 26
    %v1645 = vpop.permute.xlu0 %1644
    %1646 = vrot.lane.b32.xlu0 %v1450, 26
    %v1647 = vpop.permute.xlu0 %1646
    %1648 = vrot.lane.b32.xlu0 %v72, 26
    %v1649 = vpop.permute.xlu0 %1648
    %1650 = vrot.lane.b32.xlu0 %v1451, 26
    %v1651 = vpop.permute.xlu0 %1650
    %1652 = vrot.lane.b32.xlu0 %v73, 26
    %v1653 = vpop.permute.xlu0 %1652
    %1654 = vrot.lane.b32.xlu0 %v1452, 26
    %v1655 = vpop.permute.xlu0 %1654
    %1656 = vrot.lane.b32.xlu0 %v74, 26
    %v1657 = vpop.permute.xlu0 %1656
    %1658 = vrot.lane.b32.xlu0 %v1453, 26
    %v1659 = vpop.permute.xlu0 %1658
    %1660 = vrot.lane.b32.xlu0 %v75, 26
    %v1661 = vpop.permute.xlu0 %1660
    %1662 = vrot.lane.b32.xlu0 %v1454, 26
    %v1663 = vpop.permute.xlu0 %1662
    %1664 = vrot.lane.b32.xlu0 %v76, 26
    %v1665 = vpop.permute.xlu0 %1664
    %vm1666 = vcmask 211968
    %v1667 = vsel %vm1666, %v1645, %v1647
    %v1668 = vsel %vm1666, %v1647, %v1649
    %v1669 = vsel %vm1666, %v1649, %v1651
    %v1670 = vsel %vm1666, %v1651, %v1653
    %v1671 = vsel %vm1666, %v1653, %v1655
    %v1672 = vsel %vm1666, %v1655, %v1657
    %v1673 = vsel %vm1666, %v1657, %v1659
    %v1674 = vsel %vm1666, %v1659, %v1661
    %v1675 = vsel %vm1666, %v1661, %v1663
    %v1676 = vsel %vm1666, %v1663, %v1665
    %v1687 = vmul.f32 %v1642, %v1667
    %v1688 = vmul.f32 %v1642, %v1668
    %v1689 = vmul.f32 %v1642, %v1669
    %v1690 = vmul.f32 %v1642, %v1670
    %v1691 = vmul.f32 %v1642, %v1671
    %v1692 = vmul.f32 %v1642, %v1672
    %v1693 = vmul.f32 %v1642, %v1673
    %v1694 = vmul.f32 %v1642, %v1674
    %v1695 = vmul.f32 %v1642, %v1675
    %v1696 = vmul.f32 %v1642, %v1676
    %v1697 = vadd.f32 %v1630, %v1687
    %v1698 = vadd.f32 %v1631, %v1688
    %v1699 = vadd.f32 %v1632, %v1689
    %v1700 = vadd.f32 %v1633, %v1690
    %v1701 = vadd.f32 %v1634, %v1691
    %v1702 = vadd.f32 %v1635, %v1692
    %v1703 = vadd.f32 %v1636, %v1693
    %v1704 = vadd.f32 %v1637, %v1694
    %v1705 = vadd.f32 %v1638, %v1695
    %v1706 = vadd.f32 %v1639, %v1696
    %1707 = vset.pattern.permute.xlu0 4
    %1708 = vperm.xlu0 %1707, %v1436
    %v1709 = vpop.permute.xlu0 %1708
    %1711 = vrot.lane.b32.xlu0 %v71, 25
    %v1712 = vpop.permute.xlu0 %1711
    %1713 = vrot.lane.b32.xlu0 %v1450, 25
    %v1714 = vpop.permute.xlu0 %1713
    %1715 = vrot.lane.b32.xlu0 %v72, 25
    %v1716 = vpop.permute.xlu0 %1715
    %1717 = vrot.lane.b32.xlu0 %v1451, 25
    %v1718 = vpop.permute.xlu0 %1717
    %1719 = vrot.lane.b32.xlu0 %v73, 25
    %v1720 = vpop.permute.xlu0 %1719
    %1721 = vrot.lane.b32.xlu0 %v1452, 25
    %v1722 = vpop.permute.xlu0 %1721
    %1723 = vrot.lane.b32.xlu0 %v74, 25
    %v1724 = vpop.permute.xlu0 %1723
    %1725 = vrot.lane.b32.xlu0 %v1453, 25
    %v1726 = vpop.permute.xlu0 %1725
    %1727 = vrot.lane.b32.xlu0 %v75, 25
    %v1728 = vpop.permute.xlu0 %1727
    %1729 = vrot.lane.b32.xlu0 %v1454, 25
    %v1730 = vpop.permute.xlu0 %1729
    %1731 = vrot.lane.b32.xlu0 %v76, 25
    %v1732 = vpop.permute.xlu0 %1731
    %v1733 = vsel %vm659, %v1712, %v1714
    %v1734 = vsel %vm659, %v1714, %v1716
    %v1735 = vsel %vm659, %v1716, %v1718
    %v1736 = vsel %vm659, %v1718, %v1720
    %v1737 = vsel %vm659, %v1720, %v1722
    %v1738 = vsel %vm659, %v1722, %v1724
    %v1739 = vsel %vm659, %v1724, %v1726
    %v1740 = vsel %vm659, %v1726, %v1728
    %v1741 = vsel %vm659, %v1728, %v1730
    %v1742 = vsel %vm659, %v1730, %v1732
    %v1753 = vmul.f32 %v1709, %v1733
    %v1754 = vmul.f32 %v1709, %v1734
    %v1755 = vmul.f32 %v1709, %v1735
    %v1756 = vmul.f32 %v1709, %v1736
    %v1757 = vmul.f32 %v1709, %v1737
    %v1758 = vmul.f32 %v1709, %v1738
    %v1759 = vmul.f32 %v1709, %v1739
    %v1760 = vmul.f32 %v1709, %v1740
    %v1761 = vmul.f32 %v1709, %v1741
    %v1762 = vmul.f32 %v1709, %v1742
    %v1763 = vadd.f32 %v1697, %v1753
    %v1764 = vadd.f32 %v1698, %v1754
    %v1765 = vadd.f32 %v1699, %v1755
    %v1766 = vadd.f32 %v1700, %v1756
    %v1767 = vadd.f32 %v1701, %v1757
    %v1768 = vadd.f32 %v1702, %v1758
    %v1769 = vadd.f32 %v1703, %v1759
    %v1770 = vadd.f32 %v1704, %v1760
    %v1771 = vadd.f32 %v1705, %v1761
    %v1772 = vadd.f32 %v1706, %v1762
    %1773 = vset.pattern.permute.xlu0 5
    %1774 = vperm.xlu0 %1773, %v1436
    %v1775 = vpop.permute.xlu0 %1774
    %1777 = vrot.lane.b32.xlu0 %v71, 24
    %v1778 = vpop.permute.xlu0 %1777
    %1779 = vrot.lane.b32.xlu0 %v1450, 24
    %v1780 = vpop.permute.xlu0 %1779
    %1781 = vrot.lane.b32.xlu0 %v72, 24
    %v1782 = vpop.permute.xlu0 %1781
    %1783 = vrot.lane.b32.xlu0 %v1451, 24
    %v1784 = vpop.permute.xlu0 %1783
    %1785 = vrot.lane.b32.xlu0 %v73, 24
    %v1786 = vpop.permute.xlu0 %1785
    %1787 = vrot.lane.b32.xlu0 %v1452, 24
    %v1788 = vpop.permute.xlu0 %1787
    %1789 = vrot.lane.b32.xlu0 %v74, 24
    %v1790 = vpop.permute.xlu0 %1789
    %1791 = vrot.lane.b32.xlu0 %v1453, 24
    %v1792 = vpop.permute.xlu0 %1791
    %1793 = vrot.lane.b32.xlu0 %v75, 24
    %v1794 = vpop.permute.xlu0 %1793
    %1795 = vrot.lane.b32.xlu0 %v1454, 24
    %v1796 = vpop.permute.xlu0 %1795
    %1797 = vrot.lane.b32.xlu0 %v76, 24
    %v1798 = vpop.permute.xlu0 %1797
    %vm1799 = vcmask 195584
    %v1800 = vsel %vm1799, %v1778, %v1780
    %v1801 = vsel %vm1799, %v1780, %v1782
    %v1802 = vsel %vm1799, %v1782, %v1784
    %v1803 = vsel %vm1799, %v1784, %v1786
    %v1804 = vsel %vm1799, %v1786, %v1788
    %v1805 = vsel %vm1799, %v1788, %v1790
    %v1806 = vsel %vm1799, %v1790, %v1792
    %v1807 = vsel %vm1799, %v1792, %v1794
    %v1808 = vsel %vm1799, %v1794, %v1796
    %v1809 = vsel %vm1799, %v1796, %v1798
    %v1820 = vmul.f32 %v1775, %v1800
    %v1821 = vmul.f32 %v1775, %v1801
    %v1822 = vmul.f32 %v1775, %v1802
    %v1823 = vmul.f32 %v1775, %v1803
    %v1824 = vmul.f32 %v1775, %v1804
    %v1825 = vmul.f32 %v1775, %v1805
    %v1826 = vmul.f32 %v1775, %v1806
    %v1827 = vmul.f32 %v1775, %v1807
    %v1828 = vmul.f32 %v1775, %v1808
    %v1829 = vmul.f32 %v1775, %v1809
    %v1830 = vadd.f32 %v1763, %v1820
    %v1831 = vadd.f32 %v1764, %v1821
    %v1832 = vadd.f32 %v1765, %v1822
    %v1833 = vadd.f32 %v1766, %v1823
    %v1834 = vadd.f32 %v1767, %v1824
    %v1835 = vadd.f32 %v1768, %v1825
    %v1836 = vadd.f32 %v1769, %v1826
    %v1837 = vadd.f32 %v1770, %v1827
    %v1838 = vadd.f32 %v1771, %v1828
    %v1839 = vadd.f32 %v1772, %v1829
    %1840 = vset.pattern.permute.xlu0 6
    %1841 = vperm.xlu0 %1840, %v1436
    %v1842 = vpop.permute.xlu0 %1841
    %1844 = vrot.lane.b32.xlu0 %v71, 2
    %v1845 = vpop.permute.xlu0 %1844
    %1846 = vrot.lane.b32.xlu0 %v1450, 2
    %v1847 = vpop.permute.xlu0 %1846
    %1848 = vrot.lane.b32.xlu0 %v72, 2
    %v1849 = vpop.permute.xlu0 %1848
    %1850 = vrot.lane.b32.xlu0 %v1451, 2
    %v1851 = vpop.permute.xlu0 %1850
    %1852 = vrot.lane.b32.xlu0 %v73, 2
    %v1853 = vpop.permute.xlu0 %1852
    %1854 = vrot.lane.b32.xlu0 %v1452, 2
    %v1855 = vpop.permute.xlu0 %1854
    %1856 = vrot.lane.b32.xlu0 %v74, 2
    %v1857 = vpop.permute.xlu0 %1856
    %1858 = vrot.lane.b32.xlu0 %v1453, 2
    %v1859 = vpop.permute.xlu0 %1858
    %1860 = vrot.lane.b32.xlu0 %v75, 2
    %v1861 = vpop.permute.xlu0 %1860
    %1862 = vrot.lane.b32.xlu0 %v1454, 2
    %v1863 = vpop.permute.xlu0 %1862
    %1864 = vrot.lane.b32.xlu0 %v76, 2
    %v1865 = vpop.permute.xlu0 %1864
    %vm1866 = vcmask 15360
    %v1867 = vsel %vm1866, %v1845, %v1847
    %v1868 = vsel %vm1866, %v1847, %v1849
    %v1869 = vsel %vm1866, %v1849, %v1851
    %v1870 = vsel %vm1866, %v1851, %v1853
    %v1871 = vsel %vm1866, %v1853, %v1855
    %v1872 = vsel %vm1866, %v1855, %v1857
    %v1873 = vsel %vm1866, %v1857, %v1859
    %v1874 = vsel %vm1866, %v1859, %v1861
    %v1875 = vsel %vm1866, %v1861, %v1863
    %v1876 = vsel %vm1866, %v1863, %v1865
    %v1887 = vmul.f32 %v1842, %v1867
    %v1888 = vmul.f32 %v1842, %v1868
    %v1889 = vmul.f32 %v1842, %v1869
    %v1890 = vmul.f32 %v1842, %v1870
    %v1891 = vmul.f32 %v1842, %v1871
    %v1892 = vmul.f32 %v1842, %v1872
    %v1893 = vmul.f32 %v1842, %v1873
    %v1894 = vmul.f32 %v1842, %v1874
    %v1895 = vmul.f32 %v1842, %v1875
    %v1896 = vmul.f32 %v1842, %v1876
    %v1897 = vadd.f32 %v1830, %v1887
    %v1898 = vadd.f32 %v1831, %v1888
    %v1899 = vadd.f32 %v1832, %v1889
    %v1900 = vadd.f32 %v1833, %v1890
    %v1901 = vadd.f32 %v1834, %v1891
    %v1902 = vadd.f32 %v1835, %v1892
    %v1903 = vadd.f32 %v1836, %v1893
    %v1904 = vadd.f32 %v1837, %v1894
    %v1905 = vadd.f32 %v1838, %v1895
    %v1906 = vadd.f32 %v1839, %v1896
    %1907 = vset.pattern.permute.xlu0 7
    %1908 = vperm.xlu0 %1907, %v1436
    %v1909 = vpop.permute.xlu0 %1908
    %1911 = vrot.lane.b32.xlu0 %v71, 1
    %v1912 = vpop.permute.xlu0 %1911
    %1913 = vrot.lane.b32.xlu0 %v1450, 1
    %v1914 = vpop.permute.xlu0 %1913
    %1915 = vrot.lane.b32.xlu0 %v72, 1
    %v1916 = vpop.permute.xlu0 %1915
    %1917 = vrot.lane.b32.xlu0 %v1451, 1
    %v1918 = vpop.permute.xlu0 %1917
    %1919 = vrot.lane.b32.xlu0 %v73, 1
    %v1920 = vpop.permute.xlu0 %1919
    %1921 = vrot.lane.b32.xlu0 %v1452, 1
    %v1922 = vpop.permute.xlu0 %1921
    %1923 = vrot.lane.b32.xlu0 %v74, 1
    %v1924 = vpop.permute.xlu0 %1923
    %1925 = vrot.lane.b32.xlu0 %v1453, 1
    %v1926 = vpop.permute.xlu0 %1925
    %1927 = vrot.lane.b32.xlu0 %v75, 1
    %v1928 = vpop.permute.xlu0 %1927
    %1929 = vrot.lane.b32.xlu0 %v1454, 1
    %v1930 = vpop.permute.xlu0 %1929
    %1931 = vrot.lane.b32.xlu0 %v76, 1
    %v1932 = vpop.permute.xlu0 %1931
    %vm1933 = vcmask 7168
    %v1934 = vsel %vm1933, %v1912, %v1914
    %v1935 = vsel %vm1933, %v1914, %v1916
    %v1936 = vsel %vm1933, %v1916, %v1918
    %v1937 = vsel %vm1933, %v1918, %v1920
    %v1938 = vsel %vm1933, %v1920, %v1922
    %v1939 = vsel %vm1933, %v1922, %v1924
    %v1940 = vsel %vm1933, %v1924, %v1926
    %v1941 = vsel %vm1933, %v1926, %v1928
    %v1942 = vsel %vm1933, %v1928, %v1930
    %v1943 = vsel %vm1933, %v1930, %v1932
    %v1954 = vmul.f32 %v1909, %v1934
    %v1955 = vmul.f32 %v1909, %v1935
    %v1956 = vmul.f32 %v1909, %v1936
    %v1957 = vmul.f32 %v1909, %v1937
    %v1958 = vmul.f32 %v1909, %v1938
    %v1959 = vmul.f32 %v1909, %v1939
    %v1960 = vmul.f32 %v1909, %v1940
    %v1961 = vmul.f32 %v1909, %v1941
    %v1962 = vmul.f32 %v1909, %v1942
    %v1963 = vmul.f32 %v1909, %v1943
    %v1964 = vadd.f32 %v1897, %v1954
    %v1965 = vadd.f32 %v1898, %v1955
    %v1966 = vadd.f32 %v1899, %v1956
    %v1967 = vadd.f32 %v1900, %v1957
    %v1968 = vadd.f32 %v1901, %v1958
    %v1969 = vadd.f32 %v1902, %v1959
    %v1970 = vadd.f32 %v1903, %v1960
    %v1971 = vadd.f32 %v1904, %v1961
    %v1972 = vadd.f32 %v1905, %v1962
    %v1973 = vadd.f32 %v1906, %v1963
    %1974 = vset.pattern.permute.xlu0 8
    %1975 = vperm.xlu0 %1974, %v1436
    %v1976 = vpop.permute.xlu0 %1975
    %v1983 = vmul.f32 %v1976, %v1450
    %v1984 = vmul.f32 %v1976, %v72
    %v1985 = vmul.f32 %v1976, %v1451
    %v1986 = vmul.f32 %v1976, %v73
    %v1987 = vmul.f32 %v1976, %v1452
    %v1988 = vmul.f32 %v1976, %v74
    %v1989 = vmul.f32 %v1976, %v1453
    %v1990 = vmul.f32 %v1976, %v75
    %v1991 = vmul.f32 %v1976, %v1454
    %v1992 = vmul.f32 %v1976, %v76
    %v1993 = vadd.f32 %v1964, %v1983
    %v1994 = vadd.f32 %v1965, %v1984
    %v1995 = vadd.f32 %v1966, %v1985
    %v1996 = vadd.f32 %v1967, %v1986
    %v1997 = vadd.f32 %v1968, %v1987
    %v1998 = vadd.f32 %v1969, %v1988
    %v1999 = vadd.f32 %v1970, %v1989
    %v2000 = vadd.f32 %v1971, %v1990
    %v2001 = vadd.f32 %v1972, %v1991
    %v2002 = vadd.f32 %v1973, %v1992
    %2004 = vset.pattern.permute.xlu0 0
    %2005 = vperm.xlu0 %2004, %v1437
    %v2006 = vpop.permute.xlu0 %2005
    %v2008 = vlaneseq
    %v2009 = vshrl.u32 %v2008, 7
    %v2010 = vsub.s32 0, %v2009
    %v2011 = vrot.slane %v1993, %v2010
    %v2012 = vlaneseq
    %v2013 = vshrl.u32 %v2012, 7
    %v2014 = vsub.s32 0, %v2013
    %v2015 = vrot.slane %v1994, %v2014
    %v2016 = vlaneseq
    %v2017 = vshrl.u32 %v2016, 7
    %v2018 = vsub.s32 0, %v2017
    %v2019 = vrot.slane %v1995, %v2018
    %v2020 = vlaneseq
    %v2021 = vshrl.u32 %v2020, 7
    %v2022 = vsub.s32 0, %v2021
    %v2023 = vrot.slane %v1996, %v2022
    %v2024 = vlaneseq
    %v2025 = vshrl.u32 %v2024, 7
    %v2026 = vsub.s32 0, %v2025
    %v2027 = vrot.slane %v1997, %v2026
    %v2028 = vlaneseq
    %v2029 = vshrl.u32 %v2028, 7
    %v2030 = vsub.s32 0, %v2029
    %v2031 = vrot.slane %v1998, %v2030
    %v2032 = vlaneseq
    %v2033 = vshrl.u32 %v2032, 7
    %v2034 = vsub.s32 0, %v2033
    %v2035 = vrot.slane %v1999, %v2034
    %v2036 = vlaneseq
    %v2037 = vshrl.u32 %v2036, 7
    %v2038 = vsub.s32 0, %v2037
    %v2039 = vrot.slane %v2000, %v2038
    %v2040 = vlaneseq
    %v2041 = vshrl.u32 %v2040, 7
    %v2042 = vsub.s32 0, %v2041
    %v2043 = vrot.slane %v2001, %v2042
    %v2044 = vlaneseq
    %v2045 = vshrl.u32 %v2044, 7
    %v2046 = vsub.s32 0, %v2045
    %v2047 = vrot.slane %v2002, %v2046
    %v2048 = vmul.f32 %v2006, %v2011
    %v2049 = vmul.f32 %v2006, %v2015
    %v2050 = vmul.f32 %v2006, %v2019
    %v2051 = vmul.f32 %v2006, %v2023
    %v2052 = vmul.f32 %v2006, %v2027
    %v2053 = vmul.f32 %v2006, %v2031
    %v2054 = vmul.f32 %v2006, %v2035
    %v2055 = vmul.f32 %v2006, %v2039
    %v2056 = vmul.f32 %v2006, %v2043
    %v2057 = vmul.f32 %v2006, %v2047
    %2058 = vset.pattern.permute.xlu0 1
    %2059 = vperm.xlu0 %2058, %v1437
    %v2060 = vpop.permute.xlu0 %2059
    %v2062 = vlaneseq
    %v2063 = vshrl.u32 %v2062, 7
    %v2064 = vsub.s32 1, %v2063
    %v2065 = vrot.slane %v1993, %v2064
    %v2066 = vlaneseq
    %v2067 = vshrl.u32 %v2066, 7
    %v2068 = vsub.s32 1, %v2067
    %v2069 = vrot.slane %v1994, %v2068
    %v2070 = vlaneseq
    %v2071 = vshrl.u32 %v2070, 7
    %v2072 = vsub.s32 1, %v2071
    %v2073 = vrot.slane %v1995, %v2072
    %v2074 = vlaneseq
    %v2075 = vshrl.u32 %v2074, 7
    %v2076 = vsub.s32 1, %v2075
    %v2077 = vrot.slane %v1996, %v2076
    %v2078 = vlaneseq
    %v2079 = vshrl.u32 %v2078, 7
    %v2080 = vsub.s32 1, %v2079
    %v2081 = vrot.slane %v1997, %v2080
    %v2082 = vlaneseq
    %v2083 = vshrl.u32 %v2082, 7
    %v2084 = vsub.s32 1, %v2083
    %v2085 = vrot.slane %v1998, %v2084
    %v2086 = vlaneseq
    %v2087 = vshrl.u32 %v2086, 7
    %v2088 = vsub.s32 1, %v2087
    %v2089 = vrot.slane %v1999, %v2088
    %v2090 = vlaneseq
    %v2091 = vshrl.u32 %v2090, 7
    %v2092 = vsub.s32 1, %v2091
    %v2093 = vrot.slane %v2000, %v2092
    %v2094 = vlaneseq
    %v2095 = vshrl.u32 %v2094, 7
    %v2096 = vsub.s32 1, %v2095
    %v2097 = vrot.slane %v2001, %v2096
    %v2098 = vlaneseq
    %v2099 = vshrl.u32 %v2098, 7
    %v2100 = vsub.s32 1, %v2099
    %v2101 = vrot.slane %v2002, %v2100
    %v2102 = vmul.f32 %v2060, %v2065
    %v2103 = vmul.f32 %v2060, %v2069
    %v2104 = vmul.f32 %v2060, %v2073
    %v2105 = vmul.f32 %v2060, %v2077
    %v2106 = vmul.f32 %v2060, %v2081
    %v2107 = vmul.f32 %v2060, %v2085
    %v2108 = vmul.f32 %v2060, %v2089
    %v2109 = vmul.f32 %v2060, %v2093
    %v2110 = vmul.f32 %v2060, %v2097
    %v2111 = vmul.f32 %v2060, %v2101
    %v2112 = vadd.f32 %v2048, %v2102
    %v2113 = vadd.f32 %v2049, %v2103
    %v2114 = vadd.f32 %v2050, %v2104
    %v2115 = vadd.f32 %v2051, %v2105
    %v2116 = vadd.f32 %v2052, %v2106
    %v2117 = vadd.f32 %v2053, %v2107
    %v2118 = vadd.f32 %v2054, %v2108
    %v2119 = vadd.f32 %v2055, %v2109
    %v2120 = vadd.f32 %v2056, %v2110
    %v2121 = vadd.f32 %v2057, %v2111
    %2122 = vset.pattern.permute.xlu0 2
    %2123 = vperm.xlu0 %2122, %v1437
    %v2124 = vpop.permute.xlu0 %2123
    %v2126 = vlaneseq
    %v2127 = vshrl.u32 %v2126, 7
    %v2128 = vsub.s32 2, %v2127
    %v2129 = vrot.slane %v1993, %v2128
    %v2130 = vlaneseq
    %v2131 = vshrl.u32 %v2130, 7
    %v2132 = vsub.s32 2, %v2131
    %v2133 = vrot.slane %v1994, %v2132
    %v2134 = vlaneseq
    %v2135 = vshrl.u32 %v2134, 7
    %v2136 = vsub.s32 2, %v2135
    %v2137 = vrot.slane %v1995, %v2136
    %v2138 = vlaneseq
    %v2139 = vshrl.u32 %v2138, 7
    %v2140 = vsub.s32 2, %v2139
    %v2141 = vrot.slane %v1996, %v2140
    %v2142 = vlaneseq
    %v2143 = vshrl.u32 %v2142, 7
    %v2144 = vsub.s32 2, %v2143
    %v2145 = vrot.slane %v1997, %v2144
    %v2146 = vlaneseq
    %v2147 = vshrl.u32 %v2146, 7
    %v2148 = vsub.s32 2, %v2147
    %v2149 = vrot.slane %v1998, %v2148
    %v2150 = vlaneseq
    %v2151 = vshrl.u32 %v2150, 7
    %v2152 = vsub.s32 2, %v2151
    %v2153 = vrot.slane %v1999, %v2152
    %v2154 = vlaneseq
    %v2155 = vshrl.u32 %v2154, 7
    %v2156 = vsub.s32 2, %v2155
    %v2157 = vrot.slane %v2000, %v2156
    %v2158 = vlaneseq
    %v2159 = vshrl.u32 %v2158, 7
    %v2160 = vsub.s32 2, %v2159
    %v2161 = vrot.slane %v2001, %v2160
    %v2162 = vlaneseq
    %v2163 = vshrl.u32 %v2162, 7
    %v2164 = vsub.s32 2, %v2163
    %v2165 = vrot.slane %v2002, %v2164
    %v2166 = vmul.f32 %v2124, %v2129
    %v2167 = vmul.f32 %v2124, %v2133
    %v2168 = vmul.f32 %v2124, %v2137
    %v2169 = vmul.f32 %v2124, %v2141
    %v2170 = vmul.f32 %v2124, %v2145
    %v2171 = vmul.f32 %v2124, %v2149
    %v2172 = vmul.f32 %v2124, %v2153
    %v2173 = vmul.f32 %v2124, %v2157
    %v2174 = vmul.f32 %v2124, %v2161
    %v2175 = vmul.f32 %v2124, %v2165
    %v2176 = vadd.f32 %v2112, %v2166
    %v2177 = vadd.f32 %v2113, %v2167
    %v2178 = vadd.f32 %v2114, %v2168
    %v2179 = vadd.f32 %v2115, %v2169
    %v2180 = vadd.f32 %v2116, %v2170
    %v2181 = vadd.f32 %v2117, %v2171
    %v2182 = vadd.f32 %v2118, %v2172
    %v2183 = vadd.f32 %v2119, %v2173
    %v2184 = vadd.f32 %v2120, %v2174
    %v2185 = vadd.f32 %v2121, %v2175
    %2186 = vset.pattern.permute.xlu0 3
    %2187 = vperm.xlu0 %2186, %v1437
    %v2188 = vpop.permute.xlu0 %2187
    %v2190 = vlaneseq
    %v2191 = vshrl.u32 %v2190, 7
    %v2192 = vsub.s32 3, %v2191
    %v2193 = vrot.slane %v1993, %v2192
    %v2194 = vlaneseq
    %v2195 = vshrl.u32 %v2194, 7
    %v2196 = vsub.s32 3, %v2195
    %v2197 = vrot.slane %v1994, %v2196
    %v2198 = vlaneseq
    %v2199 = vshrl.u32 %v2198, 7
    %v2200 = vsub.s32 3, %v2199
    %v2201 = vrot.slane %v1995, %v2200
    %v2202 = vlaneseq
    %v2203 = vshrl.u32 %v2202, 7
    %v2204 = vsub.s32 3, %v2203
    %v2205 = vrot.slane %v1996, %v2204
    %v2206 = vlaneseq
    %v2207 = vshrl.u32 %v2206, 7
    %v2208 = vsub.s32 3, %v2207
    %v2209 = vrot.slane %v1997, %v2208
    %v2210 = vlaneseq
    %v2211 = vshrl.u32 %v2210, 7
    %v2212 = vsub.s32 3, %v2211
    %v2213 = vrot.slane %v1998, %v2212
    %v2214 = vlaneseq
    %v2215 = vshrl.u32 %v2214, 7
    %v2216 = vsub.s32 3, %v2215
    %v2217 = vrot.slane %v1999, %v2216
    %v2218 = vlaneseq
    %v2219 = vshrl.u32 %v2218, 7
    %v2220 = vsub.s32 3, %v2219
    %v2221 = vrot.slane %v2000, %v2220
    %v2222 = vlaneseq
    %v2223 = vshrl.u32 %v2222, 7
    %v2224 = vsub.s32 3, %v2223
    %v2225 = vrot.slane %v2001, %v2224
    %v2226 = vlaneseq
    %v2227 = vshrl.u32 %v2226, 7
    %v2228 = vsub.s32 3, %v2227
    %v2229 = vrot.slane %v2002, %v2228
    %v2230 = vmul.f32 %v2188, %v2193
    %v2231 = vmul.f32 %v2188, %v2197
    %v2232 = vmul.f32 %v2188, %v2201
    %v2233 = vmul.f32 %v2188, %v2205
    %v2234 = vmul.f32 %v2188, %v2209
    %v2235 = vmul.f32 %v2188, %v2213
    %v2236 = vmul.f32 %v2188, %v2217
    %v2237 = vmul.f32 %v2188, %v2221
    %v2238 = vmul.f32 %v2188, %v2225
    %v2239 = vmul.f32 %v2188, %v2229
    %v2240 = vadd.f32 %v2176, %v2230
    %v2241 = vadd.f32 %v2177, %v2231
    %v2242 = vadd.f32 %v2178, %v2232
    %v2243 = vadd.f32 %v2179, %v2233
    %v2244 = vadd.f32 %v2180, %v2234
    %v2245 = vadd.f32 %v2181, %v2235
    %v2246 = vadd.f32 %v2182, %v2236
    %v2247 = vadd.f32 %v2183, %v2237
    %v2248 = vadd.f32 %v2184, %v2238
    %v2249 = vadd.f32 %v2185, %v2239
    %2260 = vrot.lane.b32.xlu0 %v2240, 103
    %v2261 = vpop.permute.xlu0 %2260
    %2262 = vrot.lane.b32.xlu0 %v2241, 103
    %v2263 = vpop.permute.xlu0 %2262
    %2264 = vrot.lane.b32.xlu0 %v2242, 103
    %v2265 = vpop.permute.xlu0 %2264
    %2266 = vrot.lane.b32.xlu0 %v2243, 103
    %v2267 = vpop.permute.xlu0 %2266
    %2268 = vrot.lane.b32.xlu0 %v2244, 103
    %v2269 = vpop.permute.xlu0 %2268
    %2270 = vrot.lane.b32.xlu0 %v2245, 103
    %v2271 = vpop.permute.xlu0 %2270
    %2272 = vrot.lane.b32.xlu0 %v2246, 103
    %v2273 = vpop.permute.xlu0 %2272
    %2274 = vrot.lane.b32.xlu0 %v2247, 103
    %v2275 = vpop.permute.xlu0 %2274
    %2276 = vrot.lane.b32.xlu0 %v2248, 103
    %v2277 = vpop.permute.xlu0 %2276
    %2278 = vrot.lane.b32.xlu0 %v2249, 103
    %v2279 = vpop.permute.xlu0 %2278
    %v2280 = vsel %vm342, %v2261, %v2263
    %v2281 = vsel %vm342, %v2263, %v2265
    %v2282 = vsel %vm342, %v2265, %v2267
    %v2283 = vsel %vm342, %v2267, %v2269
    %v2284 = vsel %vm342, %v2269, %v2271
    %v2285 = vsel %vm342, %v2271, %v2273
    %v2286 = vsel %vm342, %v2273, %v2275
    %v2287 = vsel %vm342, %v2275, %v2277
    %v2288 = vsel %vm342, %v2277, %v2279
    %v2300 = vsel %vm126, %v2261, 0.0
    %v2301 = vsel %vm127, %v2280, 0.0
    %v2302 = vsel %vm128, %v2281, 0.0
    %v2303 = vsel %vm129, %v2282, 0.0
    %v2304 = vsel %vm130, %v2283, 0.0
    %v2305 = vsel %vm131, %v2284, 0.0
    %v2306 = vsel %vm132, %v2285, 0.0
    %v2307 = vsel %vm133, %v2286, 0.0
    %v2308 = vsel %vm134, %v2287, 0.0
    %v2309 = vsel %vm135, %v2288, 0.0
    %v2310 = vsel %vm136, %v2279, 0.0
    %2322 = vrot.lane.b32.xlu0 %v2300, 25
    %v2323 = vpop.permute.xlu0 %2322
    %2324 = vrot.lane.b32.xlu0 %v2301, 25
    %v2325 = vpop.permute.xlu0 %2324
    %2326 = vrot.lane.b32.xlu0 %v2302, 25
    %v2327 = vpop.permute.xlu0 %2326
    %2328 = vrot.lane.b32.xlu0 %v2303, 25
    %v2329 = vpop.permute.xlu0 %2328
    %2330 = vrot.lane.b32.xlu0 %v2304, 25
    %v2331 = vpop.permute.xlu0 %2330
    %2332 = vrot.lane.b32.xlu0 %v2305, 25
    %v2333 = vpop.permute.xlu0 %2332
    %2334 = vrot.lane.b32.xlu0 %v2306, 25
    %v2335 = vpop.permute.xlu0 %2334
    %2336 = vrot.lane.b32.xlu0 %v2307, 25
    %v2337 = vpop.permute.xlu0 %2336
    %2338 = vrot.lane.b32.xlu0 %v2308, 25
    %v2339 = vpop.permute.xlu0 %2338
    %2340 = vrot.lane.b32.xlu0 %v2309, 25
    %v2341 = vpop.permute.xlu0 %2340
    %2342 = vrot.lane.b32.xlu0 %v2310, 25
    %v2343 = vpop.permute.xlu0 %2342
    %v2344 = vsel %vm659, %v2323, %v2325
    %v2345 = vsel %vm659, %v2325, %v2327
    %v2346 = vsel %vm659, %v2327, %v2329
    %v2347 = vsel %vm659, %v2329, %v2331
    %v2348 = vsel %vm659, %v2331, %v2333
    %v2349 = vsel %vm659, %v2333, %v2335
    %v2350 = vsel %vm659, %v2335, %v2337
    %v2351 = vsel %vm659, %v2337, %v2339
    %v2352 = vsel %vm659, %v2339, %v2341
    %v2353 = vsel %vm659, %v2341, %v2343
    %v2364 = vsel %vm687, %v2344, 0.0
    %v2365 = vsel %vm687, %v2345, 0.0
    %v2366 = vadd.f32 %v2364, %v2365
    %v2367 = vsel %vm687, %v2346, 0.0
    %v2368 = vadd.f32 %v2366, %v2367
    %v2369 = vsel %vm687, %v2347, 0.0
    %v2370 = vadd.f32 %v2368, %v2369
    %v2371 = vsel %vm687, %v2348, 0.0
    %v2372 = vadd.f32 %v2370, %v2371
    %v2373 = vsel %vm687, %v2349, 0.0
    %v2374 = vadd.f32 %v2372, %v2373
    %v2375 = vsel %vm687, %v2350, 0.0
    %v2376 = vadd.f32 %v2374, %v2375
    %v2377 = vsel %vm687, %v2351, 0.0
    %v2378 = vadd.f32 %v2376, %v2377
    %v2379 = vsel %vm687, %v2352, 0.0
    %v2380 = vadd.f32 %v2378, %v2379
    %vm2381 = vcmask 404480
    %v2382 = vsel %vm2381, %v2353, 0.0
    %v2383 = vadd.f32 %v2380, %v2382
    %2384 = vadd.xlane.f32.xlu0 %v2383
    %v2385 = vpop.xlane.xlu0 %2384
    %v2386 = vmul.f32 %v2385, 0.001953125
    %v2387 = vmul.f32 %v2300, %v2300
    %v2388 = vmul.f32 %v2301, %v2301
    %v2389 = vmul.f32 %v2302, %v2302
    %v2390 = vmul.f32 %v2303, %v2303
    %v2391 = vmul.f32 %v2304, %v2304
    %v2392 = vmul.f32 %v2305, %v2305
    %v2393 = vmul.f32 %v2306, %v2306
    %v2394 = vmul.f32 %v2307, %v2307
    %v2395 = vmul.f32 %v2308, %v2308
    %v2396 = vmul.f32 %v2309, %v2309
    %v2397 = vmul.f32 %v2310, %v2310
    %2409 = vrot.lane.b32.xlu0 %v2387, 25
    %v2410 = vpop.permute.xlu0 %2409
    %2411 = vrot.lane.b32.xlu0 %v2388, 25
    %v2412 = vpop.permute.xlu0 %2411
    %2413 = vrot.lane.b32.xlu0 %v2389, 25
    %v2414 = vpop.permute.xlu0 %2413
    %2415 = vrot.lane.b32.xlu0 %v2390, 25
    %v2416 = vpop.permute.xlu0 %2415
    %2417 = vrot.lane.b32.xlu0 %v2391, 25
    %v2418 = vpop.permute.xlu0 %2417
    %2419 = vrot.lane.b32.xlu0 %v2392, 25
    %v2420 = vpop.permute.xlu0 %2419
    %2421 = vrot.lane.b32.xlu0 %v2393, 25
    %v2422 = vpop.permute.xlu0 %2421
    %2423 = vrot.lane.b32.xlu0 %v2394, 25
    %v2424 = vpop.permute.xlu0 %2423
    %2425 = vrot.lane.b32.xlu0 %v2395, 25
    %v2426 = vpop.permute.xlu0 %2425
    %2427 = vrot.lane.b32.xlu0 %v2396, 25
    %v2428 = vpop.permute.xlu0 %2427
    %2429 = vrot.lane.b32.xlu0 %v2397, 25
    %v2430 = vpop.permute.xlu0 %2429
    %v2431 = vsel %vm659, %v2410, %v2412
    %v2432 = vsel %vm659, %v2412, %v2414
    %v2433 = vsel %vm659, %v2414, %v2416
    %v2434 = vsel %vm659, %v2416, %v2418
    %v2435 = vsel %vm659, %v2418, %v2420
    %v2436 = vsel %vm659, %v2420, %v2422
    %v2437 = vsel %vm659, %v2422, %v2424
    %v2438 = vsel %vm659, %v2424, %v2426
    %v2439 = vsel %vm659, %v2426, %v2428
    %v2440 = vsel %vm659, %v2428, %v2430
    %v2451 = vsel %vm687, %v2431, 0.0
    %v2452 = vsel %vm687, %v2432, 0.0
    %v2453 = vadd.f32 %v2451, %v2452
    %v2454 = vsel %vm687, %v2433, 0.0
    %v2455 = vadd.f32 %v2453, %v2454
    %v2456 = vsel %vm687, %v2434, 0.0
    %v2457 = vadd.f32 %v2455, %v2456
    %v2458 = vsel %vm687, %v2435, 0.0
    %v2459 = vadd.f32 %v2457, %v2458
    %v2460 = vsel %vm687, %v2436, 0.0
    %v2461 = vadd.f32 %v2459, %v2460
    %v2462 = vsel %vm687, %v2437, 0.0
    %v2463 = vadd.f32 %v2461, %v2462
    %v2464 = vsel %vm687, %v2438, 0.0
    %v2465 = vadd.f32 %v2463, %v2464
    %v2466 = vsel %vm687, %v2439, 0.0
    %v2467 = vadd.f32 %v2465, %v2466
    %v2468 = vsel %vm2381, %v2440, 0.0
    %v2469 = vadd.f32 %v2467, %v2468
    %2470 = vadd.xlane.f32.xlu0 %v2469
    %v2471 = vpop.xlane.xlu0 %2470
    %v2472 = vmul.f32 %v2471, 0.001953125
    %v2473 = vmul.f32 %v2386, %v2386
    %v2474 = vsub.f32 %v2472, %v2473
    %v2475 = vmax.f32 %v2474, 0.0
    %v2476 = vsub.f32 %v2300, %v2386
    %v2477 = vsub.f32 %v2301, %v2386
    %v2478 = vsub.f32 %v2302, %v2386
    %v2479 = vsub.f32 %v2303, %v2386
    %v2480 = vsub.f32 %v2304, %v2386
    %v2481 = vsub.f32 %v2305, %v2386
    %v2482 = vsub.f32 %v2306, %v2386
    %v2483 = vsub.f32 %v2307, %v2386
    %v2484 = vsub.f32 %v2308, %v2386
    %v2485 = vsub.f32 %v2309, %v2386
    %v2486 = vsub.f32 %v2310, %v2386
    %v2487 = vadd.f32 %v2475, 1e-05
    %v2488 = vrsqrt.pop %v2487
    %v2489 = vmul.f32 %v2476, %v2488
    %v2490 = vmul.f32 %v2477, %v2488
    %v2491 = vmul.f32 %v2478, %v2488
    %v2492 = vmul.f32 %v2479, %v2488
    %v2493 = vmul.f32 %v2480, %v2488
    %v2494 = vmul.f32 %v2481, %v2488
    %v2495 = vmul.f32 %v2482, %v2488
    %v2496 = vmul.f32 %v2483, %v2488
    %v2497 = vmul.f32 %v2484, %v2488
    %v2498 = vmul.f32 %v2485, %v2488
    %v2499 = vmul.f32 %v2486, %v2488
    %v2500 = vsel %vm126, %v2489, 0.0
    %v2501 = vsel %vm127, %v2490, 0.0
    %v2502 = vsel %vm128, %v2491, 0.0
    %v2503 = vsel %vm129, %v2492, 0.0
    %v2504 = vsel %vm130, %v2493, 0.0
    %v2505 = vsel %vm131, %v2494, 0.0
    %v2506 = vsel %vm132, %v2495, 0.0
    %v2507 = vsel %vm133, %v2496, 0.0
    %v2508 = vsel %vm134, %v2497, 0.0
    %v2509 = vsel %vm135, %v2498, 0.0
    %v2510 = vsel %vm136, %v2499, 0.0
    %v2511 = vmax.f32 %v2500, 0.0
    %v2512 = vmax.f32 %v2501, 0.0
    %v2513 = vmax.f32 %v2502, 0.0
    %v2514 = vmax.f32 %v2503, 0.0
    %v2515 = vmax.f32 %v2504, 0.0
    %v2516 = vmax.f32 %v2505, 0.0
    %v2517 = vmax.f32 %v2506, 0.0
    %v2518 = vmax.f32 %v2507, 0.0
    %v2519 = vmax.f32 %v2508, 0.0
    %v2520 = vmax.f32 %v2509, 0.0
    %v2521 = vmax.f32 %v2510, 0.0
    %2523 = vset.pattern.permute.xlu0 0
    %2524 = vperm.xlu0 %2523, %v1438
    %v2525 = vpop.permute.xlu0 %2524
    %v2527 = vmul.f32 %v2525, %v2511
    %v2528 = vmul.f32 %v2525, %v2512
    %v2529 = vmul.f32 %v2525, %v2513
    %v2530 = vmul.f32 %v2525, %v2514
    %v2531 = vmul.f32 %v2525, %v2515
    %v2532 = vmul.f32 %v2525, %v2516
    %v2533 = vmul.f32 %v2525, %v2517
    %v2534 = vmul.f32 %v2525, %v2518
    %v2535 = vmul.f32 %v2525, %v2519
    %v2536 = vmul.f32 %v2525, %v2520
    %2537 = vset.pattern.permute.xlu0 1
    %2538 = vperm.xlu0 %2537, %v1438
    %v2539 = vpop.permute.xlu0 %2538
    %v2541 = vmul.f32 %v2539, %v2511
    %v2542 = vmul.f32 %v2539, %v2512
    %v2543 = vmul.f32 %v2539, %v2513
    %v2544 = vmul.f32 %v2539, %v2514
    %v2545 = vmul.f32 %v2539, %v2515
    %v2546 = vmul.f32 %v2539, %v2516
    %v2547 = vmul.f32 %v2539, %v2517
    %v2548 = vmul.f32 %v2539, %v2518
    %v2549 = vmul.f32 %v2539, %v2519
    %v2550 = vmul.f32 %v2539, %v2520
    %2561 = vrot.lane.b32.xlu0 %v2541, 127
    %v2562 = vpop.permute.xlu0 %2561
    %2563 = vrot.lane.b32.xlu0 %v2542, 127
    %v2564 = vpop.permute.xlu0 %2563
    %2565 = vrot.lane.b32.xlu0 %v2543, 127
    %v2566 = vpop.permute.xlu0 %2565
    %2567 = vrot.lane.b32.xlu0 %v2544, 127
    %v2568 = vpop.permute.xlu0 %2567
    %2569 = vrot.lane.b32.xlu0 %v2545, 127
    %v2570 = vpop.permute.xlu0 %2569
    %2571 = vrot.lane.b32.xlu0 %v2546, 127
    %v2572 = vpop.permute.xlu0 %2571
    %2573 = vrot.lane.b32.xlu0 %v2547, 127
    %v2574 = vpop.permute.xlu0 %2573
    %2575 = vrot.lane.b32.xlu0 %v2548, 127
    %v2576 = vpop.permute.xlu0 %2575
    %2577 = vrot.lane.b32.xlu0 %v2549, 127
    %v2578 = vpop.permute.xlu0 %2577
    %2579 = vrot.lane.b32.xlu0 %v2550, 127
    %v2580 = vpop.permute.xlu0 %2579
    %v2581 = vsel %vm194, %v2562, %v2564
    %v2582 = vsel %vm194, %v2564, %v2566
    %v2583 = vsel %vm194, %v2566, %v2568
    %v2584 = vsel %vm194, %v2568, %v2570
    %v2585 = vsel %vm194, %v2570, %v2572
    %v2586 = vsel %vm194, %v2572, %v2574
    %v2587 = vsel %vm194, %v2574, %v2576
    %v2588 = vsel %vm194, %v2576, %v2578
    %v2589 = vsel %vm194, %v2578, %v2580
    %v2600 = vadd.f32 %v2527, %v2581
    %v2601 = vadd.f32 %v2528, %v2582
    %v2602 = vadd.f32 %v2529, %v2583
    %v2603 = vadd.f32 %v2530, %v2584
    %v2604 = vadd.f32 %v2531, %v2585
    %v2605 = vadd.f32 %v2532, %v2586
    %v2606 = vadd.f32 %v2533, %v2587
    %v2607 = vadd.f32 %v2534, %v2588
    %v2608 = vadd.f32 %v2535, %v2589
    %v2609 = vadd.f32 %v2536, %v2580
    %2610 = vset.pattern.permute.xlu0 2
    %2611 = vperm.xlu0 %2610, %v1438
    %v2612 = vpop.permute.xlu0 %2611
    %v2614 = vmul.f32 %v2612, %v2511
    %v2615 = vmul.f32 %v2612, %v2512
    %v2616 = vmul.f32 %v2612, %v2513
    %v2617 = vmul.f32 %v2612, %v2514
    %v2618 = vmul.f32 %v2612, %v2515
    %v2619 = vmul.f32 %v2612, %v2516
    %v2620 = vmul.f32 %v2612, %v2517
    %v2621 = vmul.f32 %v2612, %v2518
    %v2622 = vmul.f32 %v2612, %v2519
    %v2623 = vmul.f32 %v2612, %v2520
    %2634 = vrot.lane.b32.xlu0 %v2614, 126
    %v2635 = vpop.permute.xlu0 %2634
    %2636 = vrot.lane.b32.xlu0 %v2615, 126
    %v2637 = vpop.permute.xlu0 %2636
    %2638 = vrot.lane.b32.xlu0 %v2616, 126
    %v2639 = vpop.permute.xlu0 %2638
    %2640 = vrot.lane.b32.xlu0 %v2617, 126
    %v2641 = vpop.permute.xlu0 %2640
    %2642 = vrot.lane.b32.xlu0 %v2618, 126
    %v2643 = vpop.permute.xlu0 %2642
    %2644 = vrot.lane.b32.xlu0 %v2619, 126
    %v2645 = vpop.permute.xlu0 %2644
    %2646 = vrot.lane.b32.xlu0 %v2620, 126
    %v2647 = vpop.permute.xlu0 %2646
    %2648 = vrot.lane.b32.xlu0 %v2621, 126
    %v2649 = vpop.permute.xlu0 %2648
    %2650 = vrot.lane.b32.xlu0 %v2622, 126
    %v2651 = vpop.permute.xlu0 %2650
    %2652 = vrot.lane.b32.xlu0 %v2623, 126
    %v2653 = vpop.permute.xlu0 %2652
    %v2654 = vsel %vm244, %v2635, %v2637
    %v2655 = vsel %vm244, %v2637, %v2639
    %v2656 = vsel %vm244, %v2639, %v2641
    %v2657 = vsel %vm244, %v2641, %v2643
    %v2658 = vsel %vm244, %v2643, %v2645
    %v2659 = vsel %vm244, %v2645, %v2647
    %v2660 = vsel %vm244, %v2647, %v2649
    %v2661 = vsel %vm244, %v2649, %v2651
    %v2662 = vsel %vm244, %v2651, %v2653
    %v2673 = vadd.f32 %v2600, %v2654
    %v2674 = vadd.f32 %v2601, %v2655
    %v2675 = vadd.f32 %v2602, %v2656
    %v2676 = vadd.f32 %v2603, %v2657
    %v2677 = vadd.f32 %v2604, %v2658
    %v2678 = vadd.f32 %v2605, %v2659
    %v2679 = vadd.f32 %v2606, %v2660
    %v2680 = vadd.f32 %v2607, %v2661
    %v2681 = vadd.f32 %v2608, %v2662
    %v2682 = vadd.f32 %v2609, %v2653
    %2683 = vset.pattern.permute.xlu0 3
    %2684 = vperm.xlu0 %2683, %v1438
    %v2685 = vpop.permute.xlu0 %2684
    %v2687 = vmul.f32 %v2685, %v2511
    %v2688 = vmul.f32 %v2685, %v2512
    %v2689 = vmul.f32 %v2685, %v2513
    %v2690 = vmul.f32 %v2685, %v2514
    %v2691 = vmul.f32 %v2685, %v2515
    %v2692 = vmul.f32 %v2685, %v2516
    %v2693 = vmul.f32 %v2685, %v2517
    %v2694 = vmul.f32 %v2685, %v2518
    %v2695 = vmul.f32 %v2685, %v2519
    %v2696 = vmul.f32 %v2685, %v2520
    %2707 = vrot.lane.b32.xlu0 %v2687, 104
    %v2708 = vpop.permute.xlu0 %2707
    %2709 = vrot.lane.b32.xlu0 %v2688, 104
    %v2710 = vpop.permute.xlu0 %2709
    %2711 = vrot.lane.b32.xlu0 %v2689, 104
    %v2712 = vpop.permute.xlu0 %2711
    %2713 = vrot.lane.b32.xlu0 %v2690, 104
    %v2714 = vpop.permute.xlu0 %2713
    %2715 = vrot.lane.b32.xlu0 %v2691, 104
    %v2716 = vpop.permute.xlu0 %2715
    %2717 = vrot.lane.b32.xlu0 %v2692, 104
    %v2718 = vpop.permute.xlu0 %2717
    %2719 = vrot.lane.b32.xlu0 %v2693, 104
    %v2720 = vpop.permute.xlu0 %2719
    %2721 = vrot.lane.b32.xlu0 %v2694, 104
    %v2722 = vpop.permute.xlu0 %2721
    %2723 = vrot.lane.b32.xlu0 %v2695, 104
    %v2724 = vpop.permute.xlu0 %2723
    %2725 = vrot.lane.b32.xlu0 %v2696, 104
    %v2726 = vpop.permute.xlu0 %2725
    %v2727 = vsel %vm294, %v2708, %v2710
    %v2728 = vsel %vm294, %v2710, %v2712
    %v2729 = vsel %vm294, %v2712, %v2714
    %v2730 = vsel %vm294, %v2714, %v2716
    %v2731 = vsel %vm294, %v2716, %v2718
    %v2732 = vsel %vm294, %v2718, %v2720
    %v2733 = vsel %vm294, %v2720, %v2722
    %v2734 = vsel %vm294, %v2722, %v2724
    %v2735 = vsel %vm294, %v2724, %v2726
    %v2746 = vadd.f32 %v2673, %v2727
    %v2747 = vadd.f32 %v2674, %v2728
    %v2748 = vadd.f32 %v2675, %v2729
    %v2749 = vadd.f32 %v2676, %v2730
    %v2750 = vadd.f32 %v2677, %v2731
    %v2751 = vadd.f32 %v2678, %v2732
    %v2752 = vadd.f32 %v2679, %v2733
    %v2753 = vadd.f32 %v2680, %v2734
    %v2754 = vadd.f32 %v2681, %v2735
    %v2755 = vadd.f32 %v2682, %v2726
    %2756 = vset.pattern.permute.xlu0 4
    %2757 = vperm.xlu0 %2756, %v1438
    %v2758 = vpop.permute.xlu0 %2757
    %v2760 = vmul.f32 %v2758, %v2512
    %v2761 = vmul.f32 %v2758, %v2513
    %v2762 = vmul.f32 %v2758, %v2514
    %v2763 = vmul.f32 %v2758, %v2515
    %v2764 = vmul.f32 %v2758, %v2516
    %v2765 = vmul.f32 %v2758, %v2517
    %v2766 = vmul.f32 %v2758, %v2518
    %v2767 = vmul.f32 %v2758, %v2519
    %v2768 = vmul.f32 %v2758, %v2520
    %2778 = vrot.lane.b32.xlu0 %v2760, 103
    %v2779 = vpop.permute.xlu0 %2778
    %2780 = vrot.lane.b32.xlu0 %v2761, 103
    %v2781 = vpop.permute.xlu0 %2780
    %2782 = vrot.lane.b32.xlu0 %v2762, 103
    %v2783 = vpop.permute.xlu0 %2782
    %2784 = vrot.lane.b32.xlu0 %v2763, 103
    %v2785 = vpop.permute.xlu0 %2784
    %2786 = vrot.lane.b32.xlu0 %v2764, 103
    %v2787 = vpop.permute.xlu0 %2786
    %2788 = vrot.lane.b32.xlu0 %v2765, 103
    %v2789 = vpop.permute.xlu0 %2788
    %2790 = vrot.lane.b32.xlu0 %v2766, 103
    %v2791 = vpop.permute.xlu0 %2790
    %2792 = vrot.lane.b32.xlu0 %v2767, 103
    %v2793 = vpop.permute.xlu0 %2792
    %2794 = vrot.lane.b32.xlu0 %v2768, 103
    %v2795 = vpop.permute.xlu0 %2794
    %v2796 = vsel %vm342, %v2779, %v2781
    %v2797 = vsel %vm342, %v2781, %v2783
    %v2798 = vsel %vm342, %v2783, %v2785
    %v2799 = vsel %vm342, %v2785, %v2787
    %v2800 = vsel %vm342, %v2787, %v2789
    %v2801 = vsel %vm342, %v2789, %v2791
    %v2802 = vsel %vm342, %v2791, %v2793
    %v2803 = vsel %vm342, %v2793, %v2795
    %v2814 = vadd.f32 %v2746, %v2779
    %v2815 = vadd.f32 %v2747, %v2796
    %v2816 = vadd.f32 %v2748, %v2797
    %v2817 = vadd.f32 %v2749, %v2798
    %v2818 = vadd.f32 %v2750, %v2799
    %v2819 = vadd.f32 %v2751, %v2800
    %v2820 = vadd.f32 %v2752, %v2801
    %v2821 = vadd.f32 %v2753, %v2802
    %v2822 = vadd.f32 %v2754, %v2803
    %v2823 = vadd.f32 %v2755, %v2795
    %2824 = vset.pattern.permute.xlu0 5
    %2825 = vperm.xlu0 %2824, %v1438
    %v2826 = vpop.permute.xlu0 %2825
    %v2828 = vmul.f32 %v2826, %v2512
    %v2829 = vmul.f32 %v2826, %v2513
    %v2830 = vmul.f32 %v2826, %v2514
    %v2831 = vmul.f32 %v2826, %v2515
    %v2832 = vmul.f32 %v2826, %v2516
    %v2833 = vmul.f32 %v2826, %v2517
    %v2834 = vmul.f32 %v2826, %v2518
    %v2835 = vmul.f32 %v2826, %v2519
    %v2836 = vmul.f32 %v2826, %v2520
    %v2837 = vmul.f32 %v2826, %v2521
    %2848 = vrot.lane.b32.xlu0 %v2828, 102
    %v2849 = vpop.permute.xlu0 %2848
    %2850 = vrot.lane.b32.xlu0 %v2829, 102
    %v2851 = vpop.permute.xlu0 %2850
    %2852 = vrot.lane.b32.xlu0 %v2830, 102
    %v2853 = vpop.permute.xlu0 %2852
    %2854 = vrot.lane.b32.xlu0 %v2831, 102
    %v2855 = vpop.permute.xlu0 %2854
    %2856 = vrot.lane.b32.xlu0 %v2832, 102
    %v2857 = vpop.permute.xlu0 %2856
    %2858 = vrot.lane.b32.xlu0 %v2833, 102
    %v2859 = vpop.permute.xlu0 %2858
    %2860 = vrot.lane.b32.xlu0 %v2834, 102
    %v2861 = vpop.permute.xlu0 %2860
    %2862 = vrot.lane.b32.xlu0 %v2835, 102
    %v2863 = vpop.permute.xlu0 %2862
    %2864 = vrot.lane.b32.xlu0 %v2836, 102
    %v2865 = vpop.permute.xlu0 %2864
    %2866 = vrot.lane.b32.xlu0 %v2837, 102
    %v2867 = vpop.permute.xlu0 %2866
    %v2868 = vsel %vm392, %v2849, %v2851
    %v2869 = vsel %vm392, %v2851, %v2853
    %v2870 = vsel %vm392, %v2853, %v2855
    %v2871 = vsel %vm392, %v2855, %v2857
    %v2872 = vsel %vm392, %v2857, %v2859
    %v2873 = vsel %vm392, %v2859, %v2861
    %v2874 = vsel %vm392, %v2861, %v2863
    %v2875 = vsel %vm392, %v2863, %v2865
    %v2876 = vsel %vm392, %v2865, %v2867
    %v2887 = vadd.f32 %v2814, %v2849
    %v2888 = vadd.f32 %v2815, %v2868
    %v2889 = vadd.f32 %v2816, %v2869
    %v2890 = vadd.f32 %v2817, %v2870
    %v2891 = vadd.f32 %v2818, %v2871
    %v2892 = vadd.f32 %v2819, %v2872
    %v2893 = vadd.f32 %v2820, %v2873
    %v2894 = vadd.f32 %v2821, %v2874
    %v2895 = vadd.f32 %v2822, %v2875
    %v2896 = vadd.f32 %v2823, %v2876
    %2897 = vset.pattern.permute.xlu0 6
    %2898 = vperm.xlu0 %2897, %v1438
    %v2899 = vpop.permute.xlu0 %2898
    %v2901 = vmul.f32 %v2899, %v2512
    %v2902 = vmul.f32 %v2899, %v2513
    %v2903 = vmul.f32 %v2899, %v2514
    %v2904 = vmul.f32 %v2899, %v2515
    %v2905 = vmul.f32 %v2899, %v2516
    %v2906 = vmul.f32 %v2899, %v2517
    %v2907 = vmul.f32 %v2899, %v2518
    %v2908 = vmul.f32 %v2899, %v2519
    %v2909 = vmul.f32 %v2899, %v2520
    %v2910 = vmul.f32 %v2899, %v2521
    %2921 = vrot.lane.b32.xlu0 %v2901, 80
    %v2922 = vpop.permute.xlu0 %2921
    %2923 = vrot.lane.b32.xlu0 %v2902, 80
    %v2924 = vpop.permute.xlu0 %2923
    %2925 = vrot.lane.b32.xlu0 %v2903, 80
    %v2926 = vpop.permute.xlu0 %2925
    %2927 = vrot.lane.b32.xlu0 %v2904, 80
    %v2928 = vpop.permute.xlu0 %2927
    %2929 = vrot.lane.b32.xlu0 %v2905, 80
    %v2930 = vpop.permute.xlu0 %2929
    %2931 = vrot.lane.b32.xlu0 %v2906, 80
    %v2932 = vpop.permute.xlu0 %2931
    %2933 = vrot.lane.b32.xlu0 %v2907, 80
    %v2934 = vpop.permute.xlu0 %2933
    %2935 = vrot.lane.b32.xlu0 %v2908, 80
    %v2936 = vpop.permute.xlu0 %2935
    %2937 = vrot.lane.b32.xlu0 %v2909, 80
    %v2938 = vpop.permute.xlu0 %2937
    %2939 = vrot.lane.b32.xlu0 %v2910, 80
    %v2940 = vpop.permute.xlu0 %2939
    %v2941 = vsel %vm442, %v2922, %v2924
    %v2942 = vsel %vm442, %v2924, %v2926
    %v2943 = vsel %vm442, %v2926, %v2928
    %v2944 = vsel %vm442, %v2928, %v2930
    %v2945 = vsel %vm442, %v2930, %v2932
    %v2946 = vsel %vm442, %v2932, %v2934
    %v2947 = vsel %vm442, %v2934, %v2936
    %v2948 = vsel %vm442, %v2936, %v2938
    %v2949 = vsel %vm442, %v2938, %v2940
    %v2960 = vadd.f32 %v2887, %v2922
    %v2961 = vadd.f32 %v2888, %v2941
    %v2962 = vadd.f32 %v2889, %v2942
    %v2963 = vadd.f32 %v2890, %v2943
    %v2964 = vadd.f32 %v2891, %v2944
    %v2965 = vadd.f32 %v2892, %v2945
    %v2966 = vadd.f32 %v2893, %v2946
    %v2967 = vadd.f32 %v2894, %v2947
    %v2968 = vadd.f32 %v2895, %v2948
    %v2969 = vadd.f32 %v2896, %v2949
    %2970 = vset.pattern.permute.xlu0 7
    %2971 = vperm.xlu0 %2970, %v1438
    %v2972 = vpop.permute.xlu0 %2971
    %v2974 = vmul.f32 %v2972, %v2512
    %v2975 = vmul.f32 %v2972, %v2513
    %v2976 = vmul.f32 %v2972, %v2514
    %v2977 = vmul.f32 %v2972, %v2515
    %v2978 = vmul.f32 %v2972, %v2516
    %v2979 = vmul.f32 %v2972, %v2517
    %v2980 = vmul.f32 %v2972, %v2518
    %v2981 = vmul.f32 %v2972, %v2519
    %v2982 = vmul.f32 %v2972, %v2520
    %v2983 = vmul.f32 %v2972, %v2521
    %2994 = vrot.lane.b32.xlu0 %v2974, 79
    %v2995 = vpop.permute.xlu0 %2994
    %2996 = vrot.lane.b32.xlu0 %v2975, 79
    %v2997 = vpop.permute.xlu0 %2996
    %2998 = vrot.lane.b32.xlu0 %v2976, 79
    %v2999 = vpop.permute.xlu0 %2998
    %3000 = vrot.lane.b32.xlu0 %v2977, 79
    %v3001 = vpop.permute.xlu0 %3000
    %3002 = vrot.lane.b32.xlu0 %v2978, 79
    %v3003 = vpop.permute.xlu0 %3002
    %3004 = vrot.lane.b32.xlu0 %v2979, 79
    %v3005 = vpop.permute.xlu0 %3004
    %3006 = vrot.lane.b32.xlu0 %v2980, 79
    %v3007 = vpop.permute.xlu0 %3006
    %3008 = vrot.lane.b32.xlu0 %v2981, 79
    %v3009 = vpop.permute.xlu0 %3008
    %3010 = vrot.lane.b32.xlu0 %v2982, 79
    %v3011 = vpop.permute.xlu0 %3010
    %3012 = vrot.lane.b32.xlu0 %v2983, 79
    %v3013 = vpop.permute.xlu0 %3012
    %v3014 = vsel %vm492, %v2995, %v2997
    %v3015 = vsel %vm492, %v2997, %v2999
    %v3016 = vsel %vm492, %v2999, %v3001
    %v3017 = vsel %vm492, %v3001, %v3003
    %v3018 = vsel %vm492, %v3003, %v3005
    %v3019 = vsel %vm492, %v3005, %v3007
    %v3020 = vsel %vm492, %v3007, %v3009
    %v3021 = vsel %vm492, %v3009, %v3011
    %v3022 = vsel %vm492, %v3011, %v3013
    %v3033 = vadd.f32 %v2960, %v2995
    %v3034 = vadd.f32 %v2961, %v3014
    %v3035 = vadd.f32 %v2962, %v3015
    %v3036 = vadd.f32 %v2963, %v3016
    %v3037 = vadd.f32 %v2964, %v3017
    %v3038 = vadd.f32 %v2965, %v3018
    %v3039 = vadd.f32 %v2966, %v3019
    %v3040 = vadd.f32 %v2967, %v3020
    %v3041 = vadd.f32 %v2968, %v3021
    %v3042 = vadd.f32 %v2969, %v3022
    %3043 = vset.pattern.permute.xlu0 8
    %3044 = vperm.xlu0 %3043, %v1438
    %v3045 = vpop.permute.xlu0 %3044
    %v3047 = vmul.f32 %v3045, %v2512
    %v3048 = vmul.f32 %v3045, %v2513
    %v3049 = vmul.f32 %v3045, %v2514
    %v3050 = vmul.f32 %v3045, %v2515
    %v3051 = vmul.f32 %v3045, %v2516
    %v3052 = vmul.f32 %v3045, %v2517
    %v3053 = vmul.f32 %v3045, %v2518
    %v3054 = vmul.f32 %v3045, %v2519
    %v3055 = vmul.f32 %v3045, %v2520
    %v3056 = vmul.f32 %v3045, %v2521
    %3067 = vrot.lane.b32.xlu0 %v3047, 78
    %v3068 = vpop.permute.xlu0 %3067
    %3069 = vrot.lane.b32.xlu0 %v3048, 78
    %v3070 = vpop.permute.xlu0 %3069
    %3071 = vrot.lane.b32.xlu0 %v3049, 78
    %v3072 = vpop.permute.xlu0 %3071
    %3073 = vrot.lane.b32.xlu0 %v3050, 78
    %v3074 = vpop.permute.xlu0 %3073
    %3075 = vrot.lane.b32.xlu0 %v3051, 78
    %v3076 = vpop.permute.xlu0 %3075
    %3077 = vrot.lane.b32.xlu0 %v3052, 78
    %v3078 = vpop.permute.xlu0 %3077
    %3079 = vrot.lane.b32.xlu0 %v3053, 78
    %v3080 = vpop.permute.xlu0 %3079
    %3081 = vrot.lane.b32.xlu0 %v3054, 78
    %v3082 = vpop.permute.xlu0 %3081
    %3083 = vrot.lane.b32.xlu0 %v3055, 78
    %v3084 = vpop.permute.xlu0 %3083
    %3085 = vrot.lane.b32.xlu0 %v3056, 78
    %v3086 = vpop.permute.xlu0 %3085
    %v3087 = vsel %vm542, %v3068, %v3070
    %v3088 = vsel %vm542, %v3070, %v3072
    %v3089 = vsel %vm542, %v3072, %v3074
    %v3090 = vsel %vm542, %v3074, %v3076
    %v3091 = vsel %vm542, %v3076, %v3078
    %v3092 = vsel %vm542, %v3078, %v3080
    %v3093 = vsel %vm542, %v3080, %v3082
    %v3094 = vsel %vm542, %v3082, %v3084
    %v3095 = vsel %vm542, %v3084, %v3086
    %v3106 = vadd.f32 %v3033, %v3068
    %v3107 = vadd.f32 %v3034, %v3087
    %v3108 = vadd.f32 %v3035, %v3088
    %v3109 = vadd.f32 %v3036, %v3089
    %v3110 = vadd.f32 %v3037, %v3090
    %v3111 = vadd.f32 %v3038, %v3091
    %v3112 = vadd.f32 %v3039, %v3092
    %v3113 = vadd.f32 %v3040, %v3093
    %v3114 = vadd.f32 %v3041, %v3094
    %v3115 = vadd.f32 %v3042, %v3095
    %3117 = vset.pattern.permute.xlu0 0
    %3118 = vperm.xlu0 %3117, %v1439
    %v3119 = vpop.permute.xlu0 %3118
    %v3121 = vlaneseq
    %v3122 = vshrl.u32 %v3121, 7
    %v3123 = vsub.s32 0, %v3122
    %v3124 = vrot.slane %v3106, %v3123
    %v3125 = vlaneseq
    %v3126 = vshrl.u32 %v3125, 7
    %v3127 = vsub.s32 0, %v3126
    %v3128 = vrot.slane %v3107, %v3127
    %v3129 = vlaneseq
    %v3130 = vshrl.u32 %v3129, 7
    %v3131 = vsub.s32 0, %v3130
    %v3132 = vrot.slane %v3108, %v3131
    %v3133 = vlaneseq
    %v3134 = vshrl.u32 %v3133, 7
    %v3135 = vsub.s32 0, %v3134
    %v3136 = vrot.slane %v3109, %v3135
    %v3137 = vlaneseq
    %v3138 = vshrl.u32 %v3137, 7
    %v3139 = vsub.s32 0, %v3138
    %v3140 = vrot.slane %v3110, %v3139
    %v3141 = vlaneseq
    %v3142 = vshrl.u32 %v3141, 7
    %v3143 = vsub.s32 0, %v3142
    %v3144 = vrot.slane %v3111, %v3143
    %v3145 = vlaneseq
    %v3146 = vshrl.u32 %v3145, 7
    %v3147 = vsub.s32 0, %v3146
    %v3148 = vrot.slane %v3112, %v3147
    %v3149 = vlaneseq
    %v3150 = vshrl.u32 %v3149, 7
    %v3151 = vsub.s32 0, %v3150
    %v3152 = vrot.slane %v3113, %v3151
    %v3153 = vlaneseq
    %v3154 = vshrl.u32 %v3153, 7
    %v3155 = vsub.s32 0, %v3154
    %v3156 = vrot.slane %v3114, %v3155
    %v3157 = vlaneseq
    %v3158 = vshrl.u32 %v3157, 7
    %v3159 = vsub.s32 0, %v3158
    %v3160 = vrot.slane %v3115, %v3159
    %v3161 = vmul.f32 %v3119, %v3124
    %v3162 = vmul.f32 %v3119, %v3128
    %v3163 = vmul.f32 %v3119, %v3132
    %v3164 = vmul.f32 %v3119, %v3136
    %v3165 = vmul.f32 %v3119, %v3140
    %v3166 = vmul.f32 %v3119, %v3144
    %v3167 = vmul.f32 %v3119, %v3148
    %v3168 = vmul.f32 %v3119, %v3152
    %v3169 = vmul.f32 %v3119, %v3156
    %v3170 = vmul.f32 %v3119, %v3160
    %3171 = vset.pattern.permute.xlu0 1
    %3172 = vperm.xlu0 %3171, %v1439
    %v3173 = vpop.permute.xlu0 %3172
    %v3175 = vlaneseq
    %v3176 = vshrl.u32 %v3175, 7
    %v3177 = vsub.s32 1, %v3176
    %v3178 = vrot.slane %v3106, %v3177
    %v3179 = vlaneseq
    %v3180 = vshrl.u32 %v3179, 7
    %v3181 = vsub.s32 1, %v3180
    %v3182 = vrot.slane %v3107, %v3181
    %v3183 = vlaneseq
    %v3184 = vshrl.u32 %v3183, 7
    %v3185 = vsub.s32 1, %v3184
    %v3186 = vrot.slane %v3108, %v3185
    %v3187 = vlaneseq
    %v3188 = vshrl.u32 %v3187, 7
    %v3189 = vsub.s32 1, %v3188
    %v3190 = vrot.slane %v3109, %v3189
    %v3191 = vlaneseq
    %v3192 = vshrl.u32 %v3191, 7
    %v3193 = vsub.s32 1, %v3192
    %v3194 = vrot.slane %v3110, %v3193
    %v3195 = vlaneseq
    %v3196 = vshrl.u32 %v3195, 7
    %v3197 = vsub.s32 1, %v3196
    %v3198 = vrot.slane %v3111, %v3197
    %v3199 = vlaneseq
    %v3200 = vshrl.u32 %v3199, 7
    %v3201 = vsub.s32 1, %v3200
    %v3202 = vrot.slane %v3112, %v3201
    %v3203 = vlaneseq
    %v3204 = vshrl.u32 %v3203, 7
    %v3205 = vsub.s32 1, %v3204
    %v3206 = vrot.slane %v3113, %v3205
    %v3207 = vlaneseq
    %v3208 = vshrl.u32 %v3207, 7
    %v3209 = vsub.s32 1, %v3208
    %v3210 = vrot.slane %v3114, %v3209
    %v3211 = vlaneseq
    %v3212 = vshrl.u32 %v3211, 7
    %v3213 = vsub.s32 1, %v3212
    %v3214 = vrot.slane %v3115, %v3213
    %v3215 = vmul.f32 %v3173, %v3178
    %v3216 = vmul.f32 %v3173, %v3182
    %v3217 = vmul.f32 %v3173, %v3186
    %v3218 = vmul.f32 %v3173, %v3190
    %v3219 = vmul.f32 %v3173, %v3194
    %v3220 = vmul.f32 %v3173, %v3198
    %v3221 = vmul.f32 %v3173, %v3202
    %v3222 = vmul.f32 %v3173, %v3206
    %v3223 = vmul.f32 %v3173, %v3210
    %v3224 = vmul.f32 %v3173, %v3214
    %v3225 = vadd.f32 %v3161, %v3215
    %v3226 = vadd.f32 %v3162, %v3216
    %v3227 = vadd.f32 %v3163, %v3217
    %v3228 = vadd.f32 %v3164, %v3218
    %v3229 = vadd.f32 %v3165, %v3219
    %v3230 = vadd.f32 %v3166, %v3220
    %v3231 = vadd.f32 %v3167, %v3221
    %v3232 = vadd.f32 %v3168, %v3222
    %v3233 = vadd.f32 %v3169, %v3223
    %v3234 = vadd.f32 %v3170, %v3224
    %3235 = vset.pattern.permute.xlu0 2
    %3236 = vperm.xlu0 %3235, %v1439
    %v3237 = vpop.permute.xlu0 %3236
    %v3239 = vlaneseq
    %v3240 = vshrl.u32 %v3239, 7
    %v3241 = vsub.s32 2, %v3240
    %v3242 = vrot.slane %v3106, %v3241
    %v3243 = vlaneseq
    %v3244 = vshrl.u32 %v3243, 7
    %v3245 = vsub.s32 2, %v3244
    %v3246 = vrot.slane %v3107, %v3245
    %v3247 = vlaneseq
    %v3248 = vshrl.u32 %v3247, 7
    %v3249 = vsub.s32 2, %v3248
    %v3250 = vrot.slane %v3108, %v3249
    %v3251 = vlaneseq
    %v3252 = vshrl.u32 %v3251, 7
    %v3253 = vsub.s32 2, %v3252
    %v3254 = vrot.slane %v3109, %v3253
    %v3255 = vlaneseq
    %v3256 = vshrl.u32 %v3255, 7
    %v3257 = vsub.s32 2, %v3256
    %v3258 = vrot.slane %v3110, %v3257
    %v3259 = vlaneseq
    %v3260 = vshrl.u32 %v3259, 7
    %v3261 = vsub.s32 2, %v3260
    %v3262 = vrot.slane %v3111, %v3261
    %v3263 = vlaneseq
    %v3264 = vshrl.u32 %v3263, 7
    %v3265 = vsub.s32 2, %v3264
    %v3266 = vrot.slane %v3112, %v3265
    %v3267 = vlaneseq
    %v3268 = vshrl.u32 %v3267, 7
    %v3269 = vsub.s32 2, %v3268
    %v3270 = vrot.slane %v3113, %v3269
    %v3271 = vlaneseq
    %v3272 = vshrl.u32 %v3271, 7
    %v3273 = vsub.s32 2, %v3272
    %v3274 = vrot.slane %v3114, %v3273
    %v3275 = vlaneseq
    %v3276 = vshrl.u32 %v3275, 7
    %v3277 = vsub.s32 2, %v3276
    %v3278 = vrot.slane %v3115, %v3277
    %v3279 = vmul.f32 %v3237, %v3242
    %v3280 = vmul.f32 %v3237, %v3246
    %v3281 = vmul.f32 %v3237, %v3250
    %v3282 = vmul.f32 %v3237, %v3254
    %v3283 = vmul.f32 %v3237, %v3258
    %v3284 = vmul.f32 %v3237, %v3262
    %v3285 = vmul.f32 %v3237, %v3266
    %v3286 = vmul.f32 %v3237, %v3270
    %v3287 = vmul.f32 %v3237, %v3274
    %v3288 = vmul.f32 %v3237, %v3278
    %v3289 = vadd.f32 %v3225, %v3279
    %v3290 = vadd.f32 %v3226, %v3280
    %v3291 = vadd.f32 %v3227, %v3281
    %v3292 = vadd.f32 %v3228, %v3282
    %v3293 = vadd.f32 %v3229, %v3283
    %v3294 = vadd.f32 %v3230, %v3284
    %v3295 = vadd.f32 %v3231, %v3285
    %v3296 = vadd.f32 %v3232, %v3286
    %v3297 = vadd.f32 %v3233, %v3287
    %v3298 = vadd.f32 %v3234, %v3288
    %3299 = vset.pattern.permute.xlu0 3
    %3300 = vperm.xlu0 %3299, %v1439
    %v3301 = vpop.permute.xlu0 %3300
    %v3303 = vlaneseq
    %v3304 = vshrl.u32 %v3303, 7
    %v3305 = vsub.s32 3, %v3304
    %v3306 = vrot.slane %v3106, %v3305
    %v3307 = vlaneseq
    %v3308 = vshrl.u32 %v3307, 7
    %v3309 = vsub.s32 3, %v3308
    %v3310 = vrot.slane %v3107, %v3309
    %v3311 = vlaneseq
    %v3312 = vshrl.u32 %v3311, 7
    %v3313 = vsub.s32 3, %v3312
    %v3314 = vrot.slane %v3108, %v3313
    %v3315 = vlaneseq
    %v3316 = vshrl.u32 %v3315, 7
    %v3317 = vsub.s32 3, %v3316
    %v3318 = vrot.slane %v3109, %v3317
    %v3319 = vlaneseq
    %v3320 = vshrl.u32 %v3319, 7
    %v3321 = vsub.s32 3, %v3320
    %v3322 = vrot.slane %v3110, %v3321
    %v3323 = vlaneseq
    %v3324 = vshrl.u32 %v3323, 7
    %v3325 = vsub.s32 3, %v3324
    %v3326 = vrot.slane %v3111, %v3325
    %v3327 = vlaneseq
    %v3328 = vshrl.u32 %v3327, 7
    %v3329 = vsub.s32 3, %v3328
    %v3330 = vrot.slane %v3112, %v3329
    %v3331 = vlaneseq
    %v3332 = vshrl.u32 %v3331, 7
    %v3333 = vsub.s32 3, %v3332
    %v3334 = vrot.slane %v3113, %v3333
    %v3335 = vlaneseq
    %v3336 = vshrl.u32 %v3335, 7
    %v3337 = vsub.s32 3, %v3336
    %v3338 = vrot.slane %v3114, %v3337
    %v3339 = vlaneseq
    %v3340 = vshrl.u32 %v3339, 7
    %v3341 = vsub.s32 3, %v3340
    %v3342 = vrot.slane %v3115, %v3341
    %v3343 = vmul.f32 %v3301, %v3306
    %v3344 = vmul.f32 %v3301, %v3310
    %v3345 = vmul.f32 %v3301, %v3314
    %v3346 = vmul.f32 %v3301, %v3318
    %v3347 = vmul.f32 %v3301, %v3322
    %v3348 = vmul.f32 %v3301, %v3326
    %v3349 = vmul.f32 %v3301, %v3330
    %v3350 = vmul.f32 %v3301, %v3334
    %v3351 = vmul.f32 %v3301, %v3338
    %v3352 = vmul.f32 %v3301, %v3342
    %v3353 = vadd.f32 %v3289, %v3343
    %v3354 = vadd.f32 %v3290, %v3344
    %v3355 = vadd.f32 %v3291, %v3345
    %v3356 = vadd.f32 %v3292, %v3346
    %v3357 = vadd.f32 %v3293, %v3347
    %v3358 = vadd.f32 %v3294, %v3348
    %v3359 = vadd.f32 %v3295, %v3349
    %v3360 = vadd.f32 %v3296, %v3350
    %v3361 = vadd.f32 %v3297, %v3351
    %v3362 = vadd.f32 %v3298, %v3352
    %3373 = vrot.lane.b32.xlu0 %v3353, 25
    %v3374 = vpop.permute.xlu0 %3373
    %3375 = vrot.lane.b32.xlu0 %v3354, 25
    %v3376 = vpop.permute.xlu0 %3375
    %3377 = vrot.lane.b32.xlu0 %v3355, 25
    %v3378 = vpop.permute.xlu0 %3377
    %3379 = vrot.lane.b32.xlu0 %v3356, 25
    %v3380 = vpop.permute.xlu0 %3379
    %3381 = vrot.lane.b32.xlu0 %v3357, 25
    %v3382 = vpop.permute.xlu0 %3381
    %3383 = vrot.lane.b32.xlu0 %v3358, 25
    %v3384 = vpop.permute.xlu0 %3383
    %3385 = vrot.lane.b32.xlu0 %v3359, 25
    %v3386 = vpop.permute.xlu0 %3385
    %3387 = vrot.lane.b32.xlu0 %v3360, 25
    %v3388 = vpop.permute.xlu0 %3387
    %3389 = vrot.lane.b32.xlu0 %v3361, 25
    %v3390 = vpop.permute.xlu0 %3389
    %3391 = vrot.lane.b32.xlu0 %v3362, 25
    %v3392 = vpop.permute.xlu0 %3391
    %v3393 = vsel %vm659, %v3374, %v3376
    %v3394 = vsel %vm659, %v3376, %v3378
    %v3395 = vsel %vm659, %v3378, %v3380
    %v3396 = vsel %vm659, %v3380, %v3382
    %v3397 = vsel %vm659, %v3382, %v3384
    %v3398 = vsel %vm659, %v3384, %v3386
    %v3399 = vsel %vm659, %v3386, %v3388
    %v3400 = vsel %vm659, %v3388, %v3390
    %v3401 = vsel %vm659, %v3390, %v3392
    %v3411 = vsel %vm620, %v3393, 0.0
    %v3412 = vsel %vm621, %v3394, 0.0
    %v3413 = vsel %vm622, %v3395, 0.0
    %v3414 = vsel %vm623, %v3396, 0.0
    %v3415 = vsel %vm624, %v3397, 0.0
    %v3416 = vsel %vm625, %v3398, 0.0
    %v3417 = vsel %vm626, %v3399, 0.0
    %v3418 = vsel %vm627, %v3400, 0.0
    %v3419 = vsel %vm628, %v3401, 0.0
    %v3420 = vsel %vm687, %v3411, 0.0
    %v3421 = vsel %vm687, %v3412, 0.0
    %v3422 = vadd.f32 %v3420, %v3421
    %v3423 = vsel %vm687, %v3413, 0.0
    %v3424 = vadd.f32 %v3422, %v3423
    %v3425 = vsel %vm687, %v3414, 0.0
    %v3426 = vadd.f32 %v3424, %v3425
    %v3427 = vsel %vm687, %v3415, 0.0
    %v3428 = vadd.f32 %v3426, %v3427
    %v3429 = vsel %vm687, %v3416, 0.0
    %v3430 = vadd.f32 %v3428, %v3429
    %v3431 = vsel %vm687, %v3417, 0.0
    %v3432 = vadd.f32 %v3430, %v3431
    %v3433 = vsel %vm687, %v3418, 0.0
    %v3434 = vadd.f32 %v3432, %v3433
    %v3435 = vsel %vm687, %v3419, 0.0
    %v3436 = vadd.f32 %v3434, %v3435
    %3437 = vadd.xlane.f32.xlu0 %v3436
    %v3438 = vpop.xlane.xlu0 %3437
    %v3439 = vmul.f32 %v3438, 0.001953125
    %v3440 = vmul.f32 %v3411, %v3411
    %v3441 = vmul.f32 %v3412, %v3412
    %v3442 = vmul.f32 %v3413, %v3413
    %v3443 = vmul.f32 %v3414, %v3414
    %v3444 = vmul.f32 %v3415, %v3415
    %v3445 = vmul.f32 %v3416, %v3416
    %v3446 = vmul.f32 %v3417, %v3417
    %v3447 = vmul.f32 %v3418, %v3418
    %v3448 = vmul.f32 %v3419, %v3419
    %v3449 = vsel %vm687, %v3440, 0.0
    %v3450 = vsel %vm687, %v3441, 0.0
    %v3451 = vadd.f32 %v3449, %v3450
    %v3452 = vsel %vm687, %v3442, 0.0
    %v3453 = vadd.f32 %v3451, %v3452
    %v3454 = vsel %vm687, %v3443, 0.0
    %v3455 = vadd.f32 %v3453, %v3454
    %v3456 = vsel %vm687, %v3444, 0.0
    %v3457 = vadd.f32 %v3455, %v3456
    %v3458 = vsel %vm687, %v3445, 0.0
    %v3459 = vadd.f32 %v3457, %v3458
    %v3460 = vsel %vm687, %v3446, 0.0
    %v3461 = vadd.f32 %v3459, %v3460
    %v3462 = vsel %vm687, %v3447, 0.0
    %v3463 = vadd.f32 %v3461, %v3462
    %v3464 = vsel %vm687, %v3448, 0.0
    %v3465 = vadd.f32 %v3463, %v3464
    %3466 = vadd.xlane.f32.xlu0 %v3465
    %v3467 = vpop.xlane.xlu0 %3466
    %v3468 = vmul.f32 %v3467, 0.001953125
    %v3469 = vmul.f32 %v3439, %v3439
    %v3470 = vsub.f32 %v3468, %v3469
    %v3471 = vmax.f32 %v3470, 0.0
    %v3472 = vsub.f32 %v3411, %v3439
    %v3473 = vsub.f32 %v3412, %v3439
    %v3474 = vsub.f32 %v3413, %v3439
    %v3475 = vsub.f32 %v3414, %v3439
    %v3476 = vsub.f32 %v3415, %v3439
    %v3477 = vsub.f32 %v3416, %v3439
    %v3478 = vsub.f32 %v3417, %v3439
    %v3479 = vsub.f32 %v3418, %v3439
    %v3480 = vsub.f32 %v3419, %v3439
    %v3481 = vadd.f32 %v3471, 1e-05
    %v3482 = vrsqrt.pop %v3481
    %v3483 = vmul.f32 %v3472, %v3482
    %v3484 = vmul.f32 %v3473, %v3482
    %v3485 = vmul.f32 %v3474, %v3482
    %v3486 = vmul.f32 %v3475, %v3482
    %v3487 = vmul.f32 %v3476, %v3482
    %v3488 = vmul.f32 %v3477, %v3482
    %v3489 = vmul.f32 %v3478, %v3482
    %v3490 = vmul.f32 %v3479, %v3482
    %v3491 = vmul.f32 %v3480, %v3482
    %v3492 = vsel %vm620, %v3483, 0.0
    %v3493 = vsel %vm621, %v3484, 0.0
    %v3494 = vsel %vm622, %v3485, 0.0
    %v3495 = vsel %vm623, %v3486, 0.0
    %v3496 = vsel %vm624, %v3487, 0.0
    %v3497 = vsel %vm625, %v3488, 0.0
    %v3498 = vsel %vm626, %v3489, 0.0
    %v3499 = vsel %vm627, %v3490, 0.0
    %v3500 = vsel %vm628, %v3491, 0.0
    %v3501 = vstv %s1435
    %v3502 = vmul.f32 %v3501, %v3492
    %v3503 = vmul.f32 %v3501, %v3493
    %v3504 = vmul.f32 %v3501, %v3494
    %v3505 = vmul.f32 %v3501, %v3495
    %v3506 = vmul.f32 %v3501, %v3496
    %v3507 = vmul.f32 %v3501, %v3497
    %v3508 = vmul.f32 %v3501, %v3498
    %v3509 = vmul.f32 %v3501, %v3499
    %v3510 = vmul.f32 %v3501, %v3500
    %v3511 = vadd.f32 %v1426, %v3502
    %v3512 = vadd.f32 %v1427, %v3503
    %v3513 = vadd.f32 %v1428, %v3504
    %v3514 = vadd.f32 %v1429, %v3505
    %v3515 = vadd.f32 %v1430, %v3506
    %v3516 = vadd.f32 %v1431, %v3507
    %v3517 = vadd.f32 %v1432, %v3508
    %v3518 = vadd.f32 %v1433, %v3509
    %v3519 = vadd.f32 %v1434, %v3510
    %s3520 = sld [smem:[#allocation2 + $0x5]]
    %v3521 = vld [vmem:[%s7] sm:$0xf]
    %v3522 = vld [vmem:[%s8] sm:$0xf]
    %v3523 = vld [vmem:[%s9] sm:$0xf]
    %v3524 = vld [vmem:[%s10] sm:$0xf]
    %3526 = vset.pattern.permute.xlu0 0
    %3527 = vperm.xlu0 %3526, %v3521
    %v3528 = vpop.permute.xlu0 %3527
    %3530 = vrot.lane.b32.xlu0 %v71, 100
    %v3531 = vpop.permute.xlu0 %3530
    %3532 = vrot.lane.b32.xlu0 %v1450, 100
    %v3533 = vpop.permute.xlu0 %3532
    %3534 = vrot.lane.b32.xlu0 %v72, 100
    %v3535 = vpop.permute.xlu0 %3534
    %3536 = vrot.lane.b32.xlu0 %v1451, 100
    %v3537 = vpop.permute.xlu0 %3536
    %3538 = vrot.lane.b32.xlu0 %v73, 100
    %v3539 = vpop.permute.xlu0 %3538
    %3540 = vrot.lane.b32.xlu0 %v1452, 100
    %v3541 = vpop.permute.xlu0 %3540
    %3542 = vrot.lane.b32.xlu0 %v74, 100
    %v3543 = vpop.permute.xlu0 %3542
    %3544 = vrot.lane.b32.xlu0 %v1453, 100
    %v3545 = vpop.permute.xlu0 %3544
    %3546 = vrot.lane.b32.xlu0 %v75, 100
    %v3547 = vpop.permute.xlu0 %3546
    %3548 = vrot.lane.b32.xlu0 %v1454, 100
    %v3549 = vpop.permute.xlu0 %3548
    %vm3550 = vcmask 818176
    %v3551 = vsel %vm3550, %v3531, %v3533
    %v3552 = vsel %vm3550, %v3533, %v3535
    %v3553 = vsel %vm3550, %v3535, %v3537
    %v3554 = vsel %vm3550, %v3537, %v3539
    %v3555 = vsel %vm3550, %v3539, %v3541
    %v3556 = vsel %vm3550, %v3541, %v3543
    %v3557 = vsel %vm3550, %v3543, %v3545
    %v3558 = vsel %vm3550, %v3545, %v3547
    %v3559 = vsel %vm3550, %v3547, %v3549
    %v3570 = vmul.f32 %v3528, %v3551
    %v3571 = vmul.f32 %v3528, %v3552
    %v3572 = vmul.f32 %v3528, %v3553
    %v3573 = vmul.f32 %v3528, %v3554
    %v3574 = vmul.f32 %v3528, %v3555
    %v3575 = vmul.f32 %v3528, %v3556
    %v3576 = vmul.f32 %v3528, %v3557
    %v3577 = vmul.f32 %v3528, %v3558
    %v3578 = vmul.f32 %v3528, %v3559
    %v3579 = vmul.f32 %v3528, %v3549
    %3580 = vset.pattern.permute.xlu0 1
    %3581 = vperm.xlu0 %3580, %v3521
    %v3582 = vpop.permute.xlu0 %3581
    %3584 = vrot.lane.b32.xlu0 %v71, 99
    %v3585 = vpop.permute.xlu0 %3584
    %3586 = vrot.lane.b32.xlu0 %v1450, 99
    %v3587 = vpop.permute.xlu0 %3586
    %3588 = vrot.lane.b32.xlu0 %v72, 99
    %v3589 = vpop.permute.xlu0 %3588
    %3590 = vrot.lane.b32.xlu0 %v1451, 99
    %v3591 = vpop.permute.xlu0 %3590
    %3592 = vrot.lane.b32.xlu0 %v73, 99
    %v3593 = vpop.permute.xlu0 %3592
    %3594 = vrot.lane.b32.xlu0 %v1452, 99
    %v3595 = vpop.permute.xlu0 %3594
    %3596 = vrot.lane.b32.xlu0 %v74, 99
    %v3597 = vpop.permute.xlu0 %3596
    %3598 = vrot.lane.b32.xlu0 %v1453, 99
    %v3599 = vpop.permute.xlu0 %3598
    %3600 = vrot.lane.b32.xlu0 %v75, 99
    %v3601 = vpop.permute.xlu0 %3600
    %3602 = vrot.lane.b32.xlu0 %v1454, 99
    %v3603 = vpop.permute.xlu0 %3602
    %3604 = vrot.lane.b32.xlu0 %v76, 99
    %v3605 = vpop.permute.xlu0 %3604
    %vm3606 = vcmask 809984
    %v3607 = vsel %vm3606, %v3585, %v3587
    %v3608 = vsel %vm3606, %v3587, %v3589
    %v3609 = vsel %vm3606, %v3589, %v3591
    %v3610 = vsel %vm3606, %v3591, %v3593
    %v3611 = vsel %vm3606, %v3593, %v3595
    %v3612 = vsel %vm3606, %v3595, %v3597
    %v3613 = vsel %vm3606, %v3597, %v3599
    %v3614 = vsel %vm3606, %v3599, %v3601
    %v3615 = vsel %vm3606, %v3601, %v3603
    %v3616 = vsel %vm3606, %v3603, %v3605
    %v3627 = vmul.f32 %v3582, %v3607
    %v3628 = vmul.f32 %v3582, %v3608
    %v3629 = vmul.f32 %v3582, %v3609
    %v3630 = vmul.f32 %v3582, %v3610
    %v3631 = vmul.f32 %v3582, %v3611
    %v3632 = vmul.f32 %v3582, %v3612
    %v3633 = vmul.f32 %v3582, %v3613
    %v3634 = vmul.f32 %v3582, %v3614
    %v3635 = vmul.f32 %v3582, %v3615
    %v3636 = vmul.f32 %v3582, %v3616
    %v3637 = vadd.f32 %v3570, %v3627
    %v3638 = vadd.f32 %v3571, %v3628
    %v3639 = vadd.f32 %v3572, %v3629
    %v3640 = vadd.f32 %v3573, %v3630
    %v3641 = vadd.f32 %v3574, %v3631
    %v3642 = vadd.f32 %v3575, %v3632
    %v3643 = vadd.f32 %v3576, %v3633
    %v3644 = vadd.f32 %v3577, %v3634
    %v3645 = vadd.f32 %v3578, %v3635
    %v3646 = vadd.f32 %v3579, %v3636
    %3647 = vset.pattern.permute.xlu0 2
    %3648 = vperm.xlu0 %3647, %v3521
    %v3649 = vpop.permute.xlu0 %3648
    %3651 = vrot.lane.b32.xlu0 %v71, 98
    %v3652 = vpop.permute.xlu0 %3651
    %3653 = vrot.lane.b32.xlu0 %v1450, 98
    %v3654 = vpop.permute.xlu0 %3653
    %3655 = vrot.lane.b32.xlu0 %v72, 98
    %v3656 = vpop.permute.xlu0 %3655
    %3657 = vrot.lane.b32.xlu0 %v1451, 98
    %v3658 = vpop.permute.xlu0 %3657
    %3659 = vrot.lane.b32.xlu0 %v73, 98
    %v3660 = vpop.permute.xlu0 %3659
    %3661 = vrot.lane.b32.xlu0 %v1452, 98
    %v3662 = vpop.permute.xlu0 %3661
    %3663 = vrot.lane.b32.xlu0 %v74, 98
    %v3664 = vpop.permute.xlu0 %3663
    %3665 = vrot.lane.b32.xlu0 %v1453, 98
    %v3666 = vpop.permute.xlu0 %3665
    %3667 = vrot.lane.b32.xlu0 %v75, 98
    %v3668 = vpop.permute.xlu0 %3667
    %3669 = vrot.lane.b32.xlu0 %v1454, 98
    %v3670 = vpop.permute.xlu0 %3669
    %3671 = vrot.lane.b32.xlu0 %v76, 98
    %v3672 = vpop.permute.xlu0 %3671
    %vm3673 = vcmask 801792
    %v3674 = vsel %vm3673, %v3652, %v3654
    %v3675 = vsel %vm3673, %v3654, %v3656
    %v3676 = vsel %vm3673, %v3656, %v3658
    %v3677 = vsel %vm3673, %v3658, %v3660
    %v3678 = vsel %vm3673, %v3660, %v3662
    %v3679 = vsel %vm3673, %v3662, %v3664
    %v3680 = vsel %vm3673, %v3664, %v3666
    %v3681 = vsel %vm3673, %v3666, %v3668
    %v3682 = vsel %vm3673, %v3668, %v3670
    %v3683 = vsel %vm3673, %v3670, %v3672
    %v3694 = vmul.f32 %v3649, %v3674
    %v3695 = vmul.f32 %v3649, %v3675
    %v3696 = vmul.f32 %v3649, %v3676
    %v3697 = vmul.f32 %v3649, %v3677
    %v3698 = vmul.f32 %v3649, %v3678
    %v3699 = vmul.f32 %v3649, %v3679
    %v3700 = vmul.f32 %v3649, %v3680
    %v3701 = vmul.f32 %v3649, %v3681
    %v3702 = vmul.f32 %v3649, %v3682
    %v3703 = vmul.f32 %v3649, %v3683
    %v3704 = vadd.f32 %v3637, %v3694
    %v3705 = vadd.f32 %v3638, %v3695
    %v3706 = vadd.f32 %v3639, %v3696
    %v3707 = vadd.f32 %v3640, %v3697
    %v3708 = vadd.f32 %v3641, %v3698
    %v3709 = vadd.f32 %v3642, %v3699
    %v3710 = vadd.f32 %v3643, %v3700
    %v3711 = vadd.f32 %v3644, %v3701
    %v3712 = vadd.f32 %v3645, %v3702
    %v3713 = vadd.f32 %v3646, %v3703
    %3714 = vset.pattern.permute.xlu0 3
    %3715 = vperm.xlu0 %3714, %v3521
    %v3716 = vpop.permute.xlu0 %3715
    %3718 = vrot.lane.b32.xlu0 %v71, 97
    %v3719 = vpop.permute.xlu0 %3718
    %3720 = vrot.lane.b32.xlu0 %v1450, 97
    %v3721 = vpop.permute.xlu0 %3720
    %3722 = vrot.lane.b32.xlu0 %v72, 97
    %v3723 = vpop.permute.xlu0 %3722
    %3724 = vrot.lane.b32.xlu0 %v1451, 97
    %v3725 = vpop.permute.xlu0 %3724
    %3726 = vrot.lane.b32.xlu0 %v73, 97
    %v3727 = vpop.permute.xlu0 %3726
    %3728 = vrot.lane.b32.xlu0 %v1452, 97
    %v3729 = vpop.permute.xlu0 %3728
    %3730 = vrot.lane.b32.xlu0 %v74, 97
    %v3731 = vpop.permute.xlu0 %3730
    %3732 = vrot.lane.b32.xlu0 %v1453, 97
    %v3733 = vpop.permute.xlu0 %3732
    %3734 = vrot.lane.b32.xlu0 %v75, 97
    %v3735 = vpop.permute.xlu0 %3734
    %3736 = vrot.lane.b32.xlu0 %v1454, 97
    %v3737 = vpop.permute.xlu0 %3736
    %3738 = vrot.lane.b32.xlu0 %v76, 97
    %v3739 = vpop.permute.xlu0 %3738
    %vm3740 = vcmask 793600
    %v3741 = vsel %vm3740, %v3719, %v3721
    %v3742 = vsel %vm3740, %v3721, %v3723
    %v3743 = vsel %vm3740, %v3723, %v3725
    %v3744 = vsel %vm3740, %v3725, %v3727
    %v3745 = vsel %vm3740, %v3727, %v3729
    %v3746 = vsel %vm3740, %v3729, %v3731
    %v3747 = vsel %vm3740, %v3731, %v3733
    %v3748 = vsel %vm3740, %v3733, %v3735
    %v3749 = vsel %vm3740, %v3735, %v3737
    %v3750 = vsel %vm3740, %v3737, %v3739
    %v3761 = vmul.f32 %v3716, %v3741
    %v3762 = vmul.f32 %v3716, %v3742
    %v3763 = vmul.f32 %v3716, %v3743
    %v3764 = vmul.f32 %v3716, %v3744
    %v3765 = vmul.f32 %v3716, %v3745
    %v3766 = vmul.f32 %v3716, %v3746
    %v3767 = vmul.f32 %v3716, %v3747
    %v3768 = vmul.f32 %v3716, %v3748
    %v3769 = vmul.f32 %v3716, %v3749
    %v3770 = vmul.f32 %v3716, %v3750
    %v3771 = vadd.f32 %v3704, %v3761
    %v3772 = vadd.f32 %v3705, %v3762
    %v3773 = vadd.f32 %v3706, %v3763
    %v3774 = vadd.f32 %v3707, %v3764
    %v3775 = vadd.f32 %v3708, %v3765
    %v3776 = vadd.f32 %v3709, %v3766
    %v3777 = vadd.f32 %v3710, %v3767
    %v3778 = vadd.f32 %v3711, %v3768
    %v3779 = vadd.f32 %v3712, %v3769
    %v3780 = vadd.f32 %v3713, %v3770
    %3781 = vset.pattern.permute.xlu0 4
    %3782 = vperm.xlu0 %3781, %v3521
    %v3783 = vpop.permute.xlu0 %3782
    %3785 = vrot.lane.b32.xlu0 %v71, 96
    %v3786 = vpop.permute.xlu0 %3785
    %3787 = vrot.lane.b32.xlu0 %v1450, 96
    %v3788 = vpop.permute.xlu0 %3787
    %3789 = vrot.lane.b32.xlu0 %v72, 96
    %v3790 = vpop.permute.xlu0 %3789
    %3791 = vrot.lane.b32.xlu0 %v1451, 96
    %v3792 = vpop.permute.xlu0 %3791
    %3793 = vrot.lane.b32.xlu0 %v73, 96
    %v3794 = vpop.permute.xlu0 %3793
    %3795 = vrot.lane.b32.xlu0 %v1452, 96
    %v3796 = vpop.permute.xlu0 %3795
    %3797 = vrot.lane.b32.xlu0 %v74, 96
    %v3798 = vpop.permute.xlu0 %3797
    %3799 = vrot.lane.b32.xlu0 %v1453, 96
    %v3800 = vpop.permute.xlu0 %3799
    %3801 = vrot.lane.b32.xlu0 %v75, 96
    %v3802 = vpop.permute.xlu0 %3801
    %3803 = vrot.lane.b32.xlu0 %v1454, 96
    %v3804 = vpop.permute.xlu0 %3803
    %3805 = vrot.lane.b32.xlu0 %v76, 96
    %v3806 = vpop.permute.xlu0 %3805
    %vm3807 = vcmask 785408
    %v3808 = vsel %vm3807, %v3786, %v3788
    %v3809 = vsel %vm3807, %v3788, %v3790
    %v3810 = vsel %vm3807, %v3790, %v3792
    %v3811 = vsel %vm3807, %v3792, %v3794
    %v3812 = vsel %vm3807, %v3794, %v3796
    %v3813 = vsel %vm3807, %v3796, %v3798
    %v3814 = vsel %vm3807, %v3798, %v3800
    %v3815 = vsel %vm3807, %v3800, %v3802
    %v3816 = vsel %vm3807, %v3802, %v3804
    %v3817 = vsel %vm3807, %v3804, %v3806
    %v3828 = vmul.f32 %v3783, %v3808
    %v3829 = vmul.f32 %v3783, %v3809
    %v3830 = vmul.f32 %v3783, %v3810
    %v3831 = vmul.f32 %v3783, %v3811
    %v3832 = vmul.f32 %v3783, %v3812
    %v3833 = vmul.f32 %v3783, %v3813
    %v3834 = vmul.f32 %v3783, %v3814
    %v3835 = vmul.f32 %v3783, %v3815
    %v3836 = vmul.f32 %v3783, %v3816
    %v3837 = vmul.f32 %v3783, %v3817
    %v3838 = vadd.f32 %v3771, %v3828
    %v3839 = vadd.f32 %v3772, %v3829
    %v3840 = vadd.f32 %v3773, %v3830
    %v3841 = vadd.f32 %v3774, %v3831
    %v3842 = vadd.f32 %v3775, %v3832
    %v3843 = vadd.f32 %v3776, %v3833
    %v3844 = vadd.f32 %v3777, %v3834
    %v3845 = vadd.f32 %v3778, %v3835
    %v3846 = vadd.f32 %v3779, %v3836
    %v3847 = vadd.f32 %v3780, %v3837
    %3848 = vset.pattern.permute.xlu0 5
    %3849 = vperm.xlu0 %3848, %v3521
    %v3850 = vpop.permute.xlu0 %3849
    %3852 = vrot.lane.b32.xlu0 %v71, 76
    %v3853 = vpop.permute.xlu0 %3852
    %3854 = vrot.lane.b32.xlu0 %v1450, 76
    %v3855 = vpop.permute.xlu0 %3854
    %3856 = vrot.lane.b32.xlu0 %v72, 76
    %v3857 = vpop.permute.xlu0 %3856
    %3858 = vrot.lane.b32.xlu0 %v1451, 76
    %v3859 = vpop.permute.xlu0 %3858
    %3860 = vrot.lane.b32.xlu0 %v73, 76
    %v3861 = vpop.permute.xlu0 %3860
    %3862 = vrot.lane.b32.xlu0 %v1452, 76
    %v3863 = vpop.permute.xlu0 %3862
    %3864 = vrot.lane.b32.xlu0 %v74, 76
    %v3865 = vpop.permute.xlu0 %3864
    %3866 = vrot.lane.b32.xlu0 %v1453, 76
    %v3867 = vpop.permute.xlu0 %3866
    %3868 = vrot.lane.b32.xlu0 %v75, 76
    %v3869 = vpop.permute.xlu0 %3868
    %3870 = vrot.lane.b32.xlu0 %v1454, 76
    %v3871 = vpop.permute.xlu0 %3870
    %3872 = vrot.lane.b32.xlu0 %v76, 76
    %v3873 = vpop.permute.xlu0 %3872
    %vm3874 = vcmask 621568
    %v3875 = vsel %vm3874, %v3853, %v3855
    %v3876 = vsel %vm3874, %v3855, %v3857
    %v3877 = vsel %vm3874, %v3857, %v3859
    %v3878 = vsel %vm3874, %v3859, %v3861
    %v3879 = vsel %vm3874, %v3861, %v3863
    %v3880 = vsel %vm3874, %v3863, %v3865
    %v3881 = vsel %vm3874, %v3865, %v3867
    %v3882 = vsel %vm3874, %v3867, %v3869
    %v3883 = vsel %vm3874, %v3869, %v3871
    %v3884 = vsel %vm3874, %v3871, %v3873
    %v3895 = vmul.f32 %v3850, %v3875
    %v3896 = vmul.f32 %v3850, %v3876
    %v3897 = vmul.f32 %v3850, %v3877
    %v3898 = vmul.f32 %v3850, %v3878
    %v3899 = vmul.f32 %v3850, %v3879
    %v3900 = vmul.f32 %v3850, %v3880
    %v3901 = vmul.f32 %v3850, %v3881
    %v3902 = vmul.f32 %v3850, %v3882
    %v3903 = vmul.f32 %v3850, %v3883
    %v3904 = vmul.f32 %v3850, %v3884
    %v3905 = vadd.f32 %v3838, %v3895
    %v3906 = vadd.f32 %v3839, %v3896
    %v3907 = vadd.f32 %v3840, %v3897
    %v3908 = vadd.f32 %v3841, %v3898
    %v3909 = vadd.f32 %v3842, %v3899
    %v3910 = vadd.f32 %v3843, %v3900
    %v3911 = vadd.f32 %v3844, %v3901
    %v3912 = vadd.f32 %v3845, %v3902
    %v3913 = vadd.f32 %v3846, %v3903
    %v3914 = vadd.f32 %v3847, %v3904
    %3915 = vset.pattern.permute.xlu0 6
    %3916 = vperm.xlu0 %3915, %v3521
    %v3917 = vpop.permute.xlu0 %3916
    %3919 = vrot.lane.b32.xlu0 %v71, 75
    %v3920 = vpop.permute.xlu0 %3919
    %3921 = vrot.lane.b32.xlu0 %v1450, 75
    %v3922 = vpop.permute.xlu0 %3921
    %3923 = vrot.lane.b32.xlu0 %v72, 75
    %v3924 = vpop.permute.xlu0 %3923
    %3925 = vrot.lane.b32.xlu0 %v1451, 75
    %v3926 = vpop.permute.xlu0 %3925
    %3927 = vrot.lane.b32.xlu0 %v73, 75
    %v3928 = vpop.permute.xlu0 %3927
    %3929 = vrot.lane.b32.xlu0 %v1452, 75
    %v3930 = vpop.permute.xlu0 %3929
    %3931 = vrot.lane.b32.xlu0 %v74, 75
    %v3932 = vpop.permute.xlu0 %3931
    %3933 = vrot.lane.b32.xlu0 %v1453, 75
    %v3934 = vpop.permute.xlu0 %3933
    %3935 = vrot.lane.b32.xlu0 %v75, 75
    %v3936 = vpop.permute.xlu0 %3935
    %3937 = vrot.lane.b32.xlu0 %v1454, 75
    %v3938 = vpop.permute.xlu0 %3937
    %3939 = vrot.lane.b32.xlu0 %v76, 75
    %v3940 = vpop.permute.xlu0 %3939
    %vm3941 = vcmask 613376
    %v3942 = vsel %vm3941, %v3920, %v3922
    %v3943 = vsel %vm3941, %v3922, %v3924
    %v3944 = vsel %vm3941, %v3924, %v3926
    %v3945 = vsel %vm3941, %v3926, %v3928
    %v3946 = vsel %vm3941, %v3928, %v3930
    %v3947 = vsel %vm3941, %v3930, %v3932
    %v3948 = vsel %vm3941, %v3932, %v3934
    %v3949 = vsel %vm3941, %v3934, %v3936
    %v3950 = vsel %vm3941, %v3936, %v3938
    %v3951 = vsel %vm3941, %v3938, %v3940
    %v3962 = vmul.f32 %v3917, %v3942
    %v3963 = vmul.f32 %v3917, %v3943
    %v3964 = vmul.f32 %v3917, %v3944
    %v3965 = vmul.f32 %v3917, %v3945
    %v3966 = vmul.f32 %v3917, %v3946
    %v3967 = vmul.f32 %v3917, %v3947
    %v3968 = vmul.f32 %v3917, %v3948
    %v3969 = vmul.f32 %v3917, %v3949
    %v3970 = vmul.f32 %v3917, %v3950
    %v3971 = vmul.f32 %v3917, %v3951
    %v3972 = vadd.f32 %v3905, %v3962
    %v3973 = vadd.f32 %v3906, %v3963
    %v3974 = vadd.f32 %v3907, %v3964
    %v3975 = vadd.f32 %v3908, %v3965
    %v3976 = vadd.f32 %v3909, %v3966
    %v3977 = vadd.f32 %v3910, %v3967
    %v3978 = vadd.f32 %v3911, %v3968
    %v3979 = vadd.f32 %v3912, %v3969
    %v3980 = vadd.f32 %v3913, %v3970
    %v3981 = vadd.f32 %v3914, %v3971
    %3982 = vset.pattern.permute.xlu0 7
    %3983 = vperm.xlu0 %3982, %v3521
    %v3984 = vpop.permute.xlu0 %3983
    %3986 = vrot.lane.b32.xlu0 %v71, 74
    %v3987 = vpop.permute.xlu0 %3986
    %3988 = vrot.lane.b32.xlu0 %v1450, 74
    %v3989 = vpop.permute.xlu0 %3988
    %3990 = vrot.lane.b32.xlu0 %v72, 74
    %v3991 = vpop.permute.xlu0 %3990
    %3992 = vrot.lane.b32.xlu0 %v1451, 74
    %v3993 = vpop.permute.xlu0 %3992
    %3994 = vrot.lane.b32.xlu0 %v73, 74
    %v3995 = vpop.permute.xlu0 %3994
    %3996 = vrot.lane.b32.xlu0 %v1452, 74
    %v3997 = vpop.permute.xlu0 %3996
    %3998 = vrot.lane.b32.xlu0 %v74, 74
    %v3999 = vpop.permute.xlu0 %3998
    %4000 = vrot.lane.b32.xlu0 %v1453, 74
    %v4001 = vpop.permute.xlu0 %4000
    %4002 = vrot.lane.b32.xlu0 %v75, 74
    %v4003 = vpop.permute.xlu0 %4002
    %4004 = vrot.lane.b32.xlu0 %v1454, 74
    %v4005 = vpop.permute.xlu0 %4004
    %4006 = vrot.lane.b32.xlu0 %v76, 74
    %v4007 = vpop.permute.xlu0 %4006
    %vm4008 = vcmask 605184
    %v4009 = vsel %vm4008, %v3987, %v3989
    %v4010 = vsel %vm4008, %v3989, %v3991
    %v4011 = vsel %vm4008, %v3991, %v3993
    %v4012 = vsel %vm4008, %v3993, %v3995
    %v4013 = vsel %vm4008, %v3995, %v3997
    %v4014 = vsel %vm4008, %v3997, %v3999
    %v4015 = vsel %vm4008, %v3999, %v4001
    %v4016 = vsel %vm4008, %v4001, %v4003
    %v4017 = vsel %vm4008, %v4003, %v4005
    %v4018 = vsel %vm4008, %v4005, %v4007
    %v4029 = vmul.f32 %v3984, %v4009
    %v4030 = vmul.f32 %v3984, %v4010
    %v4031 = vmul.f32 %v3984, %v4011
    %v4032 = vmul.f32 %v3984, %v4012
    %v4033 = vmul.f32 %v3984, %v4013
    %v4034 = vmul.f32 %v3984, %v4014
    %v4035 = vmul.f32 %v3984, %v4015
    %v4036 = vmul.f32 %v3984, %v4016
    %v4037 = vmul.f32 %v3984, %v4017
    %v4038 = vmul.f32 %v3984, %v4018
    %v4039 = vadd.f32 %v3972, %v4029
    %v4040 = vadd.f32 %v3973, %v4030
    %v4041 = vadd.f32 %v3974, %v4031
    %v4042 = vadd.f32 %v3975, %v4032
    %v4043 = vadd.f32 %v3976, %v4033
    %v4044 = vadd.f32 %v3977, %v4034
    %v4045 = vadd.f32 %v3978, %v4035
    %v4046 = vadd.f32 %v3979, %v4036
    %v4047 = vadd.f32 %v3980, %v4037
    %v4048 = vadd.f32 %v3981, %v4038
    %4049 = vset.pattern.permute.xlu0 8
    %4050 = vperm.xlu0 %4049, %v3521
    %v4051 = vpop.permute.xlu0 %4050
    %4053 = vrot.lane.b32.xlu0 %v71, 73
    %v4054 = vpop.permute.xlu0 %4053
    %4055 = vrot.lane.b32.xlu0 %v1450, 73
    %v4056 = vpop.permute.xlu0 %4055
    %4057 = vrot.lane.b32.xlu0 %v72, 73
    %v4058 = vpop.permute.xlu0 %4057
    %4059 = vrot.lane.b32.xlu0 %v1451, 73
    %v4060 = vpop.permute.xlu0 %4059
    %4061 = vrot.lane.b32.xlu0 %v73, 73
    %v4062 = vpop.permute.xlu0 %4061
    %4063 = vrot.lane.b32.xlu0 %v1452, 73
    %v4064 = vpop.permute.xlu0 %4063
    %4065 = vrot.lane.b32.xlu0 %v74, 73
    %v4066 = vpop.permute.xlu0 %4065
    %4067 = vrot.lane.b32.xlu0 %v1453, 73
    %v4068 = vpop.permute.xlu0 %4067
    %4069 = vrot.lane.b32.xlu0 %v75, 73
    %v4070 = vpop.permute.xlu0 %4069
    %4071 = vrot.lane.b32.xlu0 %v1454, 73
    %v4072 = vpop.permute.xlu0 %4071
    %4073 = vrot.lane.b32.xlu0 %v76, 73
    %v4074 = vpop.permute.xlu0 %4073
    %vm4075 = vcmask 596992
    %v4076 = vsel %vm4075, %v4054, %v4056
    %v4077 = vsel %vm4075, %v4056, %v4058
    %v4078 = vsel %vm4075, %v4058, %v4060
    %v4079 = vsel %vm4075, %v4060, %v4062
    %v4080 = vsel %vm4075, %v4062, %v4064
    %v4081 = vsel %vm4075, %v4064, %v4066
    %v4082 = vsel %vm4075, %v4066, %v4068
    %v4083 = vsel %vm4075, %v4068, %v4070
    %v4084 = vsel %vm4075, %v4070, %v4072
    %v4085 = vsel %vm4075, %v4072, %v4074
    %v4096 = vmul.f32 %v4051, %v4076
    %v4097 = vmul.f32 %v4051, %v4077
    %v4098 = vmul.f32 %v4051, %v4078
    %v4099 = vmul.f32 %v4051, %v4079
    %v4100 = vmul.f32 %v4051, %v4080
    %v4101 = vmul.f32 %v4051, %v4081
    %v4102 = vmul.f32 %v4051, %v4082
    %v4103 = vmul.f32 %v4051, %v4083
    %v4104 = vmul.f32 %v4051, %v4084
    %v4105 = vmul.f32 %v4051, %v4085
    %v4106 = vadd.f32 %v4039, %v4096
    %v4107 = vadd.f32 %v4040, %v4097
    %v4108 = vadd.f32 %v4041, %v4098
    %v4109 = vadd.f32 %v4042, %v4099
    %v4110 = vadd.f32 %v4043, %v4100
    %v4111 = vadd.f32 %v4044, %v4101
    %v4112 = vadd.f32 %v4045, %v4102
    %v4113 = vadd.f32 %v4046, %v4103
    %v4114 = vadd.f32 %v4047, %v4104
    %v4115 = vadd.f32 %v4048, %v4105
    %4116 = vset.pattern.permute.xlu0 9
    %4117 = vperm.xlu0 %4116, %v3521
    %v4118 = vpop.permute.xlu0 %4117
    %4120 = vrot.lane.b32.xlu0 %v71, 72
    %v4121 = vpop.permute.xlu0 %4120
    %4122 = vrot.lane.b32.xlu0 %v1450, 72
    %v4123 = vpop.permute.xlu0 %4122
    %4124 = vrot.lane.b32.xlu0 %v72, 72
    %v4125 = vpop.permute.xlu0 %4124
    %4126 = vrot.lane.b32.xlu0 %v1451, 72
    %v4127 = vpop.permute.xlu0 %4126
    %4128 = vrot.lane.b32.xlu0 %v73, 72
    %v4129 = vpop.permute.xlu0 %4128
    %4130 = vrot.lane.b32.xlu0 %v1452, 72
    %v4131 = vpop.permute.xlu0 %4130
    %4132 = vrot.lane.b32.xlu0 %v74, 72
    %v4133 = vpop.permute.xlu0 %4132
    %4134 = vrot.lane.b32.xlu0 %v1453, 72
    %v4135 = vpop.permute.xlu0 %4134
    %4136 = vrot.lane.b32.xlu0 %v75, 72
    %v4137 = vpop.permute.xlu0 %4136
    %4138 = vrot.lane.b32.xlu0 %v1454, 72
    %v4139 = vpop.permute.xlu0 %4138
    %4140 = vrot.lane.b32.xlu0 %v76, 72
    %v4141 = vpop.permute.xlu0 %4140
    %vm4142 = vcmask 588800
    %v4143 = vsel %vm4142, %v4121, %v4123
    %v4144 = vsel %vm4142, %v4123, %v4125
    %v4145 = vsel %vm4142, %v4125, %v4127
    %v4146 = vsel %vm4142, %v4127, %v4129
    %v4147 = vsel %vm4142, %v4129, %v4131
    %v4148 = vsel %vm4142, %v4131, %v4133
    %v4149 = vsel %vm4142, %v4133, %v4135
    %v4150 = vsel %vm4142, %v4135, %v4137
    %v4151 = vsel %vm4142, %v4137, %v4139
    %v4152 = vsel %vm4142, %v4139, %v4141
    %v4163 = vmul.f32 %v4118, %v4143
    %v4164 = vmul.f32 %v4118, %v4144
    %v4165 = vmul.f32 %v4118, %v4145
    %v4166 = vmul.f32 %v4118, %v4146
    %v4167 = vmul.f32 %v4118, %v4147
    %v4168 = vmul.f32 %v4118, %v4148
    %v4169 = vmul.f32 %v4118, %v4149
    %v4170 = vmul.f32 %v4118, %v4150
    %v4171 = vmul.f32 %v4118, %v4151
    %v4172 = vmul.f32 %v4118, %v4152
    %v4173 = vadd.f32 %v4106, %v4163
    %v4174 = vadd.f32 %v4107, %v4164
    %v4175 = vadd.f32 %v4108, %v4165
    %v4176 = vadd.f32 %v4109, %v4166
    %v4177 = vadd.f32 %v4110, %v4167
    %v4178 = vadd.f32 %v4111, %v4168
    %v4179 = vadd.f32 %v4112, %v4169
    %v4180 = vadd.f32 %v4113, %v4170
    %v4181 = vadd.f32 %v4114, %v4171
    %v4182 = vadd.f32 %v4115, %v4172
    %4183 = vset.pattern.permute.xlu0 10
    %4184 = vperm.xlu0 %4183, %v3521
    %v4185 = vpop.permute.xlu0 %4184
    %4187 = vrot.lane.b32.xlu0 %v71, 52
    %v4188 = vpop.permute.xlu0 %4187
    %4189 = vrot.lane.b32.xlu0 %v1450, 52
    %v4190 = vpop.permute.xlu0 %4189
    %4191 = vrot.lane.b32.xlu0 %v72, 52
    %v4192 = vpop.permute.xlu0 %4191
    %4193 = vrot.lane.b32.xlu0 %v1451, 52
    %v4194 = vpop.permute.xlu0 %4193
    %4195 = vrot.lane.b32.xlu0 %v73, 52
    %v4196 = vpop.permute.xlu0 %4195
    %4197 = vrot.lane.b32.xlu0 %v1452, 52
    %v4198 = vpop.permute.xlu0 %4197
    %4199 = vrot.lane.b32.xlu0 %v74, 52
    %v4200 = vpop.permute.xlu0 %4199
    %4201 = vrot.lane.b32.xlu0 %v1453, 52
    %v4202 = vpop.permute.xlu0 %4201
    %4203 = vrot.lane.b32.xlu0 %v75, 52
    %v4204 = vpop.permute.xlu0 %4203
    %4205 = vrot.lane.b32.xlu0 %v1454, 52
    %v4206 = vpop.permute.xlu0 %4205
    %4207 = vrot.lane.b32.xlu0 %v76, 52
    %v4208 = vpop.permute.xlu0 %4207
    %vm4209 = vcmask 424960
    %v4210 = vsel %vm4209, %v4188, %v4190
    %v4211 = vsel %vm4209, %v4190, %v4192
    %v4212 = vsel %vm4209, %v4192, %v4194
    %v4213 = vsel %vm4209, %v4194, %v4196
    %v4214 = vsel %vm4209, %v4196, %v4198
    %v4215 = vsel %vm4209, %v4198, %v4200
    %v4216 = vsel %vm4209, %v4200, %v4202
    %v4217 = vsel %vm4209, %v4202, %v4204
    %v4218 = vsel %vm4209, %v4204, %v4206
    %v4219 = vsel %vm4209, %v4206, %v4208
    %v4230 = vmul.f32 %v4185, %v4210
    %v4231 = vmul.f32 %v4185, %v4211
    %v4232 = vmul.f32 %v4185, %v4212
    %v4233 = vmul.f32 %v4185, %v4213
    %v4234 = vmul.f32 %v4185, %v4214
    %v4235 = vmul.f32 %v4185, %v4215
    %v4236 = vmul.f32 %v4185, %v4216
    %v4237 = vmul.f32 %v4185, %v4217
    %v4238 = vmul.f32 %v4185, %v4218
    %v4239 = vmul.f32 %v4185, %v4219
    %v4240 = vadd.f32 %v4173, %v4230
    %v4241 = vadd.f32 %v4174, %v4231
    %v4242 = vadd.f32 %v4175, %v4232
    %v4243 = vadd.f32 %v4176, %v4233
    %v4244 = vadd.f32 %v4177, %v4234
    %v4245 = vadd.f32 %v4178, %v4235
    %v4246 = vadd.f32 %v4179, %v4236
    %v4247 = vadd.f32 %v4180, %v4237
    %v4248 = vadd.f32 %v4181, %v4238
    %v4249 = vadd.f32 %v4182, %v4239
    %4250 = vset.pattern.permute.xlu0 11
    %4251 = vperm.xlu0 %4250, %v3521
    %v4252 = vpop.permute.xlu0 %4251
    %4254 = vrot.lane.b32.xlu0 %v71, 51
    %v4255 = vpop.permute.xlu0 %4254
    %4256 = vrot.lane.b32.xlu0 %v1450, 51
    %v4257 = vpop.permute.xlu0 %4256
    %4258 = vrot.lane.b32.xlu0 %v72, 51
    %v4259 = vpop.permute.xlu0 %4258
    %4260 = vrot.lane.b32.xlu0 %v1451, 51
    %v4261 = vpop.permute.xlu0 %4260
    %4262 = vrot.lane.b32.xlu0 %v73, 51
    %v4263 = vpop.permute.xlu0 %4262
    %4264 = vrot.lane.b32.xlu0 %v1452, 51
    %v4265 = vpop.permute.xlu0 %4264
    %4266 = vrot.lane.b32.xlu0 %v74, 51
    %v4267 = vpop.permute.xlu0 %4266
    %4268 = vrot.lane.b32.xlu0 %v1453, 51
    %v4269 = vpop.permute.xlu0 %4268
    %4270 = vrot.lane.b32.xlu0 %v75, 51
    %v4271 = vpop.permute.xlu0 %4270
    %4272 = vrot.lane.b32.xlu0 %v1454, 51
    %v4273 = vpop.permute.xlu0 %4272
    %4274 = vrot.lane.b32.xlu0 %v76, 51
    %v4275 = vpop.permute.xlu0 %4274
    %vm4276 = vcmask 416768
    %v4277 = vsel %vm4276, %v4255, %v4257
    %v4278 = vsel %vm4276, %v4257, %v4259
    %v4279 = vsel %vm4276, %v4259, %v4261
    %v4280 = vsel %vm4276, %v4261, %v4263
    %v4281 = vsel %vm4276, %v4263, %v4265
    %v4282 = vsel %vm4276, %v4265, %v4267
    %v4283 = vsel %vm4276, %v4267, %v4269
    %v4284 = vsel %vm4276, %v4269, %v4271
    %v4285 = vsel %vm4276, %v4271, %v4273
    %v4286 = vsel %vm4276, %v4273, %v4275
    %v4297 = vmul.f32 %v4252, %v4277
    %v4298 = vmul.f32 %v4252, %v4278
    %v4299 = vmul.f32 %v4252, %v4279
    %v4300 = vmul.f32 %v4252, %v4280
    %v4301 = vmul.f32 %v4252, %v4281
    %v4302 = vmul.f32 %v4252, %v4282
    %v4303 = vmul.f32 %v4252, %v4283
    %v4304 = vmul.f32 %v4252, %v4284
    %v4305 = vmul.f32 %v4252, %v4285
    %v4306 = vmul.f32 %v4252, %v4286
    %v4307 = vadd.f32 %v4240, %v4297
    %v4308 = vadd.f32 %v4241, %v4298
    %v4309 = vadd.f32 %v4242, %v4299
    %v4310 = vadd.f32 %v4243, %v4300
    %v4311 = vadd.f32 %v4244, %v4301
    %v4312 = vadd.f32 %v4245, %v4302
    %v4313 = vadd.f32 %v4246, %v4303
    %v4314 = vadd.f32 %v4247, %v4304
    %v4315 = vadd.f32 %v4248, %v4305
    %v4316 = vadd.f32 %v4249, %v4306
    %4317 = vset.pattern.permute.xlu0 12
    %4318 = vperm.xlu0 %4317, %v3521
    %v4319 = vpop.permute.xlu0 %4318
    %4321 = vrot.lane.b32.xlu0 %v76, 50
    %v4322 = vpop.permute.xlu0 %4321
    %v4323 = vsel %vm1475, %v1474, %v4322
    %v4325 = vmul.f32 %v4319, %v1476
    %v4326 = vmul.f32 %v4319, %v1477
    %v4327 = vmul.f32 %v4319, %v1478
    %v4328 = vmul.f32 %v4319, %v1479
    %v4329 = vmul.f32 %v4319, %v1480
    %v4330 = vmul.f32 %v4319, %v1481
    %v4331 = vmul.f32 %v4319, %v1482
    %v4332 = vmul.f32 %v4319, %v1483
    %v4333 = vmul.f32 %v4319, %v1484
    %v4334 = vmul.f32 %v4319, %v4323
    %v4335 = vadd.f32 %v4307, %v4325
    %v4336 = vadd.f32 %v4308, %v4326
    %v4337 = vadd.f32 %v4309, %v4327
    %v4338 = vadd.f32 %v4310, %v4328
    %v4339 = vadd.f32 %v4311, %v4329
    %v4340 = vadd.f32 %v4312, %v4330
    %v4341 = vadd.f32 %v4313, %v4331
    %v4342 = vadd.f32 %v4314, %v4332
    %v4343 = vadd.f32 %v4315, %v4333
    %v4344 = vadd.f32 %v4316, %v4334
    %4345 = vset.pattern.permute.xlu0 13
    %4346 = vperm.xlu0 %4345, %v3521
    %v4347 = vpop.permute.xlu0 %4346
    %v4349 = vmul.f32 %v4347, %v1533
    %v4350 = vmul.f32 %v4347, %v1534
    %v4351 = vmul.f32 %v4347, %v1535
    %v4352 = vmul.f32 %v4347, %v1536
    %v4353 = vmul.f32 %v4347, %v1537
    %v4354 = vmul.f32 %v4347, %v1538
    %v4355 = vmul.f32 %v4347, %v1539
    %v4356 = vmul.f32 %v4347, %v1540
    %v4357 = vmul.f32 %v4347, %v1541
    %v4358 = vmul.f32 %v4347, %v1542
    %v4359 = vadd.f32 %v4335, %v4349
    %v4360 = vadd.f32 %v4336, %v4350
    %v4361 = vadd.f32 %v4337, %v4351
    %v4362 = vadd.f32 %v4338, %v4352
    %v4363 = vadd.f32 %v4339, %v4353
    %v4364 = vadd.f32 %v4340, %v4354
    %v4365 = vadd.f32 %v4341, %v4355
    %v4366 = vadd.f32 %v4342, %v4356
    %v4367 = vadd.f32 %v4343, %v4357
    %v4368 = vadd.f32 %v4344, %v4358
    %4369 = vset.pattern.permute.xlu0 14
    %4370 = vperm.xlu0 %4369, %v3521
    %v4371 = vpop.permute.xlu0 %4370
    %v4373 = vmul.f32 %v4371, %v1600
    %v4374 = vmul.f32 %v4371, %v1601
    %v4375 = vmul.f32 %v4371, %v1602
    %v4376 = vmul.f32 %v4371, %v1603
    %v4377 = vmul.f32 %v4371, %v1604
    %v4378 = vmul.f32 %v4371, %v1605
    %v4379 = vmul.f32 %v4371, %v1606
    %v4380 = vmul.f32 %v4371, %v1607
    %v4381 = vmul.f32 %v4371, %v1608
    %v4382 = vmul.f32 %v4371, %v1609
    %v4383 = vadd.f32 %v4359, %v4373
    %v4384 = vadd.f32 %v4360, %v4374
    %v4385 = vadd.f32 %v4361, %v4375
    %v4386 = vadd.f32 %v4362, %v4376
    %v4387 = vadd.f32 %v4363, %v4377
    %v4388 = vadd.f32 %v4364, %v4378
    %v4389 = vadd.f32 %v4365, %v4379
    %v4390 = vadd.f32 %v4366, %v4380
    %v4391 = vadd.f32 %v4367, %v4381
    %v4392 = vadd.f32 %v4368, %v4382
    %4393 = vset.pattern.permute.xlu0 15
    %4394 = vperm.xlu0 %4393, %v3521
    %v4395 = vpop.permute.xlu0 %4394
    %4397 = vrot.lane.b32.xlu0 %v71, 28
    %v4398 = vpop.permute.xlu0 %4397
    %4399 = vrot.lane.b32.xlu0 %v1450, 28
    %v4400 = vpop.permute.xlu0 %4399
    %4401 = vrot.lane.b32.xlu0 %v72, 28
    %v4402 = vpop.permute.xlu0 %4401
    %4403 = vrot.lane.b32.xlu0 %v1451, 28
    %v4404 = vpop.permute.xlu0 %4403
    %4405 = vrot.lane.b32.xlu0 %v73, 28
    %v4406 = vpop.permute.xlu0 %4405
    %4407 = vrot.lane.b32.xlu0 %v1452, 28
    %v4408 = vpop.permute.xlu0 %4407
    %4409 = vrot.lane.b32.xlu0 %v74, 28
    %v4410 = vpop.permute.xlu0 %4409
    %4411 = vrot.lane.b32.xlu0 %v1453, 28
    %v4412 = vpop.permute.xlu0 %4411
    %4413 = vrot.lane.b32.xlu0 %v75, 28
    %v4414 = vpop.permute.xlu0 %4413
    %4415 = vrot.lane.b32.xlu0 %v1454, 28
    %v4416 = vpop.permute.xlu0 %4415
    %4417 = vrot.lane.b32.xlu0 %v76, 28
    %v4418 = vpop.permute.xlu0 %4417
    %vm4419 = vcmask 228352
    %v4420 = vsel %vm4419, %v4398, %v4400
    %v4421 = vsel %vm4419, %v4400, %v4402
    %v4422 = vsel %vm4419, %v4402, %v4404
    %v4423 = vsel %vm4419, %v4404, %v4406
    %v4424 = vsel %vm4419, %v4406, %v4408
    %v4425 = vsel %vm4419, %v4408, %v4410
    %v4426 = vsel %vm4419, %v4410, %v4412
    %v4427 = vsel %vm4419, %v4412, %v4414
    %v4428 = vsel %vm4419, %v4414, %v4416
    %v4429 = vsel %vm4419, %v4416, %v4418
    %v4440 = vmul.f32 %v4395, %v4420
    %v4441 = vmul.f32 %v4395, %v4421
    %v4442 = vmul.f32 %v4395, %v4422
    %v4443 = vmul.f32 %v4395, %v4423
    %v4444 = vmul.f32 %v4395, %v4424
    %v4445 = vmul.f32 %v4395, %v4425
    %v4446 = vmul.f32 %v4395, %v4426
    %v4447 = vmul.f32 %v4395, %v4427
    %v4448 = vmul.f32 %v4395, %v4428
    %v4449 = vmul.f32 %v4395, %v4429
    %v4450 = vadd.f32 %v4383, %v4440
    %v4451 = vadd.f32 %v4384, %v4441
    %v4452 = vadd.f32 %v4385, %v4442
    %v4453 = vadd.f32 %v4386, %v4443
    %v4454 = vadd.f32 %v4387, %v4444
    %v4455 = vadd.f32 %v4388, %v4445
    %v4456 = vadd.f32 %v4389, %v4446
    %v4457 = vadd.f32 %v4390, %v4447
    %v4458 = vadd.f32 %v4391, %v4448
    %v4459 = vadd.f32 %v4392, %v4449
    %4460 = vset.pattern.permute.xlu0 16
    %4461 = vperm.xlu0 %4460, %v3521
    %v4462 = vpop.permute.xlu0 %4461
    %4464 = vrot.lane.b32.xlu0 %v71, 27
    %v4465 = vpop.permute.xlu0 %4464
    %4466 = vrot.lane.b32.xlu0 %v1450, 27
    %v4467 = vpop.permute.xlu0 %4466
    %4468 = vrot.lane.b32.xlu0 %v72, 27
    %v4469 = vpop.permute.xlu0 %4468
    %4470 = vrot.lane.b32.xlu0 %v1451, 27
    %v4471 = vpop.permute.xlu0 %4470
    %4472 = vrot.lane.b32.xlu0 %v73, 27
    %v4473 = vpop.permute.xlu0 %4472
    %4474 = vrot.lane.b32.xlu0 %v1452, 27
    %v4475 = vpop.permute.xlu0 %4474
    %4476 = vrot.lane.b32.xlu0 %v74, 27
    %v4477 = vpop.permute.xlu0 %4476
    %4478 = vrot.lane.b32.xlu0 %v1453, 27
    %v4479 = vpop.permute.xlu0 %4478
    %4480 = vrot.lane.b32.xlu0 %v75, 27
    %v4481 = vpop.permute.xlu0 %4480
    %4482 = vrot.lane.b32.xlu0 %v1454, 27
    %v4483 = vpop.permute.xlu0 %4482
    %4484 = vrot.lane.b32.xlu0 %v76, 27
    %v4485 = vpop.permute.xlu0 %4484
    %vm4486 = vcmask 220160
    %v4487 = vsel %vm4486, %v4465, %v4467
    %v4488 = vsel %vm4486, %v4467, %v4469
    %v4489 = vsel %vm4486, %v4469, %v4471
    %v4490 = vsel %vm4486, %v4471, %v4473
    %v4491 = vsel %vm4486, %v4473, %v4475
    %v4492 = vsel %vm4486, %v4475, %v4477
    %v4493 = vsel %vm4486, %v4477, %v4479
    %v4494 = vsel %vm4486, %v4479, %v4481
    %v4495 = vsel %vm4486, %v4481, %v4483
    %v4496 = vsel %vm4486, %v4483, %v4485
    %v4507 = vmul.f32 %v4462, %v4487
    %v4508 = vmul.f32 %v4462, %v4488
    %v4509 = vmul.f32 %v4462, %v4489
    %v4510 = vmul.f32 %v4462, %v4490
    %v4511 = vmul.f32 %v4462, %v4491
    %v4512 = vmul.f32 %v4462, %v4492
    %v4513 = vmul.f32 %v4462, %v4493
    %v4514 = vmul.f32 %v4462, %v4494
    %v4515 = vmul.f32 %v4462, %v4495
    %v4516 = vmul.f32 %v4462, %v4496
    %v4517 = vadd.f32 %v4450, %v4507
    %v4518 = vadd.f32 %v4451, %v4508
    %v4519 = vadd.f32 %v4452, %v4509
    %v4520 = vadd.f32 %v4453, %v4510
    %v4521 = vadd.f32 %v4454, %v4511
    %v4522 = vadd.f32 %v4455, %v4512
    %v4523 = vadd.f32 %v4456, %v4513
    %v4524 = vadd.f32 %v4457, %v4514
    %v4525 = vadd.f32 %v4458, %v4515
    %v4526 = vadd.f32 %v4459, %v4516
    %4527 = vset.pattern.permute.xlu0 17
    %4528 = vperm.xlu0 %4527, %v3521
    %v4529 = vpop.permute.xlu0 %4528
    %v4531 = vmul.f32 %v4529, %v1667
    %v4532 = vmul.f32 %v4529, %v1668
    %v4533 = vmul.f32 %v4529, %v1669
    %v4534 = vmul.f32 %v4529, %v1670
    %v4535 = vmul.f32 %v4529, %v1671
    %v4536 = vmul.f32 %v4529, %v1672
    %v4537 = vmul.f32 %v4529, %v1673
    %v4538 = vmul.f32 %v4529, %v1674
    %v4539 = vmul.f32 %v4529, %v1675
    %v4540 = vmul.f32 %v4529, %v1676
    %v4541 = vadd.f32 %v4517, %v4531
    %v4542 = vadd.f32 %v4518, %v4532
    %v4543 = vadd.f32 %v4519, %v4533
    %v4544 = vadd.f32 %v4520, %v4534
    %v4545 = vadd.f32 %v4521, %v4535
    %v4546 = vadd.f32 %v4522, %v4536
    %v4547 = vadd.f32 %v4523, %v4537
    %v4548 = vadd.f32 %v4524, %v4538
    %v4549 = vadd.f32 %v4525, %v4539
    %v4550 = vadd.f32 %v4526, %v4540
    %4551 = vset.pattern.permute.xlu0 18
    %4552 = vperm.xlu0 %4551, %v3521
    %v4553 = vpop.permute.xlu0 %4552
    %v4555 = vmul.f32 %v4553, %v1733
    %v4556 = vmul.f32 %v4553, %v1734
    %v4557 = vmul.f32 %v4553, %v1735
    %v4558 = vmul.f32 %v4553, %v1736
    %v4559 = vmul.f32 %v4553, %v1737
    %v4560 = vmul.f32 %v4553, %v1738
    %v4561 = vmul.f32 %v4553, %v1739
    %v4562 = vmul.f32 %v4553, %v1740
    %v4563 = vmul.f32 %v4553, %v1741
    %v4564 = vmul.f32 %v4553, %v1742
    %v4565 = vadd.f32 %v4541, %v4555
    %v4566 = vadd.f32 %v4542, %v4556
    %v4567 = vadd.f32 %v4543, %v4557
    %v4568 = vadd.f32 %v4544, %v4558
    %v4569 = vadd.f32 %v4545, %v4559
    %v4570 = vadd.f32 %v4546, %v4560
    %v4571 = vadd.f32 %v4547, %v4561
    %v4572 = vadd.f32 %v4548, %v4562
    %v4573 = vadd.f32 %v4549, %v4563
    %v4574 = vadd.f32 %v4550, %v4564
    %4575 = vset.pattern.permute.xlu0 19
    %4576 = vperm.xlu0 %4575, %v3521
    %v4577 = vpop.permute.xlu0 %4576
    %v4579 = vmul.f32 %v4577, %v1800
    %v4580 = vmul.f32 %v4577, %v1801
    %v4581 = vmul.f32 %v4577, %v1802
    %v4582 = vmul.f32 %v4577, %v1803
    %v4583 = vmul.f32 %v4577, %v1804
    %v4584 = vmul.f32 %v4577, %v1805
    %v4585 = vmul.f32 %v4577, %v1806
    %v4586 = vmul.f32 %v4577, %v1807
    %v4587 = vmul.f32 %v4577, %v1808
    %v4588 = vmul.f32 %v4577, %v1809
    %v4589 = vadd.f32 %v4565, %v4579
    %v4590 = vadd.f32 %v4566, %v4580
    %v4591 = vadd.f32 %v4567, %v4581
    %v4592 = vadd.f32 %v4568, %v4582
    %v4593 = vadd.f32 %v4569, %v4583
    %v4594 = vadd.f32 %v4570, %v4584
    %v4595 = vadd.f32 %v4571, %v4585
    %v4596 = vadd.f32 %v4572, %v4586
    %v4597 = vadd.f32 %v4573, %v4587
    %v4598 = vadd.f32 %v4574, %v4588
    %4599 = vset.pattern.permute.xlu0 20
    %4600 = vperm.xlu0 %4599, %v3521
    %v4601 = vpop.permute.xlu0 %4600
    %4603 = vrot.lane.b32.xlu0 %v71, 4
    %v4604 = vpop.permute.xlu0 %4603
    %4605 = vrot.lane.b32.xlu0 %v1450, 4
    %v4606 = vpop.permute.xlu0 %4605
    %4607 = vrot.lane.b32.xlu0 %v72, 4
    %v4608 = vpop.permute.xlu0 %4607
    %4609 = vrot.lane.b32.xlu0 %v1451, 4
    %v4610 = vpop.permute.xlu0 %4609
    %4611 = vrot.lane.b32.xlu0 %v73, 4
    %v4612 = vpop.permute.xlu0 %4611
    %4613 = vrot.lane.b32.xlu0 %v1452, 4
    %v4614 = vpop.permute.xlu0 %4613
    %4615 = vrot.lane.b32.xlu0 %v74, 4
    %v4616 = vpop.permute.xlu0 %4615
    %4617 = vrot.lane.b32.xlu0 %v1453, 4
    %v4618 = vpop.permute.xlu0 %4617
    %4619 = vrot.lane.b32.xlu0 %v75, 4
    %v4620 = vpop.permute.xlu0 %4619
    %4621 = vrot.lane.b32.xlu0 %v1454, 4
    %v4622 = vpop.permute.xlu0 %4621
    %4623 = vrot.lane.b32.xlu0 %v76, 4
    %v4624 = vpop.permute.xlu0 %4623
    %vm4625 = vcmask 31744
    %v4626 = vsel %vm4625, %v4604, %v4606
    %v4627 = vsel %vm4625, %v4606, %v4608
    %v4628 = vsel %vm4625, %v4608, %v4610
    %v4629 = vsel %vm4625, %v4610, %v4612
    %v4630 = vsel %vm4625, %v4612, %v4614
    %v4631 = vsel %vm4625, %v4614, %v4616
    %v4632 = vsel %vm4625, %v4616, %v4618
    %v4633 = vsel %vm4625, %v4618, %v4620
    %v4634 = vsel %vm4625, %v4620, %v4622
    %v4635 = vsel %vm4625, %v4622, %v4624
    %v4646 = vmul.f32 %v4601, %v4626
    %v4647 = vmul.f32 %v4601, %v4627
    %v4648 = vmul.f32 %v4601, %v4628
    %v4649 = vmul.f32 %v4601, %v4629
    %v4650 = vmul.f32 %v4601, %v4630
    %v4651 = vmul.f32 %v4601, %v4631
    %v4652 = vmul.f32 %v4601, %v4632
    %v4653 = vmul.f32 %v4601, %v4633
    %v4654 = vmul.f32 %v4601, %v4634
    %v4655 = vmul.f32 %v4601, %v4635
    %v4656 = vadd.f32 %v4589, %v4646
    %v4657 = vadd.f32 %v4590, %v4647
    %v4658 = vadd.f32 %v4591, %v4648
    %v4659 = vadd.f32 %v4592, %v4649
    %v4660 = vadd.f32 %v4593, %v4650
    %v4661 = vadd.f32 %v4594, %v4651
    %v4662 = vadd.f32 %v4595, %v4652
    %v4663 = vadd.f32 %v4596, %v4653
    %v4664 = vadd.f32 %v4597, %v4654
    %v4665 = vadd.f32 %v4598, %v4655
    %4666 = vset.pattern.permute.xlu0 21
    %4667 = vperm.xlu0 %4666, %v3521
    %v4668 = vpop.permute.xlu0 %4667
    %4670 = vrot.lane.b32.xlu0 %v71, 3
    %v4671 = vpop.permute.xlu0 %4670
    %4672 = vrot.lane.b32.xlu0 %v1450, 3
    %v4673 = vpop.permute.xlu0 %4672
    %4674 = vrot.lane.b32.xlu0 %v72, 3
    %v4675 = vpop.permute.xlu0 %4674
    %4676 = vrot.lane.b32.xlu0 %v1451, 3
    %v4677 = vpop.permute.xlu0 %4676
    %4678 = vrot.lane.b32.xlu0 %v73, 3
    %v4679 = vpop.permute.xlu0 %4678
    %4680 = vrot.lane.b32.xlu0 %v1452, 3
    %v4681 = vpop.permute.xlu0 %4680
    %4682 = vrot.lane.b32.xlu0 %v74, 3
    %v4683 = vpop.permute.xlu0 %4682
    %4684 = vrot.lane.b32.xlu0 %v1453, 3
    %v4685 = vpop.permute.xlu0 %4684
    %4686 = vrot.lane.b32.xlu0 %v75, 3
    %v4687 = vpop.permute.xlu0 %4686
    %4688 = vrot.lane.b32.xlu0 %v1454, 3
    %v4689 = vpop.permute.xlu0 %4688
    %4690 = vrot.lane.b32.xlu0 %v76, 3
    %v4691 = vpop.permute.xlu0 %4690
    %vm4692 = vcmask 23552
    %v4693 = vsel %vm4692, %v4671, %v4673
    %v4694 = vsel %vm4692, %v4673, %v4675
    %v4695 = vsel %vm4692, %v4675, %v4677
    %v4696 = vsel %vm4692, %v4677, %v4679
    %v4697 = vsel %vm4692, %v4679, %v4681
    %v4698 = vsel %vm4692, %v4681, %v4683
    %v4699 = vsel %vm4692, %v4683, %v4685
    %v4700 = vsel %vm4692, %v4685, %v4687
    %v4701 = vsel %vm4692, %v4687, %v4689
    %v4702 = vsel %vm4692, %v4689, %v4691
    %v4713 = vmul.f32 %v4668, %v4693
    %v4714 = vmul.f32 %v4668, %v4694
    %v4715 = vmul.f32 %v4668, %v4695
    %v4716 = vmul.f32 %v4668, %v4696
    %v4717 = vmul.f32 %v4668, %v4697
    %v4718 = vmul.f32 %v4668, %v4698
    %v4719 = vmul.f32 %v4668, %v4699
    %v4720 = vmul.f32 %v4668, %v4700
    %v4721 = vmul.f32 %v4668, %v4701
    %v4722 = vmul.f32 %v4668, %v4702
    %v4723 = vadd.f32 %v4656, %v4713
    %v4724 = vadd.f32 %v4657, %v4714
    %v4725 = vadd.f32 %v4658, %v4715
    %v4726 = vadd.f32 %v4659, %v4716
    %v4727 = vadd.f32 %v4660, %v4717
    %v4728 = vadd.f32 %v4661, %v4718
    %v4729 = vadd.f32 %v4662, %v4719
    %v4730 = vadd.f32 %v4663, %v4720
    %v4731 = vadd.f32 %v4664, %v4721
    %v4732 = vadd.f32 %v4665, %v4722
    %4733 = vset.pattern.permute.xlu0 22
    %4734 = vperm.xlu0 %4733, %v3521
    %v4735 = vpop.permute.xlu0 %4734
    %v4737 = vmul.f32 %v4735, %v1867
    %v4738 = vmul.f32 %v4735, %v1868
    %v4739 = vmul.f32 %v4735, %v1869
    %v4740 = vmul.f32 %v4735, %v1870
    %v4741 = vmul.f32 %v4735, %v1871
    %v4742 = vmul.f32 %v4735, %v1872
    %v4743 = vmul.f32 %v4735, %v1873
    %v4744 = vmul.f32 %v4735, %v1874
    %v4745 = vmul.f32 %v4735, %v1875
    %v4746 = vmul.f32 %v4735, %v1876
    %v4747 = vadd.f32 %v4723, %v4737
    %v4748 = vadd.f32 %v4724, %v4738
    %v4749 = vadd.f32 %v4725, %v4739
    %v4750 = vadd.f32 %v4726, %v4740
    %v4751 = vadd.f32 %v4727, %v4741
    %v4752 = vadd.f32 %v4728, %v4742
    %v4753 = vadd.f32 %v4729, %v4743
    %v4754 = vadd.f32 %v4730, %v4744
    %v4755 = vadd.f32 %v4731, %v4745
    %v4756 = vadd.f32 %v4732, %v4746
    %4757 = vset.pattern.permute.xlu0 23
    %4758 = vperm.xlu0 %4757, %v3521
    %v4759 = vpop.permute.xlu0 %4758
    %v4761 = vmul.f32 %v4759, %v1934
    %v4762 = vmul.f32 %v4759, %v1935
    %v4763 = vmul.f32 %v4759, %v1936
    %v4764 = vmul.f32 %v4759, %v1937
    %v4765 = vmul.f32 %v4759, %v1938
    %v4766 = vmul.f32 %v4759, %v1939
    %v4767 = vmul.f32 %v4759, %v1940
    %v4768 = vmul.f32 %v4759, %v1941
    %v4769 = vmul.f32 %v4759, %v1942
    %v4770 = vmul.f32 %v4759, %v1943
    %v4771 = vadd.f32 %v4747, %v4761
    %v4772 = vadd.f32 %v4748, %v4762
    %v4773 = vadd.f32 %v4749, %v4763
    %v4774 = vadd.f32 %v4750, %v4764
    %v4775 = vadd.f32 %v4751, %v4765
    %v4776 = vadd.f32 %v4752, %v4766
    %v4777 = vadd.f32 %v4753, %v4767
    %v4778 = vadd.f32 %v4754, %v4768
    %v4779 = vadd.f32 %v4755, %v4769
    %v4780 = vadd.f32 %v4756, %v4770
    %4781 = vset.pattern.permute.xlu0 24
    %4782 = vperm.xlu0 %4781, %v3521
    %v4783 = vpop.permute.xlu0 %4782
    %v4785 = vmul.f32 %v4783, %v1450
    %v4786 = vmul.f32 %v4783, %v72
    %v4787 = vmul.f32 %v4783, %v1451
    %v4788 = vmul.f32 %v4783, %v73
    %v4789 = vmul.f32 %v4783, %v1452
    %v4790 = vmul.f32 %v4783, %v74
    %v4791 = vmul.f32 %v4783, %v1453
    %v4792 = vmul.f32 %v4783, %v75
    %v4793 = vmul.f32 %v4783, %v1454
    %v4794 = vmul.f32 %v4783, %v76
    %v4795 = vadd.f32 %v4771, %v4785
    %v4796 = vadd.f32 %v4772, %v4786
    %v4797 = vadd.f32 %v4773, %v4787
    %v4798 = vadd.f32 %v4774, %v4788
    %v4799 = vadd.f32 %v4775, %v4789
    %v4800 = vadd.f32 %v4776, %v4790
    %v4801 = vadd.f32 %v4777, %v4791
    %v4802 = vadd.f32 %v4778, %v4792
    %v4803 = vadd.f32 %v4779, %v4793
    %v4804 = vadd.f32 %v4780, %v4794
    %4806 = vset.pattern.permute.xlu0 0
    %4807 = vperm.xlu0 %4806, %v3522
    %v4808 = vpop.permute.xlu0 %4807
    %v4810 = vlaneseq
    %v4811 = vshrl.u32 %v4810, 7
    %v4812 = vsub.s32 0, %v4811
    %v4813 = vrot.slane %v4795, %v4812
    %v4814 = vlaneseq
    %v4815 = vshrl.u32 %v4814, 7
    %v4816 = vsub.s32 0, %v4815
    %v4817 = vrot.slane %v4796, %v4816
    %v4818 = vlaneseq
    %v4819 = vshrl.u32 %v4818, 7
    %v4820 = vsub.s32 0, %v4819
    %v4821 = vrot.slane %v4797, %v4820
    %v4822 = vlaneseq
    %v4823 = vshrl.u32 %v4822, 7
    %v4824 = vsub.s32 0, %v4823
    %v4825 = vrot.slane %v4798, %v4824
    %v4826 = vlaneseq
    %v4827 = vshrl.u32 %v4826, 7
    %v4828 = vsub.s32 0, %v4827
    %v4829 = vrot.slane %v4799, %v4828
    %v4830 = vlaneseq
    %v4831 = vshrl.u32 %v4830, 7
    %v4832 = vsub.s32 0, %v4831
    %v4833 = vrot.slane %v4800, %v4832
    %v4834 = vlaneseq
    %v4835 = vshrl.u32 %v4834, 7
    %v4836 = vsub.s32 0, %v4835
    %v4837 = vrot.slane %v4801, %v4836
    %v4838 = vlaneseq
    %v4839 = vshrl.u32 %v4838, 7
    %v4840 = vsub.s32 0, %v4839
    %v4841 = vrot.slane %v4802, %v4840
    %v4842 = vlaneseq
    %v4843 = vshrl.u32 %v4842, 7
    %v4844 = vsub.s32 0, %v4843
    %v4845 = vrot.slane %v4803, %v4844
    %v4846 = vlaneseq
    %v4847 = vshrl.u32 %v4846, 7
    %v4848 = vsub.s32 0, %v4847
    %v4849 = vrot.slane %v4804, %v4848
    %v4850 = vmul.f32 %v4808, %v4813
    %v4851 = vmul.f32 %v4808, %v4817
    %v4852 = vmul.f32 %v4808, %v4821
    %v4853 = vmul.f32 %v4808, %v4825
    %v4854 = vmul.f32 %v4808, %v4829
    %v4855 = vmul.f32 %v4808, %v4833
    %v4856 = vmul.f32 %v4808, %v4837
    %v4857 = vmul.f32 %v4808, %v4841
    %v4858 = vmul.f32 %v4808, %v4845
    %v4859 = vmul.f32 %v4808, %v4849
    %4860 = vset.pattern.permute.xlu0 1
    %4861 = vperm.xlu0 %4860, %v3522
    %v4862 = vpop.permute.xlu0 %4861
    %v4864 = vlaneseq
    %v4865 = vshrl.u32 %v4864, 7
    %v4866 = vsub.s32 1, %v4865
    %v4867 = vrot.slane %v4795, %v4866
    %v4868 = vlaneseq
    %v4869 = vshrl.u32 %v4868, 7
    %v4870 = vsub.s32 1, %v4869
    %v4871 = vrot.slane %v4796, %v4870
    %v4872 = vlaneseq
    %v4873 = vshrl.u32 %v4872, 7
    %v4874 = vsub.s32 1, %v4873
    %v4875 = vrot.slane %v4797, %v4874
    %v4876 = vlaneseq
    %v4877 = vshrl.u32 %v4876, 7
    %v4878 = vsub.s32 1, %v4877
    %v4879 = vrot.slane %v4798, %v4878
    %v4880 = vlaneseq
    %v4881 = vshrl.u32 %v4880, 7
    %v4882 = vsub.s32 1, %v4881
    %v4883 = vrot.slane %v4799, %v4882
    %v4884 = vlaneseq
    %v4885 = vshrl.u32 %v4884, 7
    %v4886 = vsub.s32 1, %v4885
    %v4887 = vrot.slane %v4800, %v4886
    %v4888 = vlaneseq
    %v4889 = vshrl.u32 %v4888, 7
    %v4890 = vsub.s32 1, %v4889
    %v4891 = vrot.slane %v4801, %v4890
    %v4892 = vlaneseq
    %v4893 = vshrl.u32 %v4892, 7
    %v4894 = vsub.s32 1, %v4893
    %v4895 = vrot.slane %v4802, %v4894
    %v4896 = vlaneseq
    %v4897 = vshrl.u32 %v4896, 7
    %v4898 = vsub.s32 1, %v4897
    %v4899 = vrot.slane %v4803, %v4898
    %v4900 = vlaneseq
    %v4901 = vshrl.u32 %v4900, 7
    %v4902 = vsub.s32 1, %v4901
    %v4903 = vrot.slane %v4804, %v4902
    %v4904 = vmul.f32 %v4862, %v4867
    %v4905 = vmul.f32 %v4862, %v4871
    %v4906 = vmul.f32 %v4862, %v4875
    %v4907 = vmul.f32 %v4862, %v4879
    %v4908 = vmul.f32 %v4862, %v4883
    %v4909 = vmul.f32 %v4862, %v4887
    %v4910 = vmul.f32 %v4862, %v4891
    %v4911 = vmul.f32 %v4862, %v4895
    %v4912 = vmul.f32 %v4862, %v4899
    %v4913 = vmul.f32 %v4862, %v4903
    %v4914 = vadd.f32 %v4850, %v4904
    %v4915 = vadd.f32 %v4851, %v4905
    %v4916 = vadd.f32 %v4852, %v4906
    %v4917 = vadd.f32 %v4853, %v4907
    %v4918 = vadd.f32 %v4854, %v4908
    %v4919 = vadd.f32 %v4855, %v4909
    %v4920 = vadd.f32 %v4856, %v4910
    %v4921 = vadd.f32 %v4857, %v4911
    %v4922 = vadd.f32 %v4858, %v4912
    %v4923 = vadd.f32 %v4859, %v4913
    %4924 = vset.pattern.permute.xlu0 2
    %4925 = vperm.xlu0 %4924, %v3522
    %v4926 = vpop.permute.xlu0 %4925
    %v4928 = vlaneseq
    %v4929 = vshrl.u32 %v4928, 7
    %v4930 = vsub.s32 2, %v4929
    %v4931 = vrot.slane %v4795, %v4930
    %v4932 = vlaneseq
    %v4933 = vshrl.u32 %v4932, 7
    %v4934 = vsub.s32 2, %v4933
    %v4935 = vrot.slane %v4796, %v4934
    %v4936 = vlaneseq
    %v4937 = vshrl.u32 %v4936, 7
    %v4938 = vsub.s32 2, %v4937
    %v4939 = vrot.slane %v4797, %v4938
    %v4940 = vlaneseq
    %v4941 = vshrl.u32 %v4940, 7
    %v4942 = vsub.s32 2, %v4941
    %v4943 = vrot.slane %v4798, %v4942
    %v4944 = vlaneseq
    %v4945 = vshrl.u32 %v4944, 7
    %v4946 = vsub.s32 2, %v4945
    %v4947 = vrot.slane %v4799, %v4946
    %v4948 = vlaneseq
    %v4949 = vshrl.u32 %v4948, 7
    %v4950 = vsub.s32 2, %v4949
    %v4951 = vrot.slane %v4800, %v4950
    %v4952 = vlaneseq
    %v4953 = vshrl.u32 %v4952, 7
    %v4954 = vsub.s32 2, %v4953
    %v4955 = vrot.slane %v4801, %v4954
    %v4956 = vlaneseq
    %v4957 = vshrl.u32 %v4956, 7
    %v4958 = vsub.s32 2, %v4957
    %v4959 = vrot.slane %v4802, %v4958
    %v4960 = vlaneseq
    %v4961 = vshrl.u32 %v4960, 7
    %v4962 = vsub.s32 2, %v4961
    %v4963 = vrot.slane %v4803, %v4962
    %v4964 = vlaneseq
    %v4965 = vshrl.u32 %v4964, 7
    %v4966 = vsub.s32 2, %v4965
    %v4967 = vrot.slane %v4804, %v4966
    %v4968 = vmul.f32 %v4926, %v4931
    %v4969 = vmul.f32 %v4926, %v4935
    %v4970 = vmul.f32 %v4926, %v4939
    %v4971 = vmul.f32 %v4926, %v4943
    %v4972 = vmul.f32 %v4926, %v4947
    %v4973 = vmul.f32 %v4926, %v4951
    %v4974 = vmul.f32 %v4926, %v4955
    %v4975 = vmul.f32 %v4926, %v4959
    %v4976 = vmul.f32 %v4926, %v4963
    %v4977 = vmul.f32 %v4926, %v4967
    %v4978 = vadd.f32 %v4914, %v4968
    %v4979 = vadd.f32 %v4915, %v4969
    %v4980 = vadd.f32 %v4916, %v4970
    %v4981 = vadd.f32 %v4917, %v4971
    %v4982 = vadd.f32 %v4918, %v4972
    %v4983 = vadd.f32 %v4919, %v4973
    %v4984 = vadd.f32 %v4920, %v4974
    %v4985 = vadd.f32 %v4921, %v4975
    %v4986 = vadd.f32 %v4922, %v4976
    %v4987 = vadd.f32 %v4923, %v4977
    %4988 = vset.pattern.permute.xlu0 3
    %4989 = vperm.xlu0 %4988, %v3522
    %v4990 = vpop.permute.xlu0 %4989
    %v4992 = vlaneseq
    %v4993 = vshrl.u32 %v4992, 7
    %v4994 = vsub.s32 3, %v4993
    %v4995 = vrot.slane %v4795, %v4994
    %v4996 = vlaneseq
    %v4997 = vshrl.u32 %v4996, 7
    %v4998 = vsub.s32 3, %v4997
    %v4999 = vrot.slane %v4796, %v4998
    %v5000 = vlaneseq
    %v5001 = vshrl.u32 %v5000, 7
    %v5002 = vsub.s32 3, %v5001
    %v5003 = vrot.slane %v4797, %v5002
    %v5004 = vlaneseq
    %v5005 = vshrl.u32 %v5004, 7
    %v5006 = vsub.s32 3, %v5005
    %v5007 = vrot.slane %v4798, %v5006
    %v5008 = vlaneseq
    %v5009 = vshrl.u32 %v5008, 7
    %v5010 = vsub.s32 3, %v5009
    %v5011 = vrot.slane %v4799, %v5010
    %v5012 = vlaneseq
    %v5013 = vshrl.u32 %v5012, 7
    %v5014 = vsub.s32 3, %v5013
    %v5015 = vrot.slane %v4800, %v5014
    %v5016 = vlaneseq
    %v5017 = vshrl.u32 %v5016, 7
    %v5018 = vsub.s32 3, %v5017
    %v5019 = vrot.slane %v4801, %v5018
    %v5020 = vlaneseq
    %v5021 = vshrl.u32 %v5020, 7
    %v5022 = vsub.s32 3, %v5021
    %v5023 = vrot.slane %v4802, %v5022
    %v5024 = vlaneseq
    %v5025 = vshrl.u32 %v5024, 7
    %v5026 = vsub.s32 3, %v5025
    %v5027 = vrot.slane %v4803, %v5026
    %v5028 = vlaneseq
    %v5029 = vshrl.u32 %v5028, 7
    %v5030 = vsub.s32 3, %v5029
    %v5031 = vrot.slane %v4804, %v5030
    %v5032 = vmul.f32 %v4990, %v4995
    %v5033 = vmul.f32 %v4990, %v4999
    %v5034 = vmul.f32 %v4990, %v5003
    %v5035 = vmul.f32 %v4990, %v5007
    %v5036 = vmul.f32 %v4990, %v5011
    %v5037 = vmul.f32 %v4990, %v5015
    %v5038 = vmul.f32 %v4990, %v5019
    %v5039 = vmul.f32 %v4990, %v5023
    %v5040 = vmul.f32 %v4990, %v5027
    %v5041 = vmul.f32 %v4990, %v5031
    %v5042 = vadd.f32 %v4978, %v5032
    %v5043 = vadd.f32 %v4979, %v5033
    %v5044 = vadd.f32 %v4980, %v5034
    %v5045 = vadd.f32 %v4981, %v5035
    %v5046 = vadd.f32 %v4982, %v5036
    %v5047 = vadd.f32 %v4983, %v5037
    %v5048 = vadd.f32 %v4984, %v5038
    %v5049 = vadd.f32 %v4985, %v5039
    %v5050 = vadd.f32 %v4986, %v5040
    %v5051 = vadd.f32 %v4987, %v5041
    %5062 = vrot.lane.b32.xlu0 %v5042, 78
    %v5063 = vpop.permute.xlu0 %5062
    %5064 = vrot.lane.b32.xlu0 %v5043, 78
    %v5065 = vpop.permute.xlu0 %5064
    %5066 = vrot.lane.b32.xlu0 %v5044, 78
    %v5067 = vpop.permute.xlu0 %5066
    %5068 = vrot.lane.b32.xlu0 %v5045, 78
    %v5069 = vpop.permute.xlu0 %5068
    %5070 = vrot.lane.b32.xlu0 %v5046, 78
    %v5071 = vpop.permute.xlu0 %5070
    %5072 = vrot.lane.b32.xlu0 %v5047, 78
    %v5073 = vpop.permute.xlu0 %5072
    %5074 = vrot.lane.b32.xlu0 %v5048, 78
    %v5075 = vpop.permute.xlu0 %5074
    %5076 = vrot.lane.b32.xlu0 %v5049, 78
    %v5077 = vpop.permute.xlu0 %5076
    %5078 = vrot.lane.b32.xlu0 %v5050, 78
    %v5079 = vpop.permute.xlu0 %5078
    %5080 = vrot.lane.b32.xlu0 %v5051, 78
    %v5081 = vpop.permute.xlu0 %5080
    %v5082 = vsel %vm542, %v5063, %v5065
    %v5083 = vsel %vm542, %v5065, %v5067
    %v5084 = vsel %vm542, %v5067, %v5069
    %v5085 = vsel %vm542, %v5069, %v5071
    %v5086 = vsel %vm542, %v5071, %v5073
    %v5087 = vsel %vm542, %v5073, %v5075
    %v5088 = vsel %vm542, %v5075, %v5077
    %v5089 = vsel %vm542, %v5077, %v5079
    %v5090 = vsel %vm542, %v5079, %v5081
    %v5102 = vsel %vm126, %v5063, 0.0
    %v5103 = vsel %vm127, %v5082, 0.0
    %v5104 = vsel %vm128, %v5083, 0.0
    %v5105 = vsel %vm129, %v5084, 0.0
    %v5106 = vsel %vm130, %v5085, 0.0
    %v5107 = vsel %vm131, %v5086, 0.0
    %v5108 = vsel %vm132, %v5087, 0.0
    %v5109 = vsel %vm133, %v5088, 0.0
    %v5110 = vsel %vm134, %v5089, 0.0
    %v5111 = vsel %vm135, %v5090, 0.0
    %v5112 = vsel %vm136, %v5081, 0.0
    %5124 = vrot.lane.b32.xlu0 %v5102, 50
    %v5125 = vpop.permute.xlu0 %5124
    %5126 = vrot.lane.b32.xlu0 %v5103, 50
    %v5127 = vpop.permute.xlu0 %5126
    %5128 = vrot.lane.b32.xlu0 %v5104, 50
    %v5129 = vpop.permute.xlu0 %5128
    %5130 = vrot.lane.b32.xlu0 %v5105, 50
    %v5131 = vpop.permute.xlu0 %5130
    %5132 = vrot.lane.b32.xlu0 %v5106, 50
    %v5133 = vpop.permute.xlu0 %5132
    %5134 = vrot.lane.b32.xlu0 %v5107, 50
    %v5135 = vpop.permute.xlu0 %5134
    %5136 = vrot.lane.b32.xlu0 %v5108, 50
    %v5137 = vpop.permute.xlu0 %5136
    %5138 = vrot.lane.b32.xlu0 %v5109, 50
    %v5139 = vpop.permute.xlu0 %5138
    %5140 = vrot.lane.b32.xlu0 %v5110, 50
    %v5141 = vpop.permute.xlu0 %5140
    %5142 = vrot.lane.b32.xlu0 %v5111, 50
    %v5143 = vpop.permute.xlu0 %5142
    %5144 = vrot.lane.b32.xlu0 %v5112, 50
    %v5145 = vpop.permute.xlu0 %5144
    %v5146 = vsel %vm1475, %v5125, %v5127
    %v5147 = vsel %vm1475, %v5127, %v5129
    %v5148 = vsel %vm1475, %v5129, %v5131
    %v5149 = vsel %vm1475, %v5131, %v5133
    %v5150 = vsel %vm1475, %v5133, %v5135
    %v5151 = vsel %vm1475, %v5135, %v5137
    %v5152 = vsel %vm1475, %v5137, %v5139
    %v5153 = vsel %vm1475, %v5139, %v5141
    %v5154 = vsel %vm1475, %v5141, %v5143
    %v5155 = vsel %vm1475, %v5143, %v5145
    %v5166 = vsel %vm687, %v5146, 0.0
    %v5167 = vsel %vm687, %v5147, 0.0
    %v5168 = vadd.f32 %v5166, %v5167
    %v5169 = vsel %vm687, %v5148, 0.0
    %v5170 = vadd.f32 %v5168, %v5169
    %v5171 = vsel %vm687, %v5149, 0.0
    %v5172 = vadd.f32 %v5170, %v5171
    %v5173 = vsel %vm687, %v5150, 0.0
    %v5174 = vadd.f32 %v5172, %v5173
    %v5175 = vsel %vm687, %v5151, 0.0
    %v5176 = vadd.f32 %v5174, %v5175
    %v5177 = vsel %vm687, %v5152, 0.0
    %v5178 = vadd.f32 %v5176, %v5177
    %v5179 = vsel %vm687, %v5153, 0.0
    %v5180 = vadd.f32 %v5178, %v5179
    %v5181 = vsel %vm687, %v5154, 0.0
    %v5182 = vadd.f32 %v5180, %v5181
    %vm5183 = vcmask 814080
    %v5184 = vsel %vm5183, %v5155, 0.0
    %v5185 = vadd.f32 %v5182, %v5184
    %5186 = vadd.xlane.f32.xlu0 %v5185
    %v5187 = vpop.xlane.xlu0 %5186
    %v5188 = vmul.f32 %v5187, 0.001953125
    %v5189 = vmul.f32 %v5102, %v5102
    %v5190 = vmul.f32 %v5103, %v5103
    %v5191 = vmul.f32 %v5104, %v5104
    %v5192 = vmul.f32 %v5105, %v5105
    %v5193 = vmul.f32 %v5106, %v5106
    %v5194 = vmul.f32 %v5107, %v5107
    %v5195 = vmul.f32 %v5108, %v5108
    %v5196 = vmul.f32 %v5109, %v5109
    %v5197 = vmul.f32 %v5110, %v5110
    %v5198 = vmul.f32 %v5111, %v5111
    %v5199 = vmul.f32 %v5112, %v5112
    %5211 = vrot.lane.b32.xlu0 %v5189, 50
    %v5212 = vpop.permute.xlu0 %5211
    %5213 = vrot.lane.b32.xlu0 %v5190, 50
    %v5214 = vpop.permute.xlu0 %5213
    %5215 = vrot.lane.b32.xlu0 %v5191, 50
    %v5216 = vpop.permute.xlu0 %5215
    %5217 = vrot.lane.b32.xlu0 %v5192, 50
    %v5218 = vpop.permute.xlu0 %5217
    %5219 = vrot.lane.b32.xlu0 %v5193, 50
    %v5220 = vpop.permute.xlu0 %5219
    %5221 = vrot.lane.b32.xlu0 %v5194, 50
    %v5222 = vpop.permute.xlu0 %5221
    %5223 = vrot.lane.b32.xlu0 %v5195, 50
    %v5224 = vpop.permute.xlu0 %5223
    %5225 = vrot.lane.b32.xlu0 %v5196, 50
    %v5226 = vpop.permute.xlu0 %5225
    %5227 = vrot.lane.b32.xlu0 %v5197, 50
    %v5228 = vpop.permute.xlu0 %5227
    %5229 = vrot.lane.b32.xlu0 %v5198, 50
    %v5230 = vpop.permute.xlu0 %5229
    %5231 = vrot.lane.b32.xlu0 %v5199, 50
    %v5232 = vpop.permute.xlu0 %5231
    %v5233 = vsel %vm1475, %v5212, %v5214
    %v5234 = vsel %vm1475, %v5214, %v5216
    %v5235 = vsel %vm1475, %v5216, %v5218
    %v5236 = vsel %vm1475, %v5218, %v5220
    %v5237 = vsel %vm1475, %v5220, %v5222
    %v5238 = vsel %vm1475, %v5222, %v5224
    %v5239 = vsel %vm1475, %v5224, %v5226
    %v5240 = vsel %vm1475, %v5226, %v5228
    %v5241 = vsel %vm1475, %v5228, %v5230
    %v5242 = vsel %vm1475, %v5230, %v5232
    %v5253 = vsel %vm687, %v5233, 0.0
    %v5254 = vsel %vm687, %v5234, 0.0
    %v5255 = vadd.f32 %v5253, %v5254
    %v5256 = vsel %vm687, %v5235, 0.0
    %v5257 = vadd.f32 %v5255, %v5256
    %v5258 = vsel %vm687, %v5236, 0.0
    %v5259 = vadd.f32 %v5257, %v5258
    %v5260 = vsel %vm687, %v5237, 0.0
    %v5261 = vadd.f32 %v5259, %v5260
    %v5262 = vsel %vm687, %v5238, 0.0
    %v5263 = vadd.f32 %v5261, %v5262
    %v5264 = vsel %vm687, %v5239, 0.0
    %v5265 = vadd.f32 %v5263, %v5264
    %v5266 = vsel %vm687, %v5240, 0.0
    %v5267 = vadd.f32 %v5265, %v5266
    %v5268 = vsel %vm687, %v5241, 0.0
    %v5269 = vadd.f32 %v5267, %v5268
    %v5270 = vsel %vm5183, %v5242, 0.0
    %v5271 = vadd.f32 %v5269, %v5270
    %5272 = vadd.xlane.f32.xlu0 %v5271
    %v5273 = vpop.xlane.xlu0 %5272
    %v5274 = vmul.f32 %v5273, 0.001953125
    %v5275 = vmul.f32 %v5188, %v5188
    %v5276 = vsub.f32 %v5274, %v5275
    %v5277 = vmax.f32 %v5276, 0.0
    %v5278 = vsub.f32 %v5102, %v5188
    %v5279 = vsub.f32 %v5103, %v5188
    %v5280 = vsub.f32 %v5104, %v5188
    %v5281 = vsub.f32 %v5105, %v5188
    %v5282 = vsub.f32 %v5106, %v5188
    %v5283 = vsub.f32 %v5107, %v5188
    %v5284 = vsub.f32 %v5108, %v5188
    %v5285 = vsub.f32 %v5109, %v5188
    %v5286 = vsub.f32 %v5110, %v5188
    %v5287 = vsub.f32 %v5111, %v5188
    %v5288 = vsub.f32 %v5112, %v5188
    %v5289 = vadd.f32 %v5277, 1e-05
    %v5290 = vrsqrt.pop %v5289
    %v5291 = vmul.f32 %v5278, %v5290
    %v5292 = vmul.f32 %v5279, %v5290
    %v5293 = vmul.f32 %v5280, %v5290
    %v5294 = vmul.f32 %v5281, %v5290
    %v5295 = vmul.f32 %v5282, %v5290
    %v5296 = vmul.f32 %v5283, %v5290
    %v5297 = vmul.f32 %v5284, %v5290
    %v5298 = vmul.f32 %v5285, %v5290
    %v5299 = vmul.f32 %v5286, %v5290
    %v5300 = vmul.f32 %v5287, %v5290
    %v5301 = vmul.f32 %v5288, %v5290
    %v5302 = vsel %vm126, %v5291, 0.0
    %v5303 = vsel %vm127, %v5292, 0.0
    %v5304 = vsel %vm128, %v5293, 0.0
    %v5305 = vsel %vm129, %v5294, 0.0
    %v5306 = vsel %vm130, %v5295, 0.0
    %v5307 = vsel %vm131, %v5296, 0.0
    %v5308 = vsel %vm132, %v5297, 0.0
    %v5309 = vsel %vm133, %v5298, 0.0
    %v5310 = vsel %vm134, %v5299, 0.0
    %v5311 = vsel %vm135, %v5300, 0.0
    %v5312 = vsel %vm136, %v5301, 0.0
    %v5313 = vmax.f32 %v5302, 0.0
    %v5314 = vmax.f32 %v5303, 0.0
    %v5315 = vmax.f32 %v5304, 0.0
    %v5316 = vmax.f32 %v5305, 0.0
    %v5317 = vmax.f32 %v5306, 0.0
    %v5318 = vmax.f32 %v5307, 0.0
    %v5319 = vmax.f32 %v5308, 0.0
    %v5320 = vmax.f32 %v5309, 0.0
    %v5321 = vmax.f32 %v5310, 0.0
    %v5322 = vmax.f32 %v5311, 0.0
    %v5323 = vmax.f32 %v5312, 0.0
    %5325 = vset.pattern.permute.xlu0 0
    %5326 = vperm.xlu0 %5325, %v3523
    %v5327 = vpop.permute.xlu0 %5326
    %v5329 = vmul.f32 %v5327, %v5313
    %v5330 = vmul.f32 %v5327, %v5314
    %v5331 = vmul.f32 %v5327, %v5315
    %v5332 = vmul.f32 %v5327, %v5316
    %v5333 = vmul.f32 %v5327, %v5317
    %v5334 = vmul.f32 %v5327, %v5318
    %v5335 = vmul.f32 %v5327, %v5319
    %v5336 = vmul.f32 %v5327, %v5320
    %v5337 = vmul.f32 %v5327, %v5321
    %v5338 = vmul.f32 %v5327, %v5322
    %5339 = vset.pattern.permute.xlu0 1
    %5340 = vperm.xlu0 %5339, %v3523
    %v5341 = vpop.permute.xlu0 %5340
    %v5343 = vmul.f32 %v5341, %v5313
    %v5344 = vmul.f32 %v5341, %v5314
    %v5345 = vmul.f32 %v5341, %v5315
    %v5346 = vmul.f32 %v5341, %v5316
    %v5347 = vmul.f32 %v5341, %v5317
    %v5348 = vmul.f32 %v5341, %v5318
    %v5349 = vmul.f32 %v5341, %v5319
    %v5350 = vmul.f32 %v5341, %v5320
    %v5351 = vmul.f32 %v5341, %v5321
    %v5352 = vmul.f32 %v5341, %v5322
    %5363 = vrot.lane.b32.xlu0 %v5343, 127
    %v5364 = vpop.permute.xlu0 %5363
    %5365 = vrot.lane.b32.xlu0 %v5344, 127
    %v5366 = vpop.permute.xlu0 %5365
    %5367 = vrot.lane.b32.xlu0 %v5345, 127
    %v5368 = vpop.permute.xlu0 %5367
    %5369 = vrot.lane.b32.xlu0 %v5346, 127
    %v5370 = vpop.permute.xlu0 %5369
    %5371 = vrot.lane.b32.xlu0 %v5347, 127
    %v5372 = vpop.permute.xlu0 %5371
    %5373 = vrot.lane.b32.xlu0 %v5348, 127
    %v5374 = vpop.permute.xlu0 %5373
    %5375 = vrot.lane.b32.xlu0 %v5349, 127
    %v5376 = vpop.permute.xlu0 %5375
    %5377 = vrot.lane.b32.xlu0 %v5350, 127
    %v5378 = vpop.permute.xlu0 %5377
    %5379 = vrot.lane.b32.xlu0 %v5351, 127
    %v5380 = vpop.permute.xlu0 %5379
    %5381 = vrot.lane.b32.xlu0 %v5352, 127
    %v5382 = vpop.permute.xlu0 %5381
    %v5383 = vsel %vm194, %v5364, %v5366
    %v5384 = vsel %vm194, %v5366, %v5368
    %v5385 = vsel %vm194, %v5368, %v5370
    %v5386 = vsel %vm194, %v5370, %v5372
    %v5387 = vsel %vm194, %v5372, %v5374
    %v5388 = vsel %vm194, %v5374, %v5376
    %v5389 = vsel %vm194, %v5376, %v5378
    %v5390 = vsel %vm194, %v5378, %v5380
    %v5391 = vsel %vm194, %v5380, %v5382
    %v5402 = vadd.f32 %v5329, %v5383
    %v5403 = vadd.f32 %v5330, %v5384
    %v5404 = vadd.f32 %v5331, %v5385
    %v5405 = vadd.f32 %v5332, %v5386
    %v5406 = vadd.f32 %v5333, %v5387
    %v5407 = vadd.f32 %v5334, %v5388
    %v5408 = vadd.f32 %v5335, %v5389
    %v5409 = vadd.f32 %v5336, %v5390
    %v5410 = vadd.f32 %v5337, %v5391
    %v5411 = vadd.f32 %v5338, %v5382
    %5412 = vset.pattern.permute.xlu0 2
    %5413 = vperm.xlu0 %5412, %v3523
    %v5414 = vpop.permute.xlu0 %5413
    %v5416 = vmul.f32 %v5414, %v5313
    %v5417 = vmul.f32 %v5414, %v5314
    %v5418 = vmul.f32 %v5414, %v5315
    %v5419 = vmul.f32 %v5414, %v5316
    %v5420 = vmul.f32 %v5414, %v5317
    %v5421 = vmul.f32 %v5414, %v5318
    %v5422 = vmul.f32 %v5414, %v5319
    %v5423 = vmul.f32 %v5414, %v5320
    %v5424 = vmul.f32 %v5414, %v5321
    %v5425 = vmul.f32 %v5414, %v5322
    %5436 = vrot.lane.b32.xlu0 %v5416, 126
    %v5437 = vpop.permute.xlu0 %5436
    %5438 = vrot.lane.b32.xlu0 %v5417, 126
    %v5439 = vpop.permute.xlu0 %5438
    %5440 = vrot.lane.b32.xlu0 %v5418, 126
    %v5441 = vpop.permute.xlu0 %5440
    %5442 = vrot.lane.b32.xlu0 %v5419, 126
    %v5443 = vpop.permute.xlu0 %5442
    %5444 = vrot.lane.b32.xlu0 %v5420, 126
    %v5445 = vpop.permute.xlu0 %5444
    %5446 = vrot.lane.b32.xlu0 %v5421, 126
    %v5447 = vpop.permute.xlu0 %5446
    %5448 = vrot.lane.b32.xlu0 %v5422, 126
    %v5449 = vpop.permute.xlu0 %5448
    %5450 = vrot.lane.b32.xlu0 %v5423, 126
    %v5451 = vpop.permute.xlu0 %5450
    %5452 = vrot.lane.b32.xlu0 %v5424, 126
    %v5453 = vpop.permute.xlu0 %5452
    %5454 = vrot.lane.b32.xlu0 %v5425, 126
    %v5455 = vpop.permute.xlu0 %5454
    %v5456 = vsel %vm244, %v5437, %v5439
    %v5457 = vsel %vm244, %v5439, %v5441
    %v5458 = vsel %vm244, %v5441, %v5443
    %v5459 = vsel %vm244, %v5443, %v5445
    %v5460 = vsel %vm244, %v5445, %v5447
    %v5461 = vsel %vm244, %v5447, %v5449
    %v5462 = vsel %vm244, %v5449, %v5451
    %v5463 = vsel %vm244, %v5451, %v5453
    %v5464 = vsel %vm244, %v5453, %v5455
    %v5475 = vadd.f32 %v5402, %v5456
    %v5476 = vadd.f32 %v5403, %v5457
    %v5477 = vadd.f32 %v5404, %v5458
    %v5478 = vadd.f32 %v5405, %v5459
    %v5479 = vadd.f32 %v5406, %v5460
    %v5480 = vadd.f32 %v5407, %v5461
    %v5481 = vadd.f32 %v5408, %v5462
    %v5482 = vadd.f32 %v5409, %v5463
    %v5483 = vadd.f32 %v5410, %v5464
    %v5484 = vadd.f32 %v5411, %v5455
    %5485 = vset.pattern.permute.xlu0 3
    %5486 = vperm.xlu0 %5485, %v3523
    %v5487 = vpop.permute.xlu0 %5486
    %v5489 = vmul.f32 %v5487, %v5313
    %v5490 = vmul.f32 %v5487, %v5314
    %v5491 = vmul.f32 %v5487, %v5315
    %v5492 = vmul.f32 %v5487, %v5316
    %v5493 = vmul.f32 %v5487, %v5317
    %v5494 = vmul.f32 %v5487, %v5318
    %v5495 = vmul.f32 %v5487, %v5319
    %v5496 = vmul.f32 %v5487, %v5320
    %v5497 = vmul.f32 %v5487, %v5321
    %v5498 = vmul.f32 %v5487, %v5322
    %5509 = vrot.lane.b32.xlu0 %v5489, 125
    %v5510 = vpop.permute.xlu0 %5509
    %5511 = vrot.lane.b32.xlu0 %v5490, 125
    %v5512 = vpop.permute.xlu0 %5511
    %5513 = vrot.lane.b32.xlu0 %v5491, 125
    %v5514 = vpop.permute.xlu0 %5513
    %5515 = vrot.lane.b32.xlu0 %v5492, 125
    %v5516 = vpop.permute.xlu0 %5515
    %5517 = vrot.lane.b32.xlu0 %v5493, 125
    %v5518 = vpop.permute.xlu0 %5517
    %5519 = vrot.lane.b32.xlu0 %v5494, 125
    %v5520 = vpop.permute.xlu0 %5519
    %5521 = vrot.lane.b32.xlu0 %v5495, 125
    %v5522 = vpop.permute.xlu0 %5521
    %5523 = vrot.lane.b32.xlu0 %v5496, 125
    %v5524 = vpop.permute.xlu0 %5523
    %5525 = vrot.lane.b32.xlu0 %v5497, 125
    %v5526 = vpop.permute.xlu0 %5525
    %5527 = vrot.lane.b32.xlu0 %v5498, 125
    %v5528 = vpop.permute.xlu0 %5527
    %vm5529 = vcmask 1022976
    %v5530 = vsel %vm5529, %v5510, %v5512
    %v5531 = vsel %vm5529, %v5512, %v5514
    %v5532 = vsel %vm5529, %v5514, %v5516
    %v5533 = vsel %vm5529, %v5516, %v5518
    %v5534 = vsel %vm5529, %v5518, %v5520
    %v5535 = vsel %vm5529, %v5520, %v5522
    %v5536 = vsel %vm5529, %v5522, %v5524
    %v5537 = vsel %vm5529, %v5524, %v5526
    %v5538 = vsel %vm5529, %v5526, %v5528
    %v5549 = vadd.f32 %v5475, %v5530
    %v5550 = vadd.f32 %v5476, %v5531
    %v5551 = vadd.f32 %v5477, %v5532
    %v5552 = vadd.f32 %v5478, %v5533
    %v5553 = vadd.f32 %v5479, %v5534
    %v5554 = vadd.f32 %v5480, %v5535
    %v5555 = vadd.f32 %v5481, %v5536
    %v5556 = vadd.f32 %v5482, %v5537
    %v5557 = vadd.f32 %v5483, %v5538
    %v5558 = vadd.f32 %v5484, %v5528
    %5559 = vset.pattern.permute.xlu0 4
    %5560 = vperm.xlu0 %5559, %v3523
    %v5561 = vpop.permute.xlu0 %5560
    %v5563 = vmul.f32 %v5561, %v5313
    %v5564 = vmul.f32 %v5561, %v5314
    %v5565 = vmul.f32 %v5561, %v5315
    %v5566 = vmul.f32 %v5561, %v5316
    %v5567 = vmul.f32 %v5561, %v5317
    %v5568 = vmul.f32 %v5561, %v5318
    %v5569 = vmul.f32 %v5561, %v5319
    %v5570 = vmul.f32 %v5561, %v5320
    %v5571 = vmul.f32 %v5561, %v5321
    %v5572 = vmul.f32 %v5561, %v5322
    %5583 = vrot.lane.b32.xlu0 %v5563, 124
    %v5584 = vpop.permute.xlu0 %5583
    %5585 = vrot.lane.b32.xlu0 %v5564, 124
    %v5586 = vpop.permute.xlu0 %5585
    %5587 = vrot.lane.b32.xlu0 %v5565, 124
    %v5588 = vpop.permute.xlu0 %5587
    %5589 = vrot.lane.b32.xlu0 %v5566, 124
    %v5590 = vpop.permute.xlu0 %5589
    %5591 = vrot.lane.b32.xlu0 %v5567, 124
    %v5592 = vpop.permute.xlu0 %5591
    %5593 = vrot.lane.b32.xlu0 %v5568, 124
    %v5594 = vpop.permute.xlu0 %5593
    %5595 = vrot.lane.b32.xlu0 %v5569, 124
    %v5596 = vpop.permute.xlu0 %5595
    %5597 = vrot.lane.b32.xlu0 %v5570, 124
    %v5598 = vpop.permute.xlu0 %5597
    %5599 = vrot.lane.b32.xlu0 %v5571, 124
    %v5600 = vpop.permute.xlu0 %5599
    %5601 = vrot.lane.b32.xlu0 %v5572, 124
    %v5602 = vpop.permute.xlu0 %5601
    %vm5603 = vcmask 1014784
    %v5604 = vsel %vm5603, %v5584, %v5586
    %v5605 = vsel %vm5603, %v5586, %v5588
    %v5606 = vsel %vm5603, %v5588, %v5590
    %v5607 = vsel %vm5603, %v5590, %v5592
    %v5608 = vsel %vm5603, %v5592, %v5594
    %v5609 = vsel %vm5603, %v5594, %v5596
    %v5610 = vsel %vm5603, %v5596, %v5598
    %v5611 = vsel %vm5603, %v5598, %v5600
    %v5612 = vsel %vm5603, %v5600, %v5602
    %v5623 = vadd.f32 %v5549, %v5604
    %v5624 = vadd.f32 %v5550, %v5605
    %v5625 = vadd.f32 %v5551, %v5606
    %v5626 = vadd.f32 %v5552, %v5607
    %v5627 = vadd.f32 %v5553, %v5608
    %v5628 = vadd.f32 %v5554, %v5609
    %v5629 = vadd.f32 %v5555, %v5610
    %v5630 = vadd.f32 %v5556, %v5611
    %v5631 = vadd.f32 %v5557, %v5612
    %v5632 = vadd.f32 %v5558, %v5602
    %5633 = vset.pattern.permute.xlu0 5
    %5634 = vperm.xlu0 %5633, %v3523
    %v5635 = vpop.permute.xlu0 %5634
    %v5637 = vmul.f32 %v5635, %v5313
    %v5638 = vmul.f32 %v5635, %v5314
    %v5639 = vmul.f32 %v5635, %v5315
    %v5640 = vmul.f32 %v5635, %v5316
    %v5641 = vmul.f32 %v5635, %v5317
    %v5642 = vmul.f32 %v5635, %v5318
    %v5643 = vmul.f32 %v5635, %v5319
    %v5644 = vmul.f32 %v5635, %v5320
    %v5645 = vmul.f32 %v5635, %v5321
    %v5646 = vmul.f32 %v5635, %v5322
    %5657 = vrot.lane.b32.xlu0 %v5637, 104
    %v5658 = vpop.permute.xlu0 %5657
    %5659 = vrot.lane.b32.xlu0 %v5638, 104
    %v5660 = vpop.permute.xlu0 %5659
    %5661 = vrot.lane.b32.xlu0 %v5639, 104
    %v5662 = vpop.permute.xlu0 %5661
    %5663 = vrot.lane.b32.xlu0 %v5640, 104
    %v5664 = vpop.permute.xlu0 %5663
    %5665 = vrot.lane.b32.xlu0 %v5641, 104
    %v5666 = vpop.permute.xlu0 %5665
    %5667 = vrot.lane.b32.xlu0 %v5642, 104
    %v5668 = vpop.permute.xlu0 %5667
    %5669 = vrot.lane.b32.xlu0 %v5643, 104
    %v5670 = vpop.permute.xlu0 %5669
    %5671 = vrot.lane.b32.xlu0 %v5644, 104
    %v5672 = vpop.permute.xlu0 %5671
    %5673 = vrot.lane.b32.xlu0 %v5645, 104
    %v5674 = vpop.permute.xlu0 %5673
    %5675 = vrot.lane.b32.xlu0 %v5646, 104
    %v5676 = vpop.permute.xlu0 %5675
    %v5677 = vsel %vm294, %v5658, %v5660
    %v5678 = vsel %vm294, %v5660, %v5662
    %v5679 = vsel %vm294, %v5662, %v5664
    %v5680 = vsel %vm294, %v5664, %v5666
    %v5681 = vsel %vm294, %v5666, %v5668
    %v5682 = vsel %vm294, %v5668, %v5670
    %v5683 = vsel %vm294, %v5670, %v5672
    %v5684 = vsel %vm294, %v5672, %v5674
    %v5685 = vsel %vm294, %v5674, %v5676
    %v5696 = vadd.f32 %v5623, %v5677
    %v5697 = vadd.f32 %v5624, %v5678
    %v5698 = vadd.f32 %v5625, %v5679
    %v5699 = vadd.f32 %v5626, %v5680
    %v5700 = vadd.f32 %v5627, %v5681
    %v5701 = vadd.f32 %v5628, %v5682
    %v5702 = vadd.f32 %v5629, %v5683
    %v5703 = vadd.f32 %v5630, %v5684
    %v5704 = vadd.f32 %v5631, %v5685
    %v5705 = vadd.f32 %v5632, %v5676
    %5706 = vset.pattern.permute.xlu0 6
    %5707 = vperm.xlu0 %5706, %v3523
    %v5708 = vpop.permute.xlu0 %5707
    %v5710 = vmul.f32 %v5708, %v5313
    %v5711 = vmul.f32 %v5708, %v5314
    %v5712 = vmul.f32 %v5708, %v5315
    %v5713 = vmul.f32 %v5708, %v5316
    %v5714 = vmul.f32 %v5708, %v5317
    %v5715 = vmul.f32 %v5708, %v5318
    %v5716 = vmul.f32 %v5708, %v5319
    %v5717 = vmul.f32 %v5708, %v5320
    %v5718 = vmul.f32 %v5708, %v5321
    %v5719 = vmul.f32 %v5708, %v5322
    %5730 = vrot.lane.b32.xlu0 %v5710, 103
    %v5731 = vpop.permute.xlu0 %5730
    %5732 = vrot.lane.b32.xlu0 %v5711, 103
    %v5733 = vpop.permute.xlu0 %5732
    %5734 = vrot.lane.b32.xlu0 %v5712, 103
    %v5735 = vpop.permute.xlu0 %5734
    %5736 = vrot.lane.b32.xlu0 %v5713, 103
    %v5737 = vpop.permute.xlu0 %5736
    %5738 = vrot.lane.b32.xlu0 %v5714, 103
    %v5739 = vpop.permute.xlu0 %5738
    %5740 = vrot.lane.b32.xlu0 %v5715, 103
    %v5741 = vpop.permute.xlu0 %5740
    %5742 = vrot.lane.b32.xlu0 %v5716, 103
    %v5743 = vpop.permute.xlu0 %5742
    %5744 = vrot.lane.b32.xlu0 %v5717, 103
    %v5745 = vpop.permute.xlu0 %5744
    %5746 = vrot.lane.b32.xlu0 %v5718, 103
    %v5747 = vpop.permute.xlu0 %5746
    %5748 = vrot.lane.b32.xlu0 %v5719, 103
    %v5749 = vpop.permute.xlu0 %5748
    %v5750 = vsel %vm342, %v5731, %v5733
    %v5751 = vsel %vm342, %v5733, %v5735
    %v5752 = vsel %vm342, %v5735, %v5737
    %v5753 = vsel %vm342, %v5737, %v5739
    %v5754 = vsel %vm342, %v5739, %v5741
    %v5755 = vsel %vm342, %v5741, %v5743
    %v5756 = vsel %vm342, %v5743, %v5745
    %v5757 = vsel %vm342, %v5745, %v5747
    %v5758 = vsel %vm342, %v5747, %v5749
    %v5769 = vadd.f32 %v5696, %v5750
    %v5770 = vadd.f32 %v5697, %v5751
    %v5771 = vadd.f32 %v5698, %v5752
    %v5772 = vadd.f32 %v5699, %v5753
    %v5773 = vadd.f32 %v5700, %v5754
    %v5774 = vadd.f32 %v5701, %v5755
    %v5775 = vadd.f32 %v5702, %v5756
    %v5776 = vadd.f32 %v5703, %v5757
    %v5777 = vadd.f32 %v5704, %v5758
    %v5778 = vadd.f32 %v5705, %v5749
    %5779 = vset.pattern.permute.xlu0 7
    %5780 = vperm.xlu0 %5779, %v3523
    %v5781 = vpop.permute.xlu0 %5780
    %v5783 = vmul.f32 %v5781, %v5313
    %v5784 = vmul.f32 %v5781, %v5314
    %v5785 = vmul.f32 %v5781, %v5315
    %v5786 = vmul.f32 %v5781, %v5316
    %v5787 = vmul.f32 %v5781, %v5317
    %v5788 = vmul.f32 %v5781, %v5318
    %v5789 = vmul.f32 %v5781, %v5319
    %v5790 = vmul.f32 %v5781, %v5320
    %v5791 = vmul.f32 %v5781, %v5321
    %v5792 = vmul.f32 %v5781, %v5322
    %5803 = vrot.lane.b32.xlu0 %v5783, 102
    %v5804 = vpop.permute.xlu0 %5803
    %5805 = vrot.lane.b32.xlu0 %v5784, 102
    %v5806 = vpop.permute.xlu0 %5805
    %5807 = vrot.lane.b32.xlu0 %v5785, 102
    %v5808 = vpop.permute.xlu0 %5807
    %5809 = vrot.lane.b32.xlu0 %v5786, 102
    %v5810 = vpop.permute.xlu0 %5809
    %5811 = vrot.lane.b32.xlu0 %v5787, 102
    %v5812 = vpop.permute.xlu0 %5811
    %5813 = vrot.lane.b32.xlu0 %v5788, 102
    %v5814 = vpop.permute.xlu0 %5813
    %5815 = vrot.lane.b32.xlu0 %v5789, 102
    %v5816 = vpop.permute.xlu0 %5815
    %5817 = vrot.lane.b32.xlu0 %v5790, 102
    %v5818 = vpop.permute.xlu0 %5817
    %5819 = vrot.lane.b32.xlu0 %v5791, 102
    %v5820 = vpop.permute.xlu0 %5819
    %5821 = vrot.lane.b32.xlu0 %v5792, 102
    %v5822 = vpop.permute.xlu0 %5821
    %v5823 = vsel %vm392, %v5804, %v5806
    %v5824 = vsel %vm392, %v5806, %v5808
    %v5825 = vsel %vm392, %v5808, %v5810
    %v5826 = vsel %vm392, %v5810, %v5812
    %v5827 = vsel %vm392, %v5812, %v5814
    %v5828 = vsel %vm392, %v5814, %v5816
    %v5829 = vsel %vm392, %v5816, %v5818
    %v5830 = vsel %vm392, %v5818, %v5820
    %v5831 = vsel %vm392, %v5820, %v5822
    %v5842 = vadd.f32 %v5769, %v5823
    %v5843 = vadd.f32 %v5770, %v5824
    %v5844 = vadd.f32 %v5771, %v5825
    %v5845 = vadd.f32 %v5772, %v5826
    %v5846 = vadd.f32 %v5773, %v5827
    %v5847 = vadd.f32 %v5774, %v5828
    %v5848 = vadd.f32 %v5775, %v5829
    %v5849 = vadd.f32 %v5776, %v5830
    %v5850 = vadd.f32 %v5777, %v5831
    %v5851 = vadd.f32 %v5778, %v5822
    %5852 = vset.pattern.permute.xlu0 8
    %5853 = vperm.xlu0 %5852, %v3523
    %v5854 = vpop.permute.xlu0 %5853
    %v5856 = vmul.f32 %v5854, %v5313
    %v5857 = vmul.f32 %v5854, %v5314
    %v5858 = vmul.f32 %v5854, %v5315
    %v5859 = vmul.f32 %v5854, %v5316
    %v5860 = vmul.f32 %v5854, %v5317
    %v5861 = vmul.f32 %v5854, %v5318
    %v5862 = vmul.f32 %v5854, %v5319
    %v5863 = vmul.f32 %v5854, %v5320
    %v5864 = vmul.f32 %v5854, %v5321
    %v5865 = vmul.f32 %v5854, %v5322
    %5876 = vrot.lane.b32.xlu0 %v5856, 101
    %v5877 = vpop.permute.xlu0 %5876
    %5878 = vrot.lane.b32.xlu0 %v5857, 101
    %v5879 = vpop.permute.xlu0 %5878
    %5880 = vrot.lane.b32.xlu0 %v5858, 101
    %v5881 = vpop.permute.xlu0 %5880
    %5882 = vrot.lane.b32.xlu0 %v5859, 101
    %v5883 = vpop.permute.xlu0 %5882
    %5884 = vrot.lane.b32.xlu0 %v5860, 101
    %v5885 = vpop.permute.xlu0 %5884
    %5886 = vrot.lane.b32.xlu0 %v5861, 101
    %v5887 = vpop.permute.xlu0 %5886
    %5888 = vrot.lane.b32.xlu0 %v5862, 101
    %v5889 = vpop.permute.xlu0 %5888
    %5890 = vrot.lane.b32.xlu0 %v5863, 101
    %v5891 = vpop.permute.xlu0 %5890
    %5892 = vrot.lane.b32.xlu0 %v5864, 101
    %v5893 = vpop.permute.xlu0 %5892
    %5894 = vrot.lane.b32.xlu0 %v5865, 101
    %v5895 = vpop.permute.xlu0 %5894
    %vm5896 = vcmask 826368
    %v5897 = vsel %vm5896, %v5877, %v5879
    %v5898 = vsel %vm5896, %v5879, %v5881
    %v5899 = vsel %vm5896, %v5881, %v5883
    %v5900 = vsel %vm5896, %v5883, %v5885
    %v5901 = vsel %vm5896, %v5885, %v5887
    %v5902 = vsel %vm5896, %v5887, %v5889
    %v5903 = vsel %vm5896, %v5889, %v5891
    %v5904 = vsel %vm5896, %v5891, %v5893
    %v5905 = vsel %vm5896, %v5893, %v5895
    %v5916 = vadd.f32 %v5842, %v5897
    %v5917 = vadd.f32 %v5843, %v5898
    %v5918 = vadd.f32 %v5844, %v5899
    %v5919 = vadd.f32 %v5845, %v5900
    %v5920 = vadd.f32 %v5846, %v5901
    %v5921 = vadd.f32 %v5847, %v5902
    %v5922 = vadd.f32 %v5848, %v5903
    %v5923 = vadd.f32 %v5849, %v5904
    %v5924 = vadd.f32 %v5850, %v5905
    %v5925 = vadd.f32 %v5851, %v5895
    %5926 = vset.pattern.permute.xlu0 9
    %5927 = vperm.xlu0 %5926, %v3523
    %v5928 = vpop.permute.xlu0 %5927
    %v5930 = vmul.f32 %v5928, %v5313
    %v5931 = vmul.f32 %v5928, %v5314
    %v5932 = vmul.f32 %v5928, %v5315
    %v5933 = vmul.f32 %v5928, %v5316
    %v5934 = vmul.f32 %v5928, %v5317
    %v5935 = vmul.f32 %v5928, %v5318
    %v5936 = vmul.f32 %v5928, %v5319
    %v5937 = vmul.f32 %v5928, %v5320
    %v5938 = vmul.f32 %v5928, %v5321
    %v5939 = vmul.f32 %v5928, %v5322
    %5950 = vrot.lane.b32.xlu0 %v5930, 100
    %v5951 = vpop.permute.xlu0 %5950
    %5952 = vrot.lane.b32.xlu0 %v5931, 100
    %v5953 = vpop.permute.xlu0 %5952
    %5954 = vrot.lane.b32.xlu0 %v5932, 100
    %v5955 = vpop.permute.xlu0 %5954
    %5956 = vrot.lane.b32.xlu0 %v5933, 100
    %v5957 = vpop.permute.xlu0 %5956
    %5958 = vrot.lane.b32.xlu0 %v5934, 100
    %v5959 = vpop.permute.xlu0 %5958
    %5960 = vrot.lane.b32.xlu0 %v5935, 100
    %v5961 = vpop.permute.xlu0 %5960
    %5962 = vrot.lane.b32.xlu0 %v5936, 100
    %v5963 = vpop.permute.xlu0 %5962
    %5964 = vrot.lane.b32.xlu0 %v5937, 100
    %v5965 = vpop.permute.xlu0 %5964
    %5966 = vrot.lane.b32.xlu0 %v5938, 100
    %v5967 = vpop.permute.xlu0 %5966
    %5968 = vrot.lane.b32.xlu0 %v5939, 100
    %v5969 = vpop.permute.xlu0 %5968
    %v5970 = vsel %vm3550, %v5951, %v5953
    %v5971 = vsel %vm3550, %v5953, %v5955
    %v5972 = vsel %vm3550, %v5955, %v5957
    %v5973 = vsel %vm3550, %v5957, %v5959
    %v5974 = vsel %vm3550, %v5959, %v5961
    %v5975 = vsel %vm3550, %v5961, %v5963
    %v5976 = vsel %vm3550, %v5963, %v5965
    %v5977 = vsel %vm3550, %v5965, %v5967
    %v5978 = vsel %vm3550, %v5967, %v5969
    %v5989 = vadd.f32 %v5916, %v5970
    %v5990 = vadd.f32 %v5917, %v5971
    %v5991 = vadd.f32 %v5918, %v5972
    %v5992 = vadd.f32 %v5919, %v5973
    %v5993 = vadd.f32 %v5920, %v5974
    %v5994 = vadd.f32 %v5921, %v5975
    %v5995 = vadd.f32 %v5922, %v5976
    %v5996 = vadd.f32 %v5923, %v5977
    %v5997 = vadd.f32 %v5924, %v5978
    %v5998 = vadd.f32 %v5925, %v5969
    %5999 = vset.pattern.permute.xlu0 10
    %6000 = vperm.xlu0 %5999, %v3523
    %v6001 = vpop.permute.xlu0 %6000
    %v6003 = vmul.f32 %v6001, %v5313
    %v6004 = vmul.f32 %v6001, %v5314
    %v6005 = vmul.f32 %v6001, %v5315
    %v6006 = vmul.f32 %v6001, %v5316
    %v6007 = vmul.f32 %v6001, %v5317
    %v6008 = vmul.f32 %v6001, %v5318
    %v6009 = vmul.f32 %v6001, %v5319
    %v6010 = vmul.f32 %v6001, %v5320
    %v6011 = vmul.f32 %v6001, %v5321
    %v6012 = vmul.f32 %v6001, %v5322
    %6023 = vrot.lane.b32.xlu0 %v6003, 80
    %v6024 = vpop.permute.xlu0 %6023
    %6025 = vrot.lane.b32.xlu0 %v6004, 80
    %v6026 = vpop.permute.xlu0 %6025
    %6027 = vrot.lane.b32.xlu0 %v6005, 80
    %v6028 = vpop.permute.xlu0 %6027
    %6029 = vrot.lane.b32.xlu0 %v6006, 80
    %v6030 = vpop.permute.xlu0 %6029
    %6031 = vrot.lane.b32.xlu0 %v6007, 80
    %v6032 = vpop.permute.xlu0 %6031
    %6033 = vrot.lane.b32.xlu0 %v6008, 80
    %v6034 = vpop.permute.xlu0 %6033
    %6035 = vrot.lane.b32.xlu0 %v6009, 80
    %v6036 = vpop.permute.xlu0 %6035
    %6037 = vrot.lane.b32.xlu0 %v6010, 80
    %v6038 = vpop.permute.xlu0 %6037
    %6039 = vrot.lane.b32.xlu0 %v6011, 80
    %v6040 = vpop.permute.xlu0 %6039
    %6041 = vrot.lane.b32.xlu0 %v6012, 80
    %v6042 = vpop.permute.xlu0 %6041
    %v6043 = vsel %vm442, %v6024, %v6026
    %v6044 = vsel %vm442, %v6026, %v6028
    %v6045 = vsel %vm442, %v6028, %v6030
    %v6046 = vsel %vm442, %v6030, %v6032
    %v6047 = vsel %vm442, %v6032, %v6034
    %v6048 = vsel %vm442, %v6034, %v6036
    %v6049 = vsel %vm442, %v6036, %v6038
    %v6050 = vsel %vm442, %v6038, %v6040
    %v6051 = vsel %vm442, %v6040, %v6042
    %v6062 = vadd.f32 %v5989, %v6043
    %v6063 = vadd.f32 %v5990, %v6044
    %v6064 = vadd.f32 %v5991, %v6045
    %v6065 = vadd.f32 %v5992, %v6046
    %v6066 = vadd.f32 %v5993, %v6047
    %v6067 = vadd.f32 %v5994, %v6048
    %v6068 = vadd.f32 %v5995, %v6049
    %v6069 = vadd.f32 %v5996, %v6050
    %v6070 = vadd.f32 %v5997, %v6051
    %v6071 = vadd.f32 %v5998, %v6042
    %6072 = vset.pattern.permute.xlu0 11
    %6073 = vperm.xlu0 %6072, %v3523
    %v6074 = vpop.permute.xlu0 %6073
    %v6076 = vmul.f32 %v6074, %v5313
    %v6077 = vmul.f32 %v6074, %v5314
    %v6078 = vmul.f32 %v6074, %v5315
    %v6079 = vmul.f32 %v6074, %v5316
    %v6080 = vmul.f32 %v6074, %v5317
    %v6081 = vmul.f32 %v6074, %v5318
    %v6082 = vmul.f32 %v6074, %v5319
    %v6083 = vmul.f32 %v6074, %v5320
    %v6084 = vmul.f32 %v6074, %v5321
    %v6085 = vmul.f32 %v6074, %v5322
    %6096 = vrot.lane.b32.xlu0 %v6076, 79
    %v6097 = vpop.permute.xlu0 %6096
    %6098 = vrot.lane.b32.xlu0 %v6077, 79
    %v6099 = vpop.permute.xlu0 %6098
    %6100 = vrot.lane.b32.xlu0 %v6078, 79
    %v6101 = vpop.permute.xlu0 %6100
    %6102 = vrot.lane.b32.xlu0 %v6079, 79
    %v6103 = vpop.permute.xlu0 %6102
    %6104 = vrot.lane.b32.xlu0 %v6080, 79
    %v6105 = vpop.permute.xlu0 %6104
    %6106 = vrot.lane.b32.xlu0 %v6081, 79
    %v6107 = vpop.permute.xlu0 %6106
    %6108 = vrot.lane.b32.xlu0 %v6082, 79
    %v6109 = vpop.permute.xlu0 %6108
    %6110 = vrot.lane.b32.xlu0 %v6083, 79
    %v6111 = vpop.permute.xlu0 %6110
    %6112 = vrot.lane.b32.xlu0 %v6084, 79
    %v6113 = vpop.permute.xlu0 %6112
    %6114 = vrot.lane.b32.xlu0 %v6085, 79
    %v6115 = vpop.permute.xlu0 %6114
    %v6116 = vsel %vm492, %v6097, %v6099
    %v6117 = vsel %vm492, %v6099, %v6101
    %v6118 = vsel %vm492, %v6101, %v6103
    %v6119 = vsel %vm492, %v6103, %v6105
    %v6120 = vsel %vm492, %v6105, %v6107
    %v6121 = vsel %vm492, %v6107, %v6109
    %v6122 = vsel %vm492, %v6109, %v6111
    %v6123 = vsel %vm492, %v6111, %v6113
    %v6124 = vsel %vm492, %v6113, %v6115
    %v6135 = vadd.f32 %v6062, %v6116
    %v6136 = vadd.f32 %v6063, %v6117
    %v6137 = vadd.f32 %v6064, %v6118
    %v6138 = vadd.f32 %v6065, %v6119
    %v6139 = vadd.f32 %v6066, %v6120
    %v6140 = vadd.f32 %v6067, %v6121
    %v6141 = vadd.f32 %v6068, %v6122
    %v6142 = vadd.f32 %v6069, %v6123
    %v6143 = vadd.f32 %v6070, %v6124
    %v6144 = vadd.f32 %v6071, %v6115
    %6145 = vset.pattern.permute.xlu0 12
    %6146 = vperm.xlu0 %6145, %v3523
    %v6147 = vpop.permute.xlu0 %6146
    %v6149 = vmul.f32 %v6147, %v5314
    %v6150 = vmul.f32 %v6147, %v5315
    %v6151 = vmul.f32 %v6147, %v5316
    %v6152 = vmul.f32 %v6147, %v5317
    %v6153 = vmul.f32 %v6147, %v5318
    %v6154 = vmul.f32 %v6147, %v5319
    %v6155 = vmul.f32 %v6147, %v5320
    %v6156 = vmul.f32 %v6147, %v5321
    %v6157 = vmul.f32 %v6147, %v5322
    %6167 = vrot.lane.b32.xlu0 %v6149, 78
    %v6168 = vpop.permute.xlu0 %6167
    %6169 = vrot.lane.b32.xlu0 %v6150, 78
    %v6170 = vpop.permute.xlu0 %6169
    %6171 = vrot.lane.b32.xlu0 %v6151, 78
    %v6172 = vpop.permute.xlu0 %6171
    %6173 = vrot.lane.b32.xlu0 %v6152, 78
    %v6174 = vpop.permute.xlu0 %6173
    %6175 = vrot.lane.b32.xlu0 %v6153, 78
    %v6176 = vpop.permute.xlu0 %6175
    %6177 = vrot.lane.b32.xlu0 %v6154, 78
    %v6178 = vpop.permute.xlu0 %6177
    %6179 = vrot.lane.b32.xlu0 %v6155, 78
    %v6180 = vpop.permute.xlu0 %6179
    %6181 = vrot.lane.b32.xlu0 %v6156, 78
    %v6182 = vpop.permute.xlu0 %6181
    %6183 = vrot.lane.b32.xlu0 %v6157, 78
    %v6184 = vpop.permute.xlu0 %6183
    %v6185 = vsel %vm542, %v6168, %v6170
    %v6186 = vsel %vm542, %v6170, %v6172
    %v6187 = vsel %vm542, %v6172, %v6174
    %v6188 = vsel %vm542, %v6174, %v6176
    %v6189 = vsel %vm542, %v6176, %v6178
    %v6190 = vsel %vm542, %v6178, %v6180
    %v6191 = vsel %vm542, %v6180, %v6182
    %v6192 = vsel %vm542, %v6182, %v6184
    %v6203 = vadd.f32 %v6135, %v6168
    %v6204 = vadd.f32 %v6136, %v6185
    %v6205 = vadd.f32 %v6137, %v6186
    %v6206 = vadd.f32 %v6138, %v6187
    %v6207 = vadd.f32 %v6139, %v6188
    %v6208 = vadd.f32 %v6140, %v6189
    %v6209 = vadd.f32 %v6141, %v6190
    %v6210 = vadd.f32 %v6142, %v6191
    %v6211 = vadd.f32 %v6143, %v6192
    %v6212 = vadd.f32 %v6144, %v6184
    %6213 = vset.pattern.permute.xlu0 13
    %6214 = vperm.xlu0 %6213, %v3523
    %v6215 = vpop.permute.xlu0 %6214
    %v6217 = vmul.f32 %v6215, %v5314
    %v6218 = vmul.f32 %v6215, %v5315
    %v6219 = vmul.f32 %v6215, %v5316
    %v6220 = vmul.f32 %v6215, %v5317
    %v6221 = vmul.f32 %v6215, %v5318
    %v6222 = vmul.f32 %v6215, %v5319
    %v6223 = vmul.f32 %v6215, %v5320
    %v6224 = vmul.f32 %v6215, %v5321
    %v6225 = vmul.f32 %v6215, %v5322
    %v6226 = vmul.f32 %v6215, %v5323
    %6237 = vrot.lane.b32.xlu0 %v6217, 77
    %v6238 = vpop.permute.xlu0 %6237
    %6239 = vrot.lane.b32.xlu0 %v6218, 77
    %v6240 = vpop.permute.xlu0 %6239
    %6241 = vrot.lane.b32.xlu0 %v6219, 77
    %v6242 = vpop.permute.xlu0 %6241
    %6243 = vrot.lane.b32.xlu0 %v6220, 77
    %v6244 = vpop.permute.xlu0 %6243
    %6245 = vrot.lane.b32.xlu0 %v6221, 77
    %v6246 = vpop.permute.xlu0 %6245
    %6247 = vrot.lane.b32.xlu0 %v6222, 77
    %v6248 = vpop.permute.xlu0 %6247
    %6249 = vrot.lane.b32.xlu0 %v6223, 77
    %v6250 = vpop.permute.xlu0 %6249
    %6251 = vrot.lane.b32.xlu0 %v6224, 77
    %v6252 = vpop.permute.xlu0 %6251
    %6253 = vrot.lane.b32.xlu0 %v6225, 77
    %v6254 = vpop.permute.xlu0 %6253
    %6255 = vrot.lane.b32.xlu0 %v6226, 77
    %v6256 = vpop.permute.xlu0 %6255
    %vm6257 = vcmask 629760
    %v6258 = vsel %vm6257, %v6238, %v6240
    %v6259 = vsel %vm6257, %v6240, %v6242
    %v6260 = vsel %vm6257, %v6242, %v6244
    %v6261 = vsel %vm6257, %v6244, %v6246
    %v6262 = vsel %vm6257, %v6246, %v6248
    %v6263 = vsel %vm6257, %v6248, %v6250
    %v6264 = vsel %vm6257, %v6250, %v6252
    %v6265 = vsel %vm6257, %v6252, %v6254
    %v6266 = vsel %vm6257, %v6254, %v6256
    %v6277 = vadd.f32 %v6203, %v6238
    %v6278 = vadd.f32 %v6204, %v6258
    %v6279 = vadd.f32 %v6205, %v6259
    %v6280 = vadd.f32 %v6206, %v6260
    %v6281 = vadd.f32 %v6207, %v6261
    %v6282 = vadd.f32 %v6208, %v6262
    %v6283 = vadd.f32 %v6209, %v6263
    %v6284 = vadd.f32 %v6210, %v6264
    %v6285 = vadd.f32 %v6211, %v6265
    %v6286 = vadd.f32 %v6212, %v6266
    %6287 = vset.pattern.permute.xlu0 14
    %6288 = vperm.xlu0 %6287, %v3523
    %v6289 = vpop.permute.xlu0 %6288
    %v6291 = vmul.f32 %v6289, %v5314
    %v6292 = vmul.f32 %v6289, %v5315
    %v6293 = vmul.f32 %v6289, %v5316
    %v6294 = vmul.f32 %v6289, %v5317
    %v6295 = vmul.f32 %v6289, %v5318
    %v6296 = vmul.f32 %v6289, %v5319
    %v6297 = vmul.f32 %v6289, %v5320
    %v6298 = vmul.f32 %v6289, %v5321
    %v6299 = vmul.f32 %v6289, %v5322
    %v6300 = vmul.f32 %v6289, %v5323
    %6311 = vrot.lane.b32.xlu0 %v6291, 76
    %v6312 = vpop.permute.xlu0 %6311
    %6313 = vrot.lane.b32.xlu0 %v6292, 76
    %v6314 = vpop.permute.xlu0 %6313
    %6315 = vrot.lane.b32.xlu0 %v6293, 76
    %v6316 = vpop.permute.xlu0 %6315
    %6317 = vrot.lane.b32.xlu0 %v6294, 76
    %v6318 = vpop.permute.xlu0 %6317
    %6319 = vrot.lane.b32.xlu0 %v6295, 76
    %v6320 = vpop.permute.xlu0 %6319
    %6321 = vrot.lane.b32.xlu0 %v6296, 76
    %v6322 = vpop.permute.xlu0 %6321
    %6323 = vrot.lane.b32.xlu0 %v6297, 76
    %v6324 = vpop.permute.xlu0 %6323
    %6325 = vrot.lane.b32.xlu0 %v6298, 76
    %v6326 = vpop.permute.xlu0 %6325
    %6327 = vrot.lane.b32.xlu0 %v6299, 76
    %v6328 = vpop.permute.xlu0 %6327
    %6329 = vrot.lane.b32.xlu0 %v6300, 76
    %v6330 = vpop.permute.xlu0 %6329
    %v6331 = vsel %vm3874, %v6312, %v6314
    %v6332 = vsel %vm3874, %v6314, %v6316
    %v6333 = vsel %vm3874, %v6316, %v6318
    %v6334 = vsel %vm3874, %v6318, %v6320
    %v6335 = vsel %vm3874, %v6320, %v6322
    %v6336 = vsel %vm3874, %v6322, %v6324
    %v6337 = vsel %vm3874, %v6324, %v6326
    %v6338 = vsel %vm3874, %v6326, %v6328
    %v6339 = vsel %vm3874, %v6328, %v6330
    %v6350 = vadd.f32 %v6277, %v6312
    %v6351 = vadd.f32 %v6278, %v6331
    %v6352 = vadd.f32 %v6279, %v6332
    %v6353 = vadd.f32 %v6280, %v6333
    %v6354 = vadd.f32 %v6281, %v6334
    %v6355 = vadd.f32 %v6282, %v6335
    %v6356 = vadd.f32 %v6283, %v6336
    %v6357 = vadd.f32 %v6284, %v6337
    %v6358 = vadd.f32 %v6285, %v6338
    %v6359 = vadd.f32 %v6286, %v6339
    %6360 = vset.pattern.permute.xlu0 15
    %6361 = vperm.xlu0 %6360, %v3523
    %v6362 = vpop.permute.xlu0 %6361
    %v6364 = vmul.f32 %v6362, %v5314
    %v6365 = vmul.f32 %v6362, %v5315
    %v6366 = vmul.f32 %v6362, %v5316
    %v6367 = vmul.f32 %v6362, %v5317
    %v6368 = vmul.f32 %v6362, %v5318
    %v6369 = vmul.f32 %v6362, %v5319
    %v6370 = vmul.f32 %v6362, %v5320
    %v6371 = vmul.f32 %v6362, %v5321
    %v6372 = vmul.f32 %v6362, %v5322
    %v6373 = vmul.f32 %v6362, %v5323
    %6384 = vrot.lane.b32.xlu0 %v6364, 56
    %v6385 = vpop.permute.xlu0 %6384
    %6386 = vrot.lane.b32.xlu0 %v6365, 56
    %v6387 = vpop.permute.xlu0 %6386
    %6388 = vrot.lane.b32.xlu0 %v6366, 56
    %v6389 = vpop.permute.xlu0 %6388
    %6390 = vrot.lane.b32.xlu0 %v6367, 56
    %v6391 = vpop.permute.xlu0 %6390
    %6392 = vrot.lane.b32.xlu0 %v6368, 56
    %v6393 = vpop.permute.xlu0 %6392
    %6394 = vrot.lane.b32.xlu0 %v6369, 56
    %v6395 = vpop.permute.xlu0 %6394
    %6396 = vrot.lane.b32.xlu0 %v6370, 56
    %v6397 = vpop.permute.xlu0 %6396
    %6398 = vrot.lane.b32.xlu0 %v6371, 56
    %v6399 = vpop.permute.xlu0 %6398
    %6400 = vrot.lane.b32.xlu0 %v6372, 56
    %v6401 = vpop.permute.xlu0 %6400
    %6402 = vrot.lane.b32.xlu0 %v6373, 56
    %v6403 = vpop.permute.xlu0 %6402
    %vm6404 = vcmask 457728
    %v6405 = vsel %vm6404, %v6385, %v6387
    %v6406 = vsel %vm6404, %v6387, %v6389
    %v6407 = vsel %vm6404, %v6389, %v6391
    %v6408 = vsel %vm6404, %v6391, %v6393
    %v6409 = vsel %vm6404, %v6393, %v6395
    %v6410 = vsel %vm6404, %v6395, %v6397
    %v6411 = vsel %vm6404, %v6397, %v6399
    %v6412 = vsel %vm6404, %v6399, %v6401
    %v6413 = vsel %vm6404, %v6401, %v6403
    %v6424 = vadd.f32 %v6350, %v6385
    %v6425 = vadd.f32 %v6351, %v6405
    %v6426 = vadd.f32 %v6352, %v6406
    %v6427 = vadd.f32 %v6353, %v6407
    %v6428 = vadd.f32 %v6354, %v6408
    %v6429 = vadd.f32 %v6355, %v6409
    %v6430 = vadd.f32 %v6356, %v6410
    %v6431 = vadd.f32 %v6357, %v6411
    %v6432 = vadd.f32 %v6358, %v6412
    %v6433 = vadd.f32 %v6359, %v6413
    %6434 = vset.pattern.permute.xlu0 16
    %6435 = vperm.xlu0 %6434, %v3523
    %v6436 = vpop.permute.xlu0 %6435
    %v6438 = vmul.f32 %v6436, %v5314
    %v6439 = vmul.f32 %v6436, %v5315
    %v6440 = vmul.f32 %v6436, %v5316
    %v6441 = vmul.f32 %v6436, %v5317
    %v6442 = vmul.f32 %v6436, %v5318
    %v6443 = vmul.f32 %v6436, %v5319
    %v6444 = vmul.f32 %v6436, %v5320
    %v6445 = vmul.f32 %v6436, %v5321
    %v6446 = vmul.f32 %v6436, %v5322
    %v6447 = vmul.f32 %v6436, %v5323
    %6458 = vrot.lane.b32.xlu0 %v6438, 55
    %v6459 = vpop.permute.xlu0 %6458
    %6460 = vrot.lane.b32.xlu0 %v6439, 55
    %v6461 = vpop.permute.xlu0 %6460
    %6462 = vrot.lane.b32.xlu0 %v6440, 55
    %v6463 = vpop.permute.xlu0 %6462
    %6464 = vrot.lane.b32.xlu0 %v6441, 55
    %v6465 = vpop.permute.xlu0 %6464
    %6466 = vrot.lane.b32.xlu0 %v6442, 55
    %v6467 = vpop.permute.xlu0 %6466
    %6468 = vrot.lane.b32.xlu0 %v6443, 55
    %v6469 = vpop.permute.xlu0 %6468
    %6470 = vrot.lane.b32.xlu0 %v6444, 55
    %v6471 = vpop.permute.xlu0 %6470
    %6472 = vrot.lane.b32.xlu0 %v6445, 55
    %v6473 = vpop.permute.xlu0 %6472
    %6474 = vrot.lane.b32.xlu0 %v6446, 55
    %v6475 = vpop.permute.xlu0 %6474
    %6476 = vrot.lane.b32.xlu0 %v6447, 55
    %v6477 = vpop.permute.xlu0 %6476
    %vm6478 = vcmask 449536
    %v6479 = vsel %vm6478, %v6459, %v6461
    %v6480 = vsel %vm6478, %v6461, %v6463
    %v6481 = vsel %vm6478, %v6463, %v6465
    %v6482 = vsel %vm6478, %v6465, %v6467
    %v6483 = vsel %vm6478, %v6467, %v6469
    %v6484 = vsel %vm6478, %v6469, %v6471
    %v6485 = vsel %vm6478, %v6471, %v6473
    %v6486 = vsel %vm6478, %v6473, %v6475
    %v6487 = vsel %vm6478, %v6475, %v6477
    %v6498 = vadd.f32 %v6424, %v6459
    %v6499 = vadd.f32 %v6425, %v6479
    %v6500 = vadd.f32 %v6426, %v6480
    %v6501 = vadd.f32 %v6427, %v6481
    %v6502 = vadd.f32 %v6428, %v6482
    %v6503 = vadd.f32 %v6429, %v6483
    %v6504 = vadd.f32 %v6430, %v6484
    %v6505 = vadd.f32 %v6431, %v6485
    %v6506 = vadd.f32 %v6432, %v6486
    %v6507 = vadd.f32 %v6433, %v6487
    %6508 = vset.pattern.permute.xlu0 17
    %6509 = vperm.xlu0 %6508, %v3523
    %v6510 = vpop.permute.xlu0 %6509
    %v6512 = vmul.f32 %v6510, %v5314
    %v6513 = vmul.f32 %v6510, %v5315
    %v6514 = vmul.f32 %v6510, %v5316
    %v6515 = vmul.f32 %v6510, %v5317
    %v6516 = vmul.f32 %v6510, %v5318
    %v6517 = vmul.f32 %v6510, %v5319
    %v6518 = vmul.f32 %v6510, %v5320
    %v6519 = vmul.f32 %v6510, %v5321
    %v6520 = vmul.f32 %v6510, %v5322
    %v6521 = vmul.f32 %v6510, %v5323
    %6532 = vrot.lane.b32.xlu0 %v6512, 54
    %v6533 = vpop.permute.xlu0 %6532
    %6534 = vrot.lane.b32.xlu0 %v6513, 54
    %v6535 = vpop.permute.xlu0 %6534
    %6536 = vrot.lane.b32.xlu0 %v6514, 54
    %v6537 = vpop.permute.xlu0 %6536
    %6538 = vrot.lane.b32.xlu0 %v6515, 54
    %v6539 = vpop.permute.xlu0 %6538
    %6540 = vrot.lane.b32.xlu0 %v6516, 54
    %v6541 = vpop.permute.xlu0 %6540
    %6542 = vrot.lane.b32.xlu0 %v6517, 54
    %v6543 = vpop.permute.xlu0 %6542
    %6544 = vrot.lane.b32.xlu0 %v6518, 54
    %v6545 = vpop.permute.xlu0 %6544
    %6546 = vrot.lane.b32.xlu0 %v6519, 54
    %v6547 = vpop.permute.xlu0 %6546
    %6548 = vrot.lane.b32.xlu0 %v6520, 54
    %v6549 = vpop.permute.xlu0 %6548
    %6550 = vrot.lane.b32.xlu0 %v6521, 54
    %v6551 = vpop.permute.xlu0 %6550
    %vm6552 = vcmask 441344
    %v6553 = vsel %vm6552, %v6533, %v6535
    %v6554 = vsel %vm6552, %v6535, %v6537
    %v6555 = vsel %vm6552, %v6537, %v6539
    %v6556 = vsel %vm6552, %v6539, %v6541
    %v6557 = vsel %vm6552, %v6541, %v6543
    %v6558 = vsel %vm6552, %v6543, %v6545
    %v6559 = vsel %vm6552, %v6545, %v6547
    %v6560 = vsel %vm6552, %v6547, %v6549
    %v6561 = vsel %vm6552, %v6549, %v6551
    %v6572 = vadd.f32 %v6498, %v6533
    %v6573 = vadd.f32 %v6499, %v6553
    %v6574 = vadd.f32 %v6500, %v6554
    %v6575 = vadd.f32 %v6501, %v6555
    %v6576 = vadd.f32 %v6502, %v6556
    %v6577 = vadd.f32 %v6503, %v6557
    %v6578 = vadd.f32 %v6504, %v6558
    %v6579 = vadd.f32 %v6505, %v6559
    %v6580 = vadd.f32 %v6506, %v6560
    %v6581 = vadd.f32 %v6507, %v6561
    %6582 = vset.pattern.permute.xlu0 18
    %6583 = vperm.xlu0 %6582, %v3523
    %v6584 = vpop.permute.xlu0 %6583
    %v6586 = vmul.f32 %v6584, %v5314
    %v6587 = vmul.f32 %v6584, %v5315
    %v6588 = vmul.f32 %v6584, %v5316
    %v6589 = vmul.f32 %v6584, %v5317
    %v6590 = vmul.f32 %v6584, %v5318
    %v6591 = vmul.f32 %v6584, %v5319
    %v6592 = vmul.f32 %v6584, %v5320
    %v6593 = vmul.f32 %v6584, %v5321
    %v6594 = vmul.f32 %v6584, %v5322
    %v6595 = vmul.f32 %v6584, %v5323
    %6606 = vrot.lane.b32.xlu0 %v6586, 53
    %v6607 = vpop.permute.xlu0 %6606
    %6608 = vrot.lane.b32.xlu0 %v6587, 53
    %v6609 = vpop.permute.xlu0 %6608
    %6610 = vrot.lane.b32.xlu0 %v6588, 53
    %v6611 = vpop.permute.xlu0 %6610
    %6612 = vrot.lane.b32.xlu0 %v6589, 53
    %v6613 = vpop.permute.xlu0 %6612
    %6614 = vrot.lane.b32.xlu0 %v6590, 53
    %v6615 = vpop.permute.xlu0 %6614
    %6616 = vrot.lane.b32.xlu0 %v6591, 53
    %v6617 = vpop.permute.xlu0 %6616
    %6618 = vrot.lane.b32.xlu0 %v6592, 53
    %v6619 = vpop.permute.xlu0 %6618
    %6620 = vrot.lane.b32.xlu0 %v6593, 53
    %v6621 = vpop.permute.xlu0 %6620
    %6622 = vrot.lane.b32.xlu0 %v6594, 53
    %v6623 = vpop.permute.xlu0 %6622
    %6624 = vrot.lane.b32.xlu0 %v6595, 53
    %v6625 = vpop.permute.xlu0 %6624
    %vm6626 = vcmask 433152
    %v6627 = vsel %vm6626, %v6607, %v6609
    %v6628 = vsel %vm6626, %v6609, %v6611
    %v6629 = vsel %vm6626, %v6611, %v6613
    %v6630 = vsel %vm6626, %v6613, %v6615
    %v6631 = vsel %vm6626, %v6615, %v6617
    %v6632 = vsel %vm6626, %v6617, %v6619
    %v6633 = vsel %vm6626, %v6619, %v6621
    %v6634 = vsel %vm6626, %v6621, %v6623
    %v6635 = vsel %vm6626, %v6623, %v6625
    %v6646 = vadd.f32 %v6572, %v6607
    %v6647 = vadd.f32 %v6573, %v6627
    %v6648 = vadd.f32 %v6574, %v6628
    %v6649 = vadd.f32 %v6575, %v6629
    %v6650 = vadd.f32 %v6576, %v6630
    %v6651 = vadd.f32 %v6577, %v6631
    %v6652 = vadd.f32 %v6578, %v6632
    %v6653 = vadd.f32 %v6579, %v6633
    %v6654 = vadd.f32 %v6580, %v6634
    %v6655 = vadd.f32 %v6581, %v6635
    %6656 = vset.pattern.permute.xlu0 19
    %6657 = vperm.xlu0 %6656, %v3523
    %v6658 = vpop.permute.xlu0 %6657
    %v6660 = vmul.f32 %v6658, %v5314
    %v6661 = vmul.f32 %v6658, %v5315
    %v6662 = vmul.f32 %v6658, %v5316
    %v6663 = vmul.f32 %v6658, %v5317
    %v6664 = vmul.f32 %v6658, %v5318
    %v6665 = vmul.f32 %v6658, %v5319
    %v6666 = vmul.f32 %v6658, %v5320
    %v6667 = vmul.f32 %v6658, %v5321
    %v6668 = vmul.f32 %v6658, %v5322
    %v6669 = vmul.f32 %v6658, %v5323
    %6680 = vrot.lane.b32.xlu0 %v6660, 52
    %v6681 = vpop.permute.xlu0 %6680
    %6682 = vrot.lane.b32.xlu0 %v6661, 52
    %v6683 = vpop.permute.xlu0 %6682
    %6684 = vrot.lane.b32.xlu0 %v6662, 52
    %v6685 = vpop.permute.xlu0 %6684
    %6686 = vrot.lane.b32.xlu0 %v6663, 52
    %v6687 = vpop.permute.xlu0 %6686
    %6688 = vrot.lane.b32.xlu0 %v6664, 52
    %v6689 = vpop.permute.xlu0 %6688
    %6690 = vrot.lane.b32.xlu0 %v6665, 52
    %v6691 = vpop.permute.xlu0 %6690
    %6692 = vrot.lane.b32.xlu0 %v6666, 52
    %v6693 = vpop.permute.xlu0 %6692
    %6694 = vrot.lane.b32.xlu0 %v6667, 52
    %v6695 = vpop.permute.xlu0 %6694
    %6696 = vrot.lane.b32.xlu0 %v6668, 52
    %v6697 = vpop.permute.xlu0 %6696
    %6698 = vrot.lane.b32.xlu0 %v6669, 52
    %v6699 = vpop.permute.xlu0 %6698
    %v6700 = vsel %vm4209, %v6681, %v6683
    %v6701 = vsel %vm4209, %v6683, %v6685
    %v6702 = vsel %vm4209, %v6685, %v6687
    %v6703 = vsel %vm4209, %v6687, %v6689
    %v6704 = vsel %vm4209, %v6689, %v6691
    %v6705 = vsel %vm4209, %v6691, %v6693
    %v6706 = vsel %vm4209, %v6693, %v6695
    %v6707 = vsel %vm4209, %v6695, %v6697
    %v6708 = vsel %vm4209, %v6697, %v6699
    %v6719 = vadd.f32 %v6646, %v6681
    %v6720 = vadd.f32 %v6647, %v6700
    %v6721 = vadd.f32 %v6648, %v6701
    %v6722 = vadd.f32 %v6649, %v6702
    %v6723 = vadd.f32 %v6650, %v6703
    %v6724 = vadd.f32 %v6651, %v6704
    %v6725 = vadd.f32 %v6652, %v6705
    %v6726 = vadd.f32 %v6653, %v6706
    %v6727 = vadd.f32 %v6654, %v6707
    %v6728 = vadd.f32 %v6655, %v6708
    %6729 = vset.pattern.permute.xlu0 20
    %6730 = vperm.xlu0 %6729, %v3523
    %v6731 = vpop.permute.xlu0 %6730
    %v6733 = vmul.f32 %v6731, %v5314
    %v6734 = vmul.f32 %v6731, %v5315
    %v6735 = vmul.f32 %v6731, %v5316
    %v6736 = vmul.f32 %v6731, %v5317
    %v6737 = vmul.f32 %v6731, %v5318
    %v6738 = vmul.f32 %v6731, %v5319
    %v6739 = vmul.f32 %v6731, %v5320
    %v6740 = vmul.f32 %v6731, %v5321
    %v6741 = vmul.f32 %v6731, %v5322
    %v6742 = vmul.f32 %v6731, %v5323
    %6753 = vrot.lane.b32.xlu0 %v6733, 32
    %v6754 = vpop.permute.xlu0 %6753
    %6755 = vrot.lane.b32.xlu0 %v6734, 32
    %v6756 = vpop.permute.xlu0 %6755
    %6757 = vrot.lane.b32.xlu0 %v6735, 32
    %v6758 = vpop.permute.xlu0 %6757
    %6759 = vrot.lane.b32.xlu0 %v6736, 32
    %v6760 = vpop.permute.xlu0 %6759
    %6761 = vrot.lane.b32.xlu0 %v6737, 32
    %v6762 = vpop.permute.xlu0 %6761
    %6763 = vrot.lane.b32.xlu0 %v6738, 32
    %v6764 = vpop.permute.xlu0 %6763
    %6765 = vrot.lane.b32.xlu0 %v6739, 32
    %v6766 = vpop.permute.xlu0 %6765
    %6767 = vrot.lane.b32.xlu0 %v6740, 32
    %v6768 = vpop.permute.xlu0 %6767
    %6769 = vrot.lane.b32.xlu0 %v6741, 32
    %v6770 = vpop.permute.xlu0 %6769
    %6771 = vrot.lane.b32.xlu0 %v6742, 32
    %v6772 = vpop.permute.xlu0 %6771
    %vm6773 = vcmask 261120
    %v6774 = vsel %vm6773, %v6754, %v6756
    %v6775 = vsel %vm6773, %v6756, %v6758
    %v6776 = vsel %vm6773, %v6758, %v6760
    %v6777 = vsel %vm6773, %v6760, %v6762
    %v6778 = vsel %vm6773, %v6762, %v6764
    %v6779 = vsel %vm6773, %v6764, %v6766
    %v6780 = vsel %vm6773, %v6766, %v6768
    %v6781 = vsel %vm6773, %v6768, %v6770
    %v6782 = vsel %vm6773, %v6770, %v6772
    %v6793 = vadd.f32 %v6719, %v6754
    %v6794 = vadd.f32 %v6720, %v6774
    %v6795 = vadd.f32 %v6721, %v6775
    %v6796 = vadd.f32 %v6722, %v6776
    %v6797 = vadd.f32 %v6723, %v6777
    %v6798 = vadd.f32 %v6724, %v6778
    %v6799 = vadd.f32 %v6725, %v6779
    %v6800 = vadd.f32 %v6726, %v6780
    %v6801 = vadd.f32 %v6727, %v6781
    %v6802 = vadd.f32 %v6728, %v6782
    %6803 = vset.pattern.permute.xlu0 21
    %6804 = vperm.xlu0 %6803, %v3523
    %v6805 = vpop.permute.xlu0 %6804
    %v6807 = vmul.f32 %v6805, %v5314
    %v6808 = vmul.f32 %v6805, %v5315
    %v6809 = vmul.f32 %v6805, %v5316
    %v6810 = vmul.f32 %v6805, %v5317
    %v6811 = vmul.f32 %v6805, %v5318
    %v6812 = vmul.f32 %v6805, %v5319
    %v6813 = vmul.f32 %v6805, %v5320
    %v6814 = vmul.f32 %v6805, %v5321
    %v6815 = vmul.f32 %v6805, %v5322
    %v6816 = vmul.f32 %v6805, %v5323
    %6827 = vrot.lane.b32.xlu0 %v6807, 31
    %v6828 = vpop.permute.xlu0 %6827
    %6829 = vrot.lane.b32.xlu0 %v6808, 31
    %v6830 = vpop.permute.xlu0 %6829
    %6831 = vrot.lane.b32.xlu0 %v6809, 31
    %v6832 = vpop.permute.xlu0 %6831
    %6833 = vrot.lane.b32.xlu0 %v6810, 31
    %v6834 = vpop.permute.xlu0 %6833
    %6835 = vrot.lane.b32.xlu0 %v6811, 31
    %v6836 = vpop.permute.xlu0 %6835
    %6837 = vrot.lane.b32.xlu0 %v6812, 31
    %v6838 = vpop.permute.xlu0 %6837
    %6839 = vrot.lane.b32.xlu0 %v6813, 31
    %v6840 = vpop.permute.xlu0 %6839
    %6841 = vrot.lane.b32.xlu0 %v6814, 31
    %v6842 = vpop.permute.xlu0 %6841
    %6843 = vrot.lane.b32.xlu0 %v6815, 31
    %v6844 = vpop.permute.xlu0 %6843
    %6845 = vrot.lane.b32.xlu0 %v6816, 31
    %v6846 = vpop.permute.xlu0 %6845
    %vm6847 = vcmask 252928
    %v6848 = vsel %vm6847, %v6828, %v6830
    %v6849 = vsel %vm6847, %v6830, %v6832
    %v6850 = vsel %vm6847, %v6832, %v6834
    %v6851 = vsel %vm6847, %v6834, %v6836
    %v6852 = vsel %vm6847, %v6836, %v6838
    %v6853 = vsel %vm6847, %v6838, %v6840
    %v6854 = vsel %vm6847, %v6840, %v6842
    %v6855 = vsel %vm6847, %v6842, %v6844
    %v6856 = vsel %vm6847, %v6844, %v6846
    %v6867 = vadd.f32 %v6793, %v6828
    %v6868 = vadd.f32 %v6794, %v6848
    %v6869 = vadd.f32 %v6795, %v6849
    %v6870 = vadd.f32 %v6796, %v6850
    %v6871 = vadd.f32 %v6797, %v6851
    %v6872 = vadd.f32 %v6798, %v6852
    %v6873 = vadd.f32 %v6799, %v6853
    %v6874 = vadd.f32 %v6800, %v6854
    %v6875 = vadd.f32 %v6801, %v6855
    %v6876 = vadd.f32 %v6802, %v6856
    %6877 = vset.pattern.permute.xlu0 22
    %6878 = vperm.xlu0 %6877, %v3523
    %v6879 = vpop.permute.xlu0 %6878
    %v6881 = vmul.f32 %v6879, %v5314
    %v6882 = vmul.f32 %v6879, %v5315
    %v6883 = vmul.f32 %v6879, %v5316
    %v6884 = vmul.f32 %v6879, %v5317
    %v6885 = vmul.f32 %v6879, %v5318
    %v6886 = vmul.f32 %v6879, %v5319
    %v6887 = vmul.f32 %v6879, %v5320
    %v6888 = vmul.f32 %v6879, %v5321
    %v6889 = vmul.f32 %v6879, %v5322
    %v6890 = vmul.f32 %v6879, %v5323
    %6901 = vrot.lane.b32.xlu0 %v6881, 30
    %v6902 = vpop.permute.xlu0 %6901
    %6903 = vrot.lane.b32.xlu0 %v6882, 30
    %v6904 = vpop.permute.xlu0 %6903
    %6905 = vrot.lane.b32.xlu0 %v6883, 30
    %v6906 = vpop.permute.xlu0 %6905
    %6907 = vrot.lane.b32.xlu0 %v6884, 30
    %v6908 = vpop.permute.xlu0 %6907
    %6909 = vrot.lane.b32.xlu0 %v6885, 30
    %v6910 = vpop.permute.xlu0 %6909
    %6911 = vrot.lane.b32.xlu0 %v6886, 30
    %v6912 = vpop.permute.xlu0 %6911
    %6913 = vrot.lane.b32.xlu0 %v6887, 30
    %v6914 = vpop.permute.xlu0 %6913
    %6915 = vrot.lane.b32.xlu0 %v6888, 30
    %v6916 = vpop.permute.xlu0 %6915
    %6917 = vrot.lane.b32.xlu0 %v6889, 30
    %v6918 = vpop.permute.xlu0 %6917
    %6919 = vrot.lane.b32.xlu0 %v6890, 30
    %v6920 = vpop.permute.xlu0 %6919
    %vm6921 = vcmask 244736
    %v6922 = vsel %vm6921, %v6902, %v6904
    %v6923 = vsel %vm6921, %v6904, %v6906
    %v6924 = vsel %vm6921, %v6906, %v6908
    %v6925 = vsel %vm6921, %v6908, %v6910
    %v6926 = vsel %vm6921, %v6910, %v6912
    %v6927 = vsel %vm6921, %v6912, %v6914
    %v6928 = vsel %vm6921, %v6914, %v6916
    %v6929 = vsel %vm6921, %v6916, %v6918
    %v6930 = vsel %vm6921, %v6918, %v6920
    %v6941 = vadd.f32 %v6867, %v6902
    %v6942 = vadd.f32 %v6868, %v6922
    %v6943 = vadd.f32 %v6869, %v6923
    %v6944 = vadd.f32 %v6870, %v6924
    %v6945 = vadd.f32 %v6871, %v6925
    %v6946 = vadd.f32 %v6872, %v6926
    %v6947 = vadd.f32 %v6873, %v6927
    %v6948 = vadd.f32 %v6874, %v6928
    %v6949 = vadd.f32 %v6875, %v6929
    %v6950 = vadd.f32 %v6876, %v6930
    %6951 = vset.pattern.permute.xlu0 23
    %6952 = vperm.xlu0 %6951, %v3523
    %v6953 = vpop.permute.xlu0 %6952
    %v6955 = vmul.f32 %v6953, %v5314
    %v6956 = vmul.f32 %v6953, %v5315
    %v6957 = vmul.f32 %v6953, %v5316
    %v6958 = vmul.f32 %v6953, %v5317
    %v6959 = vmul.f32 %v6953, %v5318
    %v6960 = vmul.f32 %v6953, %v5319
    %v6961 = vmul.f32 %v6953, %v5320
    %v6962 = vmul.f32 %v6953, %v5321
    %v6963 = vmul.f32 %v6953, %v5322
    %v6964 = vmul.f32 %v6953, %v5323
    %6975 = vrot.lane.b32.xlu0 %v6955, 29
    %v6976 = vpop.permute.xlu0 %6975
    %6977 = vrot.lane.b32.xlu0 %v6956, 29
    %v6978 = vpop.permute.xlu0 %6977
    %6979 = vrot.lane.b32.xlu0 %v6957, 29
    %v6980 = vpop.permute.xlu0 %6979
    %6981 = vrot.lane.b32.xlu0 %v6958, 29
    %v6982 = vpop.permute.xlu0 %6981
    %6983 = vrot.lane.b32.xlu0 %v6959, 29
    %v6984 = vpop.permute.xlu0 %6983
    %6985 = vrot.lane.b32.xlu0 %v6960, 29
    %v6986 = vpop.permute.xlu0 %6985
    %6987 = vrot.lane.b32.xlu0 %v6961, 29
    %v6988 = vpop.permute.xlu0 %6987
    %6989 = vrot.lane.b32.xlu0 %v6962, 29
    %v6990 = vpop.permute.xlu0 %6989
    %6991 = vrot.lane.b32.xlu0 %v6963, 29
    %v6992 = vpop.permute.xlu0 %6991
    %6993 = vrot.lane.b32.xlu0 %v6964, 29
    %v6994 = vpop.permute.xlu0 %6993
    %vm6995 = vcmask 236544
    %v6996 = vsel %vm6995, %v6976, %v6978
    %v6997 = vsel %vm6995, %v6978, %v6980
    %v6998 = vsel %vm6995, %v6980, %v6982
    %v6999 = vsel %vm6995, %v6982, %v6984
    %v7000 = vsel %vm6995, %v6984, %v6986
    %v7001 = vsel %vm6995, %v6986, %v6988
    %v7002 = vsel %vm6995, %v6988, %v6990
    %v7003 = vsel %vm6995, %v6990, %v6992
    %v7004 = vsel %vm6995, %v6992, %v6994
    %v7015 = vadd.f32 %v6941, %v6976
    %v7016 = vadd.f32 %v6942, %v6996
    %v7017 = vadd.f32 %v6943, %v6997
    %v7018 = vadd.f32 %v6944, %v6998
    %v7019 = vadd.f32 %v6945, %v6999
    %v7020 = vadd.f32 %v6946, %v7000
    %v7021 = vadd.f32 %v6947, %v7001
    %v7022 = vadd.f32 %v6948, %v7002
    %v7023 = vadd.f32 %v6949, %v7003
    %v7024 = vadd.f32 %v6950, %v7004
    %7025 = vset.pattern.permute.xlu0 24
    %7026 = vperm.xlu0 %7025, %v3523
    %v7027 = vpop.permute.xlu0 %7026
    %v7029 = vmul.f32 %v7027, %v5314
    %v7030 = vmul.f32 %v7027, %v5315
    %v7031 = vmul.f32 %v7027, %v5316
    %v7032 = vmul.f32 %v7027, %v5317
    %v7033 = vmul.f32 %v7027, %v5318
    %v7034 = vmul.f32 %v7027, %v5319
    %v7035 = vmul.f32 %v7027, %v5320
    %v7036 = vmul.f32 %v7027, %v5321
    %v7037 = vmul.f32 %v7027, %v5322
    %v7038 = vmul.f32 %v7027, %v5323
    %7049 = vrot.lane.b32.xlu0 %v7029, 28
    %v7050 = vpop.permute.xlu0 %7049
    %7051 = vrot.lane.b32.xlu0 %v7030, 28
    %v7052 = vpop.permute.xlu0 %7051
    %7053 = vrot.lane.b32.xlu0 %v7031, 28
    %v7054 = vpop.permute.xlu0 %7053
    %7055 = vrot.lane.b32.xlu0 %v7032, 28
    %v7056 = vpop.permute.xlu0 %7055
    %7057 = vrot.lane.b32.xlu0 %v7033, 28
    %v7058 = vpop.permute.xlu0 %7057
    %7059 = vrot.lane.b32.xlu0 %v7034, 28
    %v7060 = vpop.permute.xlu0 %7059
    %7061 = vrot.lane.b32.xlu0 %v7035, 28
    %v7062 = vpop.permute.xlu0 %7061
    %7063 = vrot.lane.b32.xlu0 %v7036, 28
    %v7064 = vpop.permute.xlu0 %7063
    %7065 = vrot.lane.b32.xlu0 %v7037, 28
    %v7066 = vpop.permute.xlu0 %7065
    %7067 = vrot.lane.b32.xlu0 %v7038, 28
    %v7068 = vpop.permute.xlu0 %7067
    %v7069 = vsel %vm4419, %v7050, %v7052
    %v7070 = vsel %vm4419, %v7052, %v7054
    %v7071 = vsel %vm4419, %v7054, %v7056
    %v7072 = vsel %vm4419, %v7056, %v7058
    %v7073 = vsel %vm4419, %v7058, %v7060
    %v7074 = vsel %vm4419, %v7060, %v7062
    %v7075 = vsel %vm4419, %v7062, %v7064
    %v7076 = vsel %vm4419, %v7064, %v7066
    %v7077 = vsel %vm4419, %v7066, %v7068
    %v7088 = vadd.f32 %v7015, %v7050
    %v7089 = vadd.f32 %v7016, %v7069
    %v7090 = vadd.f32 %v7017, %v7070
    %v7091 = vadd.f32 %v7018, %v7071
    %v7092 = vadd.f32 %v7019, %v7072
    %v7093 = vadd.f32 %v7020, %v7073
    %v7094 = vadd.f32 %v7021, %v7074
    %v7095 = vadd.f32 %v7022, %v7075
    %v7096 = vadd.f32 %v7023, %v7076
    %v7097 = vadd.f32 %v7024, %v7077
    %7099 = vset.pattern.permute.xlu0 0
    %7100 = vperm.xlu0 %7099, %v3524
    %v7101 = vpop.permute.xlu0 %7100
    %v7103 = vlaneseq
    %v7104 = vshrl.u32 %v7103, 7
    %v7105 = vsub.s32 0, %v7104
    %v7106 = vrot.slane %v7088, %v7105
    %v7107 = vlaneseq
    %v7108 = vshrl.u32 %v7107, 7
    %v7109 = vsub.s32 0, %v7108
    %v7110 = vrot.slane %v7089, %v7109
    %v7111 = vlaneseq
    %v7112 = vshrl.u32 %v7111, 7
    %v7113 = vsub.s32 0, %v7112
    %v7114 = vrot.slane %v7090, %v7113
    %v7115 = vlaneseq
    %v7116 = vshrl.u32 %v7115, 7
    %v7117 = vsub.s32 0, %v7116
    %v7118 = vrot.slane %v7091, %v7117
    %v7119 = vlaneseq
    %v7120 = vshrl.u32 %v7119, 7
    %v7121 = vsub.s32 0, %v7120
    %v7122 = vrot.slane %v7092, %v7121
    %v7123 = vlaneseq
    %v7124 = vshrl.u32 %v7123, 7
    %v7125 = vsub.s32 0, %v7124
    %v7126 = vrot.slane %v7093, %v7125
    %v7127 = vlaneseq
    %v7128 = vshrl.u32 %v7127, 7
    %v7129 = vsub.s32 0, %v7128
    %v7130 = vrot.slane %v7094, %v7129
    %v7131 = vlaneseq
    %v7132 = vshrl.u32 %v7131, 7
    %v7133 = vsub.s32 0, %v7132
    %v7134 = vrot.slane %v7095, %v7133
    %v7135 = vlaneseq
    %v7136 = vshrl.u32 %v7135, 7
    %v7137 = vsub.s32 0, %v7136
    %v7138 = vrot.slane %v7096, %v7137
    %v7139 = vlaneseq
    %v7140 = vshrl.u32 %v7139, 7
    %v7141 = vsub.s32 0, %v7140
    %v7142 = vrot.slane %v7097, %v7141
    %v7143 = vmul.f32 %v7101, %v7106
    %v7144 = vmul.f32 %v7101, %v7110
    %v7145 = vmul.f32 %v7101, %v7114
    %v7146 = vmul.f32 %v7101, %v7118
    %v7147 = vmul.f32 %v7101, %v7122
    %v7148 = vmul.f32 %v7101, %v7126
    %v7149 = vmul.f32 %v7101, %v7130
    %v7150 = vmul.f32 %v7101, %v7134
    %v7151 = vmul.f32 %v7101, %v7138
    %v7152 = vmul.f32 %v7101, %v7142
    %7153 = vset.pattern.permute.xlu0 1
    %7154 = vperm.xlu0 %7153, %v3524
    %v7155 = vpop.permute.xlu0 %7154
    %v7157 = vlaneseq
    %v7158 = vshrl.u32 %v7157, 7
    %v7159 = vsub.s32 1, %v7158
    %v7160 = vrot.slane %v7088, %v7159
    %v7161 = vlaneseq
    %v7162 = vshrl.u32 %v7161, 7
    %v7163 = vsub.s32 1, %v7162
    %v7164 = vrot.slane %v7089, %v7163
    %v7165 = vlaneseq
    %v7166 = vshrl.u32 %v7165, 7
    %v7167 = vsub.s32 1, %v7166
    %v7168 = vrot.slane %v7090, %v7167
    %v7169 = vlaneseq
    %v7170 = vshrl.u32 %v7169, 7
    %v7171 = vsub.s32 1, %v7170
    %v7172 = vrot.slane %v7091, %v7171
    %v7173 = vlaneseq
    %v7174 = vshrl.u32 %v7173, 7
    %v7175 = vsub.s32 1, %v7174
    %v7176 = vrot.slane %v7092, %v7175
    %v7177 = vlaneseq
    %v7178 = vshrl.u32 %v7177, 7
    %v7179 = vsub.s32 1, %v7178
    %v7180 = vrot.slane %v7093, %v7179
    %v7181 = vlaneseq
    %v7182 = vshrl.u32 %v7181, 7
    %v7183 = vsub.s32 1, %v7182
    %v7184 = vrot.slane %v7094, %v7183
    %v7185 = vlaneseq
    %v7186 = vshrl.u32 %v7185, 7
    %v7187 = vsub.s32 1, %v7186
    %v7188 = vrot.slane %v7095, %v7187
    %v7189 = vlaneseq
    %v7190 = vshrl.u32 %v7189, 7
    %v7191 = vsub.s32 1, %v7190
    %v7192 = vrot.slane %v7096, %v7191
    %v7193 = vlaneseq
    %v7194 = vshrl.u32 %v7193, 7
    %v7195 = vsub.s32 1, %v7194
    %v7196 = vrot.slane %v7097, %v7195
    %v7197 = vmul.f32 %v7155, %v7160
    %v7198 = vmul.f32 %v7155, %v7164
    %v7199 = vmul.f32 %v7155, %v7168
    %v7200 = vmul.f32 %v7155, %v7172
    %v7201 = vmul.f32 %v7155, %v7176
    %v7202 = vmul.f32 %v7155, %v7180
    %v7203 = vmul.f32 %v7155, %v7184
    %v7204 = vmul.f32 %v7155, %v7188
    %v7205 = vmul.f32 %v7155, %v7192
    %v7206 = vmul.f32 %v7155, %v7196
    %v7207 = vadd.f32 %v7143, %v7197
    %v7208 = vadd.f32 %v7144, %v7198
    %v7209 = vadd.f32 %v7145, %v7199
    %v7210 = vadd.f32 %v7146, %v7200
    %v7211 = vadd.f32 %v7147, %v7201
    %v7212 = vadd.f32 %v7148, %v7202
    %v7213 = vadd.f32 %v7149, %v7203
    %v7214 = vadd.f32 %v7150, %v7204
    %v7215 = vadd.f32 %v7151, %v7205
    %v7216 = vadd.f32 %v7152, %v7206
    %7217 = vset.pattern.permute.xlu0 2
    %7218 = vperm.xlu0 %7217, %v3524
    %v7219 = vpop.permute.xlu0 %7218
    %v7221 = vlaneseq
    %v7222 = vshrl.u32 %v7221, 7
    %v7223 = vsub.s32 2, %v7222
    %v7224 = vrot.slane %v7088, %v7223
    %v7225 = vlaneseq
    %v7226 = vshrl.u32 %v7225, 7
    %v7227 = vsub.s32 2, %v7226
    %v7228 = vrot.slane %v7089, %v7227
    %v7229 = vlaneseq
    %v7230 = vshrl.u32 %v7229, 7
    %v7231 = vsub.s32 2, %v7230
    %v7232 = vrot.slane %v7090, %v7231
    %v7233 = vlaneseq
    %v7234 = vshrl.u32 %v7233, 7
    %v7235 = vsub.s32 2, %v7234
    %v7236 = vrot.slane %v7091, %v7235
    %v7237 = vlaneseq
    %v7238 = vshrl.u32 %v7237, 7
    %v7239 = vsub.s32 2, %v7238
    %v7240 = vrot.slane %v7092, %v7239
    %v7241 = vlaneseq
    %v7242 = vshrl.u32 %v7241, 7
    %v7243 = vsub.s32 2, %v7242
    %v7244 = vrot.slane %v7093, %v7243
    %v7245 = vlaneseq
    %v7246 = vshrl.u32 %v7245, 7
    %v7247 = vsub.s32 2, %v7246
    %v7248 = vrot.slane %v7094, %v7247
    %v7249 = vlaneseq
    %v7250 = vshrl.u32 %v7249, 7
    %v7251 = vsub.s32 2, %v7250
    %v7252 = vrot.slane %v7095, %v7251
    %v7253 = vlaneseq
    %v7254 = vshrl.u32 %v7253, 7
    %v7255 = vsub.s32 2, %v7254
    %v7256 = vrot.slane %v7096, %v7255
    %v7257 = vlaneseq
    %v7258 = vshrl.u32 %v7257, 7
    %v7259 = vsub.s32 2, %v7258
    %v7260 = vrot.slane %v7097, %v7259
    %v7261 = vmul.f32 %v7219, %v7224
    %v7262 = vmul.f32 %v7219, %v7228
    %v7263 = vmul.f32 %v7219, %v7232
    %v7264 = vmul.f32 %v7219, %v7236
    %v7265 = vmul.f32 %v7219, %v7240
    %v7266 = vmul.f32 %v7219, %v7244
    %v7267 = vmul.f32 %v7219, %v7248
    %v7268 = vmul.f32 %v7219, %v7252
    %v7269 = vmul.f32 %v7219, %v7256
    %v7270 = vmul.f32 %v7219, %v7260
    %v7271 = vadd.f32 %v7207, %v7261
    %v7272 = vadd.f32 %v7208, %v7262
    %v7273 = vadd.f32 %v7209, %v7263
    %v7274 = vadd.f32 %v7210, %v7264
    %v7275 = vadd.f32 %v7211, %v7265
    %v7276 = vadd.f32 %v7212, %v7266
    %v7277 = vadd.f32 %v7213, %v7267
    %v7278 = vadd.f32 %v7214, %v7268
    %v7279 = vadd.f32 %v7215, %v7269
    %v7280 = vadd.f32 %v7216, %v7270
    %7281 = vset.pattern.permute.xlu0 3
    %7282 = vperm.xlu0 %7281, %v3524
    %v7283 = vpop.permute.xlu0 %7282
    %v7285 = vlaneseq
    %v7286 = vshrl.u32 %v7285, 7
    %v7287 = vsub.s32 3, %v7286
    %v7288 = vrot.slane %v7088, %v7287
    %v7289 = vlaneseq
    %v7290 = vshrl.u32 %v7289, 7
    %v7291 = vsub.s32 3, %v7290
    %v7292 = vrot.slane %v7089, %v7291
    %v7293 = vlaneseq
    %v7294 = vshrl.u32 %v7293, 7
    %v7295 = vsub.s32 3, %v7294
    %v7296 = vrot.slane %v7090, %v7295
    %v7297 = vlaneseq
    %v7298 = vshrl.u32 %v7297, 7
    %v7299 = vsub.s32 3, %v7298
    %v7300 = vrot.slane %v7091, %v7299
    %v7301 = vlaneseq
    %v7302 = vshrl.u32 %v7301, 7
    %v7303 = vsub.s32 3, %v7302
    %v7304 = vrot.slane %v7092, %v7303
    %v7305 = vlaneseq
    %v7306 = vshrl.u32 %v7305, 7
    %v7307 = vsub.s32 3, %v7306
    %v7308 = vrot.slane %v7093, %v7307
    %v7309 = vlaneseq
    %v7310 = vshrl.u32 %v7309, 7
    %v7311 = vsub.s32 3, %v7310
    %v7312 = vrot.slane %v7094, %v7311
    %v7313 = vlaneseq
    %v7314 = vshrl.u32 %v7313, 7
    %v7315 = vsub.s32 3, %v7314
    %v7316 = vrot.slane %v7095, %v7315
    %v7317 = vlaneseq
    %v7318 = vshrl.u32 %v7317, 7
    %v7319 = vsub.s32 3, %v7318
    %v7320 = vrot.slane %v7096, %v7319
    %v7321 = vlaneseq
    %v7322 = vshrl.u32 %v7321, 7
    %v7323 = vsub.s32 3, %v7322
    %v7324 = vrot.slane %v7097, %v7323
    %v7325 = vmul.f32 %v7283, %v7288
    %v7326 = vmul.f32 %v7283, %v7292
    %v7327 = vmul.f32 %v7283, %v7296
    %v7328 = vmul.f32 %v7283, %v7300
    %v7329 = vmul.f32 %v7283, %v7304
    %v7330 = vmul.f32 %v7283, %v7308
    %v7331 = vmul.f32 %v7283, %v7312
    %v7332 = vmul.f32 %v7283, %v7316
    %v7333 = vmul.f32 %v7283, %v7320
    %v7334 = vmul.f32 %v7283, %v7324
    %v7335 = vadd.f32 %v7271, %v7325
    %v7336 = vadd.f32 %v7272, %v7326
    %v7337 = vadd.f32 %v7273, %v7327
    %v7338 = vadd.f32 %v7274, %v7328
    %v7339 = vadd.f32 %v7275, %v7329
    %v7340 = vadd.f32 %v7276, %v7330
    %v7341 = vadd.f32 %v7277, %v7331
    %v7342 = vadd.f32 %v7278, %v7332
    %v7343 = vadd.f32 %v7279, %v7333
    %v7344 = vadd.f32 %v7280, %v7334
    %7355 = vrot.lane.b32.xlu0 %v7335, 50
    %v7356 = vpop.permute.xlu0 %7355
    %7357 = vrot.lane.b32.xlu0 %v7336, 50
    %v7358 = vpop.permute.xlu0 %7357
    %7359 = vrot.lane.b32.xlu0 %v7337, 50
    %v7360 = vpop.permute.xlu0 %7359
    %7361 = vrot.lane.b32.xlu0 %v7338, 50
    %v7362 = vpop.permute.xlu0 %7361
    %7363 = vrot.lane.b32.xlu0 %v7339, 50
    %v7364 = vpop.permute.xlu0 %7363
    %7365 = vrot.lane.b32.xlu0 %v7340, 50
    %v7366 = vpop.permute.xlu0 %7365
    %7367 = vrot.lane.b32.xlu0 %v7341, 50
    %v7368 = vpop.permute.xlu0 %7367
    %7369 = vrot.lane.b32.xlu0 %v7342, 50
    %v7370 = vpop.permute.xlu0 %7369
    %7371 = vrot.lane.b32.xlu0 %v7343, 50
    %v7372 = vpop.permute.xlu0 %7371
    %7373 = vrot.lane.b32.xlu0 %v7344, 50
    %v7374 = vpop.permute.xlu0 %7373
    %v7375 = vsel %vm1475, %v7356, %v7358
    %v7376 = vsel %vm1475, %v7358, %v7360
    %v7377 = vsel %vm1475, %v7360, %v7362
    %v7378 = vsel %vm1475, %v7362, %v7364
    %v7379 = vsel %vm1475, %v7364, %v7366
    %v7380 = vsel %vm1475, %v7366, %v7368
    %v7381 = vsel %vm1475, %v7368, %v7370
    %v7382 = vsel %vm1475, %v7370, %v7372
    %v7383 = vsel %vm1475, %v7372, %v7374
    %v7393 = vsel %vm620, %v7375, 0.0
    %v7394 = vsel %vm621, %v7376, 0.0
    %v7395 = vsel %vm622, %v7377, 0.0
    %v7396 = vsel %vm623, %v7378, 0.0
    %v7397 = vsel %vm624, %v7379, 0.0
    %v7398 = vsel %vm625, %v7380, 0.0
    %v7399 = vsel %vm626, %v7381, 0.0
    %v7400 = vsel %vm627, %v7382, 0.0
    %v7401 = vsel %vm628, %v7383, 0.0
    %v7402 = vsel %vm687, %v7393, 0.0
    %v7403 = vsel %vm687, %v7394, 0.0
    %v7404 = vadd.f32 %v7402, %v7403
    %v7405 = vsel %vm687, %v7395, 0.0
    %v7406 = vadd.f32 %v7404, %v7405
    %v7407 = vsel %vm687, %v7396, 0.0
    %v7408 = vadd.f32 %v7406, %v7407
    %v7409 = vsel %vm687, %v7397, 0.0
    %v7410 = vadd.f32 %v7408, %v7409
    %v7411 = vsel %vm687, %v7398, 0.0
    %v7412 = vadd.f32 %v7410, %v7411
    %v7413 = vsel %vm687, %v7399, 0.0
    %v7414 = vadd.f32 %v7412, %v7413
    %v7415 = vsel %vm687, %v7400, 0.0
    %v7416 = vadd.f32 %v7414, %v7415
    %v7417 = vsel %vm687, %v7401, 0.0
    %v7418 = vadd.f32 %v7416, %v7417
    %7419 = vadd.xlane.f32.xlu0 %v7418
    %v7420 = vpop.xlane.xlu0 %7419
    %v7421 = vmul.f32 %v7420, 0.001953125
    %v7422 = vmul.f32 %v7393, %v7393
    %v7423 = vmul.f32 %v7394, %v7394
    %v7424 = vmul.f32 %v7395, %v7395
    %v7425 = vmul.f32 %v7396, %v7396
    %v7426 = vmul.f32 %v7397, %v7397
    %v7427 = vmul.f32 %v7398, %v7398
    %v7428 = vmul.f32 %v7399, %v7399
    %v7429 = vmul.f32 %v7400, %v7400
    %v7430 = vmul.f32 %v7401, %v7401
    %v7431 = vsel %vm687, %v7422, 0.0
    %v7432 = vsel %vm687, %v7423, 0.0
    %v7433 = vadd.f32 %v7431, %v7432
    %v7434 = vsel %vm687, %v7424, 0.0
    %v7435 = vadd.f32 %v7433, %v7434
    %v7436 = vsel %vm687, %v7425, 0.0
    %v7437 = vadd.f32 %v7435, %v7436
    %v7438 = vsel %vm687, %v7426, 0.0
    %v7439 = vadd.f32 %v7437, %v7438
    %v7440 = vsel %vm687, %v7427, 0.0
    %v7441 = vadd.f32 %v7439, %v7440
    %v7442 = vsel %vm687, %v7428, 0.0
    %v7443 = vadd.f32 %v7441, %v7442
    %v7444 = vsel %vm687, %v7429, 0.0
    %v7445 = vadd.f32 %v7443, %v7444
    %v7446 = vsel %vm687, %v7430, 0.0
    %v7447 = vadd.f32 %v7445, %v7446
    %7448 = vadd.xlane.f32.xlu0 %v7447
    %v7449 = vpop.xlane.xlu0 %7448
    %v7450 = vmul.f32 %v7449, 0.001953125
    %v7451 = vmul.f32 %v7421, %v7421
    %v7452 = vsub.f32 %v7450, %v7451
    %v7453 = vmax.f32 %v7452, 0.0
    %v7454 = vsub.f32 %v7393, %v7421
    %v7455 = vsub.f32 %v7394, %v7421
    %v7456 = vsub.f32 %v7395, %v7421
    %v7457 = vsub.f32 %v7396, %v7421
    %v7458 = vsub.f32 %v7397, %v7421
    %v7459 = vsub.f32 %v7398, %v7421
    %v7460 = vsub.f32 %v7399, %v7421
    %v7461 = vsub.f32 %v7400, %v7421
    %v7462 = vsub.f32 %v7401, %v7421
    %v7463 = vadd.f32 %v7453, 1e-05
    %v7464 = vrsqrt.pop %v7463
    %v7465 = vmul.f32 %v7454, %v7464
    %v7466 = vmul.f32 %v7455, %v7464
    %v7467 = vmul.f32 %v7456, %v7464
    %v7468 = vmul.f32 %v7457, %v7464
    %v7469 = vmul.f32 %v7458, %v7464
    %v7470 = vmul.f32 %v7459, %v7464
    %v7471 = vmul.f32 %v7460, %v7464
    %v7472 = vmul.f32 %v7461, %v7464
    %v7473 = vmul.f32 %v7462, %v7464
    %v7474 = vsel %vm620, %v7465, 0.0
    %v7475 = vsel %vm621, %v7466, 0.0
    %v7476 = vsel %vm622, %v7467, 0.0
    %v7477 = vsel %vm623, %v7468, 0.0
    %v7478 = vsel %vm624, %v7469, 0.0
    %v7479 = vsel %vm625, %v7470, 0.0
    %v7480 = vsel %vm626, %v7471, 0.0
    %v7481 = vsel %vm627, %v7472, 0.0
    %v7482 = vsel %vm628, %v7473, 0.0
    %v7483 = vstv %s3520
    %v7484 = vmul.f32 %v7483, %v7474
    %v7485 = vmul.f32 %v7483, %v7475
    %v7486 = vmul.f32 %v7483, %v7476
    %v7487 = vmul.f32 %v7483, %v7477
    %v7488 = vmul.f32 %v7483, %v7478
    %v7489 = vmul.f32 %v7483, %v7479
    %v7490 = vmul.f32 %v7483, %v7480
    %v7491 = vmul.f32 %v7483, %v7481
    %v7492 = vmul.f32 %v7483, %v7482
    %v7493 = vadd.f32 %v3511, %v7484
    %v7494 = vadd.f32 %v3512, %v7485
    %v7495 = vadd.f32 %v3513, %v7486
    %v7496 = vadd.f32 %v3514, %v7487
    %v7497 = vadd.f32 %v3515, %v7488
    %v7498 = vadd.f32 %v3516, %v7489
    %v7499 = vadd.f32 %v3517, %v7490
    %v7500 = vadd.f32 %v3518, %v7491
    %v7501 = vadd.f32 %v3519, %v7492
    %s7502 = sld [smem:[#allocation2 + $0x6]]
    %v7503 = vld [vmem:[%s11] sm:$0xf]
    %v7504 = vld [vmem:[%s12] sm:$0xf]
    %7506 = vset.pattern.permute.xlu0 0
    %7507 = vperm.xlu0 %7506, %v7503
    %v7508 = vpop.permute.xlu0 %7507
    %v7510 = vmul.f32 %v7508, %v1476
    %v7511 = vmul.f32 %v7508, %v1477
    %v7512 = vmul.f32 %v7508, %v1478
    %v7513 = vmul.f32 %v7508, %v1479
    %v7514 = vmul.f32 %v7508, %v1480
    %v7515 = vmul.f32 %v7508, %v1481
    %v7516 = vmul.f32 %v7508, %v1482
    %v7517 = vmul.f32 %v7508, %v1483
    %v7518 = vmul.f32 %v7508, %v1484
    %7519 = vset.pattern.permute.xlu0 1
    %7520 = vperm.xlu0 %7519, %v7503
    %v7521 = vpop.permute.xlu0 %7520
    %v7523 = vmul.f32 %v7521, %v1600
    %v7524 = vmul.f32 %v7521, %v1601
    %v7525 = vmul.f32 %v7521, %v1602
    %v7526 = vmul.f32 %v7521, %v1603
    %v7527 = vmul.f32 %v7521, %v1604
    %v7528 = vmul.f32 %v7521, %v1605
    %v7529 = vmul.f32 %v7521, %v1606
    %v7530 = vmul.f32 %v7521, %v1607
    %v7531 = vmul.f32 %v7521, %v1608
    %v7532 = vadd.f32 %v7510, %v7523
    %v7533 = vadd.f32 %v7511, %v7524
    %v7534 = vadd.f32 %v7512, %v7525
    %v7535 = vadd.f32 %v7513, %v7526
    %v7536 = vadd.f32 %v7514, %v7527
    %v7537 = vadd.f32 %v7515, %v7528
    %v7538 = vadd.f32 %v7516, %v7529
    %v7539 = vadd.f32 %v7517, %v7530
    %v7540 = vadd.f32 %v7518, %v7531
    %7541 = vset.pattern.permute.xlu0 2
    %7542 = vperm.xlu0 %7541, %v7503
    %v7543 = vpop.permute.xlu0 %7542
    %7545 = vrot.lane.b32.xlu0 %v71, 46
    %v7546 = vpop.permute.xlu0 %7545
    %7547 = vrot.lane.b32.xlu0 %v1450, 46
    %v7548 = vpop.permute.xlu0 %7547
    %7549 = vrot.lane.b32.xlu0 %v72, 46
    %v7550 = vpop.permute.xlu0 %7549
    %7551 = vrot.lane.b32.xlu0 %v1451, 46
    %v7552 = vpop.permute.xlu0 %7551
    %7553 = vrot.lane.b32.xlu0 %v73, 46
    %v7554 = vpop.permute.xlu0 %7553
    %7555 = vrot.lane.b32.xlu0 %v1452, 46
    %v7556 = vpop.permute.xlu0 %7555
    %7557 = vrot.lane.b32.xlu0 %v74, 46
    %v7558 = vpop.permute.xlu0 %7557
    %7559 = vrot.lane.b32.xlu0 %v1453, 46
    %v7560 = vpop.permute.xlu0 %7559
    %7561 = vrot.lane.b32.xlu0 %v75, 46
    %v7562 = vpop.permute.xlu0 %7561
    %7563 = vrot.lane.b32.xlu0 %v1454, 46
    %v7564 = vpop.permute.xlu0 %7563
    %vm7565 = vcmask 375808
    %v7566 = vsel %vm7565, %v7546, %v7548
    %v7567 = vsel %vm7565, %v7548, %v7550
    %v7568 = vsel %vm7565, %v7550, %v7552
    %v7569 = vsel %vm7565, %v7552, %v7554
    %v7570 = vsel %vm7565, %v7554, %v7556
    %v7571 = vsel %vm7565, %v7556, %v7558
    %v7572 = vsel %vm7565, %v7558, %v7560
    %v7573 = vsel %vm7565, %v7560, %v7562
    %v7574 = vsel %vm7565, %v7562, %v7564
    %v7584 = vmul.f32 %v7543, %v7566
    %v7585 = vmul.f32 %v7543, %v7567
    %v7586 = vmul.f32 %v7543, %v7568
    %v7587 = vmul.f32 %v7543, %v7569
    %v7588 = vmul.f32 %v7543, %v7570
    %v7589 = vmul.f32 %v7543, %v7571
    %v7590 = vmul.f32 %v7543, %v7572
    %v7591 = vmul.f32 %v7543, %v7573
    %v7592 = vmul.f32 %v7543, %v7574
    %v7593 = vadd.f32 %v7532, %v7584
    %v7594 = vadd.f32 %v7533, %v7585
    %v7595 = vadd.f32 %v7534, %v7586
    %v7596 = vadd.f32 %v7535, %v7587
    %v7597 = vadd.f32 %v7536, %v7588
    %v7598 = vadd.f32 %v7537, %v7589
    %v7599 = vadd.f32 %v7538, %v7590
    %v7600 = vadd.f32 %v7539, %v7591
    %v7601 = vadd.f32 %v7540, %v7592
    %7602 = vset.pattern.permute.xlu0 3
    %7603 = vperm.xlu0 %7602, %v7503
    %v7604 = vpop.permute.xlu0 %7603
    %v7606 = vmul.f32 %v7604, %v1867
    %v7607 = vmul.f32 %v7604, %v1868
    %v7608 = vmul.f32 %v7604, %v1869
    %v7609 = vmul.f32 %v7604, %v1870
    %v7610 = vmul.f32 %v7604, %v1871
    %v7611 = vmul.f32 %v7604, %v1872
    %v7612 = vmul.f32 %v7604, %v1873
    %v7613 = vmul.f32 %v7604, %v1874
    %v7614 = vmul.f32 %v7604, %v1875
    %v7615 = vadd.f32 %v7593, %v7606
    %v7616 = vadd.f32 %v7594, %v7607
    %v7617 = vadd.f32 %v7595, %v7608
    %v7618 = vadd.f32 %v7596, %v7609
    %v7619 = vadd.f32 %v7597, %v7610
    %v7620 = vadd.f32 %v7598, %v7611
    %v7621 = vadd.f32 %v7599, %v7612
    %v7622 = vadd.f32 %v7600, %v7613
    %v7623 = vadd.f32 %v7601, %v7614
    %7624 = vset.pattern.permute.xlu0 4
    %7625 = vperm.xlu0 %7624, %v7503
    %v7626 = vpop.permute.xlu0 %7625
    %v7628 = vmul.f32 %v7626, %v1450
    %v7629 = vmul.f32 %v7626, %v72
    %v7630 = vmul.f32 %v7626, %v1451
    %v7631 = vmul.f32 %v7626, %v73
    %v7632 = vmul.f32 %v7626, %v1452
    %v7633 = vmul.f32 %v7626, %v74
    %v7634 = vmul.f32 %v7626, %v1453
    %v7635 = vmul.f32 %v7626, %v75
    %v7636 = vmul.f32 %v7626, %v1454
    %v7637 = vadd.f32 %v7615, %v7628
    %v7638 = vadd.f32 %v7616, %v7629
    %v7639 = vadd.f32 %v7617, %v7630
    %v7640 = vadd.f32 %v7618, %v7631
    %v7641 = vadd.f32 %v7619, %v7632
    %v7642 = vadd.f32 %v7620, %v7633
    %v7643 = vadd.f32 %v7621, %v7634
    %v7644 = vadd.f32 %v7622, %v7635
    %v7645 = vadd.f32 %v7623, %v7636
    %7646 = vset.pattern.permute.xlu0 5
    %7647 = vperm.xlu0 %7646, %v7503
    %v7648 = vpop.permute.xlu0 %7647
    %7650 = vrot.lane.b32.xlu0 %v1450, 126
    %v7651 = vpop.permute.xlu0 %7650
    %7652 = vrot.lane.b32.xlu0 %v72, 126
    %v7653 = vpop.permute.xlu0 %7652
    %7654 = vrot.lane.b32.xlu0 %v1451, 126
    %v7655 = vpop.permute.xlu0 %7654
    %7656 = vrot.lane.b32.xlu0 %v73, 126
    %v7657 = vpop.permute.xlu0 %7656
    %7658 = vrot.lane.b32.xlu0 %v1452, 126
    %v7659 = vpop.permute.xlu0 %7658
    %7660 = vrot.lane.b32.xlu0 %v74, 126
    %v7661 = vpop.permute.xlu0 %7660
    %7662 = vrot.lane.b32.xlu0 %v1453, 126
    %v7663 = vpop.permute.xlu0 %7662
    %7664 = vrot.lane.b32.xlu0 %v75, 126
    %v7665 = vpop.permute.xlu0 %7664
    %7666 = vrot.lane.b32.xlu0 %v1454, 126
    %v7667 = vpop.permute.xlu0 %7666
    %7668 = vrot.lane.b32.xlu0 %v76, 126
    %v7669 = vpop.permute.xlu0 %7668
    %v7670 = vsel %vm244, %v7651, %v7653
    %v7671 = vsel %vm244, %v7653, %v7655
    %v7672 = vsel %vm244, %v7655, %v7657
    %v7673 = vsel %vm244, %v7657, %v7659
    %v7674 = vsel %vm244, %v7659, %v7661
    %v7675 = vsel %vm244, %v7661, %v7663
    %v7676 = vsel %vm244, %v7663, %v7665
    %v7677 = vsel %vm244, %v7665, %v7667
    %v7678 = vsel %vm244, %v7667, %v7669
    %v7688 = vmul.f32 %v7648, %v7670
    %v7689 = vmul.f32 %v7648, %v7671
    %v7690 = vmul.f32 %v7648, %v7672
    %v7691 = vmul.f32 %v7648, %v7673
    %v7692 = vmul.f32 %v7648, %v7674
    %v7693 = vmul.f32 %v7648, %v7675
    %v7694 = vmul.f32 %v7648, %v7676
    %v7695 = vmul.f32 %v7648, %v7677
    %v7696 = vmul.f32 %v7648, %v7678
    %v7697 = vadd.f32 %v7637, %v7688
    %v7698 = vadd.f32 %v7638, %v7689
    %v7699 = vadd.f32 %v7639, %v7690
    %v7700 = vadd.f32 %v7640, %v7691
    %v7701 = vadd.f32 %v7641, %v7692
    %v7702 = vadd.f32 %v7642, %v7693
    %v7703 = vadd.f32 %v7643, %v7694
    %v7704 = vadd.f32 %v7644, %v7695
    %v7705 = vadd.f32 %v7645, %v7696
    %7706 = vset.pattern.permute.xlu0 6
    %7707 = vperm.xlu0 %7706, %v7503
    %v7708 = vpop.permute.xlu0 %7707
    %7710 = vrot.lane.b32.xlu0 %v1450, 82
    %v7711 = vpop.permute.xlu0 %7710
    %7712 = vrot.lane.b32.xlu0 %v72, 82
    %v7713 = vpop.permute.xlu0 %7712
    %7714 = vrot.lane.b32.xlu0 %v1451, 82
    %v7715 = vpop.permute.xlu0 %7714
    %7716 = vrot.lane.b32.xlu0 %v73, 82
    %v7717 = vpop.permute.xlu0 %7716
    %7718 = vrot.lane.b32.xlu0 %v1452, 82
    %v7719 = vpop.permute.xlu0 %7718
    %7720 = vrot.lane.b32.xlu0 %v74, 82
    %v7721 = vpop.permute.xlu0 %7720
    %7722 = vrot.lane.b32.xlu0 %v1453, 82
    %v7723 = vpop.permute.xlu0 %7722
    %7724 = vrot.lane.b32.xlu0 %v75, 82
    %v7725 = vpop.permute.xlu0 %7724
    %7726 = vrot.lane.b32.xlu0 %v1454, 82
    %v7727 = vpop.permute.xlu0 %7726
    %7728 = vrot.lane.b32.xlu0 %v76, 82
    %v7729 = vpop.permute.xlu0 %7728
    %vm7730 = vcmask 670720
    %v7731 = vsel %vm7730, %v7711, %v7713
    %v7732 = vsel %vm7730, %v7713, %v7715
    %v7733 = vsel %vm7730, %v7715, %v7717
    %v7734 = vsel %vm7730, %v7717, %v7719
    %v7735 = vsel %vm7730, %v7719, %v7721
    %v7736 = vsel %vm7730, %v7721, %v7723
    %v7737 = vsel %vm7730, %v7723, %v7725
    %v7738 = vsel %vm7730, %v7725, %v7727
    %v7739 = vsel %vm7730, %v7727, %v7729
    %v7749 = vmul.f32 %v7708, %v7731
    %v7750 = vmul.f32 %v7708, %v7732
    %v7751 = vmul.f32 %v7708, %v7733
    %v7752 = vmul.f32 %v7708, %v7734
    %v7753 = vmul.f32 %v7708, %v7735
    %v7754 = vmul.f32 %v7708, %v7736
    %v7755 = vmul.f32 %v7708, %v7737
    %v7756 = vmul.f32 %v7708, %v7738
    %v7757 = vmul.f32 %v7708, %v7739
    %v7758 = vadd.f32 %v7697, %v7749
    %v7759 = vadd.f32 %v7698, %v7750
    %v7760 = vadd.f32 %v7699, %v7751
    %v7761 = vadd.f32 %v7700, %v7752
    %v7762 = vadd.f32 %v7701, %v7753
    %v7763 = vadd.f32 %v7702, %v7754
    %v7764 = vadd.f32 %v7703, %v7755
    %v7765 = vadd.f32 %v7704, %v7756
    %v7766 = vadd.f32 %v7705, %v7757
    %7767 = vset.pattern.permute.xlu0 7
    %7768 = vperm.xlu0 %7767, %v7503
    %v7769 = vpop.permute.xlu0 %7768
    %7771 = vrot.lane.b32.xlu0 %v1450, 80
    %v7772 = vpop.permute.xlu0 %7771
    %7773 = vrot.lane.b32.xlu0 %v72, 80
    %v7774 = vpop.permute.xlu0 %7773
    %7775 = vrot.lane.b32.xlu0 %v1451, 80
    %v7776 = vpop.permute.xlu0 %7775
    %7777 = vrot.lane.b32.xlu0 %v73, 80
    %v7778 = vpop.permute.xlu0 %7777
    %7779 = vrot.lane.b32.xlu0 %v1452, 80
    %v7780 = vpop.permute.xlu0 %7779
    %7781 = vrot.lane.b32.xlu0 %v74, 80
    %v7782 = vpop.permute.xlu0 %7781
    %7783 = vrot.lane.b32.xlu0 %v1453, 80
    %v7784 = vpop.permute.xlu0 %7783
    %7785 = vrot.lane.b32.xlu0 %v75, 80
    %v7786 = vpop.permute.xlu0 %7785
    %7787 = vrot.lane.b32.xlu0 %v1454, 80
    %v7788 = vpop.permute.xlu0 %7787
    %7789 = vrot.lane.b32.xlu0 %v76, 80
    %v7790 = vpop.permute.xlu0 %7789
    %v7791 = vsel %vm442, %v7772, %v7774
    %v7792 = vsel %vm442, %v7774, %v7776
    %v7793 = vsel %vm442, %v7776, %v7778
    %v7794 = vsel %vm442, %v7778, %v7780
    %v7795 = vsel %vm442, %v7780, %v7782
    %v7796 = vsel %vm442, %v7782, %v7784
    %v7797 = vsel %vm442, %v7784, %v7786
    %v7798 = vsel %vm442, %v7786, %v7788
    %v7799 = vsel %vm442, %v7788, %v7790
    %v7809 = vmul.f32 %v7769, %v7791
    %v7810 = vmul.f32 %v7769, %v7792
    %v7811 = vmul.f32 %v7769, %v7793
    %v7812 = vmul.f32 %v7769, %v7794
    %v7813 = vmul.f32 %v7769, %v7795
    %v7814 = vmul.f32 %v7769, %v7796
    %v7815 = vmul.f32 %v7769, %v7797
    %v7816 = vmul.f32 %v7769, %v7798
    %v7817 = vmul.f32 %v7769, %v7799
    %v7818 = vadd.f32 %v7758, %v7809
    %v7819 = vadd.f32 %v7759, %v7810
    %v7820 = vadd.f32 %v7760, %v7811
    %v7821 = vadd.f32 %v7761, %v7812
    %v7822 = vadd.f32 %v7762, %v7813
    %v7823 = vadd.f32 %v7763, %v7814
    %v7824 = vadd.f32 %v7764, %v7815
    %v7825 = vadd.f32 %v7765, %v7816
    %v7826 = vadd.f32 %v7766, %v7817
    %7827 = vset.pattern.permute.xlu0 8
    %7828 = vperm.xlu0 %7827, %v7503
    %v7829 = vpop.permute.xlu0 %7828
    %7831 = vrot.lane.b32.xlu0 %v1450, 78
    %v7832 = vpop.permute.xlu0 %7831
    %7833 = vrot.lane.b32.xlu0 %v72, 78
    %v7834 = vpop.permute.xlu0 %7833
    %7835 = vrot.lane.b32.xlu0 %v1451, 78
    %v7836 = vpop.permute.xlu0 %7835
    %7837 = vrot.lane.b32.xlu0 %v73, 78
    %v7838 = vpop.permute.xlu0 %7837
    %7839 = vrot.lane.b32.xlu0 %v1452, 78
    %v7840 = vpop.permute.xlu0 %7839
    %7841 = vrot.lane.b32.xlu0 %v74, 78
    %v7842 = vpop.permute.xlu0 %7841
    %7843 = vrot.lane.b32.xlu0 %v1453, 78
    %v7844 = vpop.permute.xlu0 %7843
    %7845 = vrot.lane.b32.xlu0 %v75, 78
    %v7846 = vpop.permute.xlu0 %7845
    %7847 = vrot.lane.b32.xlu0 %v1454, 78
    %v7848 = vpop.permute.xlu0 %7847
    %7849 = vrot.lane.b32.xlu0 %v76, 78
    %v7850 = vpop.permute.xlu0 %7849
    %v7851 = vsel %vm542, %v7832, %v7834
    %v7852 = vsel %vm542, %v7834, %v7836
    %v7853 = vsel %vm542, %v7836, %v7838
    %v7854 = vsel %vm542, %v7838, %v7840
    %v7855 = vsel %vm542, %v7840, %v7842
    %v7856 = vsel %vm542, %v7842, %v7844
    %v7857 = vsel %vm542, %v7844, %v7846
    %v7858 = vsel %vm542, %v7846, %v7848
    %v7859 = vsel %vm542, %v7848, %v7850
    %v7869 = vmul.f32 %v7829, %v7851
    %v7870 = vmul.f32 %v7829, %v7852
    %v7871 = vmul.f32 %v7829, %v7853
    %v7872 = vmul.f32 %v7829, %v7854
    %v7873 = vmul.f32 %v7829, %v7855
    %v7874 = vmul.f32 %v7829, %v7856
    %v7875 = vmul.f32 %v7829, %v7857
    %v7876 = vmul.f32 %v7829, %v7858
    %v7877 = vmul.f32 %v7829, %v7859
    %v7878 = vadd.f32 %v7818, %v7869
    %v7879 = vadd.f32 %v7819, %v7870
    %v7880 = vadd.f32 %v7820, %v7871
    %v7881 = vadd.f32 %v7821, %v7872
    %v7882 = vadd.f32 %v7822, %v7873
    %v7883 = vadd.f32 %v7823, %v7874
    %v7884 = vadd.f32 %v7824, %v7875
    %v7885 = vadd.f32 %v7825, %v7876
    %v7886 = vadd.f32 %v7826, %v7877
    %7888 = vset.pattern.permute.xlu0 0
    %7889 = vperm.xlu0 %7888, %v7504
    %v7890 = vpop.permute.xlu0 %7889
    %v7892 = vlaneseq
    %v7893 = vshrl.u32 %v7892, 7
    %v7894 = vsub.s32 0, %v7893
    %v7895 = vrot.slane %v7878, %v7894
    %v7896 = vlaneseq
    %v7897 = vshrl.u32 %v7896, 7
    %v7898 = vsub.s32 0, %v7897
    %v7899 = vrot.slane %v7879, %v7898
    %v7900 = vlaneseq
    %v7901 = vshrl.u32 %v7900, 7
    %v7902 = vsub.s32 0, %v7901
    %v7903 = vrot.slane %v7880, %v7902
    %v7904 = vlaneseq
    %v7905 = vshrl.u32 %v7904, 7
    %v7906 = vsub.s32 0, %v7905
    %v7907 = vrot.slane %v7881, %v7906
    %v7908 = vlaneseq
    %v7909 = vshrl.u32 %v7908, 7
    %v7910 = vsub.s32 0, %v7909
    %v7911 = vrot.slane %v7882, %v7910
    %v7912 = vlaneseq
    %v7913 = vshrl.u32 %v7912, 7
    %v7914 = vsub.s32 0, %v7913
    %v7915 = vrot.slane %v7883, %v7914
    %v7916 = vlaneseq
    %v7917 = vshrl.u32 %v7916, 7
    %v7918 = vsub.s32 0, %v7917
    %v7919 = vrot.slane %v7884, %v7918
    %v7920 = vlaneseq
    %v7921 = vshrl.u32 %v7920, 7
    %v7922 = vsub.s32 0, %v7921
    %v7923 = vrot.slane %v7885, %v7922
    %v7924 = vlaneseq
    %v7925 = vshrl.u32 %v7924, 7
    %v7926 = vsub.s32 0, %v7925
    %v7927 = vrot.slane %v7886, %v7926
    %v7928 = vmul.f32 %v7890, %v7895
    %v7929 = vmul.f32 %v7890, %v7899
    %v7930 = vmul.f32 %v7890, %v7903
    %v7931 = vmul.f32 %v7890, %v7907
    %v7932 = vmul.f32 %v7890, %v7911
    %v7933 = vmul.f32 %v7890, %v7915
    %v7934 = vmul.f32 %v7890, %v7919
    %v7935 = vmul.f32 %v7890, %v7923
    %v7936 = vmul.f32 %v7890, %v7927
    %7937 = vset.pattern.permute.xlu0 1
    %7938 = vperm.xlu0 %7937, %v7504
    %v7939 = vpop.permute.xlu0 %7938
    %v7941 = vlaneseq
    %v7942 = vshrl.u32 %v7941, 7
    %v7943 = vsub.s32 1, %v7942
    %v7944 = vrot.slane %v7878, %v7943
    %v7945 = vlaneseq
    %v7946 = vshrl.u32 %v7945, 7
    %v7947 = vsub.s32 1, %v7946
    %v7948 = vrot.slane %v7879, %v7947
    %v7949 = vlaneseq
    %v7950 = vshrl.u32 %v7949, 7
    %v7951 = vsub.s32 1, %v7950
    %v7952 = vrot.slane %v7880, %v7951
    %v7953 = vlaneseq
    %v7954 = vshrl.u32 %v7953, 7
    %v7955 = vsub.s32 1, %v7954
    %v7956 = vrot.slane %v7881, %v7955
    %v7957 = vlaneseq
    %v7958 = vshrl.u32 %v7957, 7
    %v7959 = vsub.s32 1, %v7958
    %v7960 = vrot.slane %v7882, %v7959
    %v7961 = vlaneseq
    %v7962 = vshrl.u32 %v7961, 7
    %v7963 = vsub.s32 1, %v7962
    %v7964 = vrot.slane %v7883, %v7963
    %v7965 = vlaneseq
    %v7966 = vshrl.u32 %v7965, 7
    %v7967 = vsub.s32 1, %v7966
    %v7968 = vrot.slane %v7884, %v7967
    %v7969 = vlaneseq
    %v7970 = vshrl.u32 %v7969, 7
    %v7971 = vsub.s32 1, %v7970
    %v7972 = vrot.slane %v7885, %v7971
    %v7973 = vlaneseq
    %v7974 = vshrl.u32 %v7973, 7
    %v7975 = vsub.s32 1, %v7974
    %v7976 = vrot.slane %v7886, %v7975
    %v7977 = vmul.f32 %v7939, %v7944
    %v7978 = vmul.f32 %v7939, %v7948
    %v7979 = vmul.f32 %v7939, %v7952
    %v7980 = vmul.f32 %v7939, %v7956
    %v7981 = vmul.f32 %v7939, %v7960
    %v7982 = vmul.f32 %v7939, %v7964
    %v7983 = vmul.f32 %v7939, %v7968
    %v7984 = vmul.f32 %v7939, %v7972
    %v7985 = vmul.f32 %v7939, %v7976
    %v7986 = vadd.f32 %v7928, %v7977
    %v7987 = vadd.f32 %v7929, %v7978
    %v7988 = vadd.f32 %v7930, %v7979
    %v7989 = vadd.f32 %v7931, %v7980
    %v7990 = vadd.f32 %v7932, %v7981
    %v7991 = vadd.f32 %v7933, %v7982
    %v7992 = vadd.f32 %v7934, %v7983
    %v7993 = vadd.f32 %v7935, %v7984
    %v7994 = vadd.f32 %v7936, %v7985
    %7995 = vset.pattern.permute.xlu0 2
    %7996 = vperm.xlu0 %7995, %v7504
    %v7997 = vpop.permute.xlu0 %7996
    %v7999 = vlaneseq
    %v8000 = vshrl.u32 %v7999, 7
    %v8001 = vsub.s32 2, %v8000
    %v8002 = vrot.slane %v7878, %v8001
    %v8003 = vlaneseq
    %v8004 = vshrl.u32 %v8003, 7
    %v8005 = vsub.s32 2, %v8004
    %v8006 = vrot.slane %v7879, %v8005
    %v8007 = vlaneseq
    %v8008 = vshrl.u32 %v8007, 7
    %v8009 = vsub.s32 2, %v8008
    %v8010 = vrot.slane %v7880, %v8009
    %v8011 = vlaneseq
    %v8012 = vshrl.u32 %v8011, 7
    %v8013 = vsub.s32 2, %v8012
    %v8014 = vrot.slane %v7881, %v8013
    %v8015 = vlaneseq
    %v8016 = vshrl.u32 %v8015, 7
    %v8017 = vsub.s32 2, %v8016
    %v8018 = vrot.slane %v7882, %v8017
    %v8019 = vlaneseq
    %v8020 = vshrl.u32 %v8019, 7
    %v8021 = vsub.s32 2, %v8020
    %v8022 = vrot.slane %v7883, %v8021
    %v8023 = vlaneseq
    %v8024 = vshrl.u32 %v8023, 7
    %v8025 = vsub.s32 2, %v8024
    %v8026 = vrot.slane %v7884, %v8025
    %v8027 = vlaneseq
    %v8028 = vshrl.u32 %v8027, 7
    %v8029 = vsub.s32 2, %v8028
    %v8030 = vrot.slane %v7885, %v8029
    %v8031 = vlaneseq
    %v8032 = vshrl.u32 %v8031, 7
    %v8033 = vsub.s32 2, %v8032
    %v8034 = vrot.slane %v7886, %v8033
    %v8035 = vmul.f32 %v7997, %v8002
    %v8036 = vmul.f32 %v7997, %v8006
    %v8037 = vmul.f32 %v7997, %v8010
    %v8038 = vmul.f32 %v7997, %v8014
    %v8039 = vmul.f32 %v7997, %v8018
    %v8040 = vmul.f32 %v7997, %v8022
    %v8041 = vmul.f32 %v7997, %v8026
    %v8042 = vmul.f32 %v7997, %v8030
    %v8043 = vmul.f32 %v7997, %v8034
    %v8044 = vadd.f32 %v7986, %v8035
    %v8045 = vadd.f32 %v7987, %v8036
    %v8046 = vadd.f32 %v7988, %v8037
    %v8047 = vadd.f32 %v7989, %v8038
    %v8048 = vadd.f32 %v7990, %v8039
    %v8049 = vadd.f32 %v7991, %v8040
    %v8050 = vadd.f32 %v7992, %v8041
    %v8051 = vadd.f32 %v7993, %v8042
    %v8052 = vadd.f32 %v7994, %v8043
    %8053 = vset.pattern.permute.xlu0 3
    %8054 = vperm.xlu0 %8053, %v7504
    %v8055 = vpop.permute.xlu0 %8054
    %v8057 = vlaneseq
    %v8058 = vshrl.u32 %v8057, 7
    %v8059 = vsub.s32 3, %v8058
    %v8060 = vrot.slane %v7878, %v8059
    %v8061 = vlaneseq
    %v8062 = vshrl.u32 %v8061, 7
    %v8063 = vsub.s32 3, %v8062
    %v8064 = vrot.slane %v7879, %v8063
    %v8065 = vlaneseq
    %v8066 = vshrl.u32 %v8065, 7
    %v8067 = vsub.s32 3, %v8066
    %v8068 = vrot.slane %v7880, %v8067
    %v8069 = vlaneseq
    %v8070 = vshrl.u32 %v8069, 7
    %v8071 = vsub.s32 3, %v8070
    %v8072 = vrot.slane %v7881, %v8071
    %v8073 = vlaneseq
    %v8074 = vshrl.u32 %v8073, 7
    %v8075 = vsub.s32 3, %v8074
    %v8076 = vrot.slane %v7882, %v8075
    %v8077 = vlaneseq
    %v8078 = vshrl.u32 %v8077, 7
    %v8079 = vsub.s32 3, %v8078
    %v8080 = vrot.slane %v7883, %v8079
    %v8081 = vlaneseq
    %v8082 = vshrl.u32 %v8081, 7
    %v8083 = vsub.s32 3, %v8082
    %v8084 = vrot.slane %v7884, %v8083
    %v8085 = vlaneseq
    %v8086 = vshrl.u32 %v8085, 7
    %v8087 = vsub.s32 3, %v8086
    %v8088 = vrot.slane %v7885, %v8087
    %v8089 = vlaneseq
    %v8090 = vshrl.u32 %v8089, 7
    %v8091 = vsub.s32 3, %v8090
    %v8092 = vrot.slane %v7886, %v8091
    %v8093 = vmul.f32 %v8055, %v8060
    %v8094 = vmul.f32 %v8055, %v8064
    %v8095 = vmul.f32 %v8055, %v8068
    %v8096 = vmul.f32 %v8055, %v8072
    %v8097 = vmul.f32 %v8055, %v8076
    %v8098 = vmul.f32 %v8055, %v8080
    %v8099 = vmul.f32 %v8055, %v8084
    %v8100 = vmul.f32 %v8055, %v8088
    %v8101 = vmul.f32 %v8055, %v8092
    %v8102 = vadd.f32 %v8044, %v8093
    %v8103 = vadd.f32 %v8045, %v8094
    %v8104 = vadd.f32 %v8046, %v8095
    %v8105 = vadd.f32 %v8047, %v8096
    %v8106 = vadd.f32 %v8048, %v8097
    %v8107 = vadd.f32 %v8049, %v8098
    %v8108 = vadd.f32 %v8050, %v8099
    %v8109 = vadd.f32 %v8051, %v8100
    %v8110 = vadd.f32 %v8052, %v8101
    %v8111 = vsel %vm620, %v8102, 0.0
    %v8112 = vsel %vm621, %v8103, 0.0
    %v8113 = vsel %vm622, %v8104, 0.0
    %v8114 = vsel %vm623, %v8105, 0.0
    %v8115 = vsel %vm624, %v8106, 0.0
    %v8116 = vsel %vm625, %v8107, 0.0
    %v8117 = vsel %vm626, %v8108, 0.0
    %v8118 = vsel %vm627, %v8109, 0.0
    %v8119 = vsel %vm628, %v8110, 0.0
    %v8120 = vsel %vm687, %v8111, 0.0
    %v8121 = vsel %vm687, %v8112, 0.0
    %v8122 = vadd.f32 %v8120, %v8121
    %v8123 = vsel %vm687, %v8113, 0.0
    %v8124 = vadd.f32 %v8122, %v8123
    %v8125 = vsel %vm687, %v8114, 0.0
    %v8126 = vadd.f32 %v8124, %v8125
    %v8127 = vsel %vm687, %v8115, 0.0
    %v8128 = vadd.f32 %v8126, %v8127
    %v8129 = vsel %vm687, %v8116, 0.0
    %v8130 = vadd.f32 %v8128, %v8129
    %v8131 = vsel %vm687, %v8117, 0.0
    %v8132 = vadd.f32 %v8130, %v8131
    %v8133 = vsel %vm687, %v8118, 0.0
    %v8134 = vadd.f32 %v8132, %v8133
    %v8135 = vsel %vm687, %v8119, 0.0
    %v8136 = vadd.f32 %v8134, %v8135
    %8137 = vadd.xlane.f32.xlu0 %v8136
    %v8138 = vpop.xlane.xlu0 %8137
    %v8139 = vmul.f32 %v8138, 0.001953125
    %v8140 = vmul.f32 %v8111, %v8111
    %v8141 = vmul.f32 %v8112, %v8112
    %v8142 = vmul.f32 %v8113, %v8113
    %v8143 = vmul.f32 %v8114, %v8114
    %v8144 = vmul.f32 %v8115, %v8115
    %v8145 = vmul.f32 %v8116, %v8116
    %v8146 = vmul.f32 %v8117, %v8117
    %v8147 = vmul.f32 %v8118, %v8118
    %v8148 = vmul.f32 %v8119, %v8119
    %v8149 = vsel %vm687, %v8140, 0.0
    %v8150 = vsel %vm687, %v8141, 0.0
    %v8151 = vadd.f32 %v8149, %v8150
    %v8152 = vsel %vm687, %v8142, 0.0
    %v8153 = vadd.f32 %v8151, %v8152
    %v8154 = vsel %vm687, %v8143, 0.0
    %v8155 = vadd.f32 %v8153, %v8154
    %v8156 = vsel %vm687, %v8144, 0.0
    %v8157 = vadd.f32 %v8155, %v8156
    %v8158 = vsel %vm687, %v8145, 0.0
    %v8159 = vadd.f32 %v8157, %v8158
    %v8160 = vsel %vm687, %v8146, 0.0
    %v8161 = vadd.f32 %v8159, %v8160
    %v8162 = vsel %vm687, %v8147, 0.0
    %v8163 = vadd.f32 %v8161, %v8162
    %v8164 = vsel %vm687, %v8148, 0.0
    %v8165 = vadd.f32 %v8163, %v8164
    %8166 = vadd.xlane.f32.xlu0 %v8165
    %v8167 = vpop.xlane.xlu0 %8166
    %v8168 = vmul.f32 %v8167, 0.001953125
    %v8169 = vmul.f32 %v8139, %v8139
    %v8170 = vsub.f32 %v8168, %v8169
    %v8171 = vmax.f32 %v8170, 0.0
    %v8172 = vsub.f32 %v8111, %v8139
    %v8173 = vsub.f32 %v8112, %v8139
    %v8174 = vsub.f32 %v8113, %v8139
    %v8175 = vsub.f32 %v8114, %v8139
    %v8176 = vsub.f32 %v8115, %v8139
    %v8177 = vsub.f32 %v8116, %v8139
    %v8178 = vsub.f32 %v8117, %v8139
    %v8179 = vsub.f32 %v8118, %v8139
    %v8180 = vsub.f32 %v8119, %v8139
    %v8181 = vadd.f32 %v8171, 1e-05
    %v8182 = vrsqrt.pop %v8181
    %v8183 = vmul.f32 %v8172, %v8182
    %v8184 = vmul.f32 %v8173, %v8182
    %v8185 = vmul.f32 %v8174, %v8182
    %v8186 = vmul.f32 %v8175, %v8182
    %v8187 = vmul.f32 %v8176, %v8182
    %v8188 = vmul.f32 %v8177, %v8182
    %v8189 = vmul.f32 %v8178, %v8182
    %v8190 = vmul.f32 %v8179, %v8182
    %v8191 = vmul.f32 %v8180, %v8182
    %v8192 = vsel %vm620, %v8183, 0.0
    %v8193 = vsel %vm621, %v8184, 0.0
    %v8194 = vsel %vm622, %v8185, 0.0
    %v8195 = vsel %vm623, %v8186, 0.0
    %v8196 = vsel %vm624, %v8187, 0.0
    %v8197 = vsel %vm625, %v8188, 0.0
    %v8198 = vsel %vm626, %v8189, 0.0
    %v8199 = vsel %vm627, %v8190, 0.0
    %v8200 = vsel %vm628, %v8191, 0.0
    %v8201 = vstv %s7502
    %v8202 = vmul.f32 %v8201, %v8192
    %v8203 = vmul.f32 %v8201, %v8193
    %v8204 = vmul.f32 %v8201, %v8194
    %v8205 = vmul.f32 %v8201, %v8195
    %v8206 = vmul.f32 %v8201, %v8196
    %v8207 = vmul.f32 %v8201, %v8197
    %v8208 = vmul.f32 %v8201, %v8198
    %v8209 = vmul.f32 %v8201, %v8199
    %v8210 = vmul.f32 %v8201, %v8200
    %v8211 = vadd.f32 %v7493, %v8202
    %v8212 = vadd.f32 %v7494, %v8203
    %v8213 = vadd.f32 %v7495, %v8204
    %v8214 = vadd.f32 %v7496, %v8205
    %v8215 = vadd.f32 %v7497, %v8206
    %v8216 = vadd.f32 %v7498, %v8207
    %v8217 = vadd.f32 %v7499, %v8208
    %v8218 = vadd.f32 %v7500, %v8209
    %v8219 = vadd.f32 %v7501, %v8210
    %s8220 = sld [smem:[#allocation2 + $0x7]]
    %v8221 = vld [vmem:[%s13] sm:$0xf]
    %v8222 = vld [vmem:[%s14] sm:$0xf]
    %8224 = vset.pattern.permute.xlu0 0
    %8225 = vperm.xlu0 %8224, %v8221
    %v8226 = vpop.permute.xlu0 %8225
    %v8228 = vmul.f32 %v8226, %v3551
    %v8229 = vmul.f32 %v8226, %v3552
    %v8230 = vmul.f32 %v8226, %v3553
    %v8231 = vmul.f32 %v8226, %v3554
    %v8232 = vmul.f32 %v8226, %v3555
    %v8233 = vmul.f32 %v8226, %v3556
    %v8234 = vmul.f32 %v8226, %v3557
    %v8235 = vmul.f32 %v8226, %v3558
    %v8236 = vmul.f32 %v8226, %v3559
    %8237 = vset.pattern.permute.xlu0 1
    %8238 = vperm.xlu0 %8237, %v8221
    %v8239 = vpop.permute.xlu0 %8238
    %v8241 = vmul.f32 %v8239, %v3674
    %v8242 = vmul.f32 %v8239, %v3675
    %v8243 = vmul.f32 %v8239, %v3676
    %v8244 = vmul.f32 %v8239, %v3677
    %v8245 = vmul.f32 %v8239, %v3678
    %v8246 = vmul.f32 %v8239, %v3679
    %v8247 = vmul.f32 %v8239, %v3680
    %v8248 = vmul.f32 %v8239, %v3681
    %v8249 = vmul.f32 %v8239, %v3682
    %v8250 = vadd.f32 %v8228, %v8241
    %v8251 = vadd.f32 %v8229, %v8242
    %v8252 = vadd.f32 %v8230, %v8243
    %v8253 = vadd.f32 %v8231, %v8244
    %v8254 = vadd.f32 %v8232, %v8245
    %v8255 = vadd.f32 %v8233, %v8246
    %v8256 = vadd.f32 %v8234, %v8247
    %v8257 = vadd.f32 %v8235, %v8248
    %v8258 = vadd.f32 %v8236, %v8249
    %8259 = vset.pattern.permute.xlu0 2
    %8260 = vperm.xlu0 %8259, %v8221
    %v8261 = vpop.permute.xlu0 %8260
    %v8263 = vmul.f32 %v8261, %v3808
    %v8264 = vmul.f32 %v8261, %v3809
    %v8265 = vmul.f32 %v8261, %v3810
    %v8266 = vmul.f32 %v8261, %v3811
    %v8267 = vmul.f32 %v8261, %v3812
    %v8268 = vmul.f32 %v8261, %v3813
    %v8269 = vmul.f32 %v8261, %v3814
    %v8270 = vmul.f32 %v8261, %v3815
    %v8271 = vmul.f32 %v8261, %v3816
    %v8272 = vadd.f32 %v8250, %v8263
    %v8273 = vadd.f32 %v8251, %v8264
    %v8274 = vadd.f32 %v8252, %v8265
    %v8275 = vadd.f32 %v8253, %v8266
    %v8276 = vadd.f32 %v8254, %v8267
    %v8277 = vadd.f32 %v8255, %v8268
    %v8278 = vadd.f32 %v8256, %v8269
    %v8279 = vadd.f32 %v8257, %v8270
    %v8280 = vadd.f32 %v8258, %v8271
    %8281 = vset.pattern.permute.xlu0 3
    %8282 = vperm.xlu0 %8281, %v8221
    %v8283 = vpop.permute.xlu0 %8282
    %8285 = vrot.lane.b32.xlu0 %v71, 94
    %v8286 = vpop.permute.xlu0 %8285
    %8287 = vrot.lane.b32.xlu0 %v1450, 94
    %v8288 = vpop.permute.xlu0 %8287
    %8289 = vrot.lane.b32.xlu0 %v72, 94
    %v8290 = vpop.permute.xlu0 %8289
    %8291 = vrot.lane.b32.xlu0 %v1451, 94
    %v8292 = vpop.permute.xlu0 %8291
    %8293 = vrot.lane.b32.xlu0 %v73, 94
    %v8294 = vpop.permute.xlu0 %8293
    %8295 = vrot.lane.b32.xlu0 %v1452, 94
    %v8296 = vpop.permute.xlu0 %8295
    %8297 = vrot.lane.b32.xlu0 %v74, 94
    %v8298 = vpop.permute.xlu0 %8297
    %8299 = vrot.lane.b32.xlu0 %v1453, 94
    %v8300 = vpop.permute.xlu0 %8299
    %8301 = vrot.lane.b32.xlu0 %v75, 94
    %v8302 = vpop.permute.xlu0 %8301
    %8303 = vrot.lane.b32.xlu0 %v1454, 94
    %v8304 = vpop.permute.xlu0 %8303
    %vm8305 = vcmask 769024
    %v8306 = vsel %vm8305, %v8286, %v8288
    %v8307 = vsel %vm8305, %v8288, %v8290
    %v8308 = vsel %vm8305, %v8290, %v8292
    %v8309 = vsel %vm8305, %v8292, %v8294
    %v8310 = vsel %vm8305, %v8294, %v8296
    %v8311 = vsel %vm8305, %v8296, %v8298
    %v8312 = vsel %vm8305, %v8298, %v8300
    %v8313 = vsel %vm8305, %v8300, %v8302
    %v8314 = vsel %vm8305, %v8302, %v8304
    %v8324 = vmul.f32 %v8283, %v8306
    %v8325 = vmul.f32 %v8283, %v8307
    %v8326 = vmul.f32 %v8283, %v8308
    %v8327 = vmul.f32 %v8283, %v8309
    %v8328 = vmul.f32 %v8283, %v8310
    %v8329 = vmul.f32 %v8283, %v8311
    %v8330 = vmul.f32 %v8283, %v8312
    %v8331 = vmul.f32 %v8283, %v8313
    %v8332 = vmul.f32 %v8283, %v8314
    %v8333 = vadd.f32 %v8272, %v8324
    %v8334 = vadd.f32 %v8273, %v8325
    %v8335 = vadd.f32 %v8274, %v8326
    %v8336 = vadd.f32 %v8275, %v8327
    %v8337 = vadd.f32 %v8276, %v8328
    %v8338 = vadd.f32 %v8277, %v8329
    %v8339 = vadd.f32 %v8278, %v8330
    %v8340 = vadd.f32 %v8279, %v8331
    %v8341 = vadd.f32 %v8280, %v8332
    %8342 = vset.pattern.permute.xlu0 4
    %8343 = vperm.xlu0 %8342, %v8221
    %v8344 = vpop.permute.xlu0 %8343
    %8346 = vrot.lane.b32.xlu0 %v71, 92
    %v8347 = vpop.permute.xlu0 %8346
    %8348 = vrot.lane.b32.xlu0 %v1450, 92
    %v8349 = vpop.permute.xlu0 %8348
    %8350 = vrot.lane.b32.xlu0 %v72, 92
    %v8351 = vpop.permute.xlu0 %8350
    %8352 = vrot.lane.b32.xlu0 %v1451, 92
    %v8353 = vpop.permute.xlu0 %8352
    %8354 = vrot.lane.b32.xlu0 %v73, 92
    %v8355 = vpop.permute.xlu0 %8354
    %8356 = vrot.lane.b32.xlu0 %v1452, 92
    %v8357 = vpop.permute.xlu0 %8356
    %8358 = vrot.lane.b32.xlu0 %v74, 92
    %v8359 = vpop.permute.xlu0 %8358
    %8360 = vrot.lane.b32.xlu0 %v1453, 92
    %v8361 = vpop.permute.xlu0 %8360
    %8362 = vrot.lane.b32.xlu0 %v75, 92
    %v8363 = vpop.permute.xlu0 %8362
    %8364 = vrot.lane.b32.xlu0 %v1454, 92
    %v8365 = vpop.permute.xlu0 %8364
    %vm8366 = vcmask 752640
    %v8367 = vsel %vm8366, %v8347, %v8349
    %v8368 = vsel %vm8366, %v8349, %v8351
    %v8369 = vsel %vm8366, %v8351, %v8353
    %v8370 = vsel %vm8366, %v8353, %v8355
    %v8371 = vsel %vm8366, %v8355, %v8357
    %v8372 = vsel %vm8366, %v8357, %v8359
    %v8373 = vsel %vm8366, %v8359, %v8361
    %v8374 = vsel %vm8366, %v8361, %v8363
    %v8375 = vsel %vm8366, %v8363, %v8365
    %v8385 = vmul.f32 %v8344, %v8367
    %v8386 = vmul.f32 %v8344, %v8368
    %v8387 = vmul.f32 %v8344, %v8369
    %v8388 = vmul.f32 %v8344, %v8370
    %v8389 = vmul.f32 %v8344, %v8371
    %v8390 = vmul.f32 %v8344, %v8372
    %v8391 = vmul.f32 %v8344, %v8373
    %v8392 = vmul.f32 %v8344, %v8374
    %v8393 = vmul.f32 %v8344, %v8375
    %v8394 = vadd.f32 %v8333, %v8385
    %v8395 = vadd.f32 %v8334, %v8386
    %v8396 = vadd.f32 %v8335, %v8387
    %v8397 = vadd.f32 %v8336, %v8388
    %v8398 = vadd.f32 %v8337, %v8389
    %v8399 = vadd.f32 %v8338, %v8390
    %v8400 = vadd.f32 %v8339, %v8391
    %v8401 = vadd.f32 %v8340, %v8392
    %v8402 = vadd.f32 %v8341, %v8393
    %8403 = vset.pattern.permute.xlu0 5
    %8404 = vperm.xlu0 %8403, %v8221
    %v8405 = vpop.permute.xlu0 %8404
    %v8407 = vmul.f32 %v8405, %v4210
    %v8408 = vmul.f32 %v8405, %v4211
    %v8409 = vmul.f32 %v8405, %v4212
    %v8410 = vmul.f32 %v8405, %v4213
    %v8411 = vmul.f32 %v8405, %v4214
    %v8412 = vmul.f32 %v8405, %v4215
    %v8413 = vmul.f32 %v8405, %v4216
    %v8414 = vmul.f32 %v8405, %v4217
    %v8415 = vmul.f32 %v8405, %v4218
    %v8416 = vadd.f32 %v8394, %v8407
    %v8417 = vadd.f32 %v8395, %v8408
    %v8418 = vadd.f32 %v8396, %v8409
    %v8419 = vadd.f32 %v8397, %v8410
    %v8420 = vadd.f32 %v8398, %v8411
    %v8421 = vadd.f32 %v8399, %v8412
    %v8422 = vadd.f32 %v8400, %v8413
    %v8423 = vadd.f32 %v8401, %v8414
    %v8424 = vadd.f32 %v8402, %v8415
    %8425 = vset.pattern.permute.xlu0 6
    %8426 = vperm.xlu0 %8425, %v8221
    %v8427 = vpop.permute.xlu0 %8426
    %v8429 = vmul.f32 %v8427, %v1476
    %v8430 = vmul.f32 %v8427, %v1477
    %v8431 = vmul.f32 %v8427, %v1478
    %v8432 = vmul.f32 %v8427, %v1479
    %v8433 = vmul.f32 %v8427, %v1480
    %v8434 = vmul.f32 %v8427, %v1481
    %v8435 = vmul.f32 %v8427, %v1482
    %v8436 = vmul.f32 %v8427, %v1483
    %v8437 = vmul.f32 %v8427, %v1484
    %v8438 = vadd.f32 %v8416, %v8429
    %v8439 = vadd.f32 %v8417, %v8430
    %v8440 = vadd.f32 %v8418, %v8431
    %v8441 = vadd.f32 %v8419, %v8432
    %v8442 = vadd.f32 %v8420, %v8433
    %v8443 = vadd.f32 %v8421, %v8434
    %v8444 = vadd.f32 %v8422, %v8435
    %v8445 = vadd.f32 %v8423, %v8436
    %v8446 = vadd.f32 %v8424, %v8437
    %8447 = vset.pattern.permute.xlu0 7
    %8448 = vperm.xlu0 %8447, %v8221
    %v8449 = vpop.permute.xlu0 %8448
    %v8451 = vmul.f32 %v8449, %v1600
    %v8452 = vmul.f32 %v8449, %v1601
    %v8453 = vmul.f32 %v8449, %v1602
    %v8454 = vmul.f32 %v8449, %v1603
    %v8455 = vmul.f32 %v8449, %v1604
    %v8456 = vmul.f32 %v8449, %v1605
    %v8457 = vmul.f32 %v8449, %v1606
    %v8458 = vmul.f32 %v8449, %v1607
    %v8459 = vmul.f32 %v8449, %v1608
    %v8460 = vadd.f32 %v8438, %v8451
    %v8461 = vadd.f32 %v8439, %v8452
    %v8462 = vadd.f32 %v8440, %v8453
    %v8463 = vadd.f32 %v8441, %v8454
    %v8464 = vadd.f32 %v8442, %v8455
    %v8465 = vadd.f32 %v8443, %v8456
    %v8466 = vadd.f32 %v8444, %v8457
    %v8467 = vadd.f32 %v8445, %v8458
    %v8468 = vadd.f32 %v8446, %v8459
    %8469 = vset.pattern.permute.xlu0 8
    %8470 = vperm.xlu0 %8469, %v8221
    %v8471 = vpop.permute.xlu0 %8470
    %v8473 = vmul.f32 %v8471, %v7566
    %v8474 = vmul.f32 %v8471, %v7567
    %v8475 = vmul.f32 %v8471, %v7568
    %v8476 = vmul.f32 %v8471, %v7569
    %v8477 = vmul.f32 %v8471, %v7570
    %v8478 = vmul.f32 %v8471, %v7571
    %v8479 = vmul.f32 %v8471, %v7572
    %v8480 = vmul.f32 %v8471, %v7573
    %v8481 = vmul.f32 %v8471, %v7574
    %v8482 = vadd.f32 %v8460, %v8473
    %v8483 = vadd.f32 %v8461, %v8474
    %v8484 = vadd.f32 %v8462, %v8475
    %v8485 = vadd.f32 %v8463, %v8476
    %v8486 = vadd.f32 %v8464, %v8477
    %v8487 = vadd.f32 %v8465, %v8478
    %v8488 = vadd.f32 %v8466, %v8479
    %v8489 = vadd.f32 %v8467, %v8480
    %v8490 = vadd.f32 %v8468, %v8481
    %8491 = vset.pattern.permute.xlu0 9
    %8492 = vperm.xlu0 %8491, %v8221
    %v8493 = vpop.permute.xlu0 %8492
    %8495 = vrot.lane.b32.xlu0 %v71, 44
    %v8496 = vpop.permute.xlu0 %8495
    %8497 = vrot.lane.b32.xlu0 %v1450, 44
    %v8498 = vpop.permute.xlu0 %8497
    %8499 = vrot.lane.b32.xlu0 %v72, 44
    %v8500 = vpop.permute.xlu0 %8499
    %8501 = vrot.lane.b32.xlu0 %v1451, 44
    %v8502 = vpop.permute.xlu0 %8501
    %8503 = vrot.lane.b32.xlu0 %v73, 44
    %v8504 = vpop.permute.xlu0 %8503
    %8505 = vrot.lane.b32.xlu0 %v1452, 44
    %v8506 = vpop.permute.xlu0 %8505
    %8507 = vrot.lane.b32.xlu0 %v74, 44
    %v8508 = vpop.permute.xlu0 %8507
    %8509 = vrot.lane.b32.xlu0 %v1453, 44
    %v8510 = vpop.permute.xlu0 %8509
    %8511 = vrot.lane.b32.xlu0 %v75, 44
    %v8512 = vpop.permute.xlu0 %8511
    %8513 = vrot.lane.b32.xlu0 %v1454, 44
    %v8514 = vpop.permute.xlu0 %8513
    %vm8515 = vcmask 359424
    %v8516 = vsel %vm8515, %v8496, %v8498
    %v8517 = vsel %vm8515, %v8498, %v8500
    %v8518 = vsel %vm8515, %v8500, %v8502
    %v8519 = vsel %vm8515, %v8502, %v8504
    %v8520 = vsel %vm8515, %v8504, %v8506
    %v8521 = vsel %vm8515, %v8506, %v8508
    %v8522 = vsel %vm8515, %v8508, %v8510
    %v8523 = vsel %vm8515, %v8510, %v8512
    %v8524 = vsel %vm8515, %v8512, %v8514
    %v8534 = vmul.f32 %v8493, %v8516
    %v8535 = vmul.f32 %v8493, %v8517
    %v8536 = vmul.f32 %v8493, %v8518
    %v8537 = vmul.f32 %v8493, %v8519
    %v8538 = vmul.f32 %v8493, %v8520
    %v8539 = vmul.f32 %v8493, %v8521
    %v8540 = vmul.f32 %v8493, %v8522
    %v8541 = vmul.f32 %v8493, %v8523
    %v8542 = vmul.f32 %v8493, %v8524
    %v8543 = vadd.f32 %v8482, %v8534
    %v8544 = vadd.f32 %v8483, %v8535
    %v8545 = vadd.f32 %v8484, %v8536
    %v8546 = vadd.f32 %v8485, %v8537
    %v8547 = vadd.f32 %v8486, %v8538
    %v8548 = vadd.f32 %v8487, %v8539
    %v8549 = vadd.f32 %v8488, %v8540
    %v8550 = vadd.f32 %v8489, %v8541
    %v8551 = vadd.f32 %v8490, %v8542
    %8552 = vset.pattern.permute.xlu0 10
    %8553 = vperm.xlu0 %8552, %v8221
    %v8554 = vpop.permute.xlu0 %8553
    %v8556 = vmul.f32 %v8554, %v4626
    %v8557 = vmul.f32 %v8554, %v4627
    %v8558 = vmul.f32 %v8554, %v4628
    %v8559 = vmul.f32 %v8554, %v4629
    %v8560 = vmul.f32 %v8554, %v4630
    %v8561 = vmul.f32 %v8554, %v4631
    %v8562 = vmul.f32 %v8554, %v4632
    %v8563 = vmul.f32 %v8554, %v4633
    %v8564 = vmul.f32 %v8554, %v4634
    %v8565 = vadd.f32 %v8543, %v8556
    %v8566 = vadd.f32 %v8544, %v8557
    %v8567 = vadd.f32 %v8545, %v8558
    %v8568 = vadd.f32 %v8546, %v8559
    %v8569 = vadd.f32 %v8547, %v8560
    %v8570 = vadd.f32 %v8548, %v8561
    %v8571 = vadd.f32 %v8549, %v8562
    %v8572 = vadd.f32 %v8550, %v8563
    %v8573 = vadd.f32 %v8551, %v8564
    %8574 = vset.pattern.permute.xlu0 11
    %8575 = vperm.xlu0 %8574, %v8221
    %v8576 = vpop.permute.xlu0 %8575
    %v8578 = vmul.f32 %v8576, %v1867
    %v8579 = vmul.f32 %v8576, %v1868
    %v8580 = vmul.f32 %v8576, %v1869
    %v8581 = vmul.f32 %v8576, %v1870
    %v8582 = vmul.f32 %v8576, %v1871
    %v8583 = vmul.f32 %v8576, %v1872
    %v8584 = vmul.f32 %v8576, %v1873
    %v8585 = vmul.f32 %v8576, %v1874
    %v8586 = vmul.f32 %v8576, %v1875
    %v8587 = vadd.f32 %v8565, %v8578
    %v8588 = vadd.f32 %v8566, %v8579
    %v8589 = vadd.f32 %v8567, %v8580
    %v8590 = vadd.f32 %v8568, %v8581
    %v8591 = vadd.f32 %v8569, %v8582
    %v8592 = vadd.f32 %v8570, %v8583
    %v8593 = vadd.f32 %v8571, %v8584
    %v8594 = vadd.f32 %v8572, %v8585
    %v8595 = vadd.f32 %v8573, %v8586
    %8596 = vset.pattern.permute.xlu0 12
    %8597 = vperm.xlu0 %8596, %v8221
    %v8598 = vpop.permute.xlu0 %8597
    %v8600 = vmul.f32 %v8598, %v1450
    %v8601 = vmul.f32 %v8598, %v72
    %v8602 = vmul.f32 %v8598, %v1451
    %v8603 = vmul.f32 %v8598, %v73
    %v8604 = vmul.f32 %v8598, %v1452
    %v8605 = vmul.f32 %v8598, %v74
    %v8606 = vmul.f32 %v8598, %v1453
    %v8607 = vmul.f32 %v8598, %v75
    %v8608 = vmul.f32 %v8598, %v1454
    %v8609 = vadd.f32 %v8587, %v8600
    %v8610 = vadd.f32 %v8588, %v8601
    %v8611 = vadd.f32 %v8589, %v8602
    %v8612 = vadd.f32 %v8590, %v8603
    %v8613 = vadd.f32 %v8591, %v8604
    %v8614 = vadd.f32 %v8592, %v8605
    %v8615 = vadd.f32 %v8593, %v8606
    %v8616 = vadd.f32 %v8594, %v8607
    %v8617 = vadd.f32 %v8595, %v8608
    %8618 = vset.pattern.permute.xlu0 13
    %8619 = vperm.xlu0 %8618, %v8221
    %v8620 = vpop.permute.xlu0 %8619
    %v8622 = vmul.f32 %v8620, %v7670
    %v8623 = vmul.f32 %v8620, %v7671
    %v8624 = vmul.f32 %v8620, %v7672
    %v8625 = vmul.f32 %v8620, %v7673
    %v8626 = vmul.f32 %v8620, %v7674
    %v8627 = vmul.f32 %v8620, %v7675
    %v8628 = vmul.f32 %v8620, %v7676
    %v8629 = vmul.f32 %v8620, %v7677
    %v8630 = vmul.f32 %v8620, %v7678
    %v8631 = vadd.f32 %v8609, %v8622
    %v8632 = vadd.f32 %v8610, %v8623
    %v8633 = vadd.f32 %v8611, %v8624
    %v8634 = vadd.f32 %v8612, %v8625
    %v8635 = vadd.f32 %v8613, %v8626
    %v8636 = vadd.f32 %v8614, %v8627
    %v8637 = vadd.f32 %v8615, %v8628
    %v8638 = vadd.f32 %v8616, %v8629
    %v8639 = vadd.f32 %v8617, %v8630
    %8640 = vset.pattern.permute.xlu0 14
    %8641 = vperm.xlu0 %8640, %v8221
    %v8642 = vpop.permute.xlu0 %8641
    %8644 = vrot.lane.b32.xlu0 %v1450, 124
    %v8645 = vpop.permute.xlu0 %8644
    %8646 = vrot.lane.b32.xlu0 %v72, 124
    %v8647 = vpop.permute.xlu0 %8646
    %8648 = vrot.lane.b32.xlu0 %v1451, 124
    %v8649 = vpop.permute.xlu0 %8648
    %8650 = vrot.lane.b32.xlu0 %v73, 124
    %v8651 = vpop.permute.xlu0 %8650
    %8652 = vrot.lane.b32.xlu0 %v1452, 124
    %v8653 = vpop.permute.xlu0 %8652
    %8654 = vrot.lane.b32.xlu0 %v74, 124
    %v8655 = vpop.permute.xlu0 %8654
    %8656 = vrot.lane.b32.xlu0 %v1453, 124
    %v8657 = vpop.permute.xlu0 %8656
    %8658 = vrot.lane.b32.xlu0 %v75, 124
    %v8659 = vpop.permute.xlu0 %8658
    %8660 = vrot.lane.b32.xlu0 %v1454, 124
    %v8661 = vpop.permute.xlu0 %8660
    %8662 = vrot.lane.b32.xlu0 %v76, 124
    %v8663 = vpop.permute.xlu0 %8662
    %v8664 = vsel %vm5603, %v8645, %v8647
    %v8665 = vsel %vm5603, %v8647, %v8649
    %v8666 = vsel %vm5603, %v8649, %v8651
    %v8667 = vsel %vm5603, %v8651, %v8653
    %v8668 = vsel %vm5603, %v8653, %v8655
    %v8669 = vsel %vm5603, %v8655, %v8657
    %v8670 = vsel %vm5603, %v8657, %v8659
    %v8671 = vsel %vm5603, %v8659, %v8661
    %v8672 = vsel %vm5603, %v8661, %v8663
    %v8682 = vmul.f32 %v8642, %v8664
    %v8683 = vmul.f32 %v8642, %v8665
    %v8684 = vmul.f32 %v8642, %v8666
    %v8685 = vmul.f32 %v8642, %v8667
    %v8686 = vmul.f32 %v8642, %v8668
    %v8687 = vmul.f32 %v8642, %v8669
    %v8688 = vmul.f32 %v8642, %v8670
    %v8689 = vmul.f32 %v8642, %v8671
    %v8690 = vmul.f32 %v8642, %v8672
    %v8691 = vadd.f32 %v8631, %v8682
    %v8692 = vadd.f32 %v8632, %v8683
    %v8693 = vadd.f32 %v8633, %v8684
    %v8694 = vadd.f32 %v8634, %v8685
    %v8695 = vadd.f32 %v8635, %v8686
    %v8696 = vadd.f32 %v8636, %v8687
    %v8697 = vadd.f32 %v8637, %v8688
    %v8698 = vadd.f32 %v8638, %v8689
    %v8699 = vadd.f32 %v8639, %v8690
    %8700 = vset.pattern.permute.xlu0 15
    %8701 = vperm.xlu0 %8700, %v8221
    %v8702 = vpop.permute.xlu0 %8701
    %8704 = vrot.lane.b32.xlu0 %v1450, 84
    %v8705 = vpop.permute.xlu0 %8704
    %8706 = vrot.lane.b32.xlu0 %v72, 84
    %v8707 = vpop.permute.xlu0 %8706
    %8708 = vrot.lane.b32.xlu0 %v1451, 84
    %v8709 = vpop.permute.xlu0 %8708
    %8710 = vrot.lane.b32.xlu0 %v73, 84
    %v8711 = vpop.permute.xlu0 %8710
    %8712 = vrot.lane.b32.xlu0 %v1452, 84
    %v8713 = vpop.permute.xlu0 %8712
    %8714 = vrot.lane.b32.xlu0 %v74, 84
    %v8715 = vpop.permute.xlu0 %8714
    %8716 = vrot.lane.b32.xlu0 %v1453, 84
    %v8717 = vpop.permute.xlu0 %8716
    %8718 = vrot.lane.b32.xlu0 %v75, 84
    %v8719 = vpop.permute.xlu0 %8718
    %8720 = vrot.lane.b32.xlu0 %v1454, 84
    %v8721 = vpop.permute.xlu0 %8720
    %8722 = vrot.lane.b32.xlu0 %v76, 84
    %v8723 = vpop.permute.xlu0 %8722
    %vm8724 = vcmask 687104
    %v8725 = vsel %vm8724, %v8705, %v8707
    %v8726 = vsel %vm8724, %v8707, %v8709
    %v8727 = vsel %vm8724, %v8709, %v8711
    %v8728 = vsel %vm8724, %v8711, %v8713
    %v8729 = vsel %vm8724, %v8713, %v8715
    %v8730 = vsel %vm8724, %v8715, %v8717
    %v8731 = vsel %vm8724, %v8717, %v8719
    %v8732 = vsel %vm8724, %v8719, %v8721
    %v8733 = vsel %vm8724, %v8721, %v8723
    %v8743 = vmul.f32 %v8702, %v8725
    %v8744 = vmul.f32 %v8702, %v8726
    %v8745 = vmul.f32 %v8702, %v8727
    %v8746 = vmul.f32 %v8702, %v8728
    %v8747 = vmul.f32 %v8702, %v8729
    %v8748 = vmul.f32 %v8702, %v8730
    %v8749 = vmul.f32 %v8702, %v8731
    %v8750 = vmul.f32 %v8702, %v8732
    %v8751 = vmul.f32 %v8702, %v8733
    %v8752 = vadd.f32 %v8691, %v8743
    %v8753 = vadd.f32 %v8692, %v8744
    %v8754 = vadd.f32 %v8693, %v8745
    %v8755 = vadd.f32 %v8694, %v8746
    %v8756 = vadd.f32 %v8695, %v8747
    %v8757 = vadd.f32 %v8696, %v8748
    %v8758 = vadd.f32 %v8697, %v8749
    %v8759 = vadd.f32 %v8698, %v8750
    %v8760 = vadd.f32 %v8699, %v8751
    %8761 = vset.pattern.permute.xlu0 16
    %8762 = vperm.xlu0 %8761, %v8221
    %v8763 = vpop.permute.xlu0 %8762
    %v8765 = vmul.f32 %v8763, %v7731
    %v8766 = vmul.f32 %v8763, %v7732
    %v8767 = vmul.f32 %v8763, %v7733
    %v8768 = vmul.f32 %v8763, %v7734
    %v8769 = vmul.f32 %v8763, %v7735
    %v8770 = vmul.f32 %v8763, %v7736
    %v8771 = vmul.f32 %v8763, %v7737
    %v8772 = vmul.f32 %v8763, %v7738
    %v8773 = vmul.f32 %v8763, %v7739
    %v8774 = vadd.f32 %v8752, %v8765
    %v8775 = vadd.f32 %v8753, %v8766
    %v8776 = vadd.f32 %v8754, %v8767
    %v8777 = vadd.f32 %v8755, %v8768
    %v8778 = vadd.f32 %v8756, %v8769
    %v8779 = vadd.f32 %v8757, %v8770
    %v8780 = vadd.f32 %v8758, %v8771
    %v8781 = vadd.f32 %v8759, %v8772
    %v8782 = vadd.f32 %v8760, %v8773
    %8783 = vset.pattern.permute.xlu0 17
    %8784 = vperm.xlu0 %8783, %v8221
    %v8785 = vpop.permute.xlu0 %8784
    %v8787 = vmul.f32 %v8785, %v7791
    %v8788 = vmul.f32 %v8785, %v7792
    %v8789 = vmul.f32 %v8785, %v7793
    %v8790 = vmul.f32 %v8785, %v7794
    %v8791 = vmul.f32 %v8785, %v7795
    %v8792 = vmul.f32 %v8785, %v7796
    %v8793 = vmul.f32 %v8785, %v7797
    %v8794 = vmul.f32 %v8785, %v7798
    %v8795 = vmul.f32 %v8785, %v7799
    %v8796 = vadd.f32 %v8774, %v8787
    %v8797 = vadd.f32 %v8775, %v8788
    %v8798 = vadd.f32 %v8776, %v8789
    %v8799 = vadd.f32 %v8777, %v8790
    %v8800 = vadd.f32 %v8778, %v8791
    %v8801 = vadd.f32 %v8779, %v8792
    %v8802 = vadd.f32 %v8780, %v8793
    %v8803 = vadd.f32 %v8781, %v8794
    %v8804 = vadd.f32 %v8782, %v8795
    %8805 = vset.pattern.permute.xlu0 18
    %8806 = vperm.xlu0 %8805, %v8221
    %v8807 = vpop.permute.xlu0 %8806
    %v8809 = vmul.f32 %v8807, %v7851
    %v8810 = vmul.f32 %v8807, %v7852
    %v8811 = vmul.f32 %v8807, %v7853
    %v8812 = vmul.f32 %v8807, %v7854
    %v8813 = vmul.f32 %v8807, %v7855
    %v8814 = vmul.f32 %v8807, %v7856
    %v8815 = vmul.f32 %v8807, %v7857
    %v8816 = vmul.f32 %v8807, %v7858
    %v8817 = vmul.f32 %v8807, %v7859
    %v8818 = vadd.f32 %v8796, %v8809
    %v8819 = vadd.f32 %v8797, %v8810
    %v8820 = vadd.f32 %v8798, %v8811
    %v8821 = vadd.f32 %v8799, %v8812
    %v8822 = vadd.f32 %v8800, %v8813
    %v8823 = vadd.f32 %v8801, %v8814
    %v8824 = vadd.f32 %v8802, %v8815
    %v8825 = vadd.f32 %v8803, %v8816
    %v8826 = vadd.f32 %v8804, %v8817
    %8827 = vset.pattern.permute.xlu0 19
    %8828 = vperm.xlu0 %8827, %v8221
    %v8829 = vpop.permute.xlu0 %8828
    %v8831 = vmul.f32 %v8829, %v3876
    %v8832 = vmul.f32 %v8829, %v3877
    %v8833 = vmul.f32 %v8829, %v3878
    %v8834 = vmul.f32 %v8829, %v3879
    %v8835 = vmul.f32 %v8829, %v3880
    %v8836 = vmul.f32 %v8829, %v3881
    %v8837 = vmul.f32 %v8829, %v3882
    %v8838 = vmul.f32 %v8829, %v3883
    %v8839 = vmul.f32 %v8829, %v3884
    %v8840 = vadd.f32 %v8818, %v8831
    %v8841 = vadd.f32 %v8819, %v8832
    %v8842 = vadd.f32 %v8820, %v8833
    %v8843 = vadd.f32 %v8821, %v8834
    %v8844 = vadd.f32 %v8822, %v8835
    %v8845 = vadd.f32 %v8823, %v8836
    %v8846 = vadd.f32 %v8824, %v8837
    %v8847 = vadd.f32 %v8825, %v8838
    %v8848 = vadd.f32 %v8826, %v8839
    %8849 = vset.pattern.permute.xlu0 20
    %8850 = vperm.xlu0 %8849, %v8221
    %v8851 = vpop.permute.xlu0 %8850
    %8853 = vrot.lane.b32.xlu0 %v1450, 36
    %v8854 = vpop.permute.xlu0 %8853
    %8855 = vrot.lane.b32.xlu0 %v72, 36
    %v8856 = vpop.permute.xlu0 %8855
    %8857 = vrot.lane.b32.xlu0 %v1451, 36
    %v8858 = vpop.permute.xlu0 %8857
    %8859 = vrot.lane.b32.xlu0 %v73, 36
    %v8860 = vpop.permute.xlu0 %8859
    %8861 = vrot.lane.b32.xlu0 %v1452, 36
    %v8862 = vpop.permute.xlu0 %8861
    %8863 = vrot.lane.b32.xlu0 %v74, 36
    %v8864 = vpop.permute.xlu0 %8863
    %8865 = vrot.lane.b32.xlu0 %v1453, 36
    %v8866 = vpop.permute.xlu0 %8865
    %8867 = vrot.lane.b32.xlu0 %v75, 36
    %v8868 = vpop.permute.xlu0 %8867
    %8869 = vrot.lane.b32.xlu0 %v1454, 36
    %v8870 = vpop.permute.xlu0 %8869
    %8871 = vrot.lane.b32.xlu0 %v76, 36
    %v8872 = vpop.permute.xlu0 %8871
    %vm8873 = vcmask 293888
    %v8874 = vsel %vm8873, %v8854, %v8856
    %v8875 = vsel %vm8873, %v8856, %v8858
    %v8876 = vsel %vm8873, %v8858, %v8860
    %v8877 = vsel %vm8873, %v8860, %v8862
    %v8878 = vsel %vm8873, %v8862, %v8864
    %v8879 = vsel %vm8873, %v8864, %v8866
    %v8880 = vsel %vm8873, %v8866, %v8868
    %v8881 = vsel %vm8873, %v8868, %v8870
    %v8882 = vsel %vm8873, %v8870, %v8872
    %v8892 = vmul.f32 %v8851, %v8874
    %v8893 = vmul.f32 %v8851, %v8875
    %v8894 = vmul.f32 %v8851, %v8876
    %v8895 = vmul.f32 %v8851, %v8877
    %v8896 = vmul.f32 %v8851, %v8878
    %v8897 = vmul.f32 %v8851, %v8879
    %v8898 = vmul.f32 %v8851, %v8880
    %v8899 = vmul.f32 %v8851, %v8881
    %v8900 = vmul.f32 %v8851, %v8882
    %v8901 = vadd.f32 %v8840, %v8892
    %v8902 = vadd.f32 %v8841, %v8893
    %v8903 = vadd.f32 %v8842, %v8894
    %v8904 = vadd.f32 %v8843, %v8895
    %v8905 = vadd.f32 %v8844, %v8896
    %v8906 = vadd.f32 %v8845, %v8897
    %v8907 = vadd.f32 %v8846, %v8898
    %v8908 = vadd.f32 %v8847, %v8899
    %v8909 = vadd.f32 %v8848, %v8900
    %8910 = vset.pattern.permute.xlu0 21
    %8911 = vperm.xlu0 %8910, %v8221
    %v8912 = vpop.permute.xlu0 %8911
    %8914 = vrot.lane.b32.xlu0 %v1450, 34
    %v8915 = vpop.permute.xlu0 %8914
    %8916 = vrot.lane.b32.xlu0 %v72, 34
    %v8917 = vpop.permute.xlu0 %8916
    %8918 = vrot.lane.b32.xlu0 %v1451, 34
    %v8919 = vpop.permute.xlu0 %8918
    %8920 = vrot.lane.b32.xlu0 %v73, 34
    %v8921 = vpop.permute.xlu0 %8920
    %8922 = vrot.lane.b32.xlu0 %v1452, 34
    %v8923 = vpop.permute.xlu0 %8922
    %8924 = vrot.lane.b32.xlu0 %v74, 34
    %v8925 = vpop.permute.xlu0 %8924
    %8926 = vrot.lane.b32.xlu0 %v1453, 34
    %v8927 = vpop.permute.xlu0 %8926
    %8928 = vrot.lane.b32.xlu0 %v75, 34
    %v8929 = vpop.permute.xlu0 %8928
    %8930 = vrot.lane.b32.xlu0 %v1454, 34
    %v8931 = vpop.permute.xlu0 %8930
    %8932 = vrot.lane.b32.xlu0 %v76, 34
    %v8933 = vpop.permute.xlu0 %8932
    %vm8934 = vcmask 277504
    %v8935 = vsel %vm8934, %v8915, %v8917
    %v8936 = vsel %vm8934, %v8917, %v8919
    %v8937 = vsel %vm8934, %v8919, %v8921
    %v8938 = vsel %vm8934, %v8921, %v8923
    %v8939 = vsel %vm8934, %v8923, %v8925
    %v8940 = vsel %vm8934, %v8925, %v8927
    %v8941 = vsel %vm8934, %v8927, %v8929
    %v8942 = vsel %vm8934, %v8929, %v8931
    %v8943 = vsel %vm8934, %v8931, %v8933
    %v8953 = vmul.f32 %v8912, %v8935
    %v8954 = vmul.f32 %v8912, %v8936
    %v8955 = vmul.f32 %v8912, %v8937
    %v8956 = vmul.f32 %v8912, %v8938
    %v8957 = vmul.f32 %v8912, %v8939
    %v8958 = vmul.f32 %v8912, %v8940
    %v8959 = vmul.f32 %v8912, %v8941
    %v8960 = vmul.f32 %v8912, %v8942
    %v8961 = vmul.f32 %v8912, %v8943
    %v8962 = vadd.f32 %v8901, %v8953
    %v8963 = vadd.f32 %v8902, %v8954
    %v8964 = vadd.f32 %v8903, %v8955
    %v8965 = vadd.f32 %v8904, %v8956
    %v8966 = vadd.f32 %v8905, %v8957
    %v8967 = vadd.f32 %v8906, %v8958
    %v8968 = vadd.f32 %v8907, %v8959
    %v8969 = vadd.f32 %v8908, %v8960
    %v8970 = vadd.f32 %v8909, %v8961
    %8971 = vset.pattern.permute.xlu0 22
    %8972 = vperm.xlu0 %8971, %v8221
    %v8973 = vpop.permute.xlu0 %8972
    %8975 = vrot.lane.b32.xlu0 %v1450, 32
    %v8976 = vpop.permute.xlu0 %8975
    %8977 = vrot.lane.b32.xlu0 %v72, 32
    %v8978 = vpop.permute.xlu0 %8977
    %8979 = vrot.lane.b32.xlu0 %v1451, 32
    %v8980 = vpop.permute.xlu0 %8979
    %8981 = vrot.lane.b32.xlu0 %v73, 32
    %v8982 = vpop.permute.xlu0 %8981
    %8983 = vrot.lane.b32.xlu0 %v1452, 32
    %v8984 = vpop.permute.xlu0 %8983
    %8985 = vrot.lane.b32.xlu0 %v74, 32
    %v8986 = vpop.permute.xlu0 %8985
    %8987 = vrot.lane.b32.xlu0 %v1453, 32
    %v8988 = vpop.permute.xlu0 %8987
    %8989 = vrot.lane.b32.xlu0 %v75, 32
    %v8990 = vpop.permute.xlu0 %8989
    %8991 = vrot.lane.b32.xlu0 %v1454, 32
    %v8992 = vpop.permute.xlu0 %8991
    %8993 = vrot.lane.b32.xlu0 %v76, 32
    %v8994 = vpop.permute.xlu0 %8993
    %v8995 = vsel %vm6773, %v8976, %v8978
    %v8996 = vsel %vm6773, %v8978, %v8980
    %v8997 = vsel %vm6773, %v8980, %v8982
    %v8998 = vsel %vm6773, %v8982, %v8984
    %v8999 = vsel %vm6773, %v8984, %v8986
    %v9000 = vsel %vm6773, %v8986, %v8988
    %v9001 = vsel %vm6773, %v8988, %v8990
    %v9002 = vsel %vm6773, %v8990, %v8992
    %v9003 = vsel %vm6773, %v8992, %v8994
    %v9013 = vmul.f32 %v8973, %v8995
    %v9014 = vmul.f32 %v8973, %v8996
    %v9015 = vmul.f32 %v8973, %v8997
    %v9016 = vmul.f32 %v8973, %v8998
    %v9017 = vmul.f32 %v8973, %v8999
    %v9018 = vmul.f32 %v8973, %v9000
    %v9019 = vmul.f32 %v8973, %v9001
    %v9020 = vmul.f32 %v8973, %v9002
    %v9021 = vmul.f32 %v8973, %v9003
    %v9022 = vadd.f32 %v8962, %v9013
    %v9023 = vadd.f32 %v8963, %v9014
    %v9024 = vadd.f32 %v8964, %v9015
    %v9025 = vadd.f32 %v8965, %v9016
    %v9026 = vadd.f32 %v8966, %v9017
    %v9027 = vadd.f32 %v8967, %v9018
    %v9028 = vadd.f32 %v8968, %v9019
    %v9029 = vadd.f32 %v8969, %v9020
    %v9030 = vadd.f32 %v8970, %v9021
    %9031 = vset.pattern.permute.xlu0 23
    %9032 = vperm.xlu0 %9031, %v8221
    %v9033 = vpop.permute.xlu0 %9032
    %9035 = vrot.lane.b32.xlu0 %v1450, 30
    %v9036 = vpop.permute.xlu0 %9035
    %9037 = vrot.lane.b32.xlu0 %v72, 30
    %v9038 = vpop.permute.xlu0 %9037
    %9039 = vrot.lane.b32.xlu0 %v1451, 30
    %v9040 = vpop.permute.xlu0 %9039
    %9041 = vrot.lane.b32.xlu0 %v73, 30
    %v9042 = vpop.permute.xlu0 %9041
    %9043 = vrot.lane.b32.xlu0 %v1452, 30
    %v9044 = vpop.permute.xlu0 %9043
    %9045 = vrot.lane.b32.xlu0 %v74, 30
    %v9046 = vpop.permute.xlu0 %9045
    %9047 = vrot.lane.b32.xlu0 %v1453, 30
    %v9048 = vpop.permute.xlu0 %9047
    %9049 = vrot.lane.b32.xlu0 %v75, 30
    %v9050 = vpop.permute.xlu0 %9049
    %9051 = vrot.lane.b32.xlu0 %v1454, 30
    %v9052 = vpop.permute.xlu0 %9051
    %9053 = vrot.lane.b32.xlu0 %v76, 30
    %v9054 = vpop.permute.xlu0 %9053
    %v9055 = vsel %vm6921, %v9036, %v9038
    %v9056 = vsel %vm6921, %v9038, %v9040
    %v9057 = vsel %vm6921, %v9040, %v9042
    %v9058 = vsel %vm6921, %v9042, %v9044
    %v9059 = vsel %vm6921, %v9044, %v9046
    %v9060 = vsel %vm6921, %v9046, %v9048
    %v9061 = vsel %vm6921, %v9048, %v9050
    %v9062 = vsel %vm6921, %v9050, %v9052
    %v9063 = vsel %vm6921, %v9052, %v9054
    %v9073 = vmul.f32 %v9033, %v9055
    %v9074 = vmul.f32 %v9033, %v9056
    %v9075 = vmul.f32 %v9033, %v9057
    %v9076 = vmul.f32 %v9033, %v9058
    %v9077 = vmul.f32 %v9033, %v9059
    %v9078 = vmul.f32 %v9033, %v9060
    %v9079 = vmul.f32 %v9033, %v9061
    %v9080 = vmul.f32 %v9033, %v9062
    %v9081 = vmul.f32 %v9033, %v9063
    %v9082 = vadd.f32 %v9022, %v9073
    %v9083 = vadd.f32 %v9023, %v9074
    %v9084 = vadd.f32 %v9024, %v9075
    %v9085 = vadd.f32 %v9025, %v9076
    %v9086 = vadd.f32 %v9026, %v9077
    %v9087 = vadd.f32 %v9027, %v9078
    %v9088 = vadd.f32 %v9028, %v9079
    %v9089 = vadd.f32 %v9029, %v9080
    %v9090 = vadd.f32 %v9030, %v9081
    %9091 = vset.pattern.permute.xlu0 24
    %9092 = vperm.xlu0 %9091, %v8221
    %v9093 = vpop.permute.xlu0 %9092
    %v9095 = vmul.f32 %v9093, %v4421
    %v9096 = vmul.f32 %v9093, %v4422
    %v9097 = vmul.f32 %v9093, %v4423
    %v9098 = vmul.f32 %v9093, %v4424
    %v9099 = vmul.f32 %v9093, %v4425
    %v9100 = vmul.f32 %v9093, %v4426
    %v9101 = vmul.f32 %v9093, %v4427
    %v9102 = vmul.f32 %v9093, %v4428
    %v9103 = vmul.f32 %v9093, %v4429
    %v9104 = vadd.f32 %v9082, %v9095
    %v9105 = vadd.f32 %v9083, %v9096
    %v9106 = vadd.f32 %v9084, %v9097
    %v9107 = vadd.f32 %v9085, %v9098
    %v9108 = vadd.f32 %v9086, %v9099
    %v9109 = vadd.f32 %v9087, %v9100
    %v9110 = vadd.f32 %v9088, %v9101
    %v9111 = vadd.f32 %v9089, %v9102
    %v9112 = vadd.f32 %v9090, %v9103
    %9114 = vset.pattern.permute.xlu0 0
    %9115 = vperm.xlu0 %9114, %v8222
    %v9116 = vpop.permute.xlu0 %9115
    %v9118 = vlaneseq
    %v9119 = vshrl.u32 %v9118, 7
    %v9120 = vsub.s32 0, %v9119
    %v9121 = vrot.slane %v9104, %v9120
    %v9122 = vlaneseq
    %v9123 = vshrl.u32 %v9122, 7
    %v9124 = vsub.s32 0, %v9123
    %v9125 = vrot.slane %v9105, %v9124
    %v9126 = vlaneseq
    %v9127 = vshrl.u32 %v9126, 7
    %v9128 = vsub.s32 0, %v9127
    %v9129 = vrot.slane %v9106, %v9128
    %v9130 = vlaneseq
    %v9131 = vshrl.u32 %v9130, 7
    %v9132 = vsub.s32 0, %v9131
    %v9133 = vrot.slane %v9107, %v9132
    %v9134 = vlaneseq
    %v9135 = vshrl.u32 %v9134, 7
    %v9136 = vsub.s32 0, %v9135
    %v9137 = vrot.slane %v9108, %v9136
    %v9138 = vlaneseq
    %v9139 = vshrl.u32 %v9138, 7
    %v9140 = vsub.s32 0, %v9139
    %v9141 = vrot.slane %v9109, %v9140
    %v9142 = vlaneseq
    %v9143 = vshrl.u32 %v9142, 7
    %v9144 = vsub.s32 0, %v9143
    %v9145 = vrot.slane %v9110, %v9144
    %v9146 = vlaneseq
    %v9147 = vshrl.u32 %v9146, 7
    %v9148 = vsub.s32 0, %v9147
    %v9149 = vrot.slane %v9111, %v9148
    %v9150 = vlaneseq
    %v9151 = vshrl.u32 %v9150, 7
    %v9152 = vsub.s32 0, %v9151
    %v9153 = vrot.slane %v9112, %v9152
    %v9154 = vmul.f32 %v9116, %v9121
    %v9155 = vmul.f32 %v9116, %v9125
    %v9156 = vmul.f32 %v9116, %v9129
    %v9157 = vmul.f32 %v9116, %v9133
    %v9158 = vmul.f32 %v9116, %v9137
    %v9159 = vmul.f32 %v9116, %v9141
    %v9160 = vmul.f32 %v9116, %v9145
    %v9161 = vmul.f32 %v9116, %v9149
    %v9162 = vmul.f32 %v9116, %v9153
    %9163 = vset.pattern.permute.xlu0 1
    %9164 = vperm.xlu0 %9163, %v8222
    %v9165 = vpop.permute.xlu0 %9164
    %v9167 = vlaneseq
    %v9168 = vshrl.u32 %v9167, 7
    %v9169 = vsub.s32 1, %v9168
    %v9170 = vrot.slane %v9104, %v9169
    %v9171 = vlaneseq
    %v9172 = vshrl.u32 %v9171, 7
    %v9173 = vsub.s32 1, %v9172
    %v9174 = vrot.slane %v9105, %v9173
    %v9175 = vlaneseq
    %v9176 = vshrl.u32 %v9175, 7
    %v9177 = vsub.s32 1, %v9176
    %v9178 = vrot.slane %v9106, %v9177
    %v9179 = vlaneseq
    %v9180 = vshrl.u32 %v9179, 7
    %v9181 = vsub.s32 1, %v9180
    %v9182 = vrot.slane %v9107, %v9181
    %v9183 = vlaneseq
    %v9184 = vshrl.u32 %v9183, 7
    %v9185 = vsub.s32 1, %v9184
    %v9186 = vrot.slane %v9108, %v9185
    %v9187 = vlaneseq
    %v9188 = vshrl.u32 %v9187, 7
    %v9189 = vsub.s32 1, %v9188
    %v9190 = vrot.slane %v9109, %v9189
    %v9191 = vlaneseq
    %v9192 = vshrl.u32 %v9191, 7
    %v9193 = vsub.s32 1, %v9192
    %v9194 = vrot.slane %v9110, %v9193
    %v9195 = vlaneseq
    %v9196 = vshrl.u32 %v9195, 7
    %v9197 = vsub.s32 1, %v9196
    %v9198 = vrot.slane %v9111, %v9197
    %v9199 = vlaneseq
    %v9200 = vshrl.u32 %v9199, 7
    %v9201 = vsub.s32 1, %v9200
    %v9202 = vrot.slane %v9112, %v9201
    %v9203 = vmul.f32 %v9165, %v9170
    %v9204 = vmul.f32 %v9165, %v9174
    %v9205 = vmul.f32 %v9165, %v9178
    %v9206 = vmul.f32 %v9165, %v9182
    %v9207 = vmul.f32 %v9165, %v9186
    %v9208 = vmul.f32 %v9165, %v9190
    %v9209 = vmul.f32 %v9165, %v9194
    %v9210 = vmul.f32 %v9165, %v9198
    %v9211 = vmul.f32 %v9165, %v9202
    %v9212 = vadd.f32 %v9154, %v9203
    %v9213 = vadd.f32 %v9155, %v9204
    %v9214 = vadd.f32 %v9156, %v9205
    %v9215 = vadd.f32 %v9157, %v9206
    %v9216 = vadd.f32 %v9158, %v9207
    %v9217 = vadd.f32 %v9159, %v9208
    %v9218 = vadd.f32 %v9160, %v9209
    %v9219 = vadd.f32 %v9161, %v9210
    %v9220 = vadd.f32 %v9162, %v9211
    %9221 = vset.pattern.permute.xlu0 2
    %9222 = vperm.xlu0 %9221, %v8222
    %v9223 = vpop.permute.xlu0 %9222
    %v9225 = vlaneseq
    %v9226 = vshrl.u32 %v9225, 7
    %v9227 = vsub.s32 2, %v9226
    %v9228 = vrot.slane %v9104, %v9227
    %v9229 = vlaneseq
    %v9230 = vshrl.u32 %v9229, 7
    %v9231 = vsub.s32 2, %v9230
    %v9232 = vrot.slane %v9105, %v9231
    %v9233 = vlaneseq
    %v9234 = vshrl.u32 %v9233, 7
    %v9235 = vsub.s32 2, %v9234
    %v9236 = vrot.slane %v9106, %v9235
    %v9237 = vlaneseq
    %v9238 = vshrl.u32 %v9237, 7
    %v9239 = vsub.s32 2, %v9238
    %v9240 = vrot.slane %v9107, %v9239
    %v9241 = vlaneseq
    %v9242 = vshrl.u32 %v9241, 7
    %v9243 = vsub.s32 2, %v9242
    %v9244 = vrot.slane %v9108, %v9243
    %v9245 = vlaneseq
    %v9246 = vshrl.u32 %v9245, 7
    %v9247 = vsub.s32 2, %v9246
    %v9248 = vrot.slane %v9109, %v9247
    %v9249 = vlaneseq
    %v9250 = vshrl.u32 %v9249, 7
    %v9251 = vsub.s32 2, %v9250
    %v9252 = vrot.slane %v9110, %v9251
    %v9253 = vlaneseq
    %v9254 = vshrl.u32 %v9253, 7
    %v9255 = vsub.s32 2, %v9254
    %v9256 = vrot.slane %v9111, %v9255
    %v9257 = vlaneseq
    %v9258 = vshrl.u32 %v9257, 7
    %v9259 = vsub.s32 2, %v9258
    %v9260 = vrot.slane %v9112, %v9259
    %v9261 = vmul.f32 %v9223, %v9228
    %v9262 = vmul.f32 %v9223, %v9232
    %v9263 = vmul.f32 %v9223, %v9236
    %v9264 = vmul.f32 %v9223, %v9240
    %v9265 = vmul.f32 %v9223, %v9244
    %v9266 = vmul.f32 %v9223, %v9248
    %v9267 = vmul.f32 %v9223, %v9252
    %v9268 = vmul.f32 %v9223, %v9256
    %v9269 = vmul.f32 %v9223, %v9260
    %v9270 = vadd.f32 %v9212, %v9261
    %v9271 = vadd.f32 %v9213, %v9262
    %v9272 = vadd.f32 %v9214, %v9263
    %v9273 = vadd.f32 %v9215, %v9264
    %v9274 = vadd.f32 %v9216, %v9265
    %v9275 = vadd.f32 %v9217, %v9266
    %v9276 = vadd.f32 %v9218, %v9267
    %v9277 = vadd.f32 %v9219, %v9268
    %v9278 = vadd.f32 %v9220, %v9269
    %9279 = vset.pattern.permute.xlu0 3
    %9280 = vperm.xlu0 %9279, %v8222
    %v9281 = vpop.permute.xlu0 %9280
    %v9283 = vlaneseq
    %v9284 = vshrl.u32 %v9283, 7
    %v9285 = vsub.s32 3, %v9284
    %v9286 = vrot.slane %v9104, %v9285
    %v9287 = vlaneseq
    %v9288 = vshrl.u32 %v9287, 7
    %v9289 = vsub.s32 3, %v9288
    %v9290 = vrot.slane %v9105, %v9289
    %v9291 = vlaneseq
    %v9292 = vshrl.u32 %v9291, 7
    %v9293 = vsub.s32 3, %v9292
    %v9294 = vrot.slane %v9106, %v9293
    %v9295 = vlaneseq
    %v9296 = vshrl.u32 %v9295, 7
    %v9297 = vsub.s32 3, %v9296
    %v9298 = vrot.slane %v9107, %v9297
    %v9299 = vlaneseq
    %v9300 = vshrl.u32 %v9299, 7
    %v9301 = vsub.s32 3, %v9300
    %v9302 = vrot.slane %v9108, %v9301
    %v9303 = vlaneseq
    %v9304 = vshrl.u32 %v9303, 7
    %v9305 = vsub.s32 3, %v9304
    %v9306 = vrot.slane %v9109, %v9305
    %v9307 = vlaneseq
    %v9308 = vshrl.u32 %v9307, 7
    %v9309 = vsub.s32 3, %v9308
    %v9310 = vrot.slane %v9110, %v9309
    %v9311 = vlaneseq
    %v9312 = vshrl.u32 %v9311, 7
    %v9313 = vsub.s32 3, %v9312
    %v9314 = vrot.slane %v9111, %v9313
    %v9315 = vlaneseq
    %v9316 = vshrl.u32 %v9315, 7
    %v9317 = vsub.s32 3, %v9316
    %v9318 = vrot.slane %v9112, %v9317
    %v9319 = vmul.f32 %v9281, %v9286
    %v9320 = vmul.f32 %v9281, %v9290
    %v9321 = vmul.f32 %v9281, %v9294
    %v9322 = vmul.f32 %v9281, %v9298
    %v9323 = vmul.f32 %v9281, %v9302
    %v9324 = vmul.f32 %v9281, %v9306
    %v9325 = vmul.f32 %v9281, %v9310
    %v9326 = vmul.f32 %v9281, %v9314
    %v9327 = vmul.f32 %v9281, %v9318
    %v9328 = vadd.f32 %v9270, %v9319
    %v9329 = vadd.f32 %v9271, %v9320
    %v9330 = vadd.f32 %v9272, %v9321
    %v9331 = vadd.f32 %v9273, %v9322
    %v9332 = vadd.f32 %v9274, %v9323
    %v9333 = vadd.f32 %v9275, %v9324
    %v9334 = vadd.f32 %v9276, %v9325
    %v9335 = vadd.f32 %v9277, %v9326
    %v9336 = vadd.f32 %v9278, %v9327
    %v9337 = vsel %vm620, %v9328, 0.0
    %v9338 = vsel %vm621, %v9329, 0.0
    %v9339 = vsel %vm622, %v9330, 0.0
    %v9340 = vsel %vm623, %v9331, 0.0
    %v9341 = vsel %vm624, %v9332, 0.0
    %v9342 = vsel %vm625, %v9333, 0.0
    %v9343 = vsel %vm626, %v9334, 0.0
    %v9344 = vsel %vm627, %v9335, 0.0
    %v9345 = vsel %vm628, %v9336, 0.0
    %v9346 = vsel %vm687, %v9337, 0.0
    %v9347 = vsel %vm687, %v9338, 0.0
    %v9348 = vadd.f32 %v9346, %v9347
    %v9349 = vsel %vm687, %v9339, 0.0
    %v9350 = vadd.f32 %v9348, %v9349
    %v9351 = vsel %vm687, %v9340, 0.0
    %v9352 = vadd.f32 %v9350, %v9351
    %v9353 = vsel %vm687, %v9341, 0.0
    %v9354 = vadd.f32 %v9352, %v9353
    %v9355 = vsel %vm687, %v9342, 0.0
    %v9356 = vadd.f32 %v9354, %v9355
    %v9357 = vsel %vm687, %v9343, 0.0
    %v9358 = vadd.f32 %v9356, %v9357
    %v9359 = vsel %vm687, %v9344, 0.0
    %v9360 = vadd.f32 %v9358, %v9359
    %v9361 = vsel %vm687, %v9345, 0.0
    %v9362 = vadd.f32 %v9360, %v9361
    %9363 = vadd.xlane.f32.xlu0 %v9362
    %v9364 = vpop.xlane.xlu0 %9363
    %v9365 = vmul.f32 %v9364, 0.001953125
    %v9366 = vmul.f32 %v9337, %v9337
    %v9367 = vmul.f32 %v9338, %v9338
    %v9368 = vmul.f32 %v9339, %v9339
    %v9369 = vmul.f32 %v9340, %v9340
    %v9370 = vmul.f32 %v9341, %v9341
    %v9371 = vmul.f32 %v9342, %v9342
    %v9372 = vmul.f32 %v9343, %v9343
    %v9373 = vmul.f32 %v9344, %v9344
    %v9374 = vmul.f32 %v9345, %v9345
    %v9375 = vsel %vm687, %v9366, 0.0
    %v9376 = vsel %vm687, %v9367, 0.0
    %v9377 = vadd.f32 %v9375, %v9376
    %v9378 = vsel %vm687, %v9368, 0.0
    %v9379 = vadd.f32 %v9377, %v9378
    %v9380 = vsel %vm687, %v9369, 0.0
    %v9381 = vadd.f32 %v9379, %v9380
    %v9382 = vsel %vm687, %v9370, 0.0
    %v9383 = vadd.f32 %v9381, %v9382
    %v9384 = vsel %vm687, %v9371, 0.0
    %v9385 = vadd.f32 %v9383, %v9384
    %v9386 = vsel %vm687, %v9372, 0.0
    %v9387 = vadd.f32 %v9385, %v9386
    %v9388 = vsel %vm687, %v9373, 0.0
    %v9389 = vadd.f32 %v9387, %v9388
    %v9390 = vsel %vm687, %v9374, 0.0
    %v9391 = vadd.f32 %v9389, %v9390
    %9392 = vadd.xlane.f32.xlu0 %v9391
    %v9393 = vpop.xlane.xlu0 %9392
    %v9394 = vmul.f32 %v9393, 0.001953125
    %v9395 = vmul.f32 %v9365, %v9365
    %v9396 = vsub.f32 %v9394, %v9395
    %v9397 = vmax.f32 %v9396, 0.0
    %v9398 = vsub.f32 %v9337, %v9365
    %v9399 = vsub.f32 %v9338, %v9365
    %v9400 = vsub.f32 %v9339, %v9365
    %v9401 = vsub.f32 %v9340, %v9365
    %v9402 = vsub.f32 %v9341, %v9365
    %v9403 = vsub.f32 %v9342, %v9365
    %v9404 = vsub.f32 %v9343, %v9365
    %v9405 = vsub.f32 %v9344, %v9365
    %v9406 = vsub.f32 %v9345, %v9365
    %v9407 = vadd.f32 %v9397, 1e-05
    %v9408 = vrsqrt.pop %v9407
    %v9409 = vmul.f32 %v9398, %v9408
    %v9410 = vmul.f32 %v9399, %v9408
    %v9411 = vmul.f32 %v9400, %v9408
    %v9412 = vmul.f32 %v9401, %v9408
    %v9413 = vmul.f32 %v9402, %v9408
    %v9414 = vmul.f32 %v9403, %v9408
    %v9415 = vmul.f32 %v9404, %v9408
    %v9416 = vmul.f32 %v9405, %v9408
    %v9417 = vmul.f32 %v9406, %v9408
    %v9418 = vsel %vm620, %v9409, 0.0
    %v9419 = vsel %vm621, %v9410, 0.0
    %v9420 = vsel %vm622, %v9411, 0.0
    %v9421 = vsel %vm623, %v9412, 0.0
    %v9422 = vsel %vm624, %v9413, 0.0
    %v9423 = vsel %vm625, %v9414, 0.0
    %v9424 = vsel %vm626, %v9415, 0.0
    %v9425 = vsel %vm627, %v9416, 0.0
    %v9426 = vsel %vm628, %v9417, 0.0
    %v9427 = vstv %s8220
    %v9428 = vmul.f32 %v9427, %v9418
    %v9429 = vmul.f32 %v9427, %v9419
    %v9430 = vmul.f32 %v9427, %v9420
    %v9431 = vmul.f32 %v9427, %v9421
    %v9432 = vmul.f32 %v9427, %v9422
    %v9433 = vmul.f32 %v9427, %v9423
    %v9434 = vmul.f32 %v9427, %v9424
    %v9435 = vmul.f32 %v9427, %v9425
    %v9436 = vmul.f32 %v9427, %v9426
    %v9437 = vadd.f32 %v8211, %v9428
    %v9438 = vadd.f32 %v8212, %v9429
    %v9439 = vadd.f32 %v8213, %v9430
    %v9440 = vadd.f32 %v8214, %v9431
    %v9441 = vadd.f32 %v8215, %v9432
    %v9442 = vadd.f32 %v8216, %v9433
    %v9443 = vadd.f32 %v8217, %v9434
    %v9444 = vadd.f32 %v8218, %v9435
    %v9445 = vadd.f32 %v8219, %v9436
    %v9454 = vcombine.low %v9437, %v9438
    %v9455 = vcombine.low %v9439, %v9440
    %v9456 = vcombine.low %v9441, %v9442
    %v9457 = vcombine.low %v9443, %v9444
    %9462 = vst [vmem:[%s15] sm:$0xff] %v9454
    %9463 = vst [vmem:[%s15 + $0x8] sm:$0xff] %v9455
    %9464 = vst [vmem:[%s15 + $0x10] sm:$0xff] %v9456
    %9465 = vst [vmem:[%s15 + $0x18] sm:$0xff] %v9457
    %9466 = vst [vmem:[%s15 + $0x20] sm:$0xf] %v9445
    // Predicated region
    $region66: #{_lambda_.1} parent=1 // pred_check
      _
    $region67: #{_lambda_.1} parent=1 // pred_check_branch
      %9468 = sbr.rel (0) target = $region69
    $region68: #{_lambda_.1} parent=1 // pred_region
      _
    $region69: #{_lambda_.1} parent=1 // pred_fallthru
      _
    // Predicated region
    $region70: #{_lambda_.1} parent=1 // pred_check
      _
    $region71: #{_lambda_.1} parent=1 // pred_check_branch
      %9470 = sbr.rel (0) target = $region73
    $region72: #{_lambda_.1} parent=1 // pred_region
      _
    $region73: #{_lambda_.1} parent=1 // pred_fallthru
      _
    %9471 = vsyncpa [#allocation3], 1

</llo_original>
